<compile_context>
chip_gen: v7x
topology: tpu7x:2x2x1
jax: 0.10.0
libtpu: 0.0.40
codegen_flags: <defaults>
</compile_context>

<pallas_src>
import functools

import numpy as np
import jax
import jax.numpy as jnp
from jax.experimental import pallas as pl
from jax.experimental.pallas import tpu as pltpu


# ----------------------------------------------------------------------------
# Precomputed shift/mask matrices: S[t][q, p] = 1 iff output pixel p = (h, w)
# reads input pixel q = (h + oy, w + ox) and that pixel is inside the image,
# where (oy, ox) = (t // Ks - radius, t % Ks - radius), Ks = 2 * radius + 1.
# Encodes both the spatial shift of a conv tap and the 'same' zero padding.
# ----------------------------------------------------------------------------
def _make_shift_mats(H, W, radius):
    Ks = 2 * radius + 1
    HW = H * W
    p = np.arange(HW)
    h, w = p // W, p % W
    mats = np.zeros((Ks * Ks, HW, HW), np.float32)
    for t in range(Ks * Ks):
        oy, ox = t // Ks - radius, t % Ks - radius
        valid = (h + oy >= 0) & (h + oy < H) & (w + ox >= 0) & (w + ox < W)
        q = (h + oy) * W + (w + ox)
        mats[t, q[valid], p[valid]] = 1.0
    return jnp.asarray(mats)


# ----------------------------------------------------------------------------
# Fused ResiLayer kernel: one batch element per grid step, everything in VMEM.
# Weight layout: w[dy*k + dx, co, ci] == PyTorch Conv2d weight[co, ci, dy, dx].
# ----------------------------------------------------------------------------
def _resi_kernel(sout_ref, pred_ref, S_ref,
                 w1_ref, b1_ref,
                 wrev_ref, brev_ref,
                 wori_ref, bori_ref,
                 wo1o_ref, wo1r_ref, bo1_ref,
                 wo2_ref, bo2_ref,
                 o_ref, *, k, radius):
    HW = sout_ref.shape[-1]
    Ks = 2 * radius + 1

    def conv_taps(x_parts, w_refs, b_ref, ksize, relu):
        """'same' conv, stride 1.  x_parts: list of (Cin_i, HW) f32 values,
        w_refs: matching list of (ksize*ksize, Cout, Cin_i) refs."""
        cout = w_refs[0].shape[1]
        r = ksize // 2
        acc = jnp.zeros((cout, HW), jnp.float32)
        for dy in range(ksize):
            for dx in range(ksize):
                t = dy * ksize + dx
                y = jnp.zeros((cout, HW), jnp.float32)
                for x, w_ref in zip(x_parts, w_refs):
                    y = y + jnp.dot(w_ref[t], x,
                                    preferred_element_type=jnp.float32)
                ts = (dy - r + radius) * Ks + (dx - r + radius)  # tap in S
                acc = acc + jnp.dot(y, S_ref[ts],
                                    preferred_element_type=jnp.float32)
        acc = acc + b_ref[...]            # (Cout, 1) broadcasts over lanes
        if relu:
            acc = jnp.maximum(acc, 0.0)
        return acc

    x_in = sout_ref[0].astype(jnp.float32)                      # (Cin, HW)

    # conv1x1 (+ bias)
    s = jnp.dot(w1_ref[...], x_in,
                preferred_element_type=jnp.float32) + b1_ref[...]

    # ori / rev attention: sigmoid(pred) broadcasts over the channel axis.
    sig = 1.0 / (1.0 + jnp.exp(-pred_ref[0].astype(jnp.float32)))   # (1, HW)
    s_ori = s * sig
    s_rev = s - s_ori                                               # s * (1 - sig)

    # rev_conv / ori_conv: k x k conv + ReLU
    c_rev = conv_taps([s_rev], [wrev_ref], brev_ref, k, relu=True)
    c_ori = conv_taps([s_ori], [wori_ref], bori_ref, k, relu=True)

    # out_layer conv #1: k x k conv over cat([ori, rev], channel) + ReLU,
    # concat replaced by split-weight accumulation (ori block, then rev block).
    y1 = conv_taps([c_ori, c_rev], [wo1o_ref, wo1r_ref], bo1_ref, k, relu=True)

    # out_layer conv #2: 3x3 conv -> 1 channel (no activation)
    y2 = conv_taps([y1], [wo2_ref], bo2_ref, 3, relu=False)         # (1, HW)

    o_ref[0] = y2.astype(o_ref.dtype)


# ----------------------------------------------------------------------------
# Synthetic parameters (deterministic).  Layout is kernel-friendly:
#   wX[dy*k + dx, co, ci]  <->  PyTorch Conv2d weight[co, ci, dy, dx]
#   w_out1_ori / w_out1_rev  <->  out_layer[0].weight[:, :C] / [:, C:]
#   (cat order in the module is (ori, rev)).
# ----------------------------------------------------------------------------
def init_resi_layer_params(key, in_channel, channel, k):
    ks = jax.random.split(key, 12)
    scale = 0.1
    kk = k * k

    def w(key, *shape):
        return scale * jax.random.normal(key, shape, jnp.float32)

    return dict(
        w1x1=w(ks[0], channel, in_channel),      b1x1=w(ks[1], channel, 1),
        w_rev=w(ks[2], kk, channel, channel),    b_rev=w(ks[3], channel, 1),
        w_ori=w(ks[4], kk, channel, channel),    b_ori=w(ks[5], channel, 1),
        w_out1_ori=w(ks[6], kk, channel, channel),
        w_out1_rev=w(ks[7], kk, channel, channel),
        b_out1=w(ks[8], channel, 1),
        w_out2=w(ks[9], 9, 1, channel),          b_out2=w(ks[10], 1, 1),
    )


# ----------------------------------------------------------------------------
# Public forward: NCHW in / NCHW out, matching the PyTorch module.
# ----------------------------------------------------------------------------
@functools.partial(jax.jit, static_argnames=("k",))
def resi_layer_forward(params, sout_nchw, pred_nchw, *, k):
    assert k % 2 == 1, "ResiLayer uses odd kernel sizes ('same' padding)"
    N, Cin, H, W = sout_nchw.shape
    C = params["b1x1"].shape[0]
    HW = H * W
    radius = max(k // 2, 1)            # covers both the k x k and 3x3 taps

    sout_flat = sout_nchw.reshape(N, Cin, HW).astype(jnp.float32)
    pred_flat = pred_nchw.reshape(N, 1, HW).astype(jnp.float32)
    S = _make_shift_mats(H, W, radius)                  # (Ks*Ks, HW, HW) f32

    def _full(arr):                                     # replicated operand
        zeros = (0,) * arr.ndim
        return pl.BlockSpec(arr.shape, lambda n, _z=zeros: _z)

    kernel = functools.partial(_resi_kernel, k=k, radius=radius)

    out_flat = pl.pallas_call(
        kernel,
        out_shape=jax.ShapeDtypeStruct((N, 1, HW), jnp.float32),
        grid=(N,),
        in_specs=[
            pl.BlockSpec((1, Cin, HW), lambda n: (n, 0, 0)),   # sout
            pl.BlockSpec((1, 1, HW), lambda n: (n, 0, 0)),     # pred
            _full(S),
            _full(params["w1x1"]), _full(params["b1x1"]),
            _full(params["w_rev"]), _full(params["b_rev"]),
            _full(params["w_ori"]), _full(params["b_ori"]),
            _full(params["w_out1_ori"]), _full(params["w_out1_rev"]),
            _full(params["b_out1"]),
            _full(params["w_out2"]), _full(params["b_out2"]),
        ],
        out_specs=pl.BlockSpec((1, 1, HW), lambda n: (n, 0, 0)),
        compiler_params=pltpu.CompilerParams(
            dimension_semantics=("parallel",),        # v7x: one batch per TC
            vmem_limit_bytes=32 * 1024 * 1024),
    )(sout_flat, pred_flat, S,
      params["w1x1"], params["b1x1"],
      params["w_rev"], params["b_rev"],
      params["w_ori"], params["b_ori"],
      params["w_out1_ori"], params["w_out1_rev"], params["b_out1"],
      params["w_out2"], params["b_out2"])

    return out_flat.reshape(N, 1, H, W)


# ----------------------------------------------------------------------------
# Pure-JAX reference (mirrors the PyTorch module) for a numerical self-check.
# ----------------------------------------------------------------------------
def _ref_conv_same(x, w_taps, b, ksize):
    N, Cin, H, W = x.shape
    r = ksize // 2
    xp = jnp.pad(x, ((0, 0), (0, 0), (r, r), (r, r)))
    kk, Cout, _ = w_taps.shape
    out = jnp.zeros((N, Cout, H, W), jnp.float32) + b.reshape(1, Cout, 1, 1)
    for t in range(kk):
        dy, dx = t // ksize, t % ksize
        patch = xp[:, :, dy:dy + H, dx:dx + W]
        out = out + jnp.einsum('oc,nchw->nohw', w_taps[t], patch)
    return out


def resi_layer_reference(params, sout, pred, *, k):
    C = params["b1x1"].shape[0]
    s = jnp.einsum('oc,nchw->nohw', params["w1x1"], sout) \
        + params["b1x1"].reshape(1, C, 1, 1)
    sig = jax.nn.sigmoid(pred)
    s_ori = s * sig
    s_rev = s * (1.0 - sig)
    c_rev = jax.nn.relu(_ref_conv_same(s_rev, params["w_rev"], params["b_rev"], k))
    c_ori = jax.nn.relu(_ref_conv_same(s_ori, params["w_ori"], params["b_ori"], k))
    cat = jnp.concatenate([c_ori, c_rev], axis=1)
    w_out1 = jnp.concatenate([params["w_out1_ori"], params["w_out1_rev"]], axis=2)
    y = jax.nn.relu(_ref_conv_same(cat, w_out1, params["b_out1"], k))
    return _ref_conv_same(y, params["w_out2"], params["b_out2"], 3)


if __name__ == "__main__":
    key = jax.random.PRNGKey(0)
    k_param, k_sout, k_pred = jax.random.split(key, 3)

    N, in_channel, channel, k_size, H, W = 2, 4, 8, 3, 16, 16

    params = init_resi_layer_params(k_param, in_channel, channel, k_size)
    sout = jax.random.normal(k_sout, (N, in_channel, H, W), jnp.float32)
    pred = jax.random.normal(k_pred, (N, 1, H, W), jnp.float32)

    out = resi_layer_forward(params, sout, pred, k=k_size)
    out = jax.block_until_ready(out)

    assert out.shape == (N, 1, H, W), out.shape
    assert bool(jnp.all(jnp.isfinite(out)))

    ref = resi_layer_reference(params, sout, pred, k=k_size)
    err = float(jnp.max(jnp.abs(out - ref)))
    assert err < 2e-3, f"max abs error vs reference: {err}"

    print("KERNEL_OK")
</pallas_src>

<mosaic_0001>
module attributes {stable_mosaic.version = 11 : i64} {
  func.func @_resi_kernel(%arg0: i32, %arg1: memref<1x4x256xf32, #tpu.memory_space<vmem>>, %arg2: memref<1x1x256xf32, #tpu.memory_space<vmem>>, %arg3: memref<9x256x256xf32, #tpu.memory_space<vmem>>, %arg4: memref<8x4xf32, #tpu.memory_space<vmem>>, %arg5: memref<8x1xf32, #tpu.memory_space<vmem>>, %arg6: memref<9x8x8xf32, #tpu.memory_space<vmem>>, %arg7: memref<8x1xf32, #tpu.memory_space<vmem>>, %arg8: memref<9x8x8xf32, #tpu.memory_space<vmem>>, %arg9: memref<8x1xf32, #tpu.memory_space<vmem>>, %arg10: memref<9x8x8xf32, #tpu.memory_space<vmem>>, %arg11: memref<9x8x8xf32, #tpu.memory_space<vmem>>, %arg12: memref<8x1xf32, #tpu.memory_space<vmem>>, %arg13: memref<9x1x8xf32, #tpu.memory_space<vmem>>, %arg14: memref<1x1xf32, #tpu.memory_space<vmem>>, %arg15: memref<1x1x256xf32, #tpu.memory_space<vmem>>) attributes {dimension_semantics = [#tpu.dimension_semantics<parallel>], iteration_bounds = array<i64: 2>, scalar_prefetch = 0 : i64, scratch_operands = 0 : i64, tpu.core_type = #tpu.core_type<tc>, window_params = [{transform_indices = @transform_0, window_bounds = array<i64: 1, 4, 256>}, {transform_indices = @transform_1, window_bounds = array<i64: 1, 1, 256>}, {pipeline_mode = #tpu.pipeline_mode<synchronous>, transform_indices = @transform_2, window_bounds = array<i64: 9, 256, 256>}, {pipeline_mode = #tpu.pipeline_mode<synchronous>, transform_indices = @transform_3, window_bounds = array<i64: 8, 4>}, {pipeline_mode = #tpu.pipeline_mode<synchronous>, transform_indices = @transform_4, window_bounds = array<i64: 8, 1>}, {pipeline_mode = #tpu.pipeline_mode<synchronous>, transform_indices = @transform_5, window_bounds = array<i64: 9, 8, 8>}, {pipeline_mode = #tpu.pipeline_mode<synchronous>, transform_indices = @transform_6, window_bounds = array<i64: 8, 1>}, {pipeline_mode = #tpu.pipeline_mode<synchronous>, transform_indices = @transform_7, window_bounds = array<i64: 9, 8, 8>}, {pipeline_mode = #tpu.pipeline_mode<synchronous>, transform_indices = @transform_8, window_bounds = array<i64: 8, 1>}, {pipeline_mode = #tpu.pipeline_mode<synchronous>, transform_indices = @transform_9, window_bounds = array<i64: 9, 8, 8>}, {pipeline_mode = #tpu.pipeline_mode<synchronous>, transform_indices = @transform_10, window_bounds = array<i64: 9, 8, 8>}, {pipeline_mode = #tpu.pipeline_mode<synchronous>, transform_indices = @transform_11, window_bounds = array<i64: 8, 1>}, {pipeline_mode = #tpu.pipeline_mode<synchronous>, transform_indices = @transform_12, window_bounds = array<i64: 9, 1, 8>}, {pipeline_mode = #tpu.pipeline_mode<synchronous>, transform_indices = @transform_13, window_bounds = array<i64: 1, 1>}, {transform_indices = @transform_14, window_bounds = array<i64: 1, 1, 256>}]} {
    %c0 = arith.constant 0 : index
    %c0_0 = arith.constant 0 : index
    %c0_1 = arith.constant 0 : index
    %0 = vector.load %arg1[%c0, %c0_0, %c0_1] : memref<1x4x256xf32, #tpu.memory_space<vmem>>, vector<1x4x256xf32>
    %1 = vector.shape_cast %0 : vector<1x4x256xf32> to vector<4x256xf32>
    %c0_2 = arith.constant 0 : index
    %c0_3 = arith.constant 0 : index
    %2 = vector.load %arg4[%c0_2, %c0_3] : memref<8x4xf32, #tpu.memory_space<vmem>>, vector<8x4xf32>
    %cst = arith.constant dense<0.000000e+00> : vector<8x256xf32>
    %3 = tpu.matmul %2, %1, %cst {dimension_numbers = #tpu.dot_dimension_numbers<[1], [0], [0], [1], [0, 0, 1, 1], [], []>} : vector<8x4xf32>, vector<4x256xf32>, vector<8x256xf32> -> vector<8x256xf32>
    %c0_4 = arith.constant 0 : index
    %c0_5 = arith.constant 0 : index
    %4 = vector.load %arg5[%c0_4, %c0_5] : memref<8x1xf32, #tpu.memory_space<vmem>>, vector<8x1xf32>
    %5 = vector.broadcast %4 : vector<8x1xf32> to vector<8x256xf32>
    %6 = arith.addf %3, %5 : vector<8x256xf32>
    %c0_6 = arith.constant 0 : index
    %c0_7 = arith.constant 0 : index
    %c0_8 = arith.constant 0 : index
    %7 = vector.load %arg2[%c0_6, %c0_7, %c0_8] : memref<1x1x256xf32, #tpu.memory_space<vmem>>, vector<1x1x256xf32>
    %8 = vector.shape_cast %7 : vector<1x1x256xf32> to vector<1x256xf32>
    %cst_9 = arith.constant 0.000000e+00 : f32
    %9 = vector.broadcast %cst_9 : f32 to vector<1x256xf32>
    %10 = arith.subf %9, %8 : vector<1x256xf32>
    %11 = math.exp %10 : vector<1x256xf32>
    %cst_10 = arith.constant 1.000000e+00 : f32
    %12 = vector.broadcast %cst_10 : f32 to vector<1x256xf32>
    %13 = arith.addf %12, %11 : vector<1x256xf32>
    %cst_11 = arith.constant 1.000000e+00 : f32
    %14 = vector.broadcast %cst_11 : f32 to vector<1x256xf32>
    %15 = arith.divf %14, %13 : vector<1x256xf32>
    %16 = vector.broadcast %15 : vector<1x256xf32> to vector<8x256xf32>
    %17 = arith.mulf %6, %16 : vector<8x256xf32>
    %18 = arith.subf %6, %17 : vector<8x256xf32>
    %cst_12 = arith.constant 0.000000e+00 : f32
    %19 = vector.broadcast %cst_12 : f32 to vector<8x256xf32>
    %cst_13 = arith.constant 0.000000e+00 : f32
    %20 = vector.broadcast %cst_13 : f32 to vector<8x256xf32>
    %c0_14 = arith.constant 0 : index
    %c0_15 = arith.constant 0 : index
    %c0_16 = arith.constant 0 : index
    %21 = vector.load %arg6[%c0_14, %c0_15, %c0_16] : memref<9x8x8xf32, #tpu.memory_space<vmem>>, vector<1x8x8xf32>
    %22 = vector.shape_cast %21 : vector<1x8x8xf32> to vector<8x8xf32>
    %cst_17 = arith.constant dense<0.000000e+00> : vector<8x256xf32>
    %23 = tpu.matmul %22, %18, %cst_17 {dimension_numbers = #tpu.dot_dimension_numbers<[1], [0], [0], [1], [0, 0, 1, 1], [], []>} : vector<8x8xf32>, vector<8x256xf32>, vector<8x256xf32> -> vector<8x256xf32>
    %24 = arith.addf %20, %23 : vector<8x256xf32>
    %c0_18 = arith.constant 0 : index
    %c0_19 = arith.constant 0 : index
    %c0_20 = arith.constant 0 : index
    %25 = vector.load %arg3[%c0_18, %c0_19, %c0_20] : memref<9x256x256xf32, #tpu.memory_space<vmem>>, vector<1x256x256xf32>
    %26 = vector.shape_cast %25 : vector<1x256x256xf32> to vector<256x256xf32>
    %cst_21 = arith.constant dense<0.000000e+00> : vector<8x256xf32>
    %27 = tpu.matmul %24, %26, %cst_21 {dimension_numbers = #tpu.dot_dimension_numbers<[1], [0], [0], [1], [0, 0, 1, 1], [], []>} : vector<8x256xf32>, vector<256x256xf32>, vector<8x256xf32> -> vector<8x256xf32>
    %28 = arith.addf %19, %27 : vector<8x256xf32>
    %cst_22 = arith.constant 0.000000e+00 : f32
    %29 = vector.broadcast %cst_22 : f32 to vector<8x256xf32>
    %c1 = arith.constant 1 : index
    %c0_23 = arith.constant 0 : index
    %c0_24 = arith.constant 0 : index
    %30 = vector.load %arg6[%c1, %c0_23, %c0_24] : memref<9x8x8xf32, #tpu.memory_space<vmem>>, vector<1x8x8xf32>
    %31 = vector.shape_cast %30 : vector<1x8x8xf32> to vector<8x8xf32>
    %cst_25 = arith.constant dense<0.000000e+00> : vector<8x256xf32>
    %32 = tpu.matmul %31, %18, %cst_25 {dimension_numbers = #tpu.dot_dimension_numbers<[1], [0], [0], [1], [0, 0, 1, 1], [], []>} : vector<8x8xf32>, vector<8x256xf32>, vector<8x256xf32> -> vector<8x256xf32>
    %33 = arith.addf %29, %32 : vector<8x256xf32>
    %c1_26 = arith.constant 1 : index
    %c0_27 = arith.constant 0 : index
    %c0_28 = arith.constant 0 : index
    %34 = vector.load %arg3[%c1_26, %c0_27, %c0_28] : memref<9x256x256xf32, #tpu.memory_space<vmem>>, vector<1x256x256xf32>
    %35 = vector.shape_cast %34 : vector<1x256x256xf32> to vector<256x256xf32>
    %cst_29 = arith.constant dense<0.000000e+00> : vector<8x256xf32>
    %36 = tpu.matmul %33, %35, %cst_29 {dimension_numbers = #tpu.dot_dimension_numbers<[1], [0], [0], [1], [0, 0, 1, 1], [], []>} : vector<8x256xf32>, vector<256x256xf32>, vector<8x256xf32> -> vector<8x256xf32>
    %37 = arith.addf %28, %36 : vector<8x256xf32>
    %cst_30 = arith.constant 0.000000e+00 : f32
    %38 = vector.broadcast %cst_30 : f32 to vector<8x256xf32>
    %c2 = arith.constant 2 : index
    %c0_31 = arith.constant 0 : index
    %c0_32 = arith.constant 0 : index
    %39 = vector.load %arg6[%c2, %c0_31, %c0_32] : memref<9x8x8xf32, #tpu.memory_space<vmem>>, vector<1x8x8xf32>
    %40 = vector.shape_cast %39 : vector<1x8x8xf32> to vector<8x8xf32>
    %cst_33 = arith.constant dense<0.000000e+00> : vector<8x256xf32>
    %41 = tpu.matmul %40, %18, %cst_33 {dimension_numbers = #tpu.dot_dimension_numbers<[1], [0], [0], [1], [0, 0, 1, 1], [], []>} : vector<8x8xf32>, vector<8x256xf32>, vector<8x256xf32> -> vector<8x256xf32>
    %42 = arith.addf %38, %41 : vector<8x256xf32>
    %c2_34 = arith.constant 2 : index
    %c0_35 = arith.constant 0 : index
    %c0_36 = arith.constant 0 : index
    %43 = vector.load %arg3[%c2_34, %c0_35, %c0_36] : memref<9x256x256xf32, #tpu.memory_space<vmem>>, vector<1x256x256xf32>
    %44 = vector.shape_cast %43 : vector<1x256x256xf32> to vector<256x256xf32>
    %cst_37 = arith.constant dense<0.000000e+00> : vector<8x256xf32>
    %45 = tpu.matmul %42, %44, %cst_37 {dimension_numbers = #tpu.dot_dimension_numbers<[1], [0], [0], [1], [0, 0, 1, 1], [], []>} : vector<8x256xf32>, vector<256x256xf32>, vector<8x256xf32> -> vector<8x256xf32>
    %46 = arith.addf %37, %45 : vector<8x256xf32>
    %cst_38 = arith.constant 0.000000e+00 : f32
    %47 = vector.broadcast %cst_38 : f32 to vector<8x256xf32>
    %c3 = arith.constant 3 : index
    %c0_39 = arith.constant 0 : index
    %c0_40 = arith.constant 0 : index
    %48 = vector.load %arg6[%c3, %c0_39, %c0_40] : memref<9x8x8xf32, #tpu.memory_space<vmem>>, vector<1x8x8xf32>
    %49 = vector.shape_cast %48 : vector<1x8x8xf32> to vector<8x8xf32>
    %cst_41 = arith.constant dense<0.000000e+00> : vector<8x256xf32>
    %50 = tpu.matmul %49, %18, %cst_41 {dimension_numbers = #tpu.dot_dimension_numbers<[1], [0], [0], [1], [0, 0, 1, 1], [], []>} : vector<8x8xf32>, vector<8x256xf32>, vector<8x256xf32> -> vector<8x256xf32>
    %51 = arith.addf %47, %50 : vector<8x256xf32>
    %c3_42 = arith.constant 3 : index
    %c0_43 = arith.constant 0 : index
    %c0_44 = arith.constant 0 : index
    %52 = vector.load %arg3[%c3_42, %c0_43, %c0_44] : memref<9x256x256xf32, #tpu.memory_space<vmem>>, vector<1x256x256xf32>
    %53 = vector.shape_cast %52 : vector<1x256x256xf32> to vector<256x256xf32>
    %cst_45 = arith.constant dense<0.000000e+00> : vector<8x256xf32>
    %54 = tpu.matmul %51, %53, %cst_45 {dimension_numbers = #tpu.dot_dimension_numbers<[1], [0], [0], [1], [0, 0, 1, 1], [], []>} : vector<8x256xf32>, vector<256x256xf32>, vector<8x256xf32> -> vector<8x256xf32>
    %55 = arith.addf %46, %54 : vector<8x256xf32>
    %cst_46 = arith.constant 0.000000e+00 : f32
    %56 = vector.broadcast %cst_46 : f32 to vector<8x256xf32>
    %c4 = arith.constant 4 : index
    %c0_47 = arith.constant 0 : index
    %c0_48 = arith.constant 0 : index
    %57 = vector.load %arg6[%c4, %c0_47, %c0_48] : memref<9x8x8xf32, #tpu.memory_space<vmem>>, vector<1x8x8xf32>
    %58 = vector.shape_cast %57 : vector<1x8x8xf32> to vector<8x8xf32>
    %cst_49 = arith.constant dense<0.000000e+00> : vector<8x256xf32>
    %59 = tpu.matmul %58, %18, %cst_49 {dimension_numbers = #tpu.dot_dimension_numbers<[1], [0], [0], [1], [0, 0, 1, 1], [], []>} : vector<8x8xf32>, vector<8x256xf32>, vector<8x256xf32> -> vector<8x256xf32>
    %60 = arith.addf %56, %59 : vector<8x256xf32>
    %c4_50 = arith.constant 4 : index
    %c0_51 = arith.constant 0 : index
    %c0_52 = arith.constant 0 : index
    %61 = vector.load %arg3[%c4_50, %c0_51, %c0_52] : memref<9x256x256xf32, #tpu.memory_space<vmem>>, vector<1x256x256xf32>
    %62 = vector.shape_cast %61 : vector<1x256x256xf32> to vector<256x256xf32>
    %cst_53 = arith.constant dense<0.000000e+00> : vector<8x256xf32>
    %63 = tpu.matmul %60, %62, %cst_53 {dimension_numbers = #tpu.dot_dimension_numbers<[1], [0], [0], [1], [0, 0, 1, 1], [], []>} : vector<8x256xf32>, vector<256x256xf32>, vector<8x256xf32> -> vector<8x256xf32>
    %64 = arith.addf %55, %63 : vector<8x256xf32>
    %cst_54 = arith.constant 0.000000e+00 : f32
    %65 = vector.broadcast %cst_54 : f32 to vector<8x256xf32>
    %c5 = arith.constant 5 : index
    %c0_55 = arith.constant 0 : index
    %c0_56 = arith.constant 0 : index
    %66 = vector.load %arg6[%c5, %c0_55, %c0_56] : memref<9x8x8xf32, #tpu.memory_space<vmem>>, vector<1x8x8xf32>
    %67 = vector.shape_cast %66 : vector<1x8x8xf32> to vector<8x8xf32>
    %cst_57 = arith.constant dense<0.000000e+00> : vector<8x256xf32>
    %68 = tpu.matmul %67, %18, %cst_57 {dimension_numbers = #tpu.dot_dimension_numbers<[1], [0], [0], [1], [0, 0, 1, 1], [], []>} : vector<8x8xf32>, vector<8x256xf32>, vector<8x256xf32> -> vector<8x256xf32>
    %69 = arith.addf %65, %68 : vector<8x256xf32>
    %c5_58 = arith.constant 5 : index
    %c0_59 = arith.constant 0 : index
    %c0_60 = arith.constant 0 : index
    %70 = vector.load %arg3[%c5_58, %c0_59, %c0_60] : memref<9x256x256xf32, #tpu.memory_space<vmem>>, vector<1x256x256xf32>
    %71 = vector.shape_cast %70 : vector<1x256x256xf32> to vector<256x256xf32>
    %cst_61 = arith.constant dense<0.000000e+00> : vector<8x256xf32>
    %72 = tpu.matmul %69, %71, %cst_61 {dimension_numbers = #tpu.dot_dimension_numbers<[1], [0], [0], [1], [0, 0, 1, 1], [], []>} : vector<8x256xf32>, vector<256x256xf32>, vector<8x256xf32> -> vector<8x256xf32>
    %73 = arith.addf %64, %72 : vector<8x256xf32>
    %cst_62 = arith.constant 0.000000e+00 : f32
    %74 = vector.broadcast %cst_62 : f32 to vector<8x256xf32>
    %c6 = arith.constant 6 : index
    %c0_63 = arith.constant 0 : index
    %c0_64 = arith.constant 0 : index
    %75 = vector.load %arg6[%c6, %c0_63, %c0_64] : memref<9x8x8xf32, #tpu.memory_space<vmem>>, vector<1x8x8xf32>
    %76 = vector.shape_cast %75 : vector<1x8x8xf32> to vector<8x8xf32>
    %cst_65 = arith.constant dense<0.000000e+00> : vector<8x256xf32>
    %77 = tpu.matmul %76, %18, %cst_65 {dimension_numbers = #tpu.dot_dimension_numbers<[1], [0], [0], [1], [0, 0, 1, 1], [], []>} : vector<8x8xf32>, vector<8x256xf32>, vector<8x256xf32> -> vector<8x256xf32>
    %78 = arith.addf %74, %77 : vector<8x256xf32>
    %c6_66 = arith.constant 6 : index
    %c0_67 = arith.constant 0 : index
    %c0_68 = arith.constant 0 : index
    %79 = vector.load %arg3[%c6_66, %c0_67, %c0_68] : memref<9x256x256xf32, #tpu.memory_space<vmem>>, vector<1x256x256xf32>
    %80 = vector.shape_cast %79 : vector<1x256x256xf32> to vector<256x256xf32>
    %cst_69 = arith.constant dense<0.000000e+00> : vector<8x256xf32>
    %81 = tpu.matmul %78, %80, %cst_69 {dimension_numbers = #tpu.dot_dimension_numbers<[1], [0], [0], [1], [0, 0, 1, 1], [], []>} : vector<8x256xf32>, vector<256x256xf32>, vector<8x256xf32> -> vector<8x256xf32>
    %82 = arith.addf %73, %81 : vector<8x256xf32>
    %cst_70 = arith.constant 0.000000e+00 : f32
    %83 = vector.broadcast %cst_70 : f32 to vector<8x256xf32>
    %c7 = arith.constant 7 : index
    %c0_71 = arith.constant 0 : index
    %c0_72 = arith.constant 0 : index
    %84 = vector.load %arg6[%c7, %c0_71, %c0_72] : memref<9x8x8xf32, #tpu.memory_space<vmem>>, vector<1x8x8xf32>
    %85 = vector.shape_cast %84 : vector<1x8x8xf32> to vector<8x8xf32>
    %cst_73 = arith.constant dense<0.000000e+00> : vector<8x256xf32>
    %86 = tpu.matmul %85, %18, %cst_73 {dimension_numbers = #tpu.dot_dimension_numbers<[1], [0], [0], [1], [0, 0, 1, 1], [], []>} : vector<8x8xf32>, vector<8x256xf32>, vector<8x256xf32> -> vector<8x256xf32>
    %87 = arith.addf %83, %86 : vector<8x256xf32>
    %c7_74 = arith.constant 7 : index
    %c0_75 = arith.constant 0 : index
    %c0_76 = arith.constant 0 : index
    %88 = vector.load %arg3[%c7_74, %c0_75, %c0_76] : memref<9x256x256xf32, #tpu.memory_space<vmem>>, vector<1x256x256xf32>
    %89 = vector.shape_cast %88 : vector<1x256x256xf32> to vector<256x256xf32>
    %cst_77 = arith.constant dense<0.000000e+00> : vector<8x256xf32>
    %90 = tpu.matmul %87, %89, %cst_77 {dimension_numbers = #tpu.dot_dimension_numbers<[1], [0], [0], [1], [0, 0, 1, 1], [], []>} : vector<8x256xf32>, vector<256x256xf32>, vector<8x256xf32> -> vector<8x256xf32>
    %91 = arith.addf %82, %90 : vector<8x256xf32>
    %cst_78 = arith.constant 0.000000e+00 : f32
    %92 = vector.broadcast %cst_78 : f32 to vector<8x256xf32>
    %c8 = arith.constant 8 : index
    %c0_79 = arith.constant 0 : index
    %c0_80 = arith.constant 0 : index
    %93 = vector.load %arg6[%c8, %c0_79, %c0_80] : memref<9x8x8xf32, #tpu.memory_space<vmem>>, vector<1x8x8xf32>
    %94 = vector.shape_cast %93 : vector<1x8x8xf32> to vector<8x8xf32>
    %cst_81 = arith.constant dense<0.000000e+00> : vector<8x256xf32>
    %95 = tpu.matmul %94, %18, %cst_81 {dimension_numbers = #tpu.dot_dimension_numbers<[1], [0], [0], [1], [0, 0, 1, 1], [], []>} : vector<8x8xf32>, vector<8x256xf32>, vector<8x256xf32> -> vector<8x256xf32>
    %96 = arith.addf %92, %95 : vector<8x256xf32>
    %c8_82 = arith.constant 8 : index
    %c0_83 = arith.constant 0 : index
    %c0_84 = arith.constant 0 : index
    %97 = vector.load %arg3[%c8_82, %c0_83, %c0_84] : memref<9x256x256xf32, #tpu.memory_space<vmem>>, vector<1x256x256xf32>
    %98 = vector.shape_cast %97 : vector<1x256x256xf32> to vector<256x256xf32>
    %cst_85 = arith.constant dense<0.000000e+00> : vector<8x256xf32>
    %99 = tpu.matmul %96, %98, %cst_85 {dimension_numbers = #tpu.dot_dimension_numbers<[1], [0], [0], [1], [0, 0, 1, 1], [], []>} : vector<8x256xf32>, vector<256x256xf32>, vector<8x256xf32> -> vector<8x256xf32>
    %100 = arith.addf %91, %99 : vector<8x256xf32>
    %c0_86 = arith.constant 0 : index
    %c0_87 = arith.constant 0 : index
    %101 = vector.load %arg7[%c0_86, %c0_87] : memref<8x1xf32, #tpu.memory_space<vmem>>, vector<8x1xf32>
    %102 = vector.broadcast %101 : vector<8x1xf32> to vector<8x256xf32>
    %103 = arith.addf %100, %102 : vector<8x256xf32>
    %cst_88 = arith.constant 0.000000e+00 : f32
    %104 = vector.broadcast %cst_88 : f32 to vector<8x256xf32>
    %105 = arith.maximumf %103, %104 : vector<8x256xf32>
    %cst_89 = arith.constant 0.000000e+00 : f32
    %106 = vector.broadcast %cst_89 : f32 to vector<8x256xf32>
    %cst_90 = arith.constant 0.000000e+00 : f32
    %107 = vector.broadcast %cst_90 : f32 to vector<8x256xf32>
    %c0_91 = arith.constant 0 : index
    %c0_92 = arith.constant 0 : index
    %c0_93 = arith.constant 0 : index
    %108 = vector.load %arg8[%c0_91, %c0_92, %c0_93] : memref<9x8x8xf32, #tpu.memory_space<vmem>>, vector<1x8x8xf32>
    %109 = vector.shape_cast %108 : vector<1x8x8xf32> to vector<8x8xf32>
    %cst_94 = arith.constant dense<0.000000e+00> : vector<8x256xf32>
    %110 = tpu.matmul %109, %17, %cst_94 {dimension_numbers = #tpu.dot_dimension_numbers<[1], [0], [0], [1], [0, 0, 1, 1], [], []>} : vector<8x8xf32>, vector<8x256xf32>, vector<8x256xf32> -> vector<8x256xf32>
    %111 = arith.addf %107, %110 : vector<8x256xf32>
    %c0_95 = arith.constant 0 : index
    %c0_96 = arith.constant 0 : index
    %c0_97 = arith.constant 0 : index
    %112 = vector.load %arg3[%c0_95, %c0_96, %c0_97] : memref<9x256x256xf32, #tpu.memory_space<vmem>>, vector<1x256x256xf32>
    %113 = vector.shape_cast %112 : vector<1x256x256xf32> to vector<256x256xf32>
    %cst_98 = arith.constant dense<0.000000e+00> : vector<8x256xf32>
    %114 = tpu.matmul %111, %113, %cst_98 {dimension_numbers = #tpu.dot_dimension_numbers<[1], [0], [0], [1], [0, 0, 1, 1], [], []>} : vector<8x256xf32>, vector<256x256xf32>, vector<8x256xf32> -> vector<8x256xf32>
    %115 = arith.addf %106, %114 : vector<8x256xf32>
    %cst_99 = arith.constant 0.000000e+00 : f32
    %116 = vector.broadcast %cst_99 : f32 to vector<8x256xf32>
    %c1_100 = arith.constant 1 : index
    %c0_101 = arith.constant 0 : index
    %c0_102 = arith.constant 0 : index
    %117 = vector.load %arg8[%c1_100, %c0_101, %c0_102] : memref<9x8x8xf32, #tpu.memory_space<vmem>>, vector<1x8x8xf32>
    %118 = vector.shape_cast %117 : vector<1x8x8xf32> to vector<8x8xf32>
    %cst_103 = arith.constant dense<0.000000e+00> : vector<8x256xf32>
    %119 = tpu.matmul %118, %17, %cst_103 {dimension_numbers = #tpu.dot_dimension_numbers<[1], [0], [0], [1], [0, 0, 1, 1], [], []>} : vector<8x8xf32>, vector<8x256xf32>, vector<8x256xf32> -> vector<8x256xf32>
    %120 = arith.addf %116, %119 : vector<8x256xf32>
    %c1_104 = arith.constant 1 : index
    %c0_105 = arith.constant 0 : index
    %c0_106 = arith.constant 0 : index
    %121 = vector.load %arg3[%c1_104, %c0_105, %c0_106] : memref<9x256x256xf32, #tpu.memory_space<vmem>>, vector<1x256x256xf32>
    %122 = vector.shape_cast %121 : vector<1x256x256xf32> to vector<256x256xf32>
    %cst_107 = arith.constant dense<0.000000e+00> : vector<8x256xf32>
    %123 = tpu.matmul %120, %122, %cst_107 {dimension_numbers = #tpu.dot_dimension_numbers<[1], [0], [0], [1], [0, 0, 1, 1], [], []>} : vector<8x256xf32>, vector<256x256xf32>, vector<8x256xf32> -> vector<8x256xf32>
    %124 = arith.addf %115, %123 : vector<8x256xf32>
    %cst_108 = arith.constant 0.000000e+00 : f32
    %125 = vector.broadcast %cst_108 : f32 to vector<8x256xf32>
    %c2_109 = arith.constant 2 : index
    %c0_110 = arith.constant 0 : index
    %c0_111 = arith.constant 0 : index
    %126 = vector.load %arg8[%c2_109, %c0_110, %c0_111] : memref<9x8x8xf32, #tpu.memory_space<vmem>>, vector<1x8x8xf32>
    %127 = vector.shape_cast %126 : vector<1x8x8xf32> to vector<8x8xf32>
    %cst_112 = arith.constant dense<0.000000e+00> : vector<8x256xf32>
    %128 = tpu.matmul %127, %17, %cst_112 {dimension_numbers = #tpu.dot_dimension_numbers<[1], [0], [0], [1], [0, 0, 1, 1], [], []>} : vector<8x8xf32>, vector<8x256xf32>, vector<8x256xf32> -> vector<8x256xf32>
    %129 = arith.addf %125, %128 : vector<8x256xf32>
    %c2_113 = arith.constant 2 : index
    %c0_114 = arith.constant 0 : index
    %c0_115 = arith.constant 0 : index
    %130 = vector.load %arg3[%c2_113, %c0_114, %c0_115] : memref<9x256x256xf32, #tpu.memory_space<vmem>>, vector<1x256x256xf32>
    %131 = vector.shape_cast %130 : vector<1x256x256xf32> to vector<256x256xf32>
    %cst_116 = arith.constant dense<0.000000e+00> : vector<8x256xf32>
    %132 = tpu.matmul %129, %131, %cst_116 {dimension_numbers = #tpu.dot_dimension_numbers<[1], [0], [0], [1], [0, 0, 1, 1], [], []>} : vector<8x256xf32>, vector<256x256xf32>, vector<8x256xf32> -> vector<8x256xf32>
    %133 = arith.addf %124, %132 : vector<8x256xf32>
    %cst_117 = arith.constant 0.000000e+00 : f32
    %134 = vector.broadcast %cst_117 : f32 to vector<8x256xf32>
    %c3_118 = arith.constant 3 : index
    %c0_119 = arith.constant 0 : index
    %c0_120 = arith.constant 0 : index
    %135 = vector.load %arg8[%c3_118, %c0_119, %c0_120] : memref<9x8x8xf32, #tpu.memory_space<vmem>>, vector<1x8x8xf32>
    %136 = vector.shape_cast %135 : vector<1x8x8xf32> to vector<8x8xf32>
    %cst_121 = arith.constant dense<0.000000e+00> : vector<8x256xf32>
    %137 = tpu.matmul %136, %17, %cst_121 {dimension_numbers = #tpu.dot_dimension_numbers<[1], [0], [0], [1], [0, 0, 1, 1], [], []>} : vector<8x8xf32>, vector<8x256xf32>, vector<8x256xf32> -> vector<8x256xf32>
    %138 = arith.addf %134, %137 : vector<8x256xf32>
    %c3_122 = arith.constant 3 : index
    %c0_123 = arith.constant 0 : index
    %c0_124 = arith.constant 0 : index
    %139 = vector.load %arg3[%c3_122, %c0_123, %c0_124] : memref<9x256x256xf32, #tpu.memory_space<vmem>>, vector<1x256x256xf32>
    %140 = vector.shape_cast %139 : vector<1x256x256xf32> to vector<256x256xf32>
    %cst_125 = arith.constant dense<0.000000e+00> : vector<8x256xf32>
    %141 = tpu.matmul %138, %140, %cst_125 {dimension_numbers = #tpu.dot_dimension_numbers<[1], [0], [0], [1], [0, 0, 1, 1], [], []>} : vector<8x256xf32>, vector<256x256xf32>, vector<8x256xf32> -> vector<8x256xf32>
    %142 = arith.addf %133, %141 : vector<8x256xf32>
    %cst_126 = arith.constant 0.000000e+00 : f32
    %143 = vector.broadcast %cst_126 : f32 to vector<8x256xf32>
    %c4_127 = arith.constant 4 : index
    %c0_128 = arith.constant 0 : index
    %c0_129 = arith.constant 0 : index
    %144 = vector.load %arg8[%c4_127, %c0_128, %c0_129] : memref<9x8x8xf32, #tpu.memory_space<vmem>>, vector<1x8x8xf32>
    %145 = vector.shape_cast %144 : vector<1x8x8xf32> to vector<8x8xf32>
    %cst_130 = arith.constant dense<0.000000e+00> : vector<8x256xf32>
    %146 = tpu.matmul %145, %17, %cst_130 {dimension_numbers = #tpu.dot_dimension_numbers<[1], [0], [0], [1], [0, 0, 1, 1], [], []>} : vector<8x8xf32>, vector<8x256xf32>, vector<8x256xf32> -> vector<8x256xf32>
    %147 = arith.addf %143, %146 : vector<8x256xf32>
    %c4_131 = arith.constant 4 : index
    %c0_132 = arith.constant 0 : index
    %c0_133 = arith.constant 0 : index
    %148 = vector.load %arg3[%c4_131, %c0_132, %c0_133] : memref<9x256x256xf32, #tpu.memory_space<vmem>>, vector<1x256x256xf32>
    %149 = vector.shape_cast %148 : vector<1x256x256xf32> to vector<256x256xf32>
    %cst_134 = arith.constant dense<0.000000e+00> : vector<8x256xf32>
    %150 = tpu.matmul %147, %149, %cst_134 {dimension_numbers = #tpu.dot_dimension_numbers<[1], [0], [0], [1], [0, 0, 1, 1], [], []>} : vector<8x256xf32>, vector<256x256xf32>, vector<8x256xf32> -> vector<8x256xf32>
    %151 = arith.addf %142, %150 : vector<8x256xf32>
    %cst_135 = arith.constant 0.000000e+00 : f32
    %152 = vector.broadcast %cst_135 : f32 to vector<8x256xf32>
    %c5_136 = arith.constant 5 : index
    %c0_137 = arith.constant 0 : index
    %c0_138 = arith.constant 0 : index
    %153 = vector.load %arg8[%c5_136, %c0_137, %c0_138] : memref<9x8x8xf32, #tpu.memory_space<vmem>>, vector<1x8x8xf32>
    %154 = vector.shape_cast %153 : vector<1x8x8xf32> to vector<8x8xf32>
    %cst_139 = arith.constant dense<0.000000e+00> : vector<8x256xf32>
    %155 = tpu.matmul %154, %17, %cst_139 {dimension_numbers = #tpu.dot_dimension_numbers<[1], [0], [0], [1], [0, 0, 1, 1], [], []>} : vector<8x8xf32>, vector<8x256xf32>, vector<8x256xf32> -> vector<8x256xf32>
    %156 = arith.addf %152, %155 : vector<8x256xf32>
    %c5_140 = arith.constant 5 : index
    %c0_141 = arith.constant 0 : index
    %c0_142 = arith.constant 0 : index
    %157 = vector.load %arg3[%c5_140, %c0_141, %c0_142] : memref<9x256x256xf32, #tpu.memory_space<vmem>>, vector<1x256x256xf32>
    %158 = vector.shape_cast %157 : vector<1x256x256xf32> to vector<256x256xf32>
    %cst_143 = arith.constant dense<0.000000e+00> : vector<8x256xf32>
    %159 = tpu.matmul %156, %158, %cst_143 {dimension_numbers = #tpu.dot_dimension_numbers<[1], [0], [0], [1], [0, 0, 1, 1], [], []>} : vector<8x256xf32>, vector<256x256xf32>, vector<8x256xf32> -> vector<8x256xf32>
    %160 = arith.addf %151, %159 : vector<8x256xf32>
    %cst_144 = arith.constant 0.000000e+00 : f32
    %161 = vector.broadcast %cst_144 : f32 to vector<8x256xf32>
    %c6_145 = arith.constant 6 : index
    %c0_146 = arith.constant 0 : index
    %c0_147 = arith.constant 0 : index
    %162 = vector.load %arg8[%c6_145, %c0_146, %c0_147] : memref<9x8x8xf32, #tpu.memory_space<vmem>>, vector<1x8x8xf32>
    %163 = vector.shape_cast %162 : vector<1x8x8xf32> to vector<8x8xf32>
    %cst_148 = arith.constant dense<0.000000e+00> : vector<8x256xf32>
    %164 = tpu.matmul %163, %17, %cst_148 {dimension_numbers = #tpu.dot_dimension_numbers<[1], [0], [0], [1], [0, 0, 1, 1], [], []>} : vector<8x8xf32>, vector<8x256xf32>, vector<8x256xf32> -> vector<8x256xf32>
    %165 = arith.addf %161, %164 : vector<8x256xf32>
    %c6_149 = arith.constant 6 : index
    %c0_150 = arith.constant 0 : index
    %c0_151 = arith.constant 0 : index
    %166 = vector.load %arg3[%c6_149, %c0_150, %c0_151] : memref<9x256x256xf32, #tpu.memory_space<vmem>>, vector<1x256x256xf32>
    %167 = vector.shape_cast %166 : vector<1x256x256xf32> to vector<256x256xf32>
    %cst_152 = arith.constant dense<0.000000e+00> : vector<8x256xf32>
    %168 = tpu.matmul %165, %167, %cst_152 {dimension_numbers = #tpu.dot_dimension_numbers<[1], [0], [0], [1], [0, 0, 1, 1], [], []>} : vector<8x256xf32>, vector<256x256xf32>, vector<8x256xf32> -> vector<8x256xf32>
    %169 = arith.addf %160, %168 : vector<8x256xf32>
    %cst_153 = arith.constant 0.000000e+00 : f32
    %170 = vector.broadcast %cst_153 : f32 to vector<8x256xf32>
    %c7_154 = arith.constant 7 : index
    %c0_155 = arith.constant 0 : index
    %c0_156 = arith.constant 0 : index
    %171 = vector.load %arg8[%c7_154, %c0_155, %c0_156] : memref<9x8x8xf32, #tpu.memory_space<vmem>>, vector<1x8x8xf32>
    %172 = vector.shape_cast %171 : vector<1x8x8xf32> to vector<8x8xf32>
    %cst_157 = arith.constant dense<0.000000e+00> : vector<8x256xf32>
    %173 = tpu.matmul %172, %17, %cst_157 {dimension_numbers = #tpu.dot_dimension_numbers<[1], [0], [0], [1], [0, 0, 1, 1], [], []>} : vector<8x8xf32>, vector<8x256xf32>, vector<8x256xf32> -> vector<8x256xf32>
    %174 = arith.addf %170, %173 : vector<8x256xf32>
    %c7_158 = arith.constant 7 : index
    %c0_159 = arith.constant 0 : index
    %c0_160 = arith.constant 0 : index
    %175 = vector.load %arg3[%c7_158, %c0_159, %c0_160] : memref<9x256x256xf32, #tpu.memory_space<vmem>>, vector<1x256x256xf32>
    %176 = vector.shape_cast %175 : vector<1x256x256xf32> to vector<256x256xf32>
    %cst_161 = arith.constant dense<0.000000e+00> : vector<8x256xf32>
    %177 = tpu.matmul %174, %176, %cst_161 {dimension_numbers = #tpu.dot_dimension_numbers<[1], [0], [0], [1], [0, 0, 1, 1], [], []>} : vector<8x256xf32>, vector<256x256xf32>, vector<8x256xf32> -> vector<8x256xf32>
    %178 = arith.addf %169, %177 : vector<8x256xf32>
    %cst_162 = arith.constant 0.000000e+00 : f32
    %179 = vector.broadcast %cst_162 : f32 to vector<8x256xf32>
    %c8_163 = arith.constant 8 : index
    %c0_164 = arith.constant 0 : index
    %c0_165 = arith.constant 0 : index
    %180 = vector.load %arg8[%c8_163, %c0_164, %c0_165] : memref<9x8x8xf32, #tpu.memory_space<vmem>>, vector<1x8x8xf32>
    %181 = vector.shape_cast %180 : vector<1x8x8xf32> to vector<8x8xf32>
    %cst_166 = arith.constant dense<0.000000e+00> : vector<8x256xf32>
    %182 = tpu.matmul %181, %17, %cst_166 {dimension_numbers = #tpu.dot_dimension_numbers<[1], [0], [0], [1], [0, 0, 1, 1], [], []>} : vector<8x8xf32>, vector<8x256xf32>, vector<8x256xf32> -> vector<8x256xf32>
    %183 = arith.addf %179, %182 : vector<8x256xf32>
    %c8_167 = arith.constant 8 : index
    %c0_168 = arith.constant 0 : index
    %c0_169 = arith.constant 0 : index
    %184 = vector.load %arg3[%c8_167, %c0_168, %c0_169] : memref<9x256x256xf32, #tpu.memory_space<vmem>>, vector<1x256x256xf32>
    %185 = vector.shape_cast %184 : vector<1x256x256xf32> to vector<256x256xf32>
    %cst_170 = arith.constant dense<0.000000e+00> : vector<8x256xf32>
    %186 = tpu.matmul %183, %185, %cst_170 {dimension_numbers = #tpu.dot_dimension_numbers<[1], [0], [0], [1], [0, 0, 1, 1], [], []>} : vector<8x256xf32>, vector<256x256xf32>, vector<8x256xf32> -> vector<8x256xf32>
    %187 = arith.addf %178, %186 : vector<8x256xf32>
    %c0_171 = arith.constant 0 : index
    %c0_172 = arith.constant 0 : index
    %188 = vector.load %arg9[%c0_171, %c0_172] : memref<8x1xf32, #tpu.memory_space<vmem>>, vector<8x1xf32>
    %189 = vector.broadcast %188 : vector<8x1xf32> to vector<8x256xf32>
    %190 = arith.addf %187, %189 : vector<8x256xf32>
    %cst_173 = arith.constant 0.000000e+00 : f32
    %191 = vector.broadcast %cst_173 : f32 to vector<8x256xf32>
    %192 = arith.maximumf %190, %191 : vector<8x256xf32>
    %cst_174 = arith.constant 0.000000e+00 : f32
    %193 = vector.broadcast %cst_174 : f32 to vector<8x256xf32>
    %cst_175 = arith.constant 0.000000e+00 : f32
    %194 = vector.broadcast %cst_175 : f32 to vector<8x256xf32>
    %c0_176 = arith.constant 0 : index
    %c0_177 = arith.constant 0 : index
    %c0_178 = arith.constant 0 : index
    %195 = vector.load %arg10[%c0_176, %c0_177, %c0_178] : memref<9x8x8xf32, #tpu.memory_space<vmem>>, vector<1x8x8xf32>
    %196 = vector.shape_cast %195 : vector<1x8x8xf32> to vector<8x8xf32>
    %cst_179 = arith.constant dense<0.000000e+00> : vector<8x256xf32>
    %197 = tpu.matmul %196, %192, %cst_179 {dimension_numbers = #tpu.dot_dimension_numbers<[1], [0], [0], [1], [0, 0, 1, 1], [], []>} : vector<8x8xf32>, vector<8x256xf32>, vector<8x256xf32> -> vector<8x256xf32>
    %198 = arith.addf %194, %197 : vector<8x256xf32>
    %c0_180 = arith.constant 0 : index
    %c0_181 = arith.constant 0 : index
    %c0_182 = arith.constant 0 : index
    %199 = vector.load %arg11[%c0_180, %c0_181, %c0_182] : memref<9x8x8xf32, #tpu.memory_space<vmem>>, vector<1x8x8xf32>
    %200 = vector.shape_cast %199 : vector<1x8x8xf32> to vector<8x8xf32>
    %cst_183 = arith.constant dense<0.000000e+00> : vector<8x256xf32>
    %201 = tpu.matmul %200, %105, %cst_183 {dimension_numbers = #tpu.dot_dimension_numbers<[1], [0], [0], [1], [0, 0, 1, 1], [], []>} : vector<8x8xf32>, vector<8x256xf32>, vector<8x256xf32> -> vector<8x256xf32>
    %202 = arith.addf %198, %201 : vector<8x256xf32>
    %c0_184 = arith.constant 0 : index
    %c0_185 = arith.constant 0 : index
    %c0_186 = arith.constant 0 : index
    %203 = vector.load %arg3[%c0_184, %c0_185, %c0_186] : memref<9x256x256xf32, #tpu.memory_space<vmem>>, vector<1x256x256xf32>
    %204 = vector.shape_cast %203 : vector<1x256x256xf32> to vector<256x256xf32>
    %cst_187 = arith.constant dense<0.000000e+00> : vector<8x256xf32>
    %205 = tpu.matmul %202, %204, %cst_187 {dimension_numbers = #tpu.dot_dimension_numbers<[1], [0], [0], [1], [0, 0, 1, 1], [], []>} : vector<8x256xf32>, vector<256x256xf32>, vector<8x256xf32> -> vector<8x256xf32>
    %206 = arith.addf %193, %205 : vector<8x256xf32>
    %cst_188 = arith.constant 0.000000e+00 : f32
    %207 = vector.broadcast %cst_188 : f32 to vector<8x256xf32>
    %c1_189 = arith.constant 1 : index
    %c0_190 = arith.constant 0 : index
    %c0_191 = arith.constant 0 : index
    %208 = vector.load %arg10[%c1_189, %c0_190, %c0_191] : memref<9x8x8xf32, #tpu.memory_space<vmem>>, vector<1x8x8xf32>
    %209 = vector.shape_cast %208 : vector<1x8x8xf32> to vector<8x8xf32>
    %cst_192 = arith.constant dense<0.000000e+00> : vector<8x256xf32>
    %210 = tpu.matmul %209, %192, %cst_192 {dimension_numbers = #tpu.dot_dimension_numbers<[1], [0], [0], [1], [0, 0, 1, 1], [], []>} : vector<8x8xf32>, vector<8x256xf32>, vector<8x256xf32> -> vector<8x256xf32>
    %211 = arith.addf %207, %210 : vector<8x256xf32>
    %c1_193 = arith.constant 1 : index
    %c0_194 = arith.constant 0 : index
    %c0_195 = arith.constant 0 : index
    %212 = vector.load %arg11[%c1_193, %c0_194, %c0_195] : memref<9x8x8xf32, #tpu.memory_space<vmem>>, vector<1x8x8xf32>
    %213 = vector.shape_cast %212 : vector<1x8x8xf32> to vector<8x8xf32>
    %cst_196 = arith.constant dense<0.000000e+00> : vector<8x256xf32>
    %214 = tpu.matmul %213, %105, %cst_196 {dimension_numbers = #tpu.dot_dimension_numbers<[1], [0], [0], [1], [0, 0, 1, 1], [], []>} : vector<8x8xf32>, vector<8x256xf32>, vector<8x256xf32> -> vector<8x256xf32>
    %215 = arith.addf %211, %214 : vector<8x256xf32>
    %c1_197 = arith.constant 1 : index
    %c0_198 = arith.constant 0 : index
    %c0_199 = arith.constant 0 : index
    %216 = vector.load %arg3[%c1_197, %c0_198, %c0_199] : memref<9x256x256xf32, #tpu.memory_space<vmem>>, vector<1x256x256xf32>
    %217 = vector.shape_cast %216 : vector<1x256x256xf32> to vector<256x256xf32>
    %cst_200 = arith.constant dense<0.000000e+00> : vector<8x256xf32>
    %218 = tpu.matmul %215, %217, %cst_200 {dimension_numbers = #tpu.dot_dimension_numbers<[1], [0], [0], [1], [0, 0, 1, 1], [], []>} : vector<8x256xf32>, vector<256x256xf32>, vector<8x256xf32> -> vector<8x256xf32>
    %219 = arith.addf %206, %218 : vector<8x256xf32>
    %cst_201 = arith.constant 0.000000e+00 : f32
    %220 = vector.broadcast %cst_201 : f32 to vector<8x256xf32>
    %c2_202 = arith.constant 2 : index
    %c0_203 = arith.constant 0 : index
    %c0_204 = arith.constant 0 : index
    %221 = vector.load %arg10[%c2_202, %c0_203, %c0_204] : memref<9x8x8xf32, #tpu.memory_space<vmem>>, vector<1x8x8xf32>
    %222 = vector.shape_cast %221 : vector<1x8x8xf32> to vector<8x8xf32>
    %cst_205 = arith.constant dense<0.000000e+00> : vector<8x256xf32>
    %223 = tpu.matmul %222, %192, %cst_205 {dimension_numbers = #tpu.dot_dimension_numbers<[1], [0], [0], [1], [0, 0, 1, 1], [], []>} : vector<8x8xf32>, vector<8x256xf32>, vector<8x256xf32> -> vector<8x256xf32>
    %224 = arith.addf %220, %223 : vector<8x256xf32>
    %c2_206 = arith.constant 2 : index
    %c0_207 = arith.constant 0 : index
    %c0_208 = arith.constant 0 : index
    %225 = vector.load %arg11[%c2_206, %c0_207, %c0_208] : memref<9x8x8xf32, #tpu.memory_space<vmem>>, vector<1x8x8xf32>
    %226 = vector.shape_cast %225 : vector<1x8x8xf32> to vector<8x8xf32>
    %cst_209 = arith.constant dense<0.000000e+00> : vector<8x256xf32>
    %227 = tpu.matmul %226, %105, %cst_209 {dimension_numbers = #tpu.dot_dimension_numbers<[1], [0], [0], [1], [0, 0, 1, 1], [], []>} : vector<8x8xf32>, vector<8x256xf32>, vector<8x256xf32> -> vector<8x256xf32>
    %228 = arith.addf %224, %227 : vector<8x256xf32>
    %c2_210 = arith.constant 2 : index
    %c0_211 = arith.constant 0 : index
    %c0_212 = arith.constant 0 : index
    %229 = vector.load %arg3[%c2_210, %c0_211, %c0_212] : memref<9x256x256xf32, #tpu.memory_space<vmem>>, vector<1x256x256xf32>
    %230 = vector.shape_cast %229 : vector<1x256x256xf32> to vector<256x256xf32>
    %cst_213 = arith.constant dense<0.000000e+00> : vector<8x256xf32>
    %231 = tpu.matmul %228, %230, %cst_213 {dimension_numbers = #tpu.dot_dimension_numbers<[1], [0], [0], [1], [0, 0, 1, 1], [], []>} : vector<8x256xf32>, vector<256x256xf32>, vector<8x256xf32> -> vector<8x256xf32>
    %232 = arith.addf %219, %231 : vector<8x256xf32>
    %cst_214 = arith.constant 0.000000e+00 : f32
    %233 = vector.broadcast %cst_214 : f32 to vector<8x256xf32>
    %c3_215 = arith.constant 3 : index
    %c0_216 = arith.constant 0 : index
    %c0_217 = arith.constant 0 : index
    %234 = vector.load %arg10[%c3_215, %c0_216, %c0_217] : memref<9x8x8xf32, #tpu.memory_space<vmem>>, vector<1x8x8xf32>
    %235 = vector.shape_cast %234 : vector<1x8x8xf32> to vector<8x8xf32>
    %cst_218 = arith.constant dense<0.000000e+00> : vector<8x256xf32>
    %236 = tpu.matmul %235, %192, %cst_218 {dimension_numbers = #tpu.dot_dimension_numbers<[1], [0], [0], [1], [0, 0, 1, 1], [], []>} : vector<8x8xf32>, vector<8x256xf32>, vector<8x256xf32> -> vector<8x256xf32>
    %237 = arith.addf %233, %236 : vector<8x256xf32>
    %c3_219 = arith.constant 3 : index
    %c0_220 = arith.constant 0 : index
    %c0_221 = arith.constant 0 : index
    %238 = vector.load %arg11[%c3_219, %c0_220, %c0_221] : memref<9x8x8xf32, #tpu.memory_space<vmem>>, vector<1x8x8xf32>
    %239 = vector.shape_cast %238 : vector<1x8x8xf32> to vector<8x8xf32>
    %cst_222 = arith.constant dense<0.000000e+00> : vector<8x256xf32>
    %240 = tpu.matmul %239, %105, %cst_222 {dimension_numbers = #tpu.dot_dimension_numbers<[1], [0], [0], [1], [0, 0, 1, 1], [], []>} : vector<8x8xf32>, vector<8x256xf32>, vector<8x256xf32> -> vector<8x256xf32>
    %241 = arith.addf %237, %240 : vector<8x256xf32>
    %c3_223 = arith.constant 3 : index
    %c0_224 = arith.constant 0 : index
    %c0_225 = arith.constant 0 : index
    %242 = vector.load %arg3[%c3_223, %c0_224, %c0_225] : memref<9x256x256xf32, #tpu.memory_space<vmem>>, vector<1x256x256xf32>
    %243 = vector.shape_cast %242 : vector<1x256x256xf32> to vector<256x256xf32>
    %cst_226 = arith.constant dense<0.000000e+00> : vector<8x256xf32>
    %244 = tpu.matmul %241, %243, %cst_226 {dimension_numbers = #tpu.dot_dimension_numbers<[1], [0], [0], [1], [0, 0, 1, 1], [], []>} : vector<8x256xf32>, vector<256x256xf32>, vector<8x256xf32> -> vector<8x256xf32>
    %245 = arith.addf %232, %244 : vector<8x256xf32>
    %cst_227 = arith.constant 0.000000e+00 : f32
    %246 = vector.broadcast %cst_227 : f32 to vector<8x256xf32>
    %c4_228 = arith.constant 4 : index
    %c0_229 = arith.constant 0 : index
    %c0_230 = arith.constant 0 : index
    %247 = vector.load %arg10[%c4_228, %c0_229, %c0_230] : memref<9x8x8xf32, #tpu.memory_space<vmem>>, vector<1x8x8xf32>
    %248 = vector.shape_cast %247 : vector<1x8x8xf32> to vector<8x8xf32>
    %cst_231 = arith.constant dense<0.000000e+00> : vector<8x256xf32>
    %249 = tpu.matmul %248, %192, %cst_231 {dimension_numbers = #tpu.dot_dimension_numbers<[1], [0], [0], [1], [0, 0, 1, 1], [], []>} : vector<8x8xf32>, vector<8x256xf32>, vector<8x256xf32> -> vector<8x256xf32>
    %250 = arith.addf %246, %249 : vector<8x256xf32>
    %c4_232 = arith.constant 4 : index
    %c0_233 = arith.constant 0 : index
    %c0_234 = arith.constant 0 : index
    %251 = vector.load %arg11[%c4_232, %c0_233, %c0_234] : memref<9x8x8xf32, #tpu.memory_space<vmem>>, vector<1x8x8xf32>
    %252 = vector.shape_cast %251 : vector<1x8x8xf32> to vector<8x8xf32>
    %cst_235 = arith.constant dense<0.000000e+00> : vector<8x256xf32>
    %253 = tpu.matmul %252, %105, %cst_235 {dimension_numbers = #tpu.dot_dimension_numbers<[1], [0], [0], [1], [0, 0, 1, 1], [], []>} : vector<8x8xf32>, vector<8x256xf32>, vector<8x256xf32> -> vector<8x256xf32>
    %254 = arith.addf %250, %253 : vector<8x256xf32>
    %c4_236 = arith.constant 4 : index
    %c0_237 = arith.constant 0 : index
    %c0_238 = arith.constant 0 : index
    %255 = vector.load %arg3[%c4_236, %c0_237, %c0_238] : memref<9x256x256xf32, #tpu.memory_space<vmem>>, vector<1x256x256xf32>
    %256 = vector.shape_cast %255 : vector<1x256x256xf32> to vector<256x256xf32>
    %cst_239 = arith.constant dense<0.000000e+00> : vector<8x256xf32>
    %257 = tpu.matmul %254, %256, %cst_239 {dimension_numbers = #tpu.dot_dimension_numbers<[1], [0], [0], [1], [0, 0, 1, 1], [], []>} : vector<8x256xf32>, vector<256x256xf32>, vector<8x256xf32> -> vector<8x256xf32>
    %258 = arith.addf %245, %257 : vector<8x256xf32>
    %cst_240 = arith.constant 0.000000e+00 : f32
    %259 = vector.broadcast %cst_240 : f32 to vector<8x256xf32>
    %c5_241 = arith.constant 5 : index
    %c0_242 = arith.constant 0 : index
    %c0_243 = arith.constant 0 : index
    %260 = vector.load %arg10[%c5_241, %c0_242, %c0_243] : memref<9x8x8xf32, #tpu.memory_space<vmem>>, vector<1x8x8xf32>
    %261 = vector.shape_cast %260 : vector<1x8x8xf32> to vector<8x8xf32>
    %cst_244 = arith.constant dense<0.000000e+00> : vector<8x256xf32>
    %262 = tpu.matmul %261, %192, %cst_244 {dimension_numbers = #tpu.dot_dimension_numbers<[1], [0], [0], [1], [0, 0, 1, 1], [], []>} : vector<8x8xf32>, vector<8x256xf32>, vector<8x256xf32> -> vector<8x256xf32>
    %263 = arith.addf %259, %262 : vector<8x256xf32>
    %c5_245 = arith.constant 5 : index
    %c0_246 = arith.constant 0 : index
    %c0_247 = arith.constant 0 : index
    %264 = vector.load %arg11[%c5_245, %c0_246, %c0_247] : memref<9x8x8xf32, #tpu.memory_space<vmem>>, vector<1x8x8xf32>
    %265 = vector.shape_cast %264 : vector<1x8x8xf32> to vector<8x8xf32>
    %cst_248 = arith.constant dense<0.000000e+00> : vector<8x256xf32>
    %266 = tpu.matmul %265, %105, %cst_248 {dimension_numbers = #tpu.dot_dimension_numbers<[1], [0], [0], [1], [0, 0, 1, 1], [], []>} : vector<8x8xf32>, vector<8x256xf32>, vector<8x256xf32> -> vector<8x256xf32>
    %267 = arith.addf %263, %266 : vector<8x256xf32>
    %c5_249 = arith.constant 5 : index
    %c0_250 = arith.constant 0 : index
    %c0_251 = arith.constant 0 : index
    %268 = vector.load %arg3[%c5_249, %c0_250, %c0_251] : memref<9x256x256xf32, #tpu.memory_space<vmem>>, vector<1x256x256xf32>
    %269 = vector.shape_cast %268 : vector<1x256x256xf32> to vector<256x256xf32>
    %cst_252 = arith.constant dense<0.000000e+00> : vector<8x256xf32>
    %270 = tpu.matmul %267, %269, %cst_252 {dimension_numbers = #tpu.dot_dimension_numbers<[1], [0], [0], [1], [0, 0, 1, 1], [], []>} : vector<8x256xf32>, vector<256x256xf32>, vector<8x256xf32> -> vector<8x256xf32>
    %271 = arith.addf %258, %270 : vector<8x256xf32>
    %cst_253 = arith.constant 0.000000e+00 : f32
    %272 = vector.broadcast %cst_253 : f32 to vector<8x256xf32>
    %c6_254 = arith.constant 6 : index
    %c0_255 = arith.constant 0 : index
    %c0_256 = arith.constant 0 : index
    %273 = vector.load %arg10[%c6_254, %c0_255, %c0_256] : memref<9x8x8xf32, #tpu.memory_space<vmem>>, vector<1x8x8xf32>
    %274 = vector.shape_cast %273 : vector<1x8x8xf32> to vector<8x8xf32>
    %cst_257 = arith.constant dense<0.000000e+00> : vector<8x256xf32>
    %275 = tpu.matmul %274, %192, %cst_257 {dimension_numbers = #tpu.dot_dimension_numbers<[1], [0], [0], [1], [0, 0, 1, 1], [], []>} : vector<8x8xf32>, vector<8x256xf32>, vector<8x256xf32> -> vector<8x256xf32>
    %276 = arith.addf %272, %275 : vector<8x256xf32>
    %c6_258 = arith.constant 6 : index
    %c0_259 = arith.constant 0 : index
    %c0_260 = arith.constant 0 : index
    %277 = vector.load %arg11[%c6_258, %c0_259, %c0_260] : memref<9x8x8xf32, #tpu.memory_space<vmem>>, vector<1x8x8xf32>
    %278 = vector.shape_cast %277 : vector<1x8x8xf32> to vector<8x8xf32>
    %cst_261 = arith.constant dense<0.000000e+00> : vector<8x256xf32>
    %279 = tpu.matmul %278, %105, %cst_261 {dimension_numbers = #tpu.dot_dimension_numbers<[1], [0], [0], [1], [0, 0, 1, 1], [], []>} : vector<8x8xf32>, vector<8x256xf32>, vector<8x256xf32> -> vector<8x256xf32>
    %280 = arith.addf %276, %279 : vector<8x256xf32>
    %c6_262 = arith.constant 6 : index
    %c0_263 = arith.constant 0 : index
    %c0_264 = arith.constant 0 : index
    %281 = vector.load %arg3[%c6_262, %c0_263, %c0_264] : memref<9x256x256xf32, #tpu.memory_space<vmem>>, vector<1x256x256xf32>
    %282 = vector.shape_cast %281 : vector<1x256x256xf32> to vector<256x256xf32>
    %cst_265 = arith.constant dense<0.000000e+00> : vector<8x256xf32>
    %283 = tpu.matmul %280, %282, %cst_265 {dimension_numbers = #tpu.dot_dimension_numbers<[1], [0], [0], [1], [0, 0, 1, 1], [], []>} : vector<8x256xf32>, vector<256x256xf32>, vector<8x256xf32> -> vector<8x256xf32>
    %284 = arith.addf %271, %283 : vector<8x256xf32>
    %cst_266 = arith.constant 0.000000e+00 : f32
    %285 = vector.broadcast %cst_266 : f32 to vector<8x256xf32>
    %c7_267 = arith.constant 7 : index
    %c0_268 = arith.constant 0 : index
    %c0_269 = arith.constant 0 : index
    %286 = vector.load %arg10[%c7_267, %c0_268, %c0_269] : memref<9x8x8xf32, #tpu.memory_space<vmem>>, vector<1x8x8xf32>
    %287 = vector.shape_cast %286 : vector<1x8x8xf32> to vector<8x8xf32>
    %cst_270 = arith.constant dense<0.000000e+00> : vector<8x256xf32>
    %288 = tpu.matmul %287, %192, %cst_270 {dimension_numbers = #tpu.dot_dimension_numbers<[1], [0], [0], [1], [0, 0, 1, 1], [], []>} : vector<8x8xf32>, vector<8x256xf32>, vector<8x256xf32> -> vector<8x256xf32>
    %289 = arith.addf %285, %288 : vector<8x256xf32>
    %c7_271 = arith.constant 7 : index
    %c0_272 = arith.constant 0 : index
    %c0_273 = arith.constant 0 : index
    %290 = vector.load %arg11[%c7_271, %c0_272, %c0_273] : memref<9x8x8xf32, #tpu.memory_space<vmem>>, vector<1x8x8xf32>
    %291 = vector.shape_cast %290 : vector<1x8x8xf32> to vector<8x8xf32>
    %cst_274 = arith.constant dense<0.000000e+00> : vector<8x256xf32>
    %292 = tpu.matmul %291, %105, %cst_274 {dimension_numbers = #tpu.dot_dimension_numbers<[1], [0], [0], [1], [0, 0, 1, 1], [], []>} : vector<8x8xf32>, vector<8x256xf32>, vector<8x256xf32> -> vector<8x256xf32>
    %293 = arith.addf %289, %292 : vector<8x256xf32>
    %c7_275 = arith.constant 7 : index
    %c0_276 = arith.constant 0 : index
    %c0_277 = arith.constant 0 : index
    %294 = vector.load %arg3[%c7_275, %c0_276, %c0_277] : memref<9x256x256xf32, #tpu.memory_space<vmem>>, vector<1x256x256xf32>
    %295 = vector.shape_cast %294 : vector<1x256x256xf32> to vector<256x256xf32>
    %cst_278 = arith.constant dense<0.000000e+00> : vector<8x256xf32>
    %296 = tpu.matmul %293, %295, %cst_278 {dimension_numbers = #tpu.dot_dimension_numbers<[1], [0], [0], [1], [0, 0, 1, 1], [], []>} : vector<8x256xf32>, vector<256x256xf32>, vector<8x256xf32> -> vector<8x256xf32>
    %297 = arith.addf %284, %296 : vector<8x256xf32>
    %cst_279 = arith.constant 0.000000e+00 : f32
    %298 = vector.broadcast %cst_279 : f32 to vector<8x256xf32>
    %c8_280 = arith.constant 8 : index
    %c0_281 = arith.constant 0 : index
    %c0_282 = arith.constant 0 : index
    %299 = vector.load %arg10[%c8_280, %c0_281, %c0_282] : memref<9x8x8xf32, #tpu.memory_space<vmem>>, vector<1x8x8xf32>
    %300 = vector.shape_cast %299 : vector<1x8x8xf32> to vector<8x8xf32>
    %cst_283 = arith.constant dense<0.000000e+00> : vector<8x256xf32>
    %301 = tpu.matmul %300, %192, %cst_283 {dimension_numbers = #tpu.dot_dimension_numbers<[1], [0], [0], [1], [0, 0, 1, 1], [], []>} : vector<8x8xf32>, vector<8x256xf32>, vector<8x256xf32> -> vector<8x256xf32>
    %302 = arith.addf %298, %301 : vector<8x256xf32>
    %c8_284 = arith.constant 8 : index
    %c0_285 = arith.constant 0 : index
    %c0_286 = arith.constant 0 : index
    %303 = vector.load %arg11[%c8_284, %c0_285, %c0_286] : memref<9x8x8xf32, #tpu.memory_space<vmem>>, vector<1x8x8xf32>
    %304 = vector.shape_cast %303 : vector<1x8x8xf32> to vector<8x8xf32>
    %cst_287 = arith.constant dense<0.000000e+00> : vector<8x256xf32>
    %305 = tpu.matmul %304, %105, %cst_287 {dimension_numbers = #tpu.dot_dimension_numbers<[1], [0], [0], [1], [0, 0, 1, 1], [], []>} : vector<8x8xf32>, vector<8x256xf32>, vector<8x256xf32> -> vector<8x256xf32>
    %306 = arith.addf %302, %305 : vector<8x256xf32>
    %c8_288 = arith.constant 8 : index
    %c0_289 = arith.constant 0 : index
    %c0_290 = arith.constant 0 : index
    %307 = vector.load %arg3[%c8_288, %c0_289, %c0_290] : memref<9x256x256xf32, #tpu.memory_space<vmem>>, vector<1x256x256xf32>
    %308 = vector.shape_cast %307 : vector<1x256x256xf32> to vector<256x256xf32>
    %cst_291 = arith.constant dense<0.000000e+00> : vector<8x256xf32>
    %309 = tpu.matmul %306, %308, %cst_291 {dimension_numbers = #tpu.dot_dimension_numbers<[1], [0], [0], [1], [0, 0, 1, 1], [], []>} : vector<8x256xf32>, vector<256x256xf32>, vector<8x256xf32> -> vector<8x256xf32>
    %310 = arith.addf %297, %309 : vector<8x256xf32>
    %c0_292 = arith.constant 0 : index
    %c0_293 = arith.constant 0 : index
    %311 = vector.load %arg12[%c0_292, %c0_293] : memref<8x1xf32, #tpu.memory_space<vmem>>, vector<8x1xf32>
    %312 = vector.broadcast %311 : vector<8x1xf32> to vector<8x256xf32>
    %313 = arith.addf %310, %312 : vector<8x256xf32>
    %cst_294 = arith.constant 0.000000e+00 : f32
    %314 = vector.broadcast %cst_294 : f32 to vector<8x256xf32>
    %315 = arith.maximumf %313, %314 : vector<8x256xf32>
    %cst_295 = arith.constant 0.000000e+00 : f32
    %316 = vector.broadcast %cst_295 : f32 to vector<1x256xf32>
    %cst_296 = arith.constant 0.000000e+00 : f32
    %317 = vector.broadcast %cst_296 : f32 to vector<1x256xf32>
    %c0_297 = arith.constant 0 : index
    %c0_298 = arith.constant 0 : index
    %c0_299 = arith.constant 0 : index
    %318 = vector.load %arg13[%c0_297, %c0_298, %c0_299] : memref<9x1x8xf32, #tpu.memory_space<vmem>>, vector<1x1x8xf32>
    %319 = vector.shape_cast %318 : vector<1x1x8xf32> to vector<1x8xf32>
    %cst_300 = arith.constant dense<0.000000e+00> : vector<1x256xf32>
    %320 = tpu.matmul %319, %315, %cst_300 {dimension_numbers = #tpu.dot_dimension_numbers<[1], [0], [0], [1], [0, 0, 1, 1], [], []>} : vector<1x8xf32>, vector<8x256xf32>, vector<1x256xf32> -> vector<1x256xf32>
    %321 = arith.addf %317, %320 : vector<1x256xf32>
    %c0_301 = arith.constant 0 : index
    %c0_302 = arith.constant 0 : index
    %c0_303 = arith.constant 0 : index
    %322 = vector.load %arg3[%c0_301, %c0_302, %c0_303] : memref<9x256x256xf32, #tpu.memory_space<vmem>>, vector<1x256x256xf32>
    %323 = vector.shape_cast %322 : vector<1x256x256xf32> to vector<256x256xf32>
    %cst_304 = arith.constant dense<0.000000e+00> : vector<1x256xf32>
    %324 = tpu.matmul %321, %323, %cst_304 {dimension_numbers = #tpu.dot_dimension_numbers<[1], [0], [0], [1], [0, 0, 1, 1], [], []>} : vector<1x256xf32>, vector<256x256xf32>, vector<1x256xf32> -> vector<1x256xf32>
    %325 = arith.addf %316, %324 : vector<1x256xf32>
    %cst_305 = arith.constant 0.000000e+00 : f32
    %326 = vector.broadcast %cst_305 : f32 to vector<1x256xf32>
    %c1_306 = arith.constant 1 : index
    %c0_307 = arith.constant 0 : index
    %c0_308 = arith.constant 0 : index
    %327 = vector.load %arg13[%c1_306, %c0_307, %c0_308] : memref<9x1x8xf32, #tpu.memory_space<vmem>>, vector<1x1x8xf32>
    %328 = vector.shape_cast %327 : vector<1x1x8xf32> to vector<1x8xf32>
    %cst_309 = arith.constant dense<0.000000e+00> : vector<1x256xf32>
    %329 = tpu.matmul %328, %315, %cst_309 {dimension_numbers = #tpu.dot_dimension_numbers<[1], [0], [0], [1], [0, 0, 1, 1], [], []>} : vector<1x8xf32>, vector<8x256xf32>, vector<1x256xf32> -> vector<1x256xf32>
    %330 = arith.addf %326, %329 : vector<1x256xf32>
    %c1_310 = arith.constant 1 : index
    %c0_311 = arith.constant 0 : index
    %c0_312 = arith.constant 0 : index
    %331 = vector.load %arg3[%c1_310, %c0_311, %c0_312] : memref<9x256x256xf32, #tpu.memory_space<vmem>>, vector<1x256x256xf32>
    %332 = vector.shape_cast %331 : vector<1x256x256xf32> to vector<256x256xf32>
    %cst_313 = arith.constant dense<0.000000e+00> : vector<1x256xf32>
    %333 = tpu.matmul %330, %332, %cst_313 {dimension_numbers = #tpu.dot_dimension_numbers<[1], [0], [0], [1], [0, 0, 1, 1], [], []>} : vector<1x256xf32>, vector<256x256xf32>, vector<1x256xf32> -> vector<1x256xf32>
    %334 = arith.addf %325, %333 : vector<1x256xf32>
    %cst_314 = arith.constant 0.000000e+00 : f32
    %335 = vector.broadcast %cst_314 : f32 to vector<1x256xf32>
    %c2_315 = arith.constant 2 : index
    %c0_316 = arith.constant 0 : index
    %c0_317 = arith.constant 0 : index
    %336 = vector.load %arg13[%c2_315, %c0_316, %c0_317] : memref<9x1x8xf32, #tpu.memory_space<vmem>>, vector<1x1x8xf32>
    %337 = vector.shape_cast %336 : vector<1x1x8xf32> to vector<1x8xf32>
    %cst_318 = arith.constant dense<0.000000e+00> : vector<1x256xf32>
    %338 = tpu.matmul %337, %315, %cst_318 {dimension_numbers = #tpu.dot_dimension_numbers<[1], [0], [0], [1], [0, 0, 1, 1], [], []>} : vector<1x8xf32>, vector<8x256xf32>, vector<1x256xf32> -> vector<1x256xf32>
    %339 = arith.addf %335, %338 : vector<1x256xf32>
    %c2_319 = arith.constant 2 : index
    %c0_320 = arith.constant 0 : index
    %c0_321 = arith.constant 0 : index
    %340 = vector.load %arg3[%c2_319, %c0_320, %c0_321] : memref<9x256x256xf32, #tpu.memory_space<vmem>>, vector<1x256x256xf32>
    %341 = vector.shape_cast %340 : vector<1x256x256xf32> to vector<256x256xf32>
    %cst_322 = arith.constant dense<0.000000e+00> : vector<1x256xf32>
    %342 = tpu.matmul %339, %341, %cst_322 {dimension_numbers = #tpu.dot_dimension_numbers<[1], [0], [0], [1], [0, 0, 1, 1], [], []>} : vector<1x256xf32>, vector<256x256xf32>, vector<1x256xf32> -> vector<1x256xf32>
    %343 = arith.addf %334, %342 : vector<1x256xf32>
    %cst_323 = arith.constant 0.000000e+00 : f32
    %344 = vector.broadcast %cst_323 : f32 to vector<1x256xf32>
    %c3_324 = arith.constant 3 : index
    %c0_325 = arith.constant 0 : index
    %c0_326 = arith.constant 0 : index
    %345 = vector.load %arg13[%c3_324, %c0_325, %c0_326] : memref<9x1x8xf32, #tpu.memory_space<vmem>>, vector<1x1x8xf32>
    %346 = vector.shape_cast %345 : vector<1x1x8xf32> to vector<1x8xf32>
    %cst_327 = arith.constant dense<0.000000e+00> : vector<1x256xf32>
    %347 = tpu.matmul %346, %315, %cst_327 {dimension_numbers = #tpu.dot_dimension_numbers<[1], [0], [0], [1], [0, 0, 1, 1], [], []>} : vector<1x8xf32>, vector<8x256xf32>, vector<1x256xf32> -> vector<1x256xf32>
    %348 = arith.addf %344, %347 : vector<1x256xf32>
    %c3_328 = arith.constant 3 : index
    %c0_329 = arith.constant 0 : index
    %c0_330 = arith.constant 0 : index
    %349 = vector.load %arg3[%c3_328, %c0_329, %c0_330] : memref<9x256x256xf32, #tpu.memory_space<vmem>>, vector<1x256x256xf32>
    %350 = vector.shape_cast %349 : vector<1x256x256xf32> to vector<256x256xf32>
    %cst_331 = arith.constant dense<0.000000e+00> : vector<1x256xf32>
    %351 = tpu.matmul %348, %350, %cst_331 {dimension_numbers = #tpu.dot_dimension_numbers<[1], [0], [0], [1], [0, 0, 1, 1], [], []>} : vector<1x256xf32>, vector<256x256xf32>, vector<1x256xf32> -> vector<1x256xf32>
    %352 = arith.addf %343, %351 : vector<1x256xf32>
    %cst_332 = arith.constant 0.000000e+00 : f32
    %353 = vector.broadcast %cst_332 : f32 to vector<1x256xf32>
    %c4_333 = arith.constant 4 : index
    %c0_334 = arith.constant 0 : index
    %c0_335 = arith.constant 0 : index
    %354 = vector.load %arg13[%c4_333, %c0_334, %c0_335] : memref<9x1x8xf32, #tpu.memory_space<vmem>>, vector<1x1x8xf32>
    %355 = vector.shape_cast %354 : vector<1x1x8xf32> to vector<1x8xf32>
    %cst_336 = arith.constant dense<0.000000e+00> : vector<1x256xf32>
    %356 = tpu.matmul %355, %315, %cst_336 {dimension_numbers = #tpu.dot_dimension_numbers<[1], [0], [0], [1], [0, 0, 1, 1], [], []>} : vector<1x8xf32>, vector<8x256xf32>, vector<1x256xf32> -> vector<1x256xf32>
    %357 = arith.addf %353, %356 : vector<1x256xf32>
    %c4_337 = arith.constant 4 : index
    %c0_338 = arith.constant 0 : index
    %c0_339 = arith.constant 0 : index
    %358 = vector.load %arg3[%c4_337, %c0_338, %c0_339] : memref<9x256x256xf32, #tpu.memory_space<vmem>>, vector<1x256x256xf32>
    %359 = vector.shape_cast %358 : vector<1x256x256xf32> to vector<256x256xf32>
    %cst_340 = arith.constant dense<0.000000e+00> : vector<1x256xf32>
    %360 = tpu.matmul %357, %359, %cst_340 {dimension_numbers = #tpu.dot_dimension_numbers<[1], [0], [0], [1], [0, 0, 1, 1], [], []>} : vector<1x256xf32>, vector<256x256xf32>, vector<1x256xf32> -> vector<1x256xf32>
    %361 = arith.addf %352, %360 : vector<1x256xf32>
    %cst_341 = arith.constant 0.000000e+00 : f32
    %362 = vector.broadcast %cst_341 : f32 to vector<1x256xf32>
    %c5_342 = arith.constant 5 : index
    %c0_343 = arith.constant 0 : index
    %c0_344 = arith.constant 0 : index
    %363 = vector.load %arg13[%c5_342, %c0_343, %c0_344] : memref<9x1x8xf32, #tpu.memory_space<vmem>>, vector<1x1x8xf32>
    %364 = vector.shape_cast %363 : vector<1x1x8xf32> to vector<1x8xf32>
    %cst_345 = arith.constant dense<0.000000e+00> : vector<1x256xf32>
    %365 = tpu.matmul %364, %315, %cst_345 {dimension_numbers = #tpu.dot_dimension_numbers<[1], [0], [0], [1], [0, 0, 1, 1], [], []>} : vector<1x8xf32>, vector<8x256xf32>, vector<1x256xf32> -> vector<1x256xf32>
    %366 = arith.addf %362, %365 : vector<1x256xf32>
    %c5_346 = arith.constant 5 : index
    %c0_347 = arith.constant 0 : index
    %c0_348 = arith.constant 0 : index
    %367 = vector.load %arg3[%c5_346, %c0_347, %c0_348] : memref<9x256x256xf32, #tpu.memory_space<vmem>>, vector<1x256x256xf32>
    %368 = vector.shape_cast %367 : vector<1x256x256xf32> to vector<256x256xf32>
    %cst_349 = arith.constant dense<0.000000e+00> : vector<1x256xf32>
    %369 = tpu.matmul %366, %368, %cst_349 {dimension_numbers = #tpu.dot_dimension_numbers<[1], [0], [0], [1], [0, 0, 1, 1], [], []>} : vector<1x256xf32>, vector<256x256xf32>, vector<1x256xf32> -> vector<1x256xf32>
    %370 = arith.addf %361, %369 : vector<1x256xf32>
    %cst_350 = arith.constant 0.000000e+00 : f32
    %371 = vector.broadcast %cst_350 : f32 to vector<1x256xf32>
    %c6_351 = arith.constant 6 : index
    %c0_352 = arith.constant 0 : index
    %c0_353 = arith.constant 0 : index
    %372 = vector.load %arg13[%c6_351, %c0_352, %c0_353] : memref<9x1x8xf32, #tpu.memory_space<vmem>>, vector<1x1x8xf32>
    %373 = vector.shape_cast %372 : vector<1x1x8xf32> to vector<1x8xf32>
    %cst_354 = arith.constant dense<0.000000e+00> : vector<1x256xf32>
    %374 = tpu.matmul %373, %315, %cst_354 {dimension_numbers = #tpu.dot_dimension_numbers<[1], [0], [0], [1], [0, 0, 1, 1], [], []>} : vector<1x8xf32>, vector<8x256xf32>, vector<1x256xf32> -> vector<1x256xf32>
    %375 = arith.addf %371, %374 : vector<1x256xf32>
    %c6_355 = arith.constant 6 : index
    %c0_356 = arith.constant 0 : index
    %c0_357 = arith.constant 0 : index
    %376 = vector.load %arg3[%c6_355, %c0_356, %c0_357] : memref<9x256x256xf32, #tpu.memory_space<vmem>>, vector<1x256x256xf32>
    %377 = vector.shape_cast %376 : vector<1x256x256xf32> to vector<256x256xf32>
    %cst_358 = arith.constant dense<0.000000e+00> : vector<1x256xf32>
    %378 = tpu.matmul %375, %377, %cst_358 {dimension_numbers = #tpu.dot_dimension_numbers<[1], [0], [0], [1], [0, 0, 1, 1], [], []>} : vector<1x256xf32>, vector<256x256xf32>, vector<1x256xf32> -> vector<1x256xf32>
    %379 = arith.addf %370, %378 : vector<1x256xf32>
    %cst_359 = arith.constant 0.000000e+00 : f32
    %380 = vector.broadcast %cst_359 : f32 to vector<1x256xf32>
    %c7_360 = arith.constant 7 : index
    %c0_361 = arith.constant 0 : index
    %c0_362 = arith.constant 0 : index
    %381 = vector.load %arg13[%c7_360, %c0_361, %c0_362] : memref<9x1x8xf32, #tpu.memory_space<vmem>>, vector<1x1x8xf32>
    %382 = vector.shape_cast %381 : vector<1x1x8xf32> to vector<1x8xf32>
    %cst_363 = arith.constant dense<0.000000e+00> : vector<1x256xf32>
    %383 = tpu.matmul %382, %315, %cst_363 {dimension_numbers = #tpu.dot_dimension_numbers<[1], [0], [0], [1], [0, 0, 1, 1], [], []>} : vector<1x8xf32>, vector<8x256xf32>, vector<1x256xf32> -> vector<1x256xf32>
    %384 = arith.addf %380, %383 : vector<1x256xf32>
    %c7_364 = arith.constant 7 : index
    %c0_365 = arith.constant 0 : index
    %c0_366 = arith.constant 0 : index
    %385 = vector.load %arg3[%c7_364, %c0_365, %c0_366] : memref<9x256x256xf32, #tpu.memory_space<vmem>>, vector<1x256x256xf32>
    %386 = vector.shape_cast %385 : vector<1x256x256xf32> to vector<256x256xf32>
    %cst_367 = arith.constant dense<0.000000e+00> : vector<1x256xf32>
    %387 = tpu.matmul %384, %386, %cst_367 {dimension_numbers = #tpu.dot_dimension_numbers<[1], [0], [0], [1], [0, 0, 1, 1], [], []>} : vector<1x256xf32>, vector<256x256xf32>, vector<1x256xf32> -> vector<1x256xf32>
    %388 = arith.addf %379, %387 : vector<1x256xf32>
    %cst_368 = arith.constant 0.000000e+00 : f32
    %389 = vector.broadcast %cst_368 : f32 to vector<1x256xf32>
    %c8_369 = arith.constant 8 : index
    %c0_370 = arith.constant 0 : index
    %c0_371 = arith.constant 0 : index
    %390 = vector.load %arg13[%c8_369, %c0_370, %c0_371] : memref<9x1x8xf32, #tpu.memory_space<vmem>>, vector<1x1x8xf32>
    %391 = vector.shape_cast %390 : vector<1x1x8xf32> to vector<1x8xf32>
    %cst_372 = arith.constant dense<0.000000e+00> : vector<1x256xf32>
    %392 = tpu.matmul %391, %315, %cst_372 {dimension_numbers = #tpu.dot_dimension_numbers<[1], [0], [0], [1], [0, 0, 1, 1], [], []>} : vector<1x8xf32>, vector<8x256xf32>, vector<1x256xf32> -> vector<1x256xf32>
    %393 = arith.addf %389, %392 : vector<1x256xf32>
    %c8_373 = arith.constant 8 : index
    %c0_374 = arith.constant 0 : index
    %c0_375 = arith.constant 0 : index
    %394 = vector.load %arg3[%c8_373, %c0_374, %c0_375] : memref<9x256x256xf32, #tpu.memory_space<vmem>>, vector<1x256x256xf32>
    %395 = vector.shape_cast %394 : vector<1x256x256xf32> to vector<256x256xf32>
    %cst_376 = arith.constant dense<0.000000e+00> : vector<1x256xf32>
    %396 = tpu.matmul %393, %395, %cst_376 {dimension_numbers = #tpu.dot_dimension_numbers<[1], [0], [0], [1], [0, 0, 1, 1], [], []>} : vector<1x256xf32>, vector<256x256xf32>, vector<1x256xf32> -> vector<1x256xf32>
    %397 = arith.addf %388, %396 : vector<1x256xf32>
    %c0_377 = arith.constant 0 : index
    %c0_378 = arith.constant 0 : index
    %398 = vector.load %arg14[%c0_377, %c0_378] : memref<1x1xf32, #tpu.memory_space<vmem>>, vector<1x1xf32>
    %399 = vector.broadcast %398 : vector<1x1xf32> to vector<1x256xf32>
    %400 = arith.addf %397, %399 : vector<1x256xf32>
    %c0_379 = arith.constant 0 : index
    %c0_380 = arith.constant 0 : index
    %c0_381 = arith.constant 0 : index
    %401 = vector.load %arg15[%c0_379, %c0_380, %c0_381] : memref<1x1x256xf32, #tpu.memory_space<vmem>>, vector<1x1x256xf32>
    %402 = vector.shape_cast %401 : vector<1x1x256xf32> to vector<1x256xf32>
    %403 = vector.shape_cast %400 : vector<1x256xf32> to vector<1x1x256xf32>
    tpu.vector_store %arg15[%c0_379, %c0_380, %c0_381], %403 {strides = array<i32>} : memref<1x1x256xf32, #tpu.memory_space<vmem>>, vector<1x1x256xf32>,
    return
  }
  func.func @transform_0(%arg0: i32) -> (i32, i32, i32) {
    %c0_i32 = arith.constant 0 : i32
    %c0_i32_0 = arith.constant 0 : i32
    %c0_i32_1 = arith.constant 0 : i32
    return %arg0, %c0_i32, %c0_i32_0 : i32, i32, i32
  }
  func.func @transform_1(%arg0: i32) -> (i32, i32, i32) {
    %c0_i32 = arith.constant 0 : i32
    %c0_i32_0 = arith.constant 0 : i32
    %c0_i32_1 = arith.constant 0 : i32
    return %arg0, %c0_i32, %c0_i32_0 : i32, i32, i32
  }
  func.func @transform_2(%arg0: i32) -> (i32, i32, i32) {
    %c0_i32 = arith.constant 0 : i32
    %c0_i32_0 = arith.constant 0 : i32
    %c0_i32_1 = arith.constant 0 : i32
    %c0_i32_2 = arith.constant 0 : i32
    return %c0_i32, %c0_i32_0, %c0_i32_1 : i32, i32, i32
  }
  func.func @transform_3(%arg0: i32) -> (i32, i32) {
    %c0_i32 = arith.constant 0 : i32
    %c0_i32_0 = arith.constant 0 : i32
    %c0_i32_1 = arith.constant 0 : i32
    return %c0_i32, %c0_i32_0 : i32, i32
  }
  func.func @transform_4(%arg0: i32) -> (i32, i32) {
    %c0_i32 = arith.constant 0 : i32
    %c0_i32_0 = arith.constant 0 : i32
    %c0_i32_1 = arith.constant 0 : i32
    return %c0_i32, %c0_i32_0 : i32, i32
  }
  func.func @transform_5(%arg0: i32) -> (i32, i32, i32) {
    %c0_i32 = arith.constant 0 : i32
    %c0_i32_0 = arith.constant 0 : i32
    %c0_i32_1 = arith.constant 0 : i32
    %c0_i32_2 = arith.constant 0 : i32
    return %c0_i32, %c0_i32_0, %c0_i32_1 : i32, i32, i32
  }
  func.func @transform_6(%arg0: i32) -> (i32, i32) {
    %c0_i32 = arith.constant 0 : i32
    %c0_i32_0 = arith.constant 0 : i32
    %c0_i32_1 = arith.constant 0 : i32
    return %c0_i32, %c0_i32_0 : i32, i32
  }
  func.func @transform_7(%arg0: i32) -> (i32, i32, i32) {
    %c0_i32 = arith.constant 0 : i32
    %c0_i32_0 = arith.constant 0 : i32
    %c0_i32_1 = arith.constant 0 : i32
    %c0_i32_2 = arith.constant 0 : i32
    return %c0_i32, %c0_i32_0, %c0_i32_1 : i32, i32, i32
  }
  func.func @transform_8(%arg0: i32) -> (i32, i32) {
    %c0_i32 = arith.constant 0 : i32
    %c0_i32_0 = arith.constant 0 : i32
    %c0_i32_1 = arith.constant 0 : i32
    return %c0_i32, %c0_i32_0 : i32, i32
  }
  func.func @transform_9(%arg0: i32) -> (i32, i32, i32) {
    %c0_i32 = arith.constant 0 : i32
    %c0_i32_0 = arith.constant 0 : i32
    %c0_i32_1 = arith.constant 0 : i32
    %c0_i32_2 = arith.constant 0 : i32
    return %c0_i32, %c0_i32_0, %c0_i32_1 : i32, i32, i32
  }
  func.func @transform_10(%arg0: i32) -> (i32, i32, i32) {
    %c0_i32 = arith.constant 0 : i32
    %c0_i32_0 = arith.constant 0 : i32
    %c0_i32_1 = arith.constant 0 : i32
    %c0_i32_2 = arith.constant 0 : i32
    return %c0_i32, %c0_i32_0, %c0_i32_1 : i32, i32, i32
  }
  func.func @transform_11(%arg0: i32) -> (i32, i32) {
    %c0_i32 = arith.constant 0 : i32
    %c0_i32_0 = arith.constant 0 : i32
    %c0_i32_1 = arith.constant 0 : i32
    return %c0_i32, %c0_i32_0 : i32, i32
  }
  func.func @transform_12(%arg0: i32) -> (i32, i32, i32) {
    %c0_i32 = arith.constant 0 : i32
    %c0_i32_0 = arith.constant 0 : i32
    %c0_i32_1 = arith.constant 0 : i32
    %c0_i32_2 = arith.constant 0 : i32
    return %c0_i32, %c0_i32_0, %c0_i32_1 : i32, i32, i32
  }
  func.func @transform_13(%arg0: i32) -> (i32, i32) {
    %c0_i32 = arith.constant 0 : i32
    %c0_i32_0 = arith.constant 0 : i32
    %c0_i32_1 = arith.constant 0 : i32
    return %c0_i32, %c0_i32_0 : i32, i32
  }
  func.func @transform_14(%arg0: i32) -> (i32, i32, i32) {
    %c0_i32 = arith.constant 0 : i32
    %c0_i32_0 = arith.constant 0 : i32
    %c0_i32_1 = arith.constant 0 : i32
    return %arg0, %c0_i32, %c0_i32_0 : i32, i32, i32
  }
}

</mosaic_0001>

<llo_original>
// kernel: resi_layer_forward.1
$region0: #{resi_layer_forward.1}
  #allocation0 [shape = 'u32[]', space=smem, size = 0x4, offset = 0x4, fixed_abs, tag = 'smem constant byte address 0x4 - core index']
  #allocation1 [shape = 'u32[144,128]{1,0:T(1,128)}', space=vmem, size = 0x12000, scoped, tag = 'internal scratch']
  #allocation2 [shape = 'f32[1,1]{1,0:T(1,128)S(1)}', space=vmem, size = 0x200, scoped, tag = 'scoped memory for resi_layer_forward.1']
  %s0 = inlined_call_operand.vmem [shape: f32[2,4,256], index: 0, kind: input, shape index: {}]
  %s1 = inlined_call_operand.vmem [shape: f32[2,1,256], index: 1, kind: input, shape index: {}]
  %s2 = inlined_call_operand.hbm [shape: f32[9,256,256], index: 2, kind: input, shape index: {}]
  %s3 = inlined_call_operand.vmem [shape: f32[8,4], index: 3, kind: input, shape index: {}]
  %s4 = inlined_call_operand.vmem [shape: f32[8,1], index: 4, kind: input, shape index: {}]
  %s5 = inlined_call_operand.vmem [shape: f32[9,8,8], index: 5, kind: input, shape index: {}]
  %s6 = inlined_call_operand.vmem [shape: f32[8,1], index: 6, kind: input, shape index: {}]
  %s7 = inlined_call_operand.vmem [shape: f32[9,8,8], index: 7, kind: input, shape index: {}]
  %s8 = inlined_call_operand.vmem [shape: f32[8,1], index: 8, kind: input, shape index: {}]
  %s9 = inlined_call_operand.vmem [shape: f32[9,8,8], index: 9, kind: input, shape index: {}]
  %s10 = inlined_call_operand.vmem [shape: f32[9,8,8], index: 10, kind: input, shape index: {}]
  %s11 = inlined_call_operand.vmem [shape: f32[8,1], index: 11, kind: input, shape index: {}]
  %s12 = inlined_call_operand.vmem [shape: f32[9,1,8], index: 12, kind: input, shape index: {}]
  %s13 = inlined_call_operand.<no memory space> [shape: f32[1,1], index: 13, kind: input, shape index: {}]
  %s14 = inlined_call_operand.vmem [shape: f32[2,1,256], index: 14, kind: output, shape index: {}]
  %s15 = sld [smem:[#allocation0]]
  $region93: #{resi_layer_forward.1} parent=0
    _
  %s17 = ssub.s32 1, %s15
  %s18 = scalar_select 0, %s17, %s15
  %v19 = vstv %s13
  %20 = vst [vmem:[#allocation2] sm:$0x1] %v19
  $region1: #{resi_layer_forward.1} parent=0
    #allocation3 [shape = 'u8[2359296]{0}', space=vmem, size = 0x240000, scoped, tag = 'input window, operand 2, single buffered']
    #allocation4 [shape = 's32[2]{0}', space=sflag, size = 0x8, scoped, tag = 'scoped memory for resi_layer_forward.1']
    %21 = vsyncpa [#allocation4], 0
    loop: start=0, step=1, limit=4
    $region2: #{resi_layer_forward.1} parent=1 // loop_pre_header
      _
    $region3: #{resi_layer_forward.1} parent=1 // loop_header
      %s23 = sphi 0, %s27
      %p24 = scmp.ge.s32.totalorder %s23, 4
      %s33 = sphi 0, %s35
      %s36 = sphi 0, %s33
      %s37 = sphi 0, %s36
      %s53 = sphi 0, %s37
      %s59 = sphi 0, %s61
      %s62 = sphi 0, %s59
      %s63 = sphi 0, %s62
      %s79 = sphi 0, %s63
      %s83 = sphi 0, %s83
      %s85 = sphi 0, %s83
      %s86 = sphi 0, %s85
      %s100 = sphi 0, %s86
      %s104 = sphi 0, %s104
      %s106 = sphi 0, %s104
      %s107 = sphi 0, %s106
      %s121 = sphi 0, %s107
      %s125 = sphi 0, %s125
      %s127 = sphi 0, %s125
      %s128 = sphi 0, %s127
      %s142 = sphi 0, %s128
      %s146 = sphi 0, %s146
      %s148 = sphi 0, %s146
      %s149 = sphi 0, %s148
      %s163 = sphi 0, %s149
      %s167 = sphi 0, %s167
      %s169 = sphi 0, %s167
      %s170 = sphi 0, %s169
      %s184 = sphi 0, %s170
      %s188 = sphi 0, %s188
      %s190 = sphi 0, %s188
      %s191 = sphi 0, %s190
      %s205 = sphi 0, %s191
      %s209 = sphi 0, %s209
      %s211 = sphi 0, %s209
      %s212 = sphi 0, %s211
      %s226 = sphi 0, %s212
      %s230 = sphi 0, %s230
      %s232 = sphi 0, %s230
      %s233 = sphi 0, %s232
      %s247 = sphi 0, %s233
      %s251 = sphi 0, %s251
      %s253 = sphi 0, %s251
      %s254 = sphi 0, %s253
      %s268 = sphi 0, %s254
      %s272 = sphi 0, %s272
      %s274 = sphi 0, %s272
      %s275 = sphi 0, %s274
      %s289 = sphi 0, %s275
      %s293 = sphi 0, %s293
      %s295 = sphi 0, %s293
      %s296 = sphi 0, %s295
      %s310 = sphi 0, %s296
      %s314 = sphi 0, %s314
      %s316 = sphi 0, %s314
      %s317 = sphi 0, %s316
      %s331 = sphi 0, %s317
      %s337 = sphi 0, %s339
      %s340 = sphi 0, %s337
      %s341 = sphi 0, %s340
      %s357 = sphi 0, %s341
    $region4: #{resi_layer_forward.1} parent=1 // loop_header_branch
      %26 = sbr.rel (%p24) target = $region8
    $region5: #{resi_layer_forward.1} parent=1 // loop_body
      %s28 = ssub.s32 %s23, 1
      %s29 = ssub.s32 %s23, 2
      %s30 = sadd.s32 %s23, 1
      %s31 = ssub.s32 %s23, %s30
      %p32 = scmp.eq.s32.totalorder %s31, 0
      %s34 = sadd.s32 %s33, 1
      %s35 = scalar_select %p32, %s33, %s34
      %p38 = pneg %p32
      %p39 = scmp.eq.s32.totalorder %s23, 1
      %p40 = por %p38, %p39
      %p41 = scmp.ne.s32.totalorder %s33, %s36
      %p42 = scmp.eq.s32.totalorder %s23, 0
      %p43 = por %p41, %p42
      %p44 = scmp.ne.s32.totalorder %s33, %s36
      %p45 = scmp.eq.s32.totalorder %s28, 1
      %p46 = por %p44, %p45
      %p47 = scmp.ne.s32.totalorder %s36, %s37
      %p48 = scmp.eq.s32.totalorder %s28, 0
      %p49 = por %p47, %p48
      %p50 = scmp.ne.s32.totalorder %s36, %s37
      %p51 = scmp.eq.s32.totalorder %s29, 1
      %p52 = por %p50, %p51
      %p54 = scmp.ne.s32.totalorder %s37, %s53
      %p55 = scmp.eq.s32.totalorder %s29, 0
      %p56 = por %p54, %p55
      %s57 = ssub.s32 %s23, %s30
      %p58 = scmp.eq.s32.totalorder %s57, 0
      %s60 = sadd.s32 %s59, 1
      %s61 = scalar_select %p58, %s59, %s60
      %p64 = pneg %p58
      %p65 = scmp.eq.s32.totalorder %s23, 1
      %p66 = por %p64, %p65
      %p67 = scmp.ne.s32.totalorder %s59, %s62
      %p68 = scmp.eq.s32.totalorder %s23, 0
      %p69 = por %p67, %p68
      %p70 = scmp.ne.s32.totalorder %s59, %s62
      %p71 = scmp.eq.s32.totalorder %s28, 1
      %p72 = por %p70, %p71
      %p73 = scmp.ne.s32.totalorder %s62, %s63
      %p74 = scmp.eq.s32.totalorder %s28, 0
      %p75 = por %p73, %p74
      %p76 = scmp.ne.s32.totalorder %s62, %s63
      %p77 = scmp.eq.s32.totalorder %s29, 1
      %p78 = por %p76, %p77
      %p80 = scmp.ne.s32.totalorder %s63, %s79
      %p81 = scmp.eq.s32.totalorder %s29, 0
      %p82 = por %p80, %p81
      %s84 = sadd.s32 %s83, 1
      %p87 = scmp.eq.s32.totalorder %s23, 1
      %p88 = scmp.ne.s32.totalorder %s83, %s85
      %p89 = scmp.eq.s32.totalorder %s23, 0
      %p90 = por %p88, %p89
      %p91 = scmp.ne.s32.totalorder %s83, %s85
      %p92 = scmp.eq.s32.totalorder %s28, 1
      %p93 = por %p91, %p92
      %p94 = scmp.ne.s32.totalorder %s85, %s86
      %p95 = scmp.eq.s32.totalorder %s28, 0
      %p96 = por %p94, %p95
      %p97 = scmp.ne.s32.totalorder %s85, %s86
      %p98 = scmp.eq.s32.totalorder %s29, 1
      %p99 = por %p97, %p98
      %p101 = scmp.ne.s32.totalorder %s86, %s100
      %p102 = scmp.eq.s32.totalorder %s29, 0
      %p103 = por %p101, %p102
      %s105 = sadd.s32 %s104, 1
      %p108 = scmp.eq.s32.totalorder %s23, 1
      %p109 = scmp.ne.s32.totalorder %s104, %s106
      %p110 = scmp.eq.s32.totalorder %s23, 0
      %p111 = por %p109, %p110
      %p112 = scmp.ne.s32.totalorder %s104, %s106
      %p113 = scmp.eq.s32.totalorder %s28, 1
      %p114 = por %p112, %p113
      %p115 = scmp.ne.s32.totalorder %s106, %s107
      %p116 = scmp.eq.s32.totalorder %s28, 0
      %p117 = por %p115, %p116
      %p118 = scmp.ne.s32.totalorder %s106, %s107
      %p119 = scmp.eq.s32.totalorder %s29, 1
      %p120 = por %p118, %p119
      %p122 = scmp.ne.s32.totalorder %s107, %s121
      %p123 = scmp.eq.s32.totalorder %s29, 0
      %p124 = por %p122, %p123
      %s126 = sadd.s32 %s125, 1
      %p129 = scmp.eq.s32.totalorder %s23, 1
      %p130 = scmp.ne.s32.totalorder %s125, %s127
      %p131 = scmp.eq.s32.totalorder %s23, 0
      %p132 = por %p130, %p131
      %p133 = scmp.ne.s32.totalorder %s125, %s127
      %p134 = scmp.eq.s32.totalorder %s28, 1
      %p135 = por %p133, %p134
      %p136 = scmp.ne.s32.totalorder %s127, %s128
      %p137 = scmp.eq.s32.totalorder %s28, 0
      %p138 = por %p136, %p137
      %p139 = scmp.ne.s32.totalorder %s127, %s128
      %p140 = scmp.eq.s32.totalorder %s29, 1
      %p141 = por %p139, %p140
      %p143 = scmp.ne.s32.totalorder %s128, %s142
      %p144 = scmp.eq.s32.totalorder %s29, 0
      %p145 = por %p143, %p144
      %s147 = sadd.s32 %s146, 1
      %p150 = scmp.eq.s32.totalorder %s23, 1
      %p151 = scmp.ne.s32.totalorder %s146, %s148
      %p152 = scmp.eq.s32.totalorder %s23, 0
      %p153 = por %p151, %p152
      %p154 = scmp.ne.s32.totalorder %s146, %s148
      %p155 = scmp.eq.s32.totalorder %s28, 1
      %p156 = por %p154, %p155
      %p157 = scmp.ne.s32.totalorder %s148, %s149
      %p158 = scmp.eq.s32.totalorder %s28, 0
      %p159 = por %p157, %p158
      %p160 = scmp.ne.s32.totalorder %s148, %s149
      %p161 = scmp.eq.s32.totalorder %s29, 1
      %p162 = por %p160, %p161
      %p164 = scmp.ne.s32.totalorder %s149, %s163
      %p165 = scmp.eq.s32.totalorder %s29, 0
      %p166 = por %p164, %p165
      %s168 = sadd.s32 %s167, 1
      %p171 = scmp.eq.s32.totalorder %s23, 1
      %p172 = scmp.ne.s32.totalorder %s167, %s169
      %p173 = scmp.eq.s32.totalorder %s23, 0
      %p174 = por %p172, %p173
      %p175 = scmp.ne.s32.totalorder %s167, %s169
      %p176 = scmp.eq.s32.totalorder %s28, 1
      %p177 = por %p175, %p176
      %p178 = scmp.ne.s32.totalorder %s169, %s170
      %p179 = scmp.eq.s32.totalorder %s28, 0
      %p180 = por %p178, %p179
      %p181 = scmp.ne.s32.totalorder %s169, %s170
      %p182 = scmp.eq.s32.totalorder %s29, 1
      %p183 = por %p181, %p182
      %p185 = scmp.ne.s32.totalorder %s170, %s184
      %p186 = scmp.eq.s32.totalorder %s29, 0
      %p187 = por %p185, %p186
      %s189 = sadd.s32 %s188, 1
      %p192 = scmp.eq.s32.totalorder %s23, 1
      %p193 = scmp.ne.s32.totalorder %s188, %s190
      %p194 = scmp.eq.s32.totalorder %s23, 0
      %p195 = por %p193, %p194
      %p196 = scmp.ne.s32.totalorder %s188, %s190
      %p197 = scmp.eq.s32.totalorder %s28, 1
      %p198 = por %p196, %p197
      %p199 = scmp.ne.s32.totalorder %s190, %s191
      %p200 = scmp.eq.s32.totalorder %s28, 0
      %p201 = por %p199, %p200
      %p202 = scmp.ne.s32.totalorder %s190, %s191
      %p203 = scmp.eq.s32.totalorder %s29, 1
      %p204 = por %p202, %p203
      %p206 = scmp.ne.s32.totalorder %s191, %s205
      %p207 = scmp.eq.s32.totalorder %s29, 0
      %p208 = por %p206, %p207
      %s210 = sadd.s32 %s209, 1
      %p213 = scmp.eq.s32.totalorder %s23, 1
      %p214 = scmp.ne.s32.totalorder %s209, %s211
      %p215 = scmp.eq.s32.totalorder %s23, 0
      %p216 = por %p214, %p215
      %p217 = scmp.ne.s32.totalorder %s209, %s211
      %p218 = scmp.eq.s32.totalorder %s28, 1
      %p219 = por %p217, %p218
      %p220 = scmp.ne.s32.totalorder %s211, %s212
      %p221 = scmp.eq.s32.totalorder %s28, 0
      %p222 = por %p220, %p221
      %p223 = scmp.ne.s32.totalorder %s211, %s212
      %p224 = scmp.eq.s32.totalorder %s29, 1
      %p225 = por %p223, %p224
      %p227 = scmp.ne.s32.totalorder %s212, %s226
      %p228 = scmp.eq.s32.totalorder %s29, 0
      %p229 = por %p227, %p228
      %s231 = sadd.s32 %s230, 1
      %p234 = scmp.eq.s32.totalorder %s23, 1
      %p235 = scmp.ne.s32.totalorder %s230, %s232
      %p236 = scmp.eq.s32.totalorder %s23, 0
      %p237 = por %p235, %p236
      %p238 = scmp.ne.s32.totalorder %s230, %s232
      %p239 = scmp.eq.s32.totalorder %s28, 1
      %p240 = por %p238, %p239
      %p241 = scmp.ne.s32.totalorder %s232, %s233
      %p242 = scmp.eq.s32.totalorder %s28, 0
      %p243 = por %p241, %p242
      %p244 = scmp.ne.s32.totalorder %s232, %s233
      %p245 = scmp.eq.s32.totalorder %s29, 1
      %p246 = por %p244, %p245
      %p248 = scmp.ne.s32.totalorder %s233, %s247
      %p249 = scmp.eq.s32.totalorder %s29, 0
      %p250 = por %p248, %p249
      %s252 = sadd.s32 %s251, 1
      %p255 = scmp.eq.s32.totalorder %s23, 1
      %p256 = scmp.ne.s32.totalorder %s251, %s253
      %p257 = scmp.eq.s32.totalorder %s23, 0
      %p258 = por %p256, %p257
      %p259 = scmp.ne.s32.totalorder %s251, %s253
      %p260 = scmp.eq.s32.totalorder %s28, 1
      %p261 = por %p259, %p260
      %p262 = scmp.ne.s32.totalorder %s253, %s254
      %p263 = scmp.eq.s32.totalorder %s28, 0
      %p264 = por %p262, %p263
      %p265 = scmp.ne.s32.totalorder %s253, %s254
      %p266 = scmp.eq.s32.totalorder %s29, 1
      %p267 = por %p265, %p266
      %p269 = scmp.ne.s32.totalorder %s254, %s268
      %p270 = scmp.eq.s32.totalorder %s29, 0
      %p271 = por %p269, %p270
      %s273 = sadd.s32 %s272, 1
      %p276 = scmp.eq.s32.totalorder %s23, 1
      %p277 = scmp.ne.s32.totalorder %s272, %s274
      %p278 = scmp.eq.s32.totalorder %s23, 0
      %p279 = por %p277, %p278
      %p280 = scmp.ne.s32.totalorder %s272, %s274
      %p281 = scmp.eq.s32.totalorder %s28, 1
      %p282 = por %p280, %p281
      %p283 = scmp.ne.s32.totalorder %s274, %s275
      %p284 = scmp.eq.s32.totalorder %s28, 0
      %p285 = por %p283, %p284
      %p286 = scmp.ne.s32.totalorder %s274, %s275
      %p287 = scmp.eq.s32.totalorder %s29, 1
      %p288 = por %p286, %p287
      %p290 = scmp.ne.s32.totalorder %s275, %s289
      %p291 = scmp.eq.s32.totalorder %s29, 0
      %p292 = por %p290, %p291
      %s294 = sadd.s32 %s293, 1
      %p297 = scmp.eq.s32.totalorder %s23, 1
      %p298 = scmp.ne.s32.totalorder %s293, %s295
      %p299 = scmp.eq.s32.totalorder %s23, 0
      %p300 = por %p298, %p299
      %p301 = scmp.ne.s32.totalorder %s293, %s295
      %p302 = scmp.eq.s32.totalorder %s28, 1
      %p303 = por %p301, %p302
      %p304 = scmp.ne.s32.totalorder %s295, %s296
      %p305 = scmp.eq.s32.totalorder %s28, 0
      %p306 = por %p304, %p305
      %p307 = scmp.ne.s32.totalorder %s295, %s296
      %p308 = scmp.eq.s32.totalorder %s29, 1
      %p309 = por %p307, %p308
      %p311 = scmp.ne.s32.totalorder %s296, %s310
      %p312 = scmp.eq.s32.totalorder %s29, 0
      %p313 = por %p311, %p312
      %s315 = sadd.s32 %s314, 1
      %p318 = scmp.eq.s32.totalorder %s23, 1
      %p319 = scmp.ne.s32.totalorder %s314, %s316
      %p320 = scmp.eq.s32.totalorder %s23, 0
      %p321 = por %p319, %p320
      %p322 = scmp.ne.s32.totalorder %s314, %s316
      %p323 = scmp.eq.s32.totalorder %s28, 1
      %p324 = por %p322, %p323
      %p325 = scmp.ne.s32.totalorder %s316, %s317
      %p326 = scmp.eq.s32.totalorder %s28, 0
      %p327 = por %p325, %p326
      %p328 = scmp.ne.s32.totalorder %s316, %s317
      %p329 = scmp.eq.s32.totalorder %s29, 1
      %p330 = por %p328, %p329
      %p332 = scmp.ne.s32.totalorder %s317, %s331
      %p333 = scmp.eq.s32.totalorder %s29, 0
      %p334 = por %p332, %p333
      %s335 = ssub.s32 %s23, %s30
      %p336 = scmp.eq.s32.totalorder %s335, 0
      %s338 = sadd.s32 %s337, 1
      %s339 = scalar_select %p336, %s337, %s338
      %p342 = pneg %p336
      %p343 = scmp.eq.s32.totalorder %s23, 1
      %p344 = por %p342, %p343
      %p345 = scmp.ne.s32.totalorder %s337, %s340
      %p346 = scmp.eq.s32.totalorder %s23, 0
      %p347 = por %p345, %p346
      %p348 = scmp.ne.s32.totalorder %s337, %s340
      %p349 = scmp.eq.s32.totalorder %s28, 1
      %p350 = por %p348, %p349
      %p351 = scmp.ne.s32.totalorder %s340, %s341
      %p352 = scmp.eq.s32.totalorder %s28, 0
      %p353 = por %p351, %p352
      %p354 = scmp.ne.s32.totalorder %s340, %s341
      %p355 = scmp.eq.s32.totalorder %s29, 1
      %p356 = por %p354, %p355
      %p358 = scmp.ne.s32.totalorder %s341, %s357
      %p359 = scmp.eq.s32.totalorder %s29, 0
      %p360 = por %p358, %p359
      %p361 = scmp.le.s32.totalorder 1, %s23
      %p362 = scmp.lt.s32.totalorder %s23, 3
      %p363 = pnand %p361, %p362
      %p364 = pneg %p363
      // Predicated region
      $region9: #{resi_layer_forward.1} parent=5 // pred_check
        _
      $region10: #{resi_layer_forward.1} parent=5 // pred_check_branch
        %366 = sbr.rel (%p363) target = $region12
      $region11: #{resi_layer_forward.1} parent=5 // pred_region
        %s367 = ssub.s32 %s23, 1
        // Predicated region
        $region13: #{resi_layer_forward.1} parent=11 // pred_check
          %p368 = pneg %p96
        $region14: #{resi_layer_forward.1} parent=11 // pred_check_branch
          %370 = sbr.rel (%p368) target = $region16
        $region15: #{resi_layer_forward.1} parent=11 // pred_region
          %s372 = ssub.s32 73728, 73728
          %373 = vsyncadd [#allocation4], %s372
          %s374 = sshll.u32 [#allocation3], 4
          %s375 = int_to_ptr.vmem [resolvable:$true] %s374
          %380 = dma.hbm_to_vmem [thread:$0]  %s2, 73728, %s375, [#allocation4], 256, 256, 16
        $region16: #{resi_layer_forward.1} parent=11 // pred_fallthru
          _
        // Predicated region
        $region17: #{resi_layer_forward.1} parent=11 // pred_check
          %p381 = pneg %p117
        $region18: #{resi_layer_forward.1} parent=11 // pred_check_branch
          %383 = sbr.rel (%p381) target = $region20
        $region19: #{resi_layer_forward.1} parent=11 // pred_region
          _
        $region20: #{resi_layer_forward.1} parent=11 // pred_fallthru
          _
        // Predicated region
        $region21: #{resi_layer_forward.1} parent=11 // pred_check
          %p384 = pneg %p138
        $region22: #{resi_layer_forward.1} parent=11 // pred_check_branch
          %386 = sbr.rel (%p384) target = $region24
        $region23: #{resi_layer_forward.1} parent=11 // pred_region
          _
        $region24: #{resi_layer_forward.1} parent=11 // pred_fallthru
          _
        // Predicated region
        $region25: #{resi_layer_forward.1} parent=11 // pred_check
          %p387 = pneg %p159
        $region26: #{resi_layer_forward.1} parent=11 // pred_check_branch
          %389 = sbr.rel (%p387) target = $region28
        $region27: #{resi_layer_forward.1} parent=11 // pred_region
          _
        $region28: #{resi_layer_forward.1} parent=11 // pred_fallthru
          _
        // Predicated region
        $region29: #{resi_layer_forward.1} parent=11 // pred_check
          %p390 = pneg %p180
        $region30: #{resi_layer_forward.1} parent=11 // pred_check_branch
          %392 = sbr.rel (%p390) target = $region32
        $region31: #{resi_layer_forward.1} parent=11 // pred_region
          _
        $region32: #{resi_layer_forward.1} parent=11 // pred_fallthru
          _
        // Predicated region
        $region33: #{resi_layer_forward.1} parent=11 // pred_check
          %p393 = pneg %p201
        $region34: #{resi_layer_forward.1} parent=11 // pred_check_branch
          %395 = sbr.rel (%p393) target = $region36
        $region35: #{resi_layer_forward.1} parent=11 // pred_region
          _
        $region36: #{resi_layer_forward.1} parent=11 // pred_fallthru
          _
        // Predicated region
        $region37: #{resi_layer_forward.1} parent=11 // pred_check
          %p396 = pneg %p222
        $region38: #{resi_layer_forward.1} parent=11 // pred_check_branch
          %398 = sbr.rel (%p396) target = $region40
        $region39: #{resi_layer_forward.1} parent=11 // pred_region
          _
        $region40: #{resi_layer_forward.1} parent=11 // pred_fallthru
          _
        // Predicated region
        $region41: #{resi_layer_forward.1} parent=11 // pred_check
          %p399 = pneg %p243
        $region42: #{resi_layer_forward.1} parent=11 // pred_check_branch
          %401 = sbr.rel (%p399) target = $region44
        $region43: #{resi_layer_forward.1} parent=11 // pred_region
          _
        $region44: #{resi_layer_forward.1} parent=11 // pred_fallthru
          _
        // Predicated region
        $region45: #{resi_layer_forward.1} parent=11 // pred_check
          %p402 = pneg %p264
        $region46: #{resi_layer_forward.1} parent=11 // pred_check_branch
          %404 = sbr.rel (%p402) target = $region48
        $region47: #{resi_layer_forward.1} parent=11 // pred_region
          _
        $region48: #{resi_layer_forward.1} parent=11 // pred_fallthru
          _
        // Predicated region
        $region49: #{resi_layer_forward.1} parent=11 // pred_check
          %p405 = pneg %p285
        $region50: #{resi_layer_forward.1} parent=11 // pred_check_branch
          %407 = sbr.rel (%p405) target = $region52
        $region51: #{resi_layer_forward.1} parent=11 // pred_region
          _
        $region52: #{resi_layer_forward.1} parent=11 // pred_fallthru
          _
        // Predicated region
        $region53: #{resi_layer_forward.1} parent=11 // pred_check
          %p408 = pneg %p306
        $region54: #{resi_layer_forward.1} parent=11 // pred_check_branch
          %410 = sbr.rel (%p408) target = $region56
        $region55: #{resi_layer_forward.1} parent=11 // pred_region
          _
        $region56: #{resi_layer_forward.1} parent=11 // pred_fallthru
          _
        // Predicated region
        $region57: #{resi_layer_forward.1} parent=11 // pred_check
          %p411 = pneg %p327
        $region58: #{resi_layer_forward.1} parent=11 // pred_check_branch
          %413 = sbr.rel (%p411) target = $region60
        $region59: #{resi_layer_forward.1} parent=11 // pred_region
          _
        $region60: #{resi_layer_forward.1} parent=11 // pred_fallthru
          _
      $region12: #{resi_layer_forward.1} parent=5 // pred_fallthru
        _
      %p414 = scmp.lt.s32.totalorder %s23, 2
      // Predicated region
      $region61: #{resi_layer_forward.1} parent=5 // pred_check
        %p415 = pneg %p414
      $region62: #{resi_layer_forward.1} parent=5 // pred_check_branch
        %417 = sbr.rel (%p415) target = $region64
      $region63: #{resi_layer_forward.1} parent=5 // pred_region
        // Predicated region
        $region65: #{resi_layer_forward.1} parent=63 // pred_check
          %p418 = pneg %p43
        $region66: #{resi_layer_forward.1} parent=63 // pred_check_branch
          %420 = sbr.rel (%p418) target = $region68
        $region67: #{resi_layer_forward.1} parent=63 // pred_region
          %p421 = scmp.lt.s32.totalorder %s23, 1
          %s422 = scalar_select %p421, %s23, 1
          %s423 = smul.addr %s422, 2
          %s424 = smul.addr %s423, 4
          %s425 = scalar_lea.vmem %s0, %s424
        $region68: #{resi_layer_forward.1} parent=63 // pred_fallthru
          _
        // Predicated region
        $region69: #{resi_layer_forward.1} parent=63 // pred_check
          %p426 = pneg %p69
        $region70: #{resi_layer_forward.1} parent=63 // pred_check_branch
          %428 = sbr.rel (%p426) target = $region72
        $region71: #{resi_layer_forward.1} parent=63 // pred_region
          %p429 = scmp.lt.s32.totalorder %s23, 1
          %s430 = scalar_select %p429, %s23, 1
          %s431 = smul.addr %s430, 2
          %s432 = scalar_lea.vmem %s1, %s431
        $region72: #{resi_layer_forward.1} parent=63 // pred_fallthru
          _
      $region64: #{resi_layer_forward.1} parent=5 // pred_fallthru
        _
      %p433 = scmp.le.s32.totalorder 1, %s23
      %p434 = scmp.lt.s32.totalorder %s23, 3
      %p435 = pnand %p433, %p434
      %p436 = pneg %p435
      // Predicated region
      $region73: #{resi_layer_forward.1} parent=5 // pred_check
        _
      $region74: #{resi_layer_forward.1} parent=5 // pred_check_branch
        %438 = sbr.rel (%p435) target = $region76
      $region75: #{resi_layer_forward.1} parent=5 // pred_region
        %s439 = ssub.s32 %s23, 1
        // Predicated region
        $region77: #{resi_layer_forward.1} parent=75 // pred_check
          %p440 = pneg %p96
        $region78: #{resi_layer_forward.1} parent=75 // pred_check_branch
          %442 = sbr.rel (%p440) target = $region80
        $region79: #{resi_layer_forward.1} parent=75 // pred_region
          %443 = dma.done [#allocation4], 73728
        $region80: #{resi_layer_forward.1} parent=75 // pred_fallthru
          _
        %p444 = scmp.lt.s32.totalorder %s28, 1
        %s445 = scalar_select %p444, %s28, 1
        %s446 = smul.addr %s445, 2
        %s447 = smul.addr %s446, 4
        %s448 = scalar_lea.vmem %s0, %s447
        %p449 = pneg %p49
        %p450 = pneg %p46
        %p451 = scmp.lt.s32.totalorder %s28, 1
        %s452 = scalar_select %p451, %s28, 1
        %s453 = smul.addr %s452, 2
        %s454 = scalar_lea.vmem %s1, %s453
        %p455 = pneg %p75
        %p456 = pneg %p72
        %p457 = pneg %p96
        %p458 = pneg %p93
        %p459 = pneg %p117
        %p460 = pneg %p114
        %p461 = pneg %p138
        %p462 = pneg %p135
        %p463 = pneg %p159
        %p464 = pneg %p156
        %p465 = pneg %p180
        %p466 = pneg %p177
        %p467 = pneg %p201
        %p468 = pneg %p198
        %p469 = pneg %p222
        %p470 = pneg %p219
        %p471 = pneg %p243
        %p472 = pneg %p240
        %p473 = pneg %p264
        %p474 = pneg %p261
        %p475 = pneg %p285
        %p476 = pneg %p282
        %p477 = pneg %p306
        %p478 = pneg %p303
        %p479 = pneg %p327
        %p480 = pneg %p324
        %p481 = pneg %p353
        %p482 = pneg %p350
        %p483 = scmp.lt.s32.totalorder %s28, 1
        %s484 = scalar_select %p483, %s28, 1
        %s485 = smul.addr %s484, 2
        %s486 = scalar_lea.vmem %s14, %s485
        %p487 = scmp.lt.s32.totalorder %s28, 1
        %s488 = scalar_select %p487, %s28, 1
        %s489 = smul.addr %s488, 2
        %s490 = smul.addr %s489, 4
        %s491 = scalar_lea.vmem %s0, %s490
        %p492 = scmp.lt.s32.totalorder %s28, 1
        %s493 = scalar_select %p492, %s28, 1
        %s494 = smul.addr %s493, 2
        %s495 = scalar_lea.vmem %s1, %s494
        %p496 = scmp.lt.s32.totalorder %s28, 1
        %s497 = scalar_select %p496, %s28, 1
        %s498 = smul.addr %s497, 2
        %s499 = scalar_lea.vmem %s14, %s498
        %v500 = vld [vmem:[%s491] sm:$0xff]
        %v501 = vld [vmem:[%s3] sm:$0xff]
        %v502 = vld [vmem:[%s4] sm:$0xff]
        %504 = vset.pattern.permute.xlu0 0
        %505 = vperm.xlu0 %504, %v502
        %v506 = vpop.permute.xlu0 %505
        %v509 = vcombine.high %v500, %v500
        %vm510 = vcmask 31744
        %v512 = vsel %vm510, %v501, 0
        %vm514 = vcmask 1043456
        %v515 = vsel %vm514, %v500, 0
        %v517 = vsel %vm514, %v509, 0
        %519 = vmatprep.subr.mxu0 %v517
        %520 = vmatpush1.msra.mxu0 %v515
        %521 = vmatprep.subr.mxu0 0.0
        %522 = vmatpush1.msra.mxu0 0.0
        %523 = vmatprep.subr.mxu0 0.0
        %524 = vmatpush1.msra.mxu0 0.0
        %525 = vmatprep.subr.mxu0 0.0
        %526 = vmatpush1.msra.mxu0 0.0
        %527 = vmatprep.subr.mxu0 0.0
        %528 = vmatpush1.msra.mxu0 0.0
        %529 = vmatprep.subr.mxu0 0.0
        %530 = vmatpush1.msra.mxu0 0.0
        %531 = vmatprep.subr.mxu0 0.0
        %532 = vmatpush1.msra.mxu0 0.0
        %533 = vmatprep.subr.mxu0 0.0
        %534 = vmatpush1.msra.mxu0 0.0
        %535 = vmatprep.subr.mxu0 0.0
        %536 = vmatpush1.msra.mxu0 0.0
        %537 = vmatprep.subr.mxu0 0.0
        %538 = vmatpush1.msra.mxu0 0.0
        %539 = vmatprep.subr.mxu0 0.0
        %540 = vmatpush1.msra.mxu0 0.0
        %541 = vmatprep.subr.mxu0 0.0
        %542 = vmatpush1.msra.mxu0 0.0
        %543 = vmatprep.subr.mxu0 0.0
        %544 = vmatpush1.msra.mxu0 0.0
        %545 = vmatprep.subr.mxu0 0.0
        %546 = vmatpush1.msra.mxu0 0.0
        %547 = vmatprep.subr.mxu0 0.0
        %548 = vmatpush1.msra.mxu0 0.0
        %549 = vmatprep.subr.mxu0 0.0
        %550 = vmatpush1.msra.mxu0 0.0
        %551 = vmatprep.subr.mxu0 0.0
        %552 = vmatpush1.msra.mxu0 0.0
        %553 = vmatprep.subr.mxu0 0.0
        %554 = vmatpush1.msra.mxu0 0.0
        %555 = vmatprep.subr.mxu0 0.0
        %556 = vmatpush1.msra.mxu0 0.0
        %557 = vmatprep.subr.mxu0 0.0
        %558 = vmatpush1.msra.mxu0 0.0
        %559 = vmatprep.subr.mxu0 0.0
        %560 = vmatpush1.msra.mxu0 0.0
        %561 = vmatprep.subr.mxu0 0.0
        %562 = vmatpush1.msra.mxu0 0.0
        %563 = vmatprep.subr.mxu0 0.0
        %564 = vmatpush1.msra.mxu0 0.0
        %565 = vmatprep.subr.mxu0 0.0
        %566 = vmatpush1.msra.mxu0 0.0
        %567 = vmatprep.subr.mxu0 0.0
        %568 = vmatpush1.msra.mxu0 0.0
        %569 = vmatprep.subr.mxu0 0.0
        %570 = vmatpush1.msra.mxu0 0.0
        %571 = vmatprep.subr.mxu0 0.0
        %572 = vmatpush1.msra.mxu0 0.0
        %573 = vmatprep.subr.mxu0 0.0
        %574 = vmatpush1.msra.mxu0 0.0
        %575 = vmatprep.subr.mxu0 0.0
        %576 = vmatpush1.msra.mxu0 0.0
        %577 = vmatprep.subr.mxu0 0.0
        %578 = vmatpush1.msra.mxu0 0.0
        %579 = vmatprep.subr.mxu0 0.0
        %580 = vmatpush1.msra.mxu0 0.0
        %581 = vmatprep.subr.mxu0 0.0
        %582 = vmatpush1.msra.mxu0 0.0
        %583 = vmatprep.mubr.f32.mxu0 0.0
        %584 = vmatmul.mubr.f32.gmra.mrb[0].mxu0 %v512
        %v585 = vpop.f32.mrb[0].mxu0
        %v586 = vadd.f32 %v506, %v585
        %v587 = vpop.f32.mrb[0].mxu0
        %v588 = vadd.f32 %v506, %v587
        %589 = vdwg.mxu0
        %v590 = vld [vmem:[%s495] sm:$0x3]
        %v591 = vsub.f32 0.0, %v590
        %v592 = vmul.f32 %v591, 1.442695
        %v593 = vpow.pop %v592
        %v594 = vadd.f32 %v593, 1.0
        %v595 = vrcp.pop %v594
        %v596 = vmul.f32 1.0, %v595
        %v598 = vlaneseq
        %v599 = vshrl.u32 %v598, 7
        %v600 = vsub.s32 0, %v599
        %v601 = vrot.slane %v596, %v600
        %v602 = vlaneseq
        %v603 = vshrl.u32 %v602, 7
        %v604 = vsub.s32 1, %v603
        %v605 = vrot.slane %v596, %v604
        %v608 = vmul.f32 %v586, %v601
        %v609 = vmul.f32 %v588, %v605
        %v610 = vsub.f32 %v586, %v608
        %v611 = vsub.f32 %v588, %v609
        %v612 = vld [vmem:[%s5] sm:$0xff]
        %vm613 = vcmask 64512
        %v615 = vsel %vm613, %v612, 0
        %617 = vmatprep.subr.mxu0 %v611
        %618 = vmatpush1.msra.mxu0 %v610
        %619 = vmatprep.subr.mxu0 0.0
        %620 = vmatpush1.msra.mxu0 0.0
        %621 = vmatprep.subr.mxu0 0.0
        %622 = vmatpush1.msra.mxu0 0.0
        %623 = vmatprep.subr.mxu0 0.0
        %624 = vmatpush1.msra.mxu0 0.0
        %625 = vmatprep.subr.mxu0 0.0
        %626 = vmatpush1.msra.mxu0 0.0
        %627 = vmatprep.subr.mxu0 0.0
        %628 = vmatpush1.msra.mxu0 0.0
        %629 = vmatprep.subr.mxu0 0.0
        %630 = vmatpush1.msra.mxu0 0.0
        %631 = vmatprep.subr.mxu0 0.0
        %632 = vmatpush1.msra.mxu0 0.0
        %633 = vmatprep.subr.mxu0 0.0
        %634 = vmatpush1.msra.mxu0 0.0
        %635 = vmatprep.subr.mxu0 0.0
        %636 = vmatpush1.msra.mxu0 0.0
        %637 = vmatprep.subr.mxu0 0.0
        %638 = vmatpush1.msra.mxu0 0.0
        %639 = vmatprep.subr.mxu0 0.0
        %640 = vmatpush1.msra.mxu0 0.0
        %641 = vmatprep.subr.mxu0 0.0
        %642 = vmatpush1.msra.mxu0 0.0
        %643 = vmatprep.subr.mxu0 0.0
        %644 = vmatpush1.msra.mxu0 0.0
        %645 = vmatprep.subr.mxu0 0.0
        %646 = vmatpush1.msra.mxu0 0.0
        %647 = vmatprep.subr.mxu0 0.0
        %648 = vmatpush1.msra.mxu0 0.0
        %649 = vmatprep.subr.mxu0 0.0
        %650 = vmatpush1.msra.mxu0 0.0
        %651 = vmatprep.subr.mxu0 0.0
        %652 = vmatpush1.msra.mxu0 0.0
        %653 = vmatprep.subr.mxu0 0.0
        %654 = vmatpush1.msra.mxu0 0.0
        %655 = vmatprep.subr.mxu0 0.0
        %656 = vmatpush1.msra.mxu0 0.0
        %657 = vmatprep.subr.mxu0 0.0
        %658 = vmatpush1.msra.mxu0 0.0
        %659 = vmatprep.subr.mxu0 0.0
        %660 = vmatpush1.msra.mxu0 0.0
        %661 = vmatprep.subr.mxu0 0.0
        %662 = vmatpush1.msra.mxu0 0.0
        %663 = vmatprep.subr.mxu0 0.0
        %664 = vmatpush1.msra.mxu0 0.0
        %665 = vmatprep.subr.mxu0 0.0
        %666 = vmatpush1.msra.mxu0 0.0
        %667 = vmatprep.subr.mxu0 0.0
        %668 = vmatpush1.msra.mxu0 0.0
        %669 = vmatprep.subr.mxu0 0.0
        %670 = vmatpush1.msra.mxu0 0.0
        %671 = vmatprep.subr.mxu0 0.0
        %672 = vmatpush1.msra.mxu0 0.0
        %673 = vmatprep.subr.mxu0 0.0
        %674 = vmatpush1.msra.mxu0 0.0
        %675 = vmatprep.subr.mxu0 0.0
        %676 = vmatpush1.msra.mxu0 0.0
        %677 = vmatprep.subr.mxu0 0.0
        %678 = vmatpush1.msra.mxu0 0.0
        %679 = vmatprep.subr.mxu0 0.0
        %680 = vmatpush1.msra.mxu0 0.0
        %681 = vmatprep.mubr.f32.mxu0 0.0
        %682 = vmatmul.mubr.f32.gmra.mrb[0].mxu0 %v615
        %v683 = vpop.f32.mrb[0].mxu0
        %v684 = vadd.f32 0.0, %v683
        %v685 = vpop.f32.mrb[0].mxu0
        %v686 = vadd.f32 0.0, %v685
        %687 = vdwg.mxu0
        %v688 = vld [vmem:[#allocation3] sm:$0xff]
        %v689 = vld [vmem:[#allocation3 + $0x8] sm:$0xff]
        %v690 = vld [vmem:[#allocation3 + $0x10] sm:$0xff]
        %v691 = vld [vmem:[#allocation3 + $0x18] sm:$0xff]
        %v692 = vld [vmem:[#allocation3 + $0x20] sm:$0xff]
        %v693 = vld [vmem:[#allocation3 + $0x28] sm:$0xff]
        %v694 = vld [vmem:[#allocation3 + $0x30] sm:$0xff]
        %v695 = vld [vmem:[#allocation3 + $0x38] sm:$0xff]
        %v696 = vld [vmem:[#allocation3 + $0x40] sm:$0xff]
        %v697 = vld [vmem:[#allocation3 + $0x48] sm:$0xff]
        %v698 = vld [vmem:[#allocation3 + $0x50] sm:$0xff]
        %v699 = vld [vmem:[#allocation3 + $0x58] sm:$0xff]
        %v700 = vld [vmem:[#allocation3 + $0x60] sm:$0xff]
        %v701 = vld [vmem:[#allocation3 + $0x68] sm:$0xff]
        %v702 = vld [vmem:[#allocation3 + $0x70] sm:$0xff]
        %v703 = vld [vmem:[#allocation3 + $0x78] sm:$0xff]
        %v704 = vld [vmem:[#allocation3 + $0x80] sm:$0xff]
        %v705 = vld [vmem:[#allocation3 + $0x88] sm:$0xff]
        %v706 = vld [vmem:[#allocation3 + $0x90] sm:$0xff]
        %v707 = vld [vmem:[#allocation3 + $0x98] sm:$0xff]
        %v708 = vld [vmem:[#allocation3 + $0xa0] sm:$0xff]
        %v709 = vld [vmem:[#allocation3 + $0xa8] sm:$0xff]
        %v710 = vld [vmem:[#allocation3 + $0xb0] sm:$0xff]
        %v711 = vld [vmem:[#allocation3 + $0xb8] sm:$0xff]
        %v712 = vld [vmem:[#allocation3 + $0xc0] sm:$0xff]
        %v713 = vld [vmem:[#allocation3 + $0xc8] sm:$0xff]
        %v714 = vld [vmem:[#allocation3 + $0xd0] sm:$0xff]
        %v715 = vld [vmem:[#allocation3 + $0xd8] sm:$0xff]
        %v716 = vld [vmem:[#allocation3 + $0xe0] sm:$0xff]
        %v717 = vld [vmem:[#allocation3 + $0xe8] sm:$0xff]
        %v718 = vld [vmem:[#allocation3 + $0xf0] sm:$0xff]
        %v719 = vld [vmem:[#allocation3 + $0xf8] sm:$0xff]
        %v720 = vld [vmem:[#allocation3 + $0x100] sm:$0xff]
        %v721 = vld [vmem:[#allocation3 + $0x108] sm:$0xff]
        %v722 = vld [vmem:[#allocation3 + $0x110] sm:$0xff]
        %v723 = vld [vmem:[#allocation3 + $0x118] sm:$0xff]
        %v724 = vld [vmem:[#allocation3 + $0x120] sm:$0xff]
        %v725 = vld [vmem:[#allocation3 + $0x128] sm:$0xff]
        %v726 = vld [vmem:[#allocation3 + $0x130] sm:$0xff]
        %v727 = vld [vmem:[#allocation3 + $0x138] sm:$0xff]
        %v728 = vld [vmem:[#allocation3 + $0x140] sm:$0xff]
        %v729 = vld [vmem:[#allocation3 + $0x148] sm:$0xff]
        %v730 = vld [vmem:[#allocation3 + $0x150] sm:$0xff]
        %v731 = vld [vmem:[#allocation3 + $0x158] sm:$0xff]
        %v732 = vld [vmem:[#allocation3 + $0x160] sm:$0xff]
        %v733 = vld [vmem:[#allocation3 + $0x168] sm:$0xff]
        %v734 = vld [vmem:[#allocation3 + $0x170] sm:$0xff]
        %v735 = vld [vmem:[#allocation3 + $0x178] sm:$0xff]
        %v736 = vld [vmem:[#allocation3 + $0x180] sm:$0xff]
        %v737 = vld [vmem:[#allocation3 + $0x188] sm:$0xff]
        %v738 = vld [vmem:[#allocation3 + $0x190] sm:$0xff]
        %v739 = vld [vmem:[#allocation3 + $0x198] sm:$0xff]
        %v740 = vld [vmem:[#allocation3 + $0x1a0] sm:$0xff]
        %v741 = vld [vmem:[#allocation3 + $0x1a8] sm:$0xff]
        %v742 = vld [vmem:[#allocation3 + $0x1b0] sm:$0xff]
        %v743 = vld [vmem:[#allocation3 + $0x1b8] sm:$0xff]
        %v744 = vld [vmem:[#allocation3 + $0x1c0] sm:$0xff]
        %v745 = vld [vmem:[#allocation3 + $0x1c8] sm:$0xff]
        %v746 = vld [vmem:[#allocation3 + $0x1d0] sm:$0xff]
        %v747 = vld [vmem:[#allocation3 + $0x1d8] sm:$0xff]
        %v748 = vld [vmem:[#allocation3 + $0x1e0] sm:$0xff]
        %v749 = vld [vmem:[#allocation3 + $0x1e8] sm:$0xff]
        %v750 = vld [vmem:[#allocation3 + $0x1f0] sm:$0xff]
        %v751 = vld [vmem:[#allocation3 + $0x1f8] sm:$0xff]
        %s752 = scalar_lea.vmem %s5, 8
        %v753 = vld [vmem:[%s752] sm:$0xff]
        %v755 = vsel %vm613, %v753, 0
        %757 = vmatprep.subr.mxu0 %v611
        %758 = vmatpush1.msra.mxu0 %v610
        %759 = vmatprep.subr.mxu0 0.0
        %760 = vmatpush1.msra.mxu0 0.0
        %761 = vmatprep.subr.mxu0 0.0
        %762 = vmatpush1.msra.mxu0 0.0
        %763 = vmatprep.subr.mxu0 0.0
        %764 = vmatpush1.msra.mxu0 0.0
        %765 = vmatprep.subr.mxu0 0.0
        %766 = vmatpush1.msra.mxu0 0.0
        %767 = vmatprep.subr.mxu0 0.0
        %768 = vmatpush1.msra.mxu0 0.0
        %769 = vmatprep.subr.mxu0 0.0
        %770 = vmatpush1.msra.mxu0 0.0
        %771 = vmatprep.subr.mxu0 0.0
        %772 = vmatpush1.msra.mxu0 0.0
        %773 = vmatprep.subr.mxu0 0.0
        %774 = vmatpush1.msra.mxu0 0.0
        %775 = vmatprep.subr.mxu0 0.0
        %776 = vmatpush1.msra.mxu0 0.0
        %777 = vmatprep.subr.mxu0 0.0
        %778 = vmatpush1.msra.mxu0 0.0
        %779 = vmatprep.subr.mxu0 0.0
        %780 = vmatpush1.msra.mxu0 0.0
        %781 = vmatprep.subr.mxu0 0.0
        %782 = vmatpush1.msra.mxu0 0.0
        %783 = vmatprep.subr.mxu0 0.0
        %784 = vmatpush1.msra.mxu0 0.0
        %785 = vmatprep.subr.mxu0 0.0
        %786 = vmatpush1.msra.mxu0 0.0
        %787 = vmatprep.subr.mxu0 0.0
        %788 = vmatpush1.msra.mxu0 0.0
        %789 = vmatprep.subr.mxu0 0.0
        %790 = vmatpush1.msra.mxu0 0.0
        %791 = vmatprep.subr.mxu0 0.0
        %792 = vmatpush1.msra.mxu0 0.0
        %793 = vmatprep.subr.mxu0 0.0
        %794 = vmatpush1.msra.mxu0 0.0
        %795 = vmatprep.subr.mxu0 0.0
        %796 = vmatpush1.msra.mxu0 0.0
        %797 = vmatprep.subr.mxu0 0.0
        %798 = vmatpush1.msra.mxu0 0.0
        %799 = vmatprep.subr.mxu0 0.0
        %800 = vmatpush1.msra.mxu0 0.0
        %801 = vmatprep.subr.mxu0 0.0
        %802 = vmatpush1.msra.mxu0 0.0
        %803 = vmatprep.subr.mxu0 0.0
        %804 = vmatpush1.msra.mxu0 0.0
        %805 = vmatprep.subr.mxu0 0.0
        %806 = vmatpush1.msra.mxu0 0.0
        %807 = vmatprep.subr.mxu0 0.0
        %808 = vmatpush1.msra.mxu0 0.0
        %809 = vmatprep.subr.mxu0 0.0
        %810 = vmatpush1.msra.mxu0 0.0
        %811 = vmatprep.subr.mxu0 0.0
        %812 = vmatpush1.msra.mxu0 0.0
        %813 = vmatprep.subr.mxu0 0.0
        %814 = vmatpush1.msra.mxu0 0.0
        %815 = vmatprep.subr.mxu0 0.0
        %816 = vmatpush1.msra.mxu0 0.0
        %817 = vmatprep.subr.mxu0 0.0
        %818 = vmatpush1.msra.mxu0 0.0
        %819 = vmatprep.subr.mxu0 0.0
        %820 = vmatpush1.msra.mxu0 0.0
        %821 = vmatprep.mubr.f32.mxu0 0.0
        %822 = vmatmul.mubr.f32.gmra.mrb[0].mxu0 %v755
        %v823 = vpop.f32.mrb[0].mxu0
        %v824 = vadd.f32 0.0, %v823
        %v825 = vpop.f32.mrb[0].mxu0
        %v826 = vadd.f32 0.0, %v825
        %827 = vdwg.mxu0
        %s828 = scalar_lea.vmem [#allocation3], 512
        %v829 = vld [vmem:[%s828] sm:$0xff]
        %v830 = vld [vmem:[%s828 + $0x8] sm:$0xff]
        %v831 = vld [vmem:[%s828 + $0x10] sm:$0xff]
        %v832 = vld [vmem:[%s828 + $0x18] sm:$0xff]
        %v833 = vld [vmem:[%s828 + $0x20] sm:$0xff]
        %v834 = vld [vmem:[%s828 + $0x28] sm:$0xff]
        %v835 = vld [vmem:[%s828 + $0x30] sm:$0xff]
        %v836 = vld [vmem:[%s828 + $0x38] sm:$0xff]
        %v837 = vld [vmem:[%s828 + $0x40] sm:$0xff]
        %v838 = vld [vmem:[%s828 + $0x48] sm:$0xff]
        %v839 = vld [vmem:[%s828 + $0x50] sm:$0xff]
        %v840 = vld [vmem:[%s828 + $0x58] sm:$0xff]
        %v841 = vld [vmem:[%s828 + $0x60] sm:$0xff]
        %v842 = vld [vmem:[%s828 + $0x68] sm:$0xff]
        %v843 = vld [vmem:[%s828 + $0x70] sm:$0xff]
        %v844 = vld [vmem:[%s828 + $0x78] sm:$0xff]
        %v845 = vld [vmem:[%s828 + $0x80] sm:$0xff]
        %v846 = vld [vmem:[%s828 + $0x88] sm:$0xff]
        %v847 = vld [vmem:[%s828 + $0x90] sm:$0xff]
        %v848 = vld [vmem:[%s828 + $0x98] sm:$0xff]
        %v849 = vld [vmem:[%s828 + $0xa0] sm:$0xff]
        %v850 = vld [vmem:[%s828 + $0xa8] sm:$0xff]
        %v851 = vld [vmem:[%s828 + $0xb0] sm:$0xff]
        %v852 = vld [vmem:[%s828 + $0xb8] sm:$0xff]
        %v853 = vld [vmem:[%s828 + $0xc0] sm:$0xff]
        %v854 = vld [vmem:[%s828 + $0xc8] sm:$0xff]
        %v855 = vld [vmem:[%s828 + $0xd0] sm:$0xff]
        %v856 = vld [vmem:[%s828 + $0xd8] sm:$0xff]
        %v857 = vld [vmem:[%s828 + $0xe0] sm:$0xff]
        %v858 = vld [vmem:[%s828 + $0xe8] sm:$0xff]
        %v859 = vld [vmem:[%s828 + $0xf0] sm:$0xff]
        %v860 = vld [vmem:[%s828 + $0xf8] sm:$0xff]
        %v861 = vld [vmem:[%s828 + $0x100] sm:$0xff]
        %v862 = vld [vmem:[%s828 + $0x108] sm:$0xff]
        %v863 = vld [vmem:[%s828 + $0x110] sm:$0xff]
        %v864 = vld [vmem:[%s828 + $0x118] sm:$0xff]
        %v865 = vld [vmem:[%s828 + $0x120] sm:$0xff]
        %v866 = vld [vmem:[%s828 + $0x128] sm:$0xff]
        %v867 = vld [vmem:[%s828 + $0x130] sm:$0xff]
        %v868 = vld [vmem:[%s828 + $0x138] sm:$0xff]
        %v869 = vld [vmem:[%s828 + $0x140] sm:$0xff]
        %v870 = vld [vmem:[%s828 + $0x148] sm:$0xff]
        %v871 = vld [vmem:[%s828 + $0x150] sm:$0xff]
        %v872 = vld [vmem:[%s828 + $0x158] sm:$0xff]
        %v873 = vld [vmem:[%s828 + $0x160] sm:$0xff]
        %v874 = vld [vmem:[%s828 + $0x168] sm:$0xff]
        %v875 = vld [vmem:[%s828 + $0x170] sm:$0xff]
        %v876 = vld [vmem:[%s828 + $0x178] sm:$0xff]
        %v877 = vld [vmem:[%s828 + $0x180] sm:$0xff]
        %v878 = vld [vmem:[%s828 + $0x188] sm:$0xff]
        %v879 = vld [vmem:[%s828 + $0x190] sm:$0xff]
        %v880 = vld [vmem:[%s828 + $0x198] sm:$0xff]
        %v881 = vld [vmem:[%s828 + $0x1a0] sm:$0xff]
        %v882 = vld [vmem:[%s828 + $0x1a8] sm:$0xff]
        %v883 = vld [vmem:[%s828 + $0x1b0] sm:$0xff]
        %v884 = vld [vmem:[%s828 + $0x1b8] sm:$0xff]
        %v885 = vld [vmem:[%s828 + $0x1c0] sm:$0xff]
        %v886 = vld [vmem:[%s828 + $0x1c8] sm:$0xff]
        %v887 = vld [vmem:[%s828 + $0x1d0] sm:$0xff]
        %v888 = vld [vmem:[%s828 + $0x1d8] sm:$0xff]
        %v889 = vld [vmem:[%s828 + $0x1e0] sm:$0xff]
        %v890 = vld [vmem:[%s828 + $0x1e8] sm:$0xff]
        %v891 = vld [vmem:[%s828 + $0x1f0] sm:$0xff]
        %v892 = vld [vmem:[%s828 + $0x1f8] sm:$0xff]
        %893 = vmatprep.subr.mxu0 %v830
        %894 = vmatpush1.msra.mxu0 %v829
        %895 = vmatprep.subr.mxu0 %v832
        %896 = vmatpush1.msra.mxu0 %v831
        %897 = vmatprep.subr.mxu0 %v834
        %898 = vmatpush1.msra.mxu0 %v833
        %899 = vmatprep.subr.mxu0 %v836
        %900 = vmatpush1.msra.mxu0 %v835
        %901 = vmatprep.subr.mxu0 %v838
        %902 = vmatpush1.msra.mxu0 %v837
        %903 = vmatprep.subr.mxu0 %v840
        %904 = vmatpush1.msra.mxu0 %v839
        %905 = vmatprep.subr.mxu0 %v842
        %906 = vmatpush1.msra.mxu0 %v841
        %907 = vmatprep.subr.mxu0 %v844
        %908 = vmatpush1.msra.mxu0 %v843
        %909 = vmatprep.subr.mxu0 %v846
        %910 = vmatpush1.msra.mxu0 %v845
        %911 = vmatprep.subr.mxu0 %v848
        %912 = vmatpush1.msra.mxu0 %v847
        %913 = vmatprep.subr.mxu0 %v850
        %914 = vmatpush1.msra.mxu0 %v849
        %915 = vmatprep.subr.mxu0 %v852
        %916 = vmatpush1.msra.mxu0 %v851
        %917 = vmatprep.subr.mxu0 %v854
        %918 = vmatpush1.msra.mxu0 %v853
        %919 = vmatprep.subr.mxu0 %v856
        %920 = vmatpush1.msra.mxu0 %v855
        %921 = vmatprep.subr.mxu0 %v858
        %922 = vmatpush1.msra.mxu0 %v857
        %923 = vmatprep.subr.mxu0 %v860
        %924 = vmatpush1.msra.mxu0 %v859
        %925 = vmatprep.subr.mxu0 %v862
        %926 = vmatpush1.msra.mxu0 %v861
        %927 = vmatprep.subr.mxu0 %v864
        %928 = vmatpush1.msra.mxu0 %v863
        %929 = vmatprep.subr.mxu0 %v866
        %930 = vmatpush1.msra.mxu0 %v865
        %931 = vmatprep.subr.mxu0 %v868
        %932 = vmatpush1.msra.mxu0 %v867
        %933 = vmatprep.subr.mxu0 %v870
        %934 = vmatpush1.msra.mxu0 %v869
        %935 = vmatprep.subr.mxu0 %v872
        %936 = vmatpush1.msra.mxu0 %v871
        %937 = vmatprep.subr.mxu0 %v874
        %938 = vmatpush1.msra.mxu0 %v873
        %939 = vmatprep.subr.mxu0 %v876
        %940 = vmatpush1.msra.mxu0 %v875
        %941 = vmatprep.subr.mxu0 %v878
        %942 = vmatpush1.msra.mxu0 %v877
        %943 = vmatprep.subr.mxu0 %v880
        %944 = vmatpush1.msra.mxu0 %v879
        %945 = vmatprep.subr.mxu0 %v882
        %946 = vmatpush1.msra.mxu0 %v881
        %947 = vmatprep.subr.mxu0 %v884
        %948 = vmatpush1.msra.mxu0 %v883
        %949 = vmatprep.subr.mxu0 %v886
        %950 = vmatpush1.msra.mxu0 %v885
        %951 = vmatprep.subr.mxu0 %v888
        %952 = vmatpush1.msra.mxu0 %v887
        %953 = vmatprep.subr.mxu0 %v890
        %954 = vmatpush1.msra.mxu0 %v889
        %955 = vmatprep.subr.mxu0 %v892
        %956 = vmatpush1.msra.mxu0 %v891
        %957 = vmatprep.mubr.f32.mxu0 %v826
        %958 = vmatmul.mubr.f32.gmra.mrb[0].mxu0 %v824
        %v959 = vpop.f32.mrb[0].mxu0
        %v960 = vadd.f32 0.0, %v959
        %v961 = vpop.f32.mrb[0].mxu0
        %v962 = vadd.f32 0.0, %v961
        %963 = vdwg.mxu0
        %964 = vmatprep.subr.mxu0 %v689
        %965 = vmatpush1.msra.mxu0 %v688
        %966 = vmatprep.subr.mxu0 %v691
        %967 = vmatpush1.msra.mxu0 %v690
        %968 = vmatprep.subr.mxu0 %v693
        %969 = vmatpush1.msra.mxu0 %v692
        %970 = vmatprep.subr.mxu0 %v695
        %971 = vmatpush1.msra.mxu0 %v694
        %972 = vmatprep.subr.mxu0 %v697
        %973 = vmatpush1.msra.mxu0 %v696
        %974 = vmatprep.subr.mxu0 %v699
        %975 = vmatpush1.msra.mxu0 %v698
        %976 = vmatprep.subr.mxu0 %v701
        %977 = vmatpush1.msra.mxu0 %v700
        %978 = vmatprep.subr.mxu0 %v703
        %979 = vmatpush1.msra.mxu0 %v702
        %980 = vmatprep.subr.mxu0 %v705
        %981 = vmatpush1.msra.mxu0 %v704
        %982 = vmatprep.subr.mxu0 %v707
        %983 = vmatpush1.msra.mxu0 %v706
        %984 = vmatprep.subr.mxu0 %v709
        %985 = vmatpush1.msra.mxu0 %v708
        %986 = vmatprep.subr.mxu0 %v711
        %987 = vmatpush1.msra.mxu0 %v710
        %988 = vmatprep.subr.mxu0 %v713
        %989 = vmatpush1.msra.mxu0 %v712
        %990 = vmatprep.subr.mxu0 %v715
        %991 = vmatpush1.msra.mxu0 %v714
        %992 = vmatprep.subr.mxu0 %v717
        %993 = vmatpush1.msra.mxu0 %v716
        %994 = vmatprep.subr.mxu0 %v719
        %995 = vmatpush1.msra.mxu0 %v718
        %996 = vmatprep.subr.mxu0 %v721
        %997 = vmatpush1.msra.mxu0 %v720
        %998 = vmatprep.subr.mxu0 %v723
        %999 = vmatpush1.msra.mxu0 %v722
        %1000 = vmatprep.subr.mxu0 %v725
        %1001 = vmatpush1.msra.mxu0 %v724
        %1002 = vmatprep.subr.mxu0 %v727
        %1003 = vmatpush1.msra.mxu0 %v726
        %1004 = vmatprep.subr.mxu0 %v729
        %1005 = vmatpush1.msra.mxu0 %v728
        %1006 = vmatprep.subr.mxu0 %v731
        %1007 = vmatpush1.msra.mxu0 %v730
        %1008 = vmatprep.subr.mxu0 %v733
        %1009 = vmatpush1.msra.mxu0 %v732
        %1010 = vmatprep.subr.mxu0 %v735
        %1011 = vmatpush1.msra.mxu0 %v734
        %1012 = vmatprep.subr.mxu0 %v737
        %1013 = vmatpush1.msra.mxu0 %v736
        %1014 = vmatprep.subr.mxu0 %v739
        %1015 = vmatpush1.msra.mxu0 %v738
        %1016 = vmatprep.subr.mxu0 %v741
        %1017 = vmatpush1.msra.mxu0 %v740
        %1018 = vmatprep.subr.mxu0 %v743
        %1019 = vmatpush1.msra.mxu0 %v742
        %1020 = vmatprep.subr.mxu0 %v745
        %1021 = vmatpush1.msra.mxu0 %v744
        %1022 = vmatprep.subr.mxu0 %v747
        %1023 = vmatpush1.msra.mxu0 %v746
        %1024 = vmatprep.subr.mxu0 %v749
        %1025 = vmatpush1.msra.mxu0 %v748
        %1026 = vmatprep.subr.mxu0 %v751
        %1027 = vmatpush1.msra.mxu0 %v750
        %1028 = vmatprep.mubr.f32.mxu0 %v686
        %1029 = vmatmul.mubr.f32.gmra.mrb[0].mxu0 %v684
        %v1030 = vpop.f32.mrb[0].mxu0
        %v1031 = vadd.f32 %v960, %v1030
        %v1032 = vpop.f32.mrb[0].mxu0
        %v1033 = vadd.f32 %v962, %v1032
        %1034 = vdwg.mxu0
        %s1035 = scalar_lea.vmem %s5, 16
        %v1036 = vld [vmem:[%s1035] sm:$0xff]
        %v1038 = vsel %vm613, %v1036, 0
        %1040 = vmatprep.subr.mxu0 %v611
        %1041 = vmatpush1.msra.mxu0 %v610
        %1042 = vmatprep.subr.mxu0 0.0
        %1043 = vmatpush1.msra.mxu0 0.0
        %1044 = vmatprep.subr.mxu0 0.0
        %1045 = vmatpush1.msra.mxu0 0.0
        %1046 = vmatprep.subr.mxu0 0.0
        %1047 = vmatpush1.msra.mxu0 0.0
        %1048 = vmatprep.subr.mxu0 0.0
        %1049 = vmatpush1.msra.mxu0 0.0
        %1050 = vmatprep.subr.mxu0 0.0
        %1051 = vmatpush1.msra.mxu0 0.0
        %1052 = vmatprep.subr.mxu0 0.0
        %1053 = vmatpush1.msra.mxu0 0.0
        %1054 = vmatprep.subr.mxu0 0.0
        %1055 = vmatpush1.msra.mxu0 0.0
        %1056 = vmatprep.subr.mxu0 0.0
        %1057 = vmatpush1.msra.mxu0 0.0
        %1058 = vmatprep.subr.mxu0 0.0
        %1059 = vmatpush1.msra.mxu0 0.0
        %1060 = vmatprep.subr.mxu0 0.0
        %1061 = vmatpush1.msra.mxu0 0.0
        %1062 = vmatprep.subr.mxu0 0.0
        %1063 = vmatpush1.msra.mxu0 0.0
        %1064 = vmatprep.subr.mxu0 0.0
        %1065 = vmatpush1.msra.mxu0 0.0
        %1066 = vmatprep.subr.mxu0 0.0
        %1067 = vmatpush1.msra.mxu0 0.0
        %1068 = vmatprep.subr.mxu0 0.0
        %1069 = vmatpush1.msra.mxu0 0.0
        %1070 = vmatprep.subr.mxu0 0.0
        %1071 = vmatpush1.msra.mxu0 0.0
        %1072 = vmatprep.subr.mxu0 0.0
        %1073 = vmatpush1.msra.mxu0 0.0
        %1074 = vmatprep.subr.mxu0 0.0
        %1075 = vmatpush1.msra.mxu0 0.0
        %1076 = vmatprep.subr.mxu0 0.0
        %1077 = vmatpush1.msra.mxu0 0.0
        %1078 = vmatprep.subr.mxu0 0.0
        %1079 = vmatpush1.msra.mxu0 0.0
        %1080 = vmatprep.subr.mxu0 0.0
        %1081 = vmatpush1.msra.mxu0 0.0
        %1082 = vmatprep.subr.mxu0 0.0
        %1083 = vmatpush1.msra.mxu0 0.0
        %1084 = vmatprep.subr.mxu0 0.0
        %1085 = vmatpush1.msra.mxu0 0.0
        %1086 = vmatprep.subr.mxu0 0.0
        %1087 = vmatpush1.msra.mxu0 0.0
        %1088 = vmatprep.subr.mxu0 0.0
        %1089 = vmatpush1.msra.mxu0 0.0
        %1090 = vmatprep.subr.mxu0 0.0
        %1091 = vmatpush1.msra.mxu0 0.0
        %1092 = vmatprep.subr.mxu0 0.0
        %1093 = vmatpush1.msra.mxu0 0.0
        %1094 = vmatprep.subr.mxu0 0.0
        %1095 = vmatpush1.msra.mxu0 0.0
        %1096 = vmatprep.subr.mxu0 0.0
        %1097 = vmatpush1.msra.mxu0 0.0
        %1098 = vmatprep.subr.mxu0 0.0
        %1099 = vmatpush1.msra.mxu0 0.0
        %1100 = vmatprep.subr.mxu0 0.0
        %1101 = vmatpush1.msra.mxu0 0.0
        %1102 = vmatprep.subr.mxu0 0.0
        %1103 = vmatpush1.msra.mxu0 0.0
        %1104 = vmatprep.mubr.f32.mxu0 0.0
        %1105 = vmatmul.mubr.f32.gmra.mrb[0].mxu0 %v1038
        %v1106 = vpop.f32.mrb[0].mxu0
        %v1107 = vadd.f32 0.0, %v1106
        %v1108 = vpop.f32.mrb[0].mxu0
        %v1109 = vadd.f32 0.0, %v1108
        %1110 = vdwg.mxu0
        %s1111 = scalar_lea.vmem [#allocation3], 1024
        %v1112 = vld [vmem:[%s1111] sm:$0xff]
        %v1113 = vld [vmem:[%s1111 + $0x8] sm:$0xff]
        %v1114 = vld [vmem:[%s1111 + $0x10] sm:$0xff]
        %v1115 = vld [vmem:[%s1111 + $0x18] sm:$0xff]
        %v1116 = vld [vmem:[%s1111 + $0x20] sm:$0xff]
        %v1117 = vld [vmem:[%s1111 + $0x28] sm:$0xff]
        %v1118 = vld [vmem:[%s1111 + $0x30] sm:$0xff]
        %v1119 = vld [vmem:[%s1111 + $0x38] sm:$0xff]
        %v1120 = vld [vmem:[%s1111 + $0x40] sm:$0xff]
        %v1121 = vld [vmem:[%s1111 + $0x48] sm:$0xff]
        %v1122 = vld [vmem:[%s1111 + $0x50] sm:$0xff]
        %v1123 = vld [vmem:[%s1111 + $0x58] sm:$0xff]
        %v1124 = vld [vmem:[%s1111 + $0x60] sm:$0xff]
        %v1125 = vld [vmem:[%s1111 + $0x68] sm:$0xff]
        %v1126 = vld [vmem:[%s1111 + $0x70] sm:$0xff]
        %v1127 = vld [vmem:[%s1111 + $0x78] sm:$0xff]
        %v1128 = vld [vmem:[%s1111 + $0x80] sm:$0xff]
        %v1129 = vld [vmem:[%s1111 + $0x88] sm:$0xff]
        %v1130 = vld [vmem:[%s1111 + $0x90] sm:$0xff]
        %v1131 = vld [vmem:[%s1111 + $0x98] sm:$0xff]
        %v1132 = vld [vmem:[%s1111 + $0xa0] sm:$0xff]
        %v1133 = vld [vmem:[%s1111 + $0xa8] sm:$0xff]
        %v1134 = vld [vmem:[%s1111 + $0xb0] sm:$0xff]
        %v1135 = vld [vmem:[%s1111 + $0xb8] sm:$0xff]
        %v1136 = vld [vmem:[%s1111 + $0xc0] sm:$0xff]
        %v1137 = vld [vmem:[%s1111 + $0xc8] sm:$0xff]
        %v1138 = vld [vmem:[%s1111 + $0xd0] sm:$0xff]
        %v1139 = vld [vmem:[%s1111 + $0xd8] sm:$0xff]
        %v1140 = vld [vmem:[%s1111 + $0xe0] sm:$0xff]
        %v1141 = vld [vmem:[%s1111 + $0xe8] sm:$0xff]
        %v1142 = vld [vmem:[%s1111 + $0xf0] sm:$0xff]
        %v1143 = vld [vmem:[%s1111 + $0xf8] sm:$0xff]
        %v1144 = vld [vmem:[%s1111 + $0x100] sm:$0xff]
        %v1145 = vld [vmem:[%s1111 + $0x108] sm:$0xff]
        %v1146 = vld [vmem:[%s1111 + $0x110] sm:$0xff]
        %v1147 = vld [vmem:[%s1111 + $0x118] sm:$0xff]
        %v1148 = vld [vmem:[%s1111 + $0x120] sm:$0xff]
        %v1149 = vld [vmem:[%s1111 + $0x128] sm:$0xff]
        %v1150 = vld [vmem:[%s1111 + $0x130] sm:$0xff]
        %v1151 = vld [vmem:[%s1111 + $0x138] sm:$0xff]
        %v1152 = vld [vmem:[%s1111 + $0x140] sm:$0xff]
        %v1153 = vld [vmem:[%s1111 + $0x148] sm:$0xff]
        %v1154 = vld [vmem:[%s1111 + $0x150] sm:$0xff]
        %v1155 = vld [vmem:[%s1111 + $0x158] sm:$0xff]
        %v1156 = vld [vmem:[%s1111 + $0x160] sm:$0xff]
        %v1157 = vld [vmem:[%s1111 + $0x168] sm:$0xff]
        %v1158 = vld [vmem:[%s1111 + $0x170] sm:$0xff]
        %v1159 = vld [vmem:[%s1111 + $0x178] sm:$0xff]
        %v1160 = vld [vmem:[%s1111 + $0x180] sm:$0xff]
        %v1161 = vld [vmem:[%s1111 + $0x188] sm:$0xff]
        %v1162 = vld [vmem:[%s1111 + $0x190] sm:$0xff]
        %v1163 = vld [vmem:[%s1111 + $0x198] sm:$0xff]
        %v1164 = vld [vmem:[%s1111 + $0x1a0] sm:$0xff]
        %v1165 = vld [vmem:[%s1111 + $0x1a8] sm:$0xff]
        %v1166 = vld [vmem:[%s1111 + $0x1b0] sm:$0xff]
        %v1167 = vld [vmem:[%s1111 + $0x1b8] sm:$0xff]
        %v1168 = vld [vmem:[%s1111 + $0x1c0] sm:$0xff]
        %v1169 = vld [vmem:[%s1111 + $0x1c8] sm:$0xff]
        %v1170 = vld [vmem:[%s1111 + $0x1d0] sm:$0xff]
        %v1171 = vld [vmem:[%s1111 + $0x1d8] sm:$0xff]
        %v1172 = vld [vmem:[%s1111 + $0x1e0] sm:$0xff]
        %v1173 = vld [vmem:[%s1111 + $0x1e8] sm:$0xff]
        %v1174 = vld [vmem:[%s1111 + $0x1f0] sm:$0xff]
        %v1175 = vld [vmem:[%s1111 + $0x1f8] sm:$0xff]
        %1176 = vmatprep.subr.mxu0 %v1113
        %1177 = vmatpush1.msra.mxu0 %v1112
        %1178 = vmatprep.subr.mxu0 %v1115
        %1179 = vmatpush1.msra.mxu0 %v1114
        %1180 = vmatprep.subr.mxu0 %v1117
        %1181 = vmatpush1.msra.mxu0 %v1116
        %1182 = vmatprep.subr.mxu0 %v1119
        %1183 = vmatpush1.msra.mxu0 %v1118
        %1184 = vmatprep.subr.mxu0 %v1121
        %1185 = vmatpush1.msra.mxu0 %v1120
        %1186 = vmatprep.subr.mxu0 %v1123
        %1187 = vmatpush1.msra.mxu0 %v1122
        %1188 = vmatprep.subr.mxu0 %v1125
        %1189 = vmatpush1.msra.mxu0 %v1124
        %1190 = vmatprep.subr.mxu0 %v1127
        %1191 = vmatpush1.msra.mxu0 %v1126
        %1192 = vmatprep.subr.mxu0 %v1129
        %1193 = vmatpush1.msra.mxu0 %v1128
        %1194 = vmatprep.subr.mxu0 %v1131
        %1195 = vmatpush1.msra.mxu0 %v1130
        %1196 = vmatprep.subr.mxu0 %v1133
        %1197 = vmatpush1.msra.mxu0 %v1132
        %1198 = vmatprep.subr.mxu0 %v1135
        %1199 = vmatpush1.msra.mxu0 %v1134
        %1200 = vmatprep.subr.mxu0 %v1137
        %1201 = vmatpush1.msra.mxu0 %v1136
        %1202 = vmatprep.subr.mxu0 %v1139
        %1203 = vmatpush1.msra.mxu0 %v1138
        %1204 = vmatprep.subr.mxu0 %v1141
        %1205 = vmatpush1.msra.mxu0 %v1140
        %1206 = vmatprep.subr.mxu0 %v1143
        %1207 = vmatpush1.msra.mxu0 %v1142
        %1208 = vmatprep.subr.mxu0 %v1145
        %1209 = vmatpush1.msra.mxu0 %v1144
        %1210 = vmatprep.subr.mxu0 %v1147
        %1211 = vmatpush1.msra.mxu0 %v1146
        %1212 = vmatprep.subr.mxu0 %v1149
        %1213 = vmatpush1.msra.mxu0 %v1148
        %1214 = vmatprep.subr.mxu0 %v1151
        %1215 = vmatpush1.msra.mxu0 %v1150
        %1216 = vmatprep.subr.mxu0 %v1153
        %1217 = vmatpush1.msra.mxu0 %v1152
        %1218 = vmatprep.subr.mxu0 %v1155
        %1219 = vmatpush1.msra.mxu0 %v1154
        %1220 = vmatprep.subr.mxu0 %v1157
        %1221 = vmatpush1.msra.mxu0 %v1156
        %1222 = vmatprep.subr.mxu0 %v1159
        %1223 = vmatpush1.msra.mxu0 %v1158
        %1224 = vmatprep.subr.mxu0 %v1161
        %1225 = vmatpush1.msra.mxu0 %v1160
        %1226 = vmatprep.subr.mxu0 %v1163
        %1227 = vmatpush1.msra.mxu0 %v1162
        %1228 = vmatprep.subr.mxu0 %v1165
        %1229 = vmatpush1.msra.mxu0 %v1164
        %1230 = vmatprep.subr.mxu0 %v1167
        %1231 = vmatpush1.msra.mxu0 %v1166
        %1232 = vmatprep.subr.mxu0 %v1169
        %1233 = vmatpush1.msra.mxu0 %v1168
        %1234 = vmatprep.subr.mxu0 %v1171
        %1235 = vmatpush1.msra.mxu0 %v1170
        %1236 = vmatprep.subr.mxu0 %v1173
        %1237 = vmatpush1.msra.mxu0 %v1172
        %1238 = vmatprep.subr.mxu0 %v1175
        %1239 = vmatpush1.msra.mxu0 %v1174
        %1240 = vmatprep.mubr.f32.mxu0 %v1109
        %1241 = vmatmul.mubr.f32.gmra.mrb[0].mxu0 %v1107
        %v1242 = vpop.f32.mrb[0].mxu0
        %v1243 = vadd.f32 0.0, %v1242
        %v1244 = vpop.f32.mrb[0].mxu0
        %v1245 = vadd.f32 0.0, %v1244
        %1246 = vdwg.mxu0
        %v1247 = vadd.f32 %v1031, %v1243
        %v1248 = vadd.f32 %v1033, %v1245
        %s1249 = scalar_lea.vmem %s5, 24
        %v1250 = vld [vmem:[%s1249] sm:$0xff]
        %v1252 = vsel %vm613, %v1250, 0
        %1254 = vmatprep.subr.mxu0 %v611
        %1255 = vmatpush1.msra.mxu0 %v610
        %1256 = vmatprep.subr.mxu0 0.0
        %1257 = vmatpush1.msra.mxu0 0.0
        %1258 = vmatprep.subr.mxu0 0.0
        %1259 = vmatpush1.msra.mxu0 0.0
        %1260 = vmatprep.subr.mxu0 0.0
        %1261 = vmatpush1.msra.mxu0 0.0
        %1262 = vmatprep.subr.mxu0 0.0
        %1263 = vmatpush1.msra.mxu0 0.0
        %1264 = vmatprep.subr.mxu0 0.0
        %1265 = vmatpush1.msra.mxu0 0.0
        %1266 = vmatprep.subr.mxu0 0.0
        %1267 = vmatpush1.msra.mxu0 0.0
        %1268 = vmatprep.subr.mxu0 0.0
        %1269 = vmatpush1.msra.mxu0 0.0
        %1270 = vmatprep.subr.mxu0 0.0
        %1271 = vmatpush1.msra.mxu0 0.0
        %1272 = vmatprep.subr.mxu0 0.0
        %1273 = vmatpush1.msra.mxu0 0.0
        %1274 = vmatprep.subr.mxu0 0.0
        %1275 = vmatpush1.msra.mxu0 0.0
        %1276 = vmatprep.subr.mxu0 0.0
        %1277 = vmatpush1.msra.mxu0 0.0
        %1278 = vmatprep.subr.mxu0 0.0
        %1279 = vmatpush1.msra.mxu0 0.0
        %1280 = vmatprep.subr.mxu0 0.0
        %1281 = vmatpush1.msra.mxu0 0.0
        %1282 = vmatprep.subr.mxu0 0.0
        %1283 = vmatpush1.msra.mxu0 0.0
        %1284 = vmatprep.subr.mxu0 0.0
        %1285 = vmatpush1.msra.mxu0 0.0
        %1286 = vmatprep.subr.mxu0 0.0
        %1287 = vmatpush1.msra.mxu0 0.0
        %1288 = vmatprep.subr.mxu0 0.0
        %1289 = vmatpush1.msra.mxu0 0.0
        %1290 = vmatprep.subr.mxu0 0.0
        %1291 = vmatpush1.msra.mxu0 0.0
        %1292 = vmatprep.subr.mxu0 0.0
        %1293 = vmatpush1.msra.mxu0 0.0
        %1294 = vmatprep.subr.mxu0 0.0
        %1295 = vmatpush1.msra.mxu0 0.0
        %1296 = vmatprep.subr.mxu0 0.0
        %1297 = vmatpush1.msra.mxu0 0.0
        %1298 = vmatprep.subr.mxu0 0.0
        %1299 = vmatpush1.msra.mxu0 0.0
        %1300 = vmatprep.subr.mxu0 0.0
        %1301 = vmatpush1.msra.mxu0 0.0
        %1302 = vmatprep.subr.mxu0 0.0
        %1303 = vmatpush1.msra.mxu0 0.0
        %1304 = vmatprep.subr.mxu0 0.0
        %1305 = vmatpush1.msra.mxu0 0.0
        %1306 = vmatprep.subr.mxu0 0.0
        %1307 = vmatpush1.msra.mxu0 0.0
        %1308 = vmatprep.subr.mxu0 0.0
        %1309 = vmatpush1.msra.mxu0 0.0
        %1310 = vmatprep.subr.mxu0 0.0
        %1311 = vmatpush1.msra.mxu0 0.0
        %1312 = vmatprep.subr.mxu0 0.0
        %1313 = vmatpush1.msra.mxu0 0.0
        %1314 = vmatprep.subr.mxu0 0.0
        %1315 = vmatpush1.msra.mxu0 0.0
        %1316 = vmatprep.subr.mxu0 0.0
        %1317 = vmatpush1.msra.mxu0 0.0
        %1318 = vmatprep.mubr.f32.mxu0 0.0
        %1319 = vmatmul.mubr.f32.gmra.mrb[0].mxu0 %v1252
        %v1320 = vpop.f32.mrb[0].mxu0
        %v1321 = vadd.f32 0.0, %v1320
        %v1322 = vpop.f32.mrb[0].mxu0
        %v1323 = vadd.f32 0.0, %v1322
        %1324 = vdwg.mxu0
        %s1325 = scalar_lea.vmem [#allocation3], 1536
        %v1326 = vld [vmem:[%s1325] sm:$0xff]
        %v1327 = vld [vmem:[%s1325 + $0x8] sm:$0xff]
        %v1328 = vld [vmem:[%s1325 + $0x10] sm:$0xff]
        %v1329 = vld [vmem:[%s1325 + $0x18] sm:$0xff]
        %v1330 = vld [vmem:[%s1325 + $0x20] sm:$0xff]
        %v1331 = vld [vmem:[%s1325 + $0x28] sm:$0xff]
        %v1332 = vld [vmem:[%s1325 + $0x30] sm:$0xff]
        %v1333 = vld [vmem:[%s1325 + $0x38] sm:$0xff]
        %v1334 = vld [vmem:[%s1325 + $0x40] sm:$0xff]
        %v1335 = vld [vmem:[%s1325 + $0x48] sm:$0xff]
        %v1336 = vld [vmem:[%s1325 + $0x50] sm:$0xff]
        %v1337 = vld [vmem:[%s1325 + $0x58] sm:$0xff]
        %v1338 = vld [vmem:[%s1325 + $0x60] sm:$0xff]
        %v1339 = vld [vmem:[%s1325 + $0x68] sm:$0xff]
        %v1340 = vld [vmem:[%s1325 + $0x70] sm:$0xff]
        %v1341 = vld [vmem:[%s1325 + $0x78] sm:$0xff]
        %v1342 = vld [vmem:[%s1325 + $0x80] sm:$0xff]
        %v1343 = vld [vmem:[%s1325 + $0x88] sm:$0xff]
        %v1344 = vld [vmem:[%s1325 + $0x90] sm:$0xff]
        %v1345 = vld [vmem:[%s1325 + $0x98] sm:$0xff]
        %v1346 = vld [vmem:[%s1325 + $0xa0] sm:$0xff]
        %v1347 = vld [vmem:[%s1325 + $0xa8] sm:$0xff]
        %v1348 = vld [vmem:[%s1325 + $0xb0] sm:$0xff]
        %v1349 = vld [vmem:[%s1325 + $0xb8] sm:$0xff]
        %v1350 = vld [vmem:[%s1325 + $0xc0] sm:$0xff]
        %v1351 = vld [vmem:[%s1325 + $0xc8] sm:$0xff]
        %v1352 = vld [vmem:[%s1325 + $0xd0] sm:$0xff]
        %v1353 = vld [vmem:[%s1325 + $0xd8] sm:$0xff]
        %v1354 = vld [vmem:[%s1325 + $0xe0] sm:$0xff]
        %v1355 = vld [vmem:[%s1325 + $0xe8] sm:$0xff]
        %v1356 = vld [vmem:[%s1325 + $0xf0] sm:$0xff]
        %v1357 = vld [vmem:[%s1325 + $0xf8] sm:$0xff]
        %v1358 = vld [vmem:[%s1325 + $0x100] sm:$0xff]
        %v1359 = vld [vmem:[%s1325 + $0x108] sm:$0xff]
        %v1360 = vld [vmem:[%s1325 + $0x110] sm:$0xff]
        %v1361 = vld [vmem:[%s1325 + $0x118] sm:$0xff]
        %v1362 = vld [vmem:[%s1325 + $0x120] sm:$0xff]
        %v1363 = vld [vmem:[%s1325 + $0x128] sm:$0xff]
        %v1364 = vld [vmem:[%s1325 + $0x130] sm:$0xff]
        %v1365 = vld [vmem:[%s1325 + $0x138] sm:$0xff]
        %v1366 = vld [vmem:[%s1325 + $0x140] sm:$0xff]
        %v1367 = vld [vmem:[%s1325 + $0x148] sm:$0xff]
        %v1368 = vld [vmem:[%s1325 + $0x150] sm:$0xff]
        %v1369 = vld [vmem:[%s1325 + $0x158] sm:$0xff]
        %v1370 = vld [vmem:[%s1325 + $0x160] sm:$0xff]
        %v1371 = vld [vmem:[%s1325 + $0x168] sm:$0xff]
        %v1372 = vld [vmem:[%s1325 + $0x170] sm:$0xff]
        %v1373 = vld [vmem:[%s1325 + $0x178] sm:$0xff]
        %v1374 = vld [vmem:[%s1325 + $0x180] sm:$0xff]
        %v1375 = vld [vmem:[%s1325 + $0x188] sm:$0xff]
        %v1376 = vld [vmem:[%s1325 + $0x190] sm:$0xff]
        %v1377 = vld [vmem:[%s1325 + $0x198] sm:$0xff]
        %v1378 = vld [vmem:[%s1325 + $0x1a0] sm:$0xff]
        %v1379 = vld [vmem:[%s1325 + $0x1a8] sm:$0xff]
        %v1380 = vld [vmem:[%s1325 + $0x1b0] sm:$0xff]
        %v1381 = vld [vmem:[%s1325 + $0x1b8] sm:$0xff]
        %v1382 = vld [vmem:[%s1325 + $0x1c0] sm:$0xff]
        %v1383 = vld [vmem:[%s1325 + $0x1c8] sm:$0xff]
        %v1384 = vld [vmem:[%s1325 + $0x1d0] sm:$0xff]
        %v1385 = vld [vmem:[%s1325 + $0x1d8] sm:$0xff]
        %v1386 = vld [vmem:[%s1325 + $0x1e0] sm:$0xff]
        %v1387 = vld [vmem:[%s1325 + $0x1e8] sm:$0xff]
        %v1388 = vld [vmem:[%s1325 + $0x1f0] sm:$0xff]
        %v1389 = vld [vmem:[%s1325 + $0x1f8] sm:$0xff]
        %1390 = vmatprep.subr.mxu0 %v1327
        %1391 = vmatpush1.msra.mxu0 %v1326
        %1392 = vmatprep.subr.mxu0 %v1329
        %1393 = vmatpush1.msra.mxu0 %v1328
        %1394 = vmatprep.subr.mxu0 %v1331
        %1395 = vmatpush1.msra.mxu0 %v1330
        %1396 = vmatprep.subr.mxu0 %v1333
        %1397 = vmatpush1.msra.mxu0 %v1332
        %1398 = vmatprep.subr.mxu0 %v1335
        %1399 = vmatpush1.msra.mxu0 %v1334
        %1400 = vmatprep.subr.mxu0 %v1337
        %1401 = vmatpush1.msra.mxu0 %v1336
        %1402 = vmatprep.subr.mxu0 %v1339
        %1403 = vmatpush1.msra.mxu0 %v1338
        %1404 = vmatprep.subr.mxu0 %v1341
        %1405 = vmatpush1.msra.mxu0 %v1340
        %1406 = vmatprep.subr.mxu0 %v1343
        %1407 = vmatpush1.msra.mxu0 %v1342
        %1408 = vmatprep.subr.mxu0 %v1345
        %1409 = vmatpush1.msra.mxu0 %v1344
        %1410 = vmatprep.subr.mxu0 %v1347
        %1411 = vmatpush1.msra.mxu0 %v1346
        %1412 = vmatprep.subr.mxu0 %v1349
        %1413 = vmatpush1.msra.mxu0 %v1348
        %1414 = vmatprep.subr.mxu0 %v1351
        %1415 = vmatpush1.msra.mxu0 %v1350
        %1416 = vmatprep.subr.mxu0 %v1353
        %1417 = vmatpush1.msra.mxu0 %v1352
        %1418 = vmatprep.subr.mxu0 %v1355
        %1419 = vmatpush1.msra.mxu0 %v1354
        %1420 = vmatprep.subr.mxu0 %v1357
        %1421 = vmatpush1.msra.mxu0 %v1356
        %1422 = vmatprep.subr.mxu0 %v1359
        %1423 = vmatpush1.msra.mxu0 %v1358
        %1424 = vmatprep.subr.mxu0 %v1361
        %1425 = vmatpush1.msra.mxu0 %v1360
        %1426 = vmatprep.subr.mxu0 %v1363
        %1427 = vmatpush1.msra.mxu0 %v1362
        %1428 = vmatprep.subr.mxu0 %v1365
        %1429 = vmatpush1.msra.mxu0 %v1364
        %1430 = vmatprep.subr.mxu0 %v1367
        %1431 = vmatpush1.msra.mxu0 %v1366
        %1432 = vmatprep.subr.mxu0 %v1369
        %1433 = vmatpush1.msra.mxu0 %v1368
        %1434 = vmatprep.subr.mxu0 %v1371
        %1435 = vmatpush1.msra.mxu0 %v1370
        %1436 = vmatprep.subr.mxu0 %v1373
        %1437 = vmatpush1.msra.mxu0 %v1372
        %1438 = vmatprep.subr.mxu0 %v1375
        %1439 = vmatpush1.msra.mxu0 %v1374
        %1440 = vmatprep.subr.mxu0 %v1377
        %1441 = vmatpush1.msra.mxu0 %v1376
        %1442 = vmatprep.subr.mxu0 %v1379
        %1443 = vmatpush1.msra.mxu0 %v1378
        %1444 = vmatprep.subr.mxu0 %v1381
        %1445 = vmatpush1.msra.mxu0 %v1380
        %1446 = vmatprep.subr.mxu0 %v1383
        %1447 = vmatpush1.msra.mxu0 %v1382
        %1448 = vmatprep.subr.mxu0 %v1385
        %1449 = vmatpush1.msra.mxu0 %v1384
        %1450 = vmatprep.subr.mxu0 %v1387
        %1451 = vmatpush1.msra.mxu0 %v1386
        %1452 = vmatprep.subr.mxu0 %v1389
        %1453 = vmatpush1.msra.mxu0 %v1388
        %1454 = vmatprep.mubr.f32.mxu0 %v1323
        %1455 = vmatmul.mubr.f32.gmra.mrb[0].mxu0 %v1321
        %v1456 = vpop.f32.mrb[0].mxu0
        %v1457 = vadd.f32 0.0, %v1456
        %v1458 = vpop.f32.mrb[0].mxu0
        %v1459 = vadd.f32 0.0, %v1458
        %1460 = vdwg.mxu0
        %v1461 = vadd.f32 %v1247, %v1457
        %v1462 = vadd.f32 %v1248, %v1459
        %s1463 = scalar_lea.vmem %s5, 32
        %v1464 = vld [vmem:[%s1463] sm:$0xff]
        %v1466 = vsel %vm613, %v1464, 0
        %1468 = vmatprep.subr.mxu0 %v611
        %1469 = vmatpush1.msra.mxu0 %v610
        %1470 = vmatprep.subr.mxu0 0.0
        %1471 = vmatpush1.msra.mxu0 0.0
        %1472 = vmatprep.subr.mxu0 0.0
        %1473 = vmatpush1.msra.mxu0 0.0
        %1474 = vmatprep.subr.mxu0 0.0
        %1475 = vmatpush1.msra.mxu0 0.0
        %1476 = vmatprep.subr.mxu0 0.0
        %1477 = vmatpush1.msra.mxu0 0.0
        %1478 = vmatprep.subr.mxu0 0.0
        %1479 = vmatpush1.msra.mxu0 0.0
        %1480 = vmatprep.subr.mxu0 0.0
        %1481 = vmatpush1.msra.mxu0 0.0
        %1482 = vmatprep.subr.mxu0 0.0
        %1483 = vmatpush1.msra.mxu0 0.0
        %1484 = vmatprep.subr.mxu0 0.0
        %1485 = vmatpush1.msra.mxu0 0.0
        %1486 = vmatprep.subr.mxu0 0.0
        %1487 = vmatpush1.msra.mxu0 0.0
        %1488 = vmatprep.subr.mxu0 0.0
        %1489 = vmatpush1.msra.mxu0 0.0
        %1490 = vmatprep.subr.mxu0 0.0
        %1491 = vmatpush1.msra.mxu0 0.0
        %1492 = vmatprep.subr.mxu0 0.0
        %1493 = vmatpush1.msra.mxu0 0.0
        %1494 = vmatprep.subr.mxu0 0.0
        %1495 = vmatpush1.msra.mxu0 0.0
        %1496 = vmatprep.subr.mxu0 0.0
        %1497 = vmatpush1.msra.mxu0 0.0
        %1498 = vmatprep.subr.mxu0 0.0
        %1499 = vmatpush1.msra.mxu0 0.0
        %1500 = vmatprep.subr.mxu0 0.0
        %1501 = vmatpush1.msra.mxu0 0.0
        %1502 = vmatprep.subr.mxu0 0.0
        %1503 = vmatpush1.msra.mxu0 0.0
        %1504 = vmatprep.subr.mxu0 0.0
        %1505 = vmatpush1.msra.mxu0 0.0
        %1506 = vmatprep.subr.mxu0 0.0
        %1507 = vmatpush1.msra.mxu0 0.0
        %1508 = vmatprep.subr.mxu0 0.0
        %1509 = vmatpush1.msra.mxu0 0.0
        %1510 = vmatprep.subr.mxu0 0.0
        %1511 = vmatpush1.msra.mxu0 0.0
        %1512 = vmatprep.subr.mxu0 0.0
        %1513 = vmatpush1.msra.mxu0 0.0
        %1514 = vmatprep.subr.mxu0 0.0
        %1515 = vmatpush1.msra.mxu0 0.0
        %1516 = vmatprep.subr.mxu0 0.0
        %1517 = vmatpush1.msra.mxu0 0.0
        %1518 = vmatprep.subr.mxu0 0.0
        %1519 = vmatpush1.msra.mxu0 0.0
        %1520 = vmatprep.subr.mxu0 0.0
        %1521 = vmatpush1.msra.mxu0 0.0
        %1522 = vmatprep.subr.mxu0 0.0
        %1523 = vmatpush1.msra.mxu0 0.0
        %1524 = vmatprep.subr.mxu0 0.0
        %1525 = vmatpush1.msra.mxu0 0.0
        %1526 = vmatprep.subr.mxu0 0.0
        %1527 = vmatpush1.msra.mxu0 0.0
        %1528 = vmatprep.subr.mxu0 0.0
        %1529 = vmatpush1.msra.mxu0 0.0
        %1530 = vmatprep.subr.mxu0 0.0
        %1531 = vmatpush1.msra.mxu0 0.0
        %1532 = vmatprep.mubr.f32.mxu0 0.0
        %1533 = vmatmul.mubr.f32.gmra.mrb[0].mxu0 %v1466
        %v1534 = vpop.f32.mrb[0].mxu0
        %v1535 = vadd.f32 0.0, %v1534
        %v1536 = vpop.f32.mrb[0].mxu0
        %v1537 = vadd.f32 0.0, %v1536
        %1538 = vdwg.mxu0
        %s1539 = scalar_lea.vmem [#allocation3], 2048
        %v1540 = vld [vmem:[%s1539] sm:$0xff]
        %v1541 = vld [vmem:[%s1539 + $0x8] sm:$0xff]
        %v1542 = vld [vmem:[%s1539 + $0x10] sm:$0xff]
        %v1543 = vld [vmem:[%s1539 + $0x18] sm:$0xff]
        %v1544 = vld [vmem:[%s1539 + $0x20] sm:$0xff]
        %v1545 = vld [vmem:[%s1539 + $0x28] sm:$0xff]
        %v1546 = vld [vmem:[%s1539 + $0x30] sm:$0xff]
        %v1547 = vld [vmem:[%s1539 + $0x38] sm:$0xff]
        %v1548 = vld [vmem:[%s1539 + $0x40] sm:$0xff]
        %v1549 = vld [vmem:[%s1539 + $0x48] sm:$0xff]
        %v1550 = vld [vmem:[%s1539 + $0x50] sm:$0xff]
        %v1551 = vld [vmem:[%s1539 + $0x58] sm:$0xff]
        %v1552 = vld [vmem:[%s1539 + $0x60] sm:$0xff]
        %v1553 = vld [vmem:[%s1539 + $0x68] sm:$0xff]
        %v1554 = vld [vmem:[%s1539 + $0x70] sm:$0xff]
        %v1555 = vld [vmem:[%s1539 + $0x78] sm:$0xff]
        %v1556 = vld [vmem:[%s1539 + $0x80] sm:$0xff]
        %v1557 = vld [vmem:[%s1539 + $0x88] sm:$0xff]
        %v1558 = vld [vmem:[%s1539 + $0x90] sm:$0xff]
        %v1559 = vld [vmem:[%s1539 + $0x98] sm:$0xff]
        %v1560 = vld [vmem:[%s1539 + $0xa0] sm:$0xff]
        %v1561 = vld [vmem:[%s1539 + $0xa8] sm:$0xff]
        %v1562 = vld [vmem:[%s1539 + $0xb0] sm:$0xff]
        %v1563 = vld [vmem:[%s1539 + $0xb8] sm:$0xff]
        %v1564 = vld [vmem:[%s1539 + $0xc0] sm:$0xff]
        %v1565 = vld [vmem:[%s1539 + $0xc8] sm:$0xff]
        %v1566 = vld [vmem:[%s1539 + $0xd0] sm:$0xff]
        %v1567 = vld [vmem:[%s1539 + $0xd8] sm:$0xff]
        %v1568 = vld [vmem:[%s1539 + $0xe0] sm:$0xff]
        %v1569 = vld [vmem:[%s1539 + $0xe8] sm:$0xff]
        %v1570 = vld [vmem:[%s1539 + $0xf0] sm:$0xff]
        %v1571 = vld [vmem:[%s1539 + $0xf8] sm:$0xff]
        %v1572 = vld [vmem:[%s1539 + $0x100] sm:$0xff]
        %v1573 = vld [vmem:[%s1539 + $0x108] sm:$0xff]
        %v1574 = vld [vmem:[%s1539 + $0x110] sm:$0xff]
        %v1575 = vld [vmem:[%s1539 + $0x118] sm:$0xff]
        %v1576 = vld [vmem:[%s1539 + $0x120] sm:$0xff]
        %v1577 = vld [vmem:[%s1539 + $0x128] sm:$0xff]
        %v1578 = vld [vmem:[%s1539 + $0x130] sm:$0xff]
        %v1579 = vld [vmem:[%s1539 + $0x138] sm:$0xff]
        %v1580 = vld [vmem:[%s1539 + $0x140] sm:$0xff]
        %v1581 = vld [vmem:[%s1539 + $0x148] sm:$0xff]
        %v1582 = vld [vmem:[%s1539 + $0x150] sm:$0xff]
        %v1583 = vld [vmem:[%s1539 + $0x158] sm:$0xff]
        %v1584 = vld [vmem:[%s1539 + $0x160] sm:$0xff]
        %v1585 = vld [vmem:[%s1539 + $0x168] sm:$0xff]
        %v1586 = vld [vmem:[%s1539 + $0x170] sm:$0xff]
        %v1587 = vld [vmem:[%s1539 + $0x178] sm:$0xff]
        %v1588 = vld [vmem:[%s1539 + $0x180] sm:$0xff]
        %v1589 = vld [vmem:[%s1539 + $0x188] sm:$0xff]
        %v1590 = vld [vmem:[%s1539 + $0x190] sm:$0xff]
        %v1591 = vld [vmem:[%s1539 + $0x198] sm:$0xff]
        %v1592 = vld [vmem:[%s1539 + $0x1a0] sm:$0xff]
        %v1593 = vld [vmem:[%s1539 + $0x1a8] sm:$0xff]
        %v1594 = vld [vmem:[%s1539 + $0x1b0] sm:$0xff]
        %v1595 = vld [vmem:[%s1539 + $0x1b8] sm:$0xff]
        %v1596 = vld [vmem:[%s1539 + $0x1c0] sm:$0xff]
        %v1597 = vld [vmem:[%s1539 + $0x1c8] sm:$0xff]
        %v1598 = vld [vmem:[%s1539 + $0x1d0] sm:$0xff]
        %v1599 = vld [vmem:[%s1539 + $0x1d8] sm:$0xff]
        %v1600 = vld [vmem:[%s1539 + $0x1e0] sm:$0xff]
        %v1601 = vld [vmem:[%s1539 + $0x1e8] sm:$0xff]
        %v1602 = vld [vmem:[%s1539 + $0x1f0] sm:$0xff]
        %v1603 = vld [vmem:[%s1539 + $0x1f8] sm:$0xff]
        %1604 = vmatprep.subr.mxu0 %v1541
        %1605 = vmatpush1.msra.mxu0 %v1540
        %1606 = vmatprep.subr.mxu0 %v1543
        %1607 = vmatpush1.msra.mxu0 %v1542
        %1608 = vmatprep.subr.mxu0 %v1545
        %1609 = vmatpush1.msra.mxu0 %v1544
        %1610 = vmatprep.subr.mxu0 %v1547
        %1611 = vmatpush1.msra.mxu0 %v1546
        %1612 = vmatprep.subr.mxu0 %v1549
        %1613 = vmatpush1.msra.mxu0 %v1548
        %1614 = vmatprep.subr.mxu0 %v1551
        %1615 = vmatpush1.msra.mxu0 %v1550
        %1616 = vmatprep.subr.mxu0 %v1553
        %1617 = vmatpush1.msra.mxu0 %v1552
        %1618 = vmatprep.subr.mxu0 %v1555
        %1619 = vmatpush1.msra.mxu0 %v1554
        %1620 = vmatprep.subr.mxu0 %v1557
        %1621 = vmatpush1.msra.mxu0 %v1556
        %1622 = vmatprep.subr.mxu0 %v1559
        %1623 = vmatpush1.msra.mxu0 %v1558
        %1624 = vmatprep.subr.mxu0 %v1561
        %1625 = vmatpush1.msra.mxu0 %v1560
        %1626 = vmatprep.subr.mxu0 %v1563
        %1627 = vmatpush1.msra.mxu0 %v1562
        %1628 = vmatprep.subr.mxu0 %v1565
        %1629 = vmatpush1.msra.mxu0 %v1564
        %1630 = vmatprep.subr.mxu0 %v1567
        %1631 = vmatpush1.msra.mxu0 %v1566
        %1632 = vmatprep.subr.mxu0 %v1569
        %1633 = vmatpush1.msra.mxu0 %v1568
        %1634 = vmatprep.subr.mxu0 %v1571
        %1635 = vmatpush1.msra.mxu0 %v1570
        %1636 = vmatprep.subr.mxu0 %v1573
        %1637 = vmatpush1.msra.mxu0 %v1572
        %1638 = vmatprep.subr.mxu0 %v1575
        %1639 = vmatpush1.msra.mxu0 %v1574
        %1640 = vmatprep.subr.mxu0 %v1577
        %1641 = vmatpush1.msra.mxu0 %v1576
        %1642 = vmatprep.subr.mxu0 %v1579
        %1643 = vmatpush1.msra.mxu0 %v1578
        %1644 = vmatprep.subr.mxu0 %v1581
        %1645 = vmatpush1.msra.mxu0 %v1580
        %1646 = vmatprep.subr.mxu0 %v1583
        %1647 = vmatpush1.msra.mxu0 %v1582
        %1648 = vmatprep.subr.mxu0 %v1585
        %1649 = vmatpush1.msra.mxu0 %v1584
        %1650 = vmatprep.subr.mxu0 %v1587
        %1651 = vmatpush1.msra.mxu0 %v1586
        %1652 = vmatprep.subr.mxu0 %v1589
        %1653 = vmatpush1.msra.mxu0 %v1588
        %1654 = vmatprep.subr.mxu0 %v1591
        %1655 = vmatpush1.msra.mxu0 %v1590
        %1656 = vmatprep.subr.mxu0 %v1593
        %1657 = vmatpush1.msra.mxu0 %v1592
        %1658 = vmatprep.subr.mxu0 %v1595
        %1659 = vmatpush1.msra.mxu0 %v1594
        %1660 = vmatprep.subr.mxu0 %v1597
        %1661 = vmatpush1.msra.mxu0 %v1596
        %1662 = vmatprep.subr.mxu0 %v1599
        %1663 = vmatpush1.msra.mxu0 %v1598
        %1664 = vmatprep.subr.mxu0 %v1601
        %1665 = vmatpush1.msra.mxu0 %v1600
        %1666 = vmatprep.subr.mxu0 %v1603
        %1667 = vmatpush1.msra.mxu0 %v1602
        %1668 = vmatprep.mubr.f32.mxu0 %v1537
        %1669 = vmatmul.mubr.f32.gmra.mrb[0].mxu0 %v1535
        %v1670 = vpop.f32.mrb[0].mxu0
        %v1671 = vadd.f32 0.0, %v1670
        %v1672 = vpop.f32.mrb[0].mxu0
        %v1673 = vadd.f32 0.0, %v1672
        %1674 = vdwg.mxu0
        %v1675 = vadd.f32 %v1461, %v1671
        %v1676 = vadd.f32 %v1462, %v1673
        %s1677 = scalar_lea.vmem %s5, 40
        %v1678 = vld [vmem:[%s1677] sm:$0xff]
        %v1680 = vsel %vm613, %v1678, 0
        %1682 = vmatprep.subr.mxu0 %v611
        %1683 = vmatpush1.msra.mxu0 %v610
        %1684 = vmatprep.subr.mxu0 0.0
        %1685 = vmatpush1.msra.mxu0 0.0
        %1686 = vmatprep.subr.mxu0 0.0
        %1687 = vmatpush1.msra.mxu0 0.0
        %1688 = vmatprep.subr.mxu0 0.0
        %1689 = vmatpush1.msra.mxu0 0.0
        %1690 = vmatprep.subr.mxu0 0.0
        %1691 = vmatpush1.msra.mxu0 0.0
        %1692 = vmatprep.subr.mxu0 0.0
        %1693 = vmatpush1.msra.mxu0 0.0
        %1694 = vmatprep.subr.mxu0 0.0
        %1695 = vmatpush1.msra.mxu0 0.0
        %1696 = vmatprep.subr.mxu0 0.0
        %1697 = vmatpush1.msra.mxu0 0.0
        %1698 = vmatprep.subr.mxu0 0.0
        %1699 = vmatpush1.msra.mxu0 0.0
        %1700 = vmatprep.subr.mxu0 0.0
        %1701 = vmatpush1.msra.mxu0 0.0
        %1702 = vmatprep.subr.mxu0 0.0
        %1703 = vmatpush1.msra.mxu0 0.0
        %1704 = vmatprep.subr.mxu0 0.0
        %1705 = vmatpush1.msra.mxu0 0.0
        %1706 = vmatprep.subr.mxu0 0.0
        %1707 = vmatpush1.msra.mxu0 0.0
        %1708 = vmatprep.subr.mxu0 0.0
        %1709 = vmatpush1.msra.mxu0 0.0
        %1710 = vmatprep.subr.mxu0 0.0
        %1711 = vmatpush1.msra.mxu0 0.0
        %1712 = vmatprep.subr.mxu0 0.0
        %1713 = vmatpush1.msra.mxu0 0.0
        %1714 = vmatprep.subr.mxu0 0.0
        %1715 = vmatpush1.msra.mxu0 0.0
        %1716 = vmatprep.subr.mxu0 0.0
        %1717 = vmatpush1.msra.mxu0 0.0
        %1718 = vmatprep.subr.mxu0 0.0
        %1719 = vmatpush1.msra.mxu0 0.0
        %1720 = vmatprep.subr.mxu0 0.0
        %1721 = vmatpush1.msra.mxu0 0.0
        %1722 = vmatprep.subr.mxu0 0.0
        %1723 = vmatpush1.msra.mxu0 0.0
        %1724 = vmatprep.subr.mxu0 0.0
        %1725 = vmatpush1.msra.mxu0 0.0
        %1726 = vmatprep.subr.mxu0 0.0
        %1727 = vmatpush1.msra.mxu0 0.0
        %1728 = vmatprep.subr.mxu0 0.0
        %1729 = vmatpush1.msra.mxu0 0.0
        %1730 = vmatprep.subr.mxu0 0.0
        %1731 = vmatpush1.msra.mxu0 0.0
        %1732 = vmatprep.subr.mxu0 0.0
        %1733 = vmatpush1.msra.mxu0 0.0
        %1734 = vmatprep.subr.mxu0 0.0
        %1735 = vmatpush1.msra.mxu0 0.0
        %1736 = vmatprep.subr.mxu0 0.0
        %1737 = vmatpush1.msra.mxu0 0.0
        %1738 = vmatprep.subr.mxu0 0.0
        %1739 = vmatpush1.msra.mxu0 0.0
        %1740 = vmatprep.subr.mxu0 0.0
        %1741 = vmatpush1.msra.mxu0 0.0
        %1742 = vmatprep.subr.mxu0 0.0
        %1743 = vmatpush1.msra.mxu0 0.0
        %1744 = vmatprep.subr.mxu0 0.0
        %1745 = vmatpush1.msra.mxu0 0.0
        %1746 = vmatprep.mubr.f32.mxu0 0.0
        %1747 = vmatmul.mubr.f32.gmra.mrb[0].mxu0 %v1680
        %v1748 = vpop.f32.mrb[0].mxu0
        %v1749 = vadd.f32 0.0, %v1748
        %v1750 = vpop.f32.mrb[0].mxu0
        %v1751 = vadd.f32 0.0, %v1750
        %1752 = vdwg.mxu0
        %s1753 = scalar_lea.vmem [#allocation3], 2560
        %v1754 = vld [vmem:[%s1753] sm:$0xff]
        %v1755 = vld [vmem:[%s1753 + $0x8] sm:$0xff]
        %v1756 = vld [vmem:[%s1753 + $0x10] sm:$0xff]
        %v1757 = vld [vmem:[%s1753 + $0x18] sm:$0xff]
        %v1758 = vld [vmem:[%s1753 + $0x20] sm:$0xff]
        %v1759 = vld [vmem:[%s1753 + $0x28] sm:$0xff]
        %v1760 = vld [vmem:[%s1753 + $0x30] sm:$0xff]
        %v1761 = vld [vmem:[%s1753 + $0x38] sm:$0xff]
        %v1762 = vld [vmem:[%s1753 + $0x40] sm:$0xff]
        %v1763 = vld [vmem:[%s1753 + $0x48] sm:$0xff]
        %v1764 = vld [vmem:[%s1753 + $0x50] sm:$0xff]
        %v1765 = vld [vmem:[%s1753 + $0x58] sm:$0xff]
        %v1766 = vld [vmem:[%s1753 + $0x60] sm:$0xff]
        %v1767 = vld [vmem:[%s1753 + $0x68] sm:$0xff]
        %v1768 = vld [vmem:[%s1753 + $0x70] sm:$0xff]
        %v1769 = vld [vmem:[%s1753 + $0x78] sm:$0xff]
        %v1770 = vld [vmem:[%s1753 + $0x80] sm:$0xff]
        %v1771 = vld [vmem:[%s1753 + $0x88] sm:$0xff]
        %v1772 = vld [vmem:[%s1753 + $0x90] sm:$0xff]
        %v1773 = vld [vmem:[%s1753 + $0x98] sm:$0xff]
        %v1774 = vld [vmem:[%s1753 + $0xa0] sm:$0xff]
        %v1775 = vld [vmem:[%s1753 + $0xa8] sm:$0xff]
        %v1776 = vld [vmem:[%s1753 + $0xb0] sm:$0xff]
        %v1777 = vld [vmem:[%s1753 + $0xb8] sm:$0xff]
        %v1778 = vld [vmem:[%s1753 + $0xc0] sm:$0xff]
        %v1779 = vld [vmem:[%s1753 + $0xc8] sm:$0xff]
        %v1780 = vld [vmem:[%s1753 + $0xd0] sm:$0xff]
        %v1781 = vld [vmem:[%s1753 + $0xd8] sm:$0xff]
        %v1782 = vld [vmem:[%s1753 + $0xe0] sm:$0xff]
        %v1783 = vld [vmem:[%s1753 + $0xe8] sm:$0xff]
        %v1784 = vld [vmem:[%s1753 + $0xf0] sm:$0xff]
        %v1785 = vld [vmem:[%s1753 + $0xf8] sm:$0xff]
        %v1786 = vld [vmem:[%s1753 + $0x100] sm:$0xff]
        %v1787 = vld [vmem:[%s1753 + $0x108] sm:$0xff]
        %v1788 = vld [vmem:[%s1753 + $0x110] sm:$0xff]
        %v1789 = vld [vmem:[%s1753 + $0x118] sm:$0xff]
        %v1790 = vld [vmem:[%s1753 + $0x120] sm:$0xff]
        %v1791 = vld [vmem:[%s1753 + $0x128] sm:$0xff]
        %v1792 = vld [vmem:[%s1753 + $0x130] sm:$0xff]
        %v1793 = vld [vmem:[%s1753 + $0x138] sm:$0xff]
        %v1794 = vld [vmem:[%s1753 + $0x140] sm:$0xff]
        %v1795 = vld [vmem:[%s1753 + $0x148] sm:$0xff]
        %v1796 = vld [vmem:[%s1753 + $0x150] sm:$0xff]
        %v1797 = vld [vmem:[%s1753 + $0x158] sm:$0xff]
        %v1798 = vld [vmem:[%s1753 + $0x160] sm:$0xff]
        %v1799 = vld [vmem:[%s1753 + $0x168] sm:$0xff]
        %v1800 = vld [vmem:[%s1753 + $0x170] sm:$0xff]
        %v1801 = vld [vmem:[%s1753 + $0x178] sm:$0xff]
        %v1802 = vld [vmem:[%s1753 + $0x180] sm:$0xff]
        %v1803 = vld [vmem:[%s1753 + $0x188] sm:$0xff]
        %v1804 = vld [vmem:[%s1753 + $0x190] sm:$0xff]
        %v1805 = vld [vmem:[%s1753 + $0x198] sm:$0xff]
        %v1806 = vld [vmem:[%s1753 + $0x1a0] sm:$0xff]
        %v1807 = vld [vmem:[%s1753 + $0x1a8] sm:$0xff]
        %v1808 = vld [vmem:[%s1753 + $0x1b0] sm:$0xff]
        %v1809 = vld [vmem:[%s1753 + $0x1b8] sm:$0xff]
        %v1810 = vld [vmem:[%s1753 + $0x1c0] sm:$0xff]
        %v1811 = vld [vmem:[%s1753 + $0x1c8] sm:$0xff]
        %v1812 = vld [vmem:[%s1753 + $0x1d0] sm:$0xff]
        %v1813 = vld [vmem:[%s1753 + $0x1d8] sm:$0xff]
        %v1814 = vld [vmem:[%s1753 + $0x1e0] sm:$0xff]
        %v1815 = vld [vmem:[%s1753 + $0x1e8] sm:$0xff]
        %v1816 = vld [vmem:[%s1753 + $0x1f0] sm:$0xff]
        %v1817 = vld [vmem:[%s1753 + $0x1f8] sm:$0xff]
        %1818 = vmatprep.subr.mxu0 %v1755
        %1819 = vmatpush1.msra.mxu0 %v1754
        %1820 = vmatprep.subr.mxu0 %v1757
        %1821 = vmatpush1.msra.mxu0 %v1756
        %1822 = vmatprep.subr.mxu0 %v1759
        %1823 = vmatpush1.msra.mxu0 %v1758
        %1824 = vmatprep.subr.mxu0 %v1761
        %1825 = vmatpush1.msra.mxu0 %v1760
        %1826 = vmatprep.subr.mxu0 %v1763
        %1827 = vmatpush1.msra.mxu0 %v1762
        %1828 = vmatprep.subr.mxu0 %v1765
        %1829 = vmatpush1.msra.mxu0 %v1764
        %1830 = vmatprep.subr.mxu0 %v1767
        %1831 = vmatpush1.msra.mxu0 %v1766
        %1832 = vmatprep.subr.mxu0 %v1769
        %1833 = vmatpush1.msra.mxu0 %v1768
        %1834 = vmatprep.subr.mxu0 %v1771
        %1835 = vmatpush1.msra.mxu0 %v1770
        %1836 = vmatprep.subr.mxu0 %v1773
        %1837 = vmatpush1.msra.mxu0 %v1772
        %1838 = vmatprep.subr.mxu0 %v1775
        %1839 = vmatpush1.msra.mxu0 %v1774
        %1840 = vmatprep.subr.mxu0 %v1777
        %1841 = vmatpush1.msra.mxu0 %v1776
        %1842 = vmatprep.subr.mxu0 %v1779
        %1843 = vmatpush1.msra.mxu0 %v1778
        %1844 = vmatprep.subr.mxu0 %v1781
        %1845 = vmatpush1.msra.mxu0 %v1780
        %1846 = vmatprep.subr.mxu0 %v1783
        %1847 = vmatpush1.msra.mxu0 %v1782
        %1848 = vmatprep.subr.mxu0 %v1785
        %1849 = vmatpush1.msra.mxu0 %v1784
        %1850 = vmatprep.subr.mxu0 %v1787
        %1851 = vmatpush1.msra.mxu0 %v1786
        %1852 = vmatprep.subr.mxu0 %v1789
        %1853 = vmatpush1.msra.mxu0 %v1788
        %1854 = vmatprep.subr.mxu0 %v1791
        %1855 = vmatpush1.msra.mxu0 %v1790
        %1856 = vmatprep.subr.mxu0 %v1793
        %1857 = vmatpush1.msra.mxu0 %v1792
        %1858 = vmatprep.subr.mxu0 %v1795
        %1859 = vmatpush1.msra.mxu0 %v1794
        %1860 = vmatprep.subr.mxu0 %v1797
        %1861 = vmatpush1.msra.mxu0 %v1796
        %1862 = vmatprep.subr.mxu0 %v1799
        %1863 = vmatpush1.msra.mxu0 %v1798
        %1864 = vmatprep.subr.mxu0 %v1801
        %1865 = vmatpush1.msra.mxu0 %v1800
        %1866 = vmatprep.subr.mxu0 %v1803
        %1867 = vmatpush1.msra.mxu0 %v1802
        %1868 = vmatprep.subr.mxu0 %v1805
        %1869 = vmatpush1.msra.mxu0 %v1804
        %1870 = vmatprep.subr.mxu0 %v1807
        %1871 = vmatpush1.msra.mxu0 %v1806
        %1872 = vmatprep.subr.mxu0 %v1809
        %1873 = vmatpush1.msra.mxu0 %v1808
        %1874 = vmatprep.subr.mxu0 %v1811
        %1875 = vmatpush1.msra.mxu0 %v1810
        %1876 = vmatprep.subr.mxu0 %v1813
        %1877 = vmatpush1.msra.mxu0 %v1812
        %1878 = vmatprep.subr.mxu0 %v1815
        %1879 = vmatpush1.msra.mxu0 %v1814
        %1880 = vmatprep.subr.mxu0 %v1817
        %1881 = vmatpush1.msra.mxu0 %v1816
        %1882 = vmatprep.mubr.f32.mxu0 %v1751
        %1883 = vmatmul.mubr.f32.gmra.mrb[0].mxu0 %v1749
        %v1884 = vpop.f32.mrb[0].mxu0
        %v1885 = vadd.f32 0.0, %v1884
        %v1886 = vpop.f32.mrb[0].mxu0
        %v1887 = vadd.f32 0.0, %v1886
        %1888 = vdwg.mxu0
        %v1889 = vadd.f32 %v1675, %v1885
        %v1890 = vadd.f32 %v1676, %v1887
        %s1891 = scalar_lea.vmem %s5, 48
        %v1892 = vld [vmem:[%s1891] sm:$0xff]
        %v1894 = vsel %vm613, %v1892, 0
        %1896 = vmatprep.subr.mxu0 %v611
        %1897 = vmatpush1.msra.mxu0 %v610
        %1898 = vmatprep.subr.mxu0 0.0
        %1899 = vmatpush1.msra.mxu0 0.0
        %1900 = vmatprep.subr.mxu0 0.0
        %1901 = vmatpush1.msra.mxu0 0.0
        %1902 = vmatprep.subr.mxu0 0.0
        %1903 = vmatpush1.msra.mxu0 0.0
        %1904 = vmatprep.subr.mxu0 0.0
        %1905 = vmatpush1.msra.mxu0 0.0
        %1906 = vmatprep.subr.mxu0 0.0
        %1907 = vmatpush1.msra.mxu0 0.0
        %1908 = vmatprep.subr.mxu0 0.0
        %1909 = vmatpush1.msra.mxu0 0.0
        %1910 = vmatprep.subr.mxu0 0.0
        %1911 = vmatpush1.msra.mxu0 0.0
        %1912 = vmatprep.subr.mxu0 0.0
        %1913 = vmatpush1.msra.mxu0 0.0
        %1914 = vmatprep.subr.mxu0 0.0
        %1915 = vmatpush1.msra.mxu0 0.0
        %1916 = vmatprep.subr.mxu0 0.0
        %1917 = vmatpush1.msra.mxu0 0.0
        %1918 = vmatprep.subr.mxu0 0.0
        %1919 = vmatpush1.msra.mxu0 0.0
        %1920 = vmatprep.subr.mxu0 0.0
        %1921 = vmatpush1.msra.mxu0 0.0
        %1922 = vmatprep.subr.mxu0 0.0
        %1923 = vmatpush1.msra.mxu0 0.0
        %1924 = vmatprep.subr.mxu0 0.0
        %1925 = vmatpush1.msra.mxu0 0.0
        %1926 = vmatprep.subr.mxu0 0.0
        %1927 = vmatpush1.msra.mxu0 0.0
        %1928 = vmatprep.subr.mxu0 0.0
        %1929 = vmatpush1.msra.mxu0 0.0
        %1930 = vmatprep.subr.mxu0 0.0
        %1931 = vmatpush1.msra.mxu0 0.0
        %1932 = vmatprep.subr.mxu0 0.0
        %1933 = vmatpush1.msra.mxu0 0.0
        %1934 = vmatprep.subr.mxu0 0.0
        %1935 = vmatpush1.msra.mxu0 0.0
        %1936 = vmatprep.subr.mxu0 0.0
        %1937 = vmatpush1.msra.mxu0 0.0
        %1938 = vmatprep.subr.mxu0 0.0
        %1939 = vmatpush1.msra.mxu0 0.0
        %1940 = vmatprep.subr.mxu0 0.0
        %1941 = vmatpush1.msra.mxu0 0.0
        %1942 = vmatprep.subr.mxu0 0.0
        %1943 = vmatpush1.msra.mxu0 0.0
        %1944 = vmatprep.subr.mxu0 0.0
        %1945 = vmatpush1.msra.mxu0 0.0
        %1946 = vmatprep.subr.mxu0 0.0
        %1947 = vmatpush1.msra.mxu0 0.0
        %1948 = vmatprep.subr.mxu0 0.0
        %1949 = vmatpush1.msra.mxu0 0.0
        %1950 = vmatprep.subr.mxu0 0.0
        %1951 = vmatpush1.msra.mxu0 0.0
        %1952 = vmatprep.subr.mxu0 0.0
        %1953 = vmatpush1.msra.mxu0 0.0
        %1954 = vmatprep.subr.mxu0 0.0
        %1955 = vmatpush1.msra.mxu0 0.0
        %1956 = vmatprep.subr.mxu0 0.0
        %1957 = vmatpush1.msra.mxu0 0.0
        %1958 = vmatprep.subr.mxu0 0.0
        %1959 = vmatpush1.msra.mxu0 0.0
        %1960 = vmatprep.mubr.f32.mxu0 0.0
        %1961 = vmatmul.mubr.f32.gmra.mrb[0].mxu0 %v1894
        %v1962 = vpop.f32.mrb[0].mxu0
        %v1963 = vadd.f32 0.0, %v1962
        %v1964 = vpop.f32.mrb[0].mxu0
        %v1965 = vadd.f32 0.0, %v1964
        %1966 = vdwg.mxu0
        %s1967 = scalar_lea.vmem [#allocation3], 3072
        %v1968 = vld [vmem:[%s1967] sm:$0xff]
        %v1969 = vld [vmem:[%s1967 + $0x8] sm:$0xff]
        %v1970 = vld [vmem:[%s1967 + $0x10] sm:$0xff]
        %v1971 = vld [vmem:[%s1967 + $0x18] sm:$0xff]
        %v1972 = vld [vmem:[%s1967 + $0x20] sm:$0xff]
        %v1973 = vld [vmem:[%s1967 + $0x28] sm:$0xff]
        %v1974 = vld [vmem:[%s1967 + $0x30] sm:$0xff]
        %v1975 = vld [vmem:[%s1967 + $0x38] sm:$0xff]
        %v1976 = vld [vmem:[%s1967 + $0x40] sm:$0xff]
        %v1977 = vld [vmem:[%s1967 + $0x48] sm:$0xff]
        %v1978 = vld [vmem:[%s1967 + $0x50] sm:$0xff]
        %v1979 = vld [vmem:[%s1967 + $0x58] sm:$0xff]
        %v1980 = vld [vmem:[%s1967 + $0x60] sm:$0xff]
        %v1981 = vld [vmem:[%s1967 + $0x68] sm:$0xff]
        %v1982 = vld [vmem:[%s1967 + $0x70] sm:$0xff]
        %v1983 = vld [vmem:[%s1967 + $0x78] sm:$0xff]
        %v1984 = vld [vmem:[%s1967 + $0x80] sm:$0xff]
        %v1985 = vld [vmem:[%s1967 + $0x88] sm:$0xff]
        %v1986 = vld [vmem:[%s1967 + $0x90] sm:$0xff]
        %v1987 = vld [vmem:[%s1967 + $0x98] sm:$0xff]
        %v1988 = vld [vmem:[%s1967 + $0xa0] sm:$0xff]
        %v1989 = vld [vmem:[%s1967 + $0xa8] sm:$0xff]
        %v1990 = vld [vmem:[%s1967 + $0xb0] sm:$0xff]
        %v1991 = vld [vmem:[%s1967 + $0xb8] sm:$0xff]
        %v1992 = vld [vmem:[%s1967 + $0xc0] sm:$0xff]
        %v1993 = vld [vmem:[%s1967 + $0xc8] sm:$0xff]
        %v1994 = vld [vmem:[%s1967 + $0xd0] sm:$0xff]
        %v1995 = vld [vmem:[%s1967 + $0xd8] sm:$0xff]
        %v1996 = vld [vmem:[%s1967 + $0xe0] sm:$0xff]
        %v1997 = vld [vmem:[%s1967 + $0xe8] sm:$0xff]
        %v1998 = vld [vmem:[%s1967 + $0xf0] sm:$0xff]
        %v1999 = vld [vmem:[%s1967 + $0xf8] sm:$0xff]
        %v2000 = vld [vmem:[%s1967 + $0x100] sm:$0xff]
        %v2001 = vld [vmem:[%s1967 + $0x108] sm:$0xff]
        %v2002 = vld [vmem:[%s1967 + $0x110] sm:$0xff]
        %v2003 = vld [vmem:[%s1967 + $0x118] sm:$0xff]
        %v2004 = vld [vmem:[%s1967 + $0x120] sm:$0xff]
        %v2005 = vld [vmem:[%s1967 + $0x128] sm:$0xff]
        %v2006 = vld [vmem:[%s1967 + $0x130] sm:$0xff]
        %v2007 = vld [vmem:[%s1967 + $0x138] sm:$0xff]
        %v2008 = vld [vmem:[%s1967 + $0x140] sm:$0xff]
        %v2009 = vld [vmem:[%s1967 + $0x148] sm:$0xff]
        %v2010 = vld [vmem:[%s1967 + $0x150] sm:$0xff]
        %v2011 = vld [vmem:[%s1967 + $0x158] sm:$0xff]
        %v2012 = vld [vmem:[%s1967 + $0x160] sm:$0xff]
        %v2013 = vld [vmem:[%s1967 + $0x168] sm:$0xff]
        %v2014 = vld [vmem:[%s1967 + $0x170] sm:$0xff]
        %v2015 = vld [vmem:[%s1967 + $0x178] sm:$0xff]
        %v2016 = vld [vmem:[%s1967 + $0x180] sm:$0xff]
        %v2017 = vld [vmem:[%s1967 + $0x188] sm:$0xff]
        %v2018 = vld [vmem:[%s1967 + $0x190] sm:$0xff]
        %v2019 = vld [vmem:[%s1967 + $0x198] sm:$0xff]
        %v2020 = vld [vmem:[%s1967 + $0x1a0] sm:$0xff]
        %v2021 = vld [vmem:[%s1967 + $0x1a8] sm:$0xff]
        %v2022 = vld [vmem:[%s1967 + $0x1b0] sm:$0xff]
        %v2023 = vld [vmem:[%s1967 + $0x1b8] sm:$0xff]
        %v2024 = vld [vmem:[%s1967 + $0x1c0] sm:$0xff]
        %v2025 = vld [vmem:[%s1967 + $0x1c8] sm:$0xff]
        %v2026 = vld [vmem:[%s1967 + $0x1d0] sm:$0xff]
        %v2027 = vld [vmem:[%s1967 + $0x1d8] sm:$0xff]
        %v2028 = vld [vmem:[%s1967 + $0x1e0] sm:$0xff]
        %v2029 = vld [vmem:[%s1967 + $0x1e8] sm:$0xff]
        %v2030 = vld [vmem:[%s1967 + $0x1f0] sm:$0xff]
        %v2031 = vld [vmem:[%s1967 + $0x1f8] sm:$0xff]
        %2032 = vmatprep.subr.mxu0 %v1969
        %2033 = vmatpush1.msra.mxu0 %v1968
        %2034 = vmatprep.subr.mxu0 %v1971
        %2035 = vmatpush1.msra.mxu0 %v1970
        %2036 = vmatprep.subr.mxu0 %v1973
        %2037 = vmatpush1.msra.mxu0 %v1972
        %2038 = vmatprep.subr.mxu0 %v1975
        %2039 = vmatpush1.msra.mxu0 %v1974
        %2040 = vmatprep.subr.mxu0 %v1977
        %2041 = vmatpush1.msra.mxu0 %v1976
        %2042 = vmatprep.subr.mxu0 %v1979
        %2043 = vmatpush1.msra.mxu0 %v1978
        %2044 = vmatprep.subr.mxu0 %v1981
        %2045 = vmatpush1.msra.mxu0 %v1980
        %2046 = vmatprep.subr.mxu0 %v1983
        %2047 = vmatpush1.msra.mxu0 %v1982
        %2048 = vmatprep.subr.mxu0 %v1985
        %2049 = vmatpush1.msra.mxu0 %v1984
        %2050 = vmatprep.subr.mxu0 %v1987
        %2051 = vmatpush1.msra.mxu0 %v1986
        %2052 = vmatprep.subr.mxu0 %v1989
        %2053 = vmatpush1.msra.mxu0 %v1988
        %2054 = vmatprep.subr.mxu0 %v1991
        %2055 = vmatpush1.msra.mxu0 %v1990
        %2056 = vmatprep.subr.mxu0 %v1993
        %2057 = vmatpush1.msra.mxu0 %v1992
        %2058 = vmatprep.subr.mxu0 %v1995
        %2059 = vmatpush1.msra.mxu0 %v1994
        %2060 = vmatprep.subr.mxu0 %v1997
        %2061 = vmatpush1.msra.mxu0 %v1996
        %2062 = vmatprep.subr.mxu0 %v1999
        %2063 = vmatpush1.msra.mxu0 %v1998
        %2064 = vmatprep.subr.mxu0 %v2001
        %2065 = vmatpush1.msra.mxu0 %v2000
        %2066 = vmatprep.subr.mxu0 %v2003
        %2067 = vmatpush1.msra.mxu0 %v2002
        %2068 = vmatprep.subr.mxu0 %v2005
        %2069 = vmatpush1.msra.mxu0 %v2004
        %2070 = vmatprep.subr.mxu0 %v2007
        %2071 = vmatpush1.msra.mxu0 %v2006
        %2072 = vmatprep.subr.mxu0 %v2009
        %2073 = vmatpush1.msra.mxu0 %v2008
        %2074 = vmatprep.subr.mxu0 %v2011
        %2075 = vmatpush1.msra.mxu0 %v2010
        %2076 = vmatprep.subr.mxu0 %v2013
        %2077 = vmatpush1.msra.mxu0 %v2012
        %2078 = vmatprep.subr.mxu0 %v2015
        %2079 = vmatpush1.msra.mxu0 %v2014
        %2080 = vmatprep.subr.mxu0 %v2017
        %2081 = vmatpush1.msra.mxu0 %v2016
        %2082 = vmatprep.subr.mxu0 %v2019
        %2083 = vmatpush1.msra.mxu0 %v2018
        %2084 = vmatprep.subr.mxu0 %v2021
        %2085 = vmatpush1.msra.mxu0 %v2020
        %2086 = vmatprep.subr.mxu0 %v2023
        %2087 = vmatpush1.msra.mxu0 %v2022
        %2088 = vmatprep.subr.mxu0 %v2025
        %2089 = vmatpush1.msra.mxu0 %v2024
        %2090 = vmatprep.subr.mxu0 %v2027
        %2091 = vmatpush1.msra.mxu0 %v2026
        %2092 = vmatprep.subr.mxu0 %v2029
        %2093 = vmatpush1.msra.mxu0 %v2028
        %2094 = vmatprep.subr.mxu0 %v2031
        %2095 = vmatpush1.msra.mxu0 %v2030
        %2096 = vmatprep.mubr.f32.mxu0 %v1965
        %2097 = vmatmul.mubr.f32.gmra.mrb[0].mxu0 %v1963
        %v2098 = vpop.f32.mrb[0].mxu0
        %v2099 = vadd.f32 0.0, %v2098
        %v2100 = vpop.f32.mrb[0].mxu0
        %v2101 = vadd.f32 0.0, %v2100
        %2102 = vdwg.mxu0
        %v2103 = vadd.f32 %v1889, %v2099
        %v2104 = vadd.f32 %v1890, %v2101
        %s2105 = scalar_lea.vmem %s5, 56
        %v2106 = vld [vmem:[%s2105] sm:$0xff]
        %v2108 = vsel %vm613, %v2106, 0
        %2110 = vmatprep.subr.mxu0 %v611
        %2111 = vmatpush1.msra.mxu0 %v610
        %2112 = vmatprep.subr.mxu0 0.0
        %2113 = vmatpush1.msra.mxu0 0.0
        %2114 = vmatprep.subr.mxu0 0.0
        %2115 = vmatpush1.msra.mxu0 0.0
        %2116 = vmatprep.subr.mxu0 0.0
        %2117 = vmatpush1.msra.mxu0 0.0
        %2118 = vmatprep.subr.mxu0 0.0
        %2119 = vmatpush1.msra.mxu0 0.0
        %2120 = vmatprep.subr.mxu0 0.0
        %2121 = vmatpush1.msra.mxu0 0.0
        %2122 = vmatprep.subr.mxu0 0.0
        %2123 = vmatpush1.msra.mxu0 0.0
        %2124 = vmatprep.subr.mxu0 0.0
        %2125 = vmatpush1.msra.mxu0 0.0
        %2126 = vmatprep.subr.mxu0 0.0
        %2127 = vmatpush1.msra.mxu0 0.0
        %2128 = vmatprep.subr.mxu0 0.0
        %2129 = vmatpush1.msra.mxu0 0.0
        %2130 = vmatprep.subr.mxu0 0.0
        %2131 = vmatpush1.msra.mxu0 0.0
        %2132 = vmatprep.subr.mxu0 0.0
        %2133 = vmatpush1.msra.mxu0 0.0
        %2134 = vmatprep.subr.mxu0 0.0
        %2135 = vmatpush1.msra.mxu0 0.0
        %2136 = vmatprep.subr.mxu0 0.0
        %2137 = vmatpush1.msra.mxu0 0.0
        %2138 = vmatprep.subr.mxu0 0.0
        %2139 = vmatpush1.msra.mxu0 0.0
        %2140 = vmatprep.subr.mxu0 0.0
        %2141 = vmatpush1.msra.mxu0 0.0
        %2142 = vmatprep.subr.mxu0 0.0
        %2143 = vmatpush1.msra.mxu0 0.0
        %2144 = vmatprep.subr.mxu0 0.0
        %2145 = vmatpush1.msra.mxu0 0.0
        %2146 = vmatprep.subr.mxu0 0.0
        %2147 = vmatpush1.msra.mxu0 0.0
        %2148 = vmatprep.subr.mxu0 0.0
        %2149 = vmatpush1.msra.mxu0 0.0
        %2150 = vmatprep.subr.mxu0 0.0
        %2151 = vmatpush1.msra.mxu0 0.0
        %2152 = vmatprep.subr.mxu0 0.0
        %2153 = vmatpush1.msra.mxu0 0.0
        %2154 = vmatprep.subr.mxu0 0.0
        %2155 = vmatpush1.msra.mxu0 0.0
        %2156 = vmatprep.subr.mxu0 0.0
        %2157 = vmatpush1.msra.mxu0 0.0
        %2158 = vmatprep.subr.mxu0 0.0
        %2159 = vmatpush1.msra.mxu0 0.0
        %2160 = vmatprep.subr.mxu0 0.0
        %2161 = vmatpush1.msra.mxu0 0.0
        %2162 = vmatprep.subr.mxu0 0.0
        %2163 = vmatpush1.msra.mxu0 0.0
        %2164 = vmatprep.subr.mxu0 0.0
        %2165 = vmatpush1.msra.mxu0 0.0
        %2166 = vmatprep.subr.mxu0 0.0
        %2167 = vmatpush1.msra.mxu0 0.0
        %2168 = vmatprep.subr.mxu0 0.0
        %2169 = vmatpush1.msra.mxu0 0.0
        %2170 = vmatprep.subr.mxu0 0.0
        %2171 = vmatpush1.msra.mxu0 0.0
        %2172 = vmatprep.subr.mxu0 0.0
        %2173 = vmatpush1.msra.mxu0 0.0
        %2174 = vmatprep.mubr.f32.mxu0 0.0
        %2175 = vmatmul.mubr.f32.gmra.mrb[0].mxu0 %v2108
        %v2176 = vpop.f32.mrb[0].mxu0
        %v2177 = vadd.f32 0.0, %v2176
        %v2178 = vpop.f32.mrb[0].mxu0
        %v2179 = vadd.f32 0.0, %v2178
        %2180 = vdwg.mxu0
        %s2181 = scalar_lea.vmem [#allocation3], 3584
        %v2182 = vld [vmem:[%s2181] sm:$0xff]
        %v2183 = vld [vmem:[%s2181 + $0x8] sm:$0xff]
        %v2184 = vld [vmem:[%s2181 + $0x10] sm:$0xff]
        %v2185 = vld [vmem:[%s2181 + $0x18] sm:$0xff]
        %v2186 = vld [vmem:[%s2181 + $0x20] sm:$0xff]
        %v2187 = vld [vmem:[%s2181 + $0x28] sm:$0xff]
        %v2188 = vld [vmem:[%s2181 + $0x30] sm:$0xff]
        %v2189 = vld [vmem:[%s2181 + $0x38] sm:$0xff]
        %v2190 = vld [vmem:[%s2181 + $0x40] sm:$0xff]
        %v2191 = vld [vmem:[%s2181 + $0x48] sm:$0xff]
        %v2192 = vld [vmem:[%s2181 + $0x50] sm:$0xff]
        %v2193 = vld [vmem:[%s2181 + $0x58] sm:$0xff]
        %v2194 = vld [vmem:[%s2181 + $0x60] sm:$0xff]
        %v2195 = vld [vmem:[%s2181 + $0x68] sm:$0xff]
        %v2196 = vld [vmem:[%s2181 + $0x70] sm:$0xff]
        %v2197 = vld [vmem:[%s2181 + $0x78] sm:$0xff]
        %v2198 = vld [vmem:[%s2181 + $0x80] sm:$0xff]
        %v2199 = vld [vmem:[%s2181 + $0x88] sm:$0xff]
        %v2200 = vld [vmem:[%s2181 + $0x90] sm:$0xff]
        %v2201 = vld [vmem:[%s2181 + $0x98] sm:$0xff]
        %v2202 = vld [vmem:[%s2181 + $0xa0] sm:$0xff]
        %v2203 = vld [vmem:[%s2181 + $0xa8] sm:$0xff]
        %v2204 = vld [vmem:[%s2181 + $0xb0] sm:$0xff]
        %v2205 = vld [vmem:[%s2181 + $0xb8] sm:$0xff]
        %v2206 = vld [vmem:[%s2181 + $0xc0] sm:$0xff]
        %v2207 = vld [vmem:[%s2181 + $0xc8] sm:$0xff]
        %v2208 = vld [vmem:[%s2181 + $0xd0] sm:$0xff]
        %v2209 = vld [vmem:[%s2181 + $0xd8] sm:$0xff]
        %v2210 = vld [vmem:[%s2181 + $0xe0] sm:$0xff]
        %v2211 = vld [vmem:[%s2181 + $0xe8] sm:$0xff]
        %v2212 = vld [vmem:[%s2181 + $0xf0] sm:$0xff]
        %v2213 = vld [vmem:[%s2181 + $0xf8] sm:$0xff]
        %v2214 = vld [vmem:[%s2181 + $0x100] sm:$0xff]
        %v2215 = vld [vmem:[%s2181 + $0x108] sm:$0xff]
        %v2216 = vld [vmem:[%s2181 + $0x110] sm:$0xff]
        %v2217 = vld [vmem:[%s2181 + $0x118] sm:$0xff]
        %v2218 = vld [vmem:[%s2181 + $0x120] sm:$0xff]
        %v2219 = vld [vmem:[%s2181 + $0x128] sm:$0xff]
        %v2220 = vld [vmem:[%s2181 + $0x130] sm:$0xff]
        %v2221 = vld [vmem:[%s2181 + $0x138] sm:$0xff]
        %v2222 = vld [vmem:[%s2181 + $0x140] sm:$0xff]
        %v2223 = vld [vmem:[%s2181 + $0x148] sm:$0xff]
        %v2224 = vld [vmem:[%s2181 + $0x150] sm:$0xff]
        %v2225 = vld [vmem:[%s2181 + $0x158] sm:$0xff]
        %v2226 = vld [vmem:[%s2181 + $0x160] sm:$0xff]
        %v2227 = vld [vmem:[%s2181 + $0x168] sm:$0xff]
        %v2228 = vld [vmem:[%s2181 + $0x170] sm:$0xff]
        %v2229 = vld [vmem:[%s2181 + $0x178] sm:$0xff]
        %v2230 = vld [vmem:[%s2181 + $0x180] sm:$0xff]
        %v2231 = vld [vmem:[%s2181 + $0x188] sm:$0xff]
        %v2232 = vld [vmem:[%s2181 + $0x190] sm:$0xff]
        %v2233 = vld [vmem:[%s2181 + $0x198] sm:$0xff]
        %v2234 = vld [vmem:[%s2181 + $0x1a0] sm:$0xff]
        %v2235 = vld [vmem:[%s2181 + $0x1a8] sm:$0xff]
        %v2236 = vld [vmem:[%s2181 + $0x1b0] sm:$0xff]
        %v2237 = vld [vmem:[%s2181 + $0x1b8] sm:$0xff]
        %v2238 = vld [vmem:[%s2181 + $0x1c0] sm:$0xff]
        %v2239 = vld [vmem:[%s2181 + $0x1c8] sm:$0xff]
        %v2240 = vld [vmem:[%s2181 + $0x1d0] sm:$0xff]
        %v2241 = vld [vmem:[%s2181 + $0x1d8] sm:$0xff]
        %v2242 = vld [vmem:[%s2181 + $0x1e0] sm:$0xff]
        %v2243 = vld [vmem:[%s2181 + $0x1e8] sm:$0xff]
        %v2244 = vld [vmem:[%s2181 + $0x1f0] sm:$0xff]
        %v2245 = vld [vmem:[%s2181 + $0x1f8] sm:$0xff]
        %2246 = vmatprep.subr.mxu0 %v2183
        %2247 = vmatpush1.msra.mxu0 %v2182
        %2248 = vmatprep.subr.mxu0 %v2185
        %2249 = vmatpush1.msra.mxu0 %v2184
        %2250 = vmatprep.subr.mxu0 %v2187
        %2251 = vmatpush1.msra.mxu0 %v2186
        %2252 = vmatprep.subr.mxu0 %v2189
        %2253 = vmatpush1.msra.mxu0 %v2188
        %2254 = vmatprep.subr.mxu0 %v2191
        %2255 = vmatpush1.msra.mxu0 %v2190
        %2256 = vmatprep.subr.mxu0 %v2193
        %2257 = vmatpush1.msra.mxu0 %v2192
        %2258 = vmatprep.subr.mxu0 %v2195
        %2259 = vmatpush1.msra.mxu0 %v2194
        %2260 = vmatprep.subr.mxu0 %v2197
        %2261 = vmatpush1.msra.mxu0 %v2196
        %2262 = vmatprep.subr.mxu0 %v2199
        %2263 = vmatpush1.msra.mxu0 %v2198
        %2264 = vmatprep.subr.mxu0 %v2201
        %2265 = vmatpush1.msra.mxu0 %v2200
        %2266 = vmatprep.subr.mxu0 %v2203
        %2267 = vmatpush1.msra.mxu0 %v2202
        %2268 = vmatprep.subr.mxu0 %v2205
        %2269 = vmatpush1.msra.mxu0 %v2204
        %2270 = vmatprep.subr.mxu0 %v2207
        %2271 = vmatpush1.msra.mxu0 %v2206
        %2272 = vmatprep.subr.mxu0 %v2209
        %2273 = vmatpush1.msra.mxu0 %v2208
        %2274 = vmatprep.subr.mxu0 %v2211
        %2275 = vmatpush1.msra.mxu0 %v2210
        %2276 = vmatprep.subr.mxu0 %v2213
        %2277 = vmatpush1.msra.mxu0 %v2212
        %2278 = vmatprep.subr.mxu0 %v2215
        %2279 = vmatpush1.msra.mxu0 %v2214
        %2280 = vmatprep.subr.mxu0 %v2217
        %2281 = vmatpush1.msra.mxu0 %v2216
        %2282 = vmatprep.subr.mxu0 %v2219
        %2283 = vmatpush1.msra.mxu0 %v2218
        %2284 = vmatprep.subr.mxu0 %v2221
        %2285 = vmatpush1.msra.mxu0 %v2220
        %2286 = vmatprep.subr.mxu0 %v2223
        %2287 = vmatpush1.msra.mxu0 %v2222
        %2288 = vmatprep.subr.mxu0 %v2225
        %2289 = vmatpush1.msra.mxu0 %v2224
        %2290 = vmatprep.subr.mxu0 %v2227
        %2291 = vmatpush1.msra.mxu0 %v2226
        %2292 = vmatprep.subr.mxu0 %v2229
        %2293 = vmatpush1.msra.mxu0 %v2228
        %2294 = vmatprep.subr.mxu0 %v2231
        %2295 = vmatpush1.msra.mxu0 %v2230
        %2296 = vmatprep.subr.mxu0 %v2233
        %2297 = vmatpush1.msra.mxu0 %v2232
        %2298 = vmatprep.subr.mxu0 %v2235
        %2299 = vmatpush1.msra.mxu0 %v2234
        %2300 = vmatprep.subr.mxu0 %v2237
        %2301 = vmatpush1.msra.mxu0 %v2236
        %2302 = vmatprep.subr.mxu0 %v2239
        %2303 = vmatpush1.msra.mxu0 %v2238
        %2304 = vmatprep.subr.mxu0 %v2241
        %2305 = vmatpush1.msra.mxu0 %v2240
        %2306 = vmatprep.subr.mxu0 %v2243
        %2307 = vmatpush1.msra.mxu0 %v2242
        %2308 = vmatprep.subr.mxu0 %v2245
        %2309 = vmatpush1.msra.mxu0 %v2244
        %2310 = vmatprep.mubr.f32.mxu0 %v2179
        %2311 = vmatmul.mubr.f32.gmra.mrb[0].mxu0 %v2177
        %v2312 = vpop.f32.mrb[0].mxu0
        %v2313 = vadd.f32 0.0, %v2312
        %v2314 = vpop.f32.mrb[0].mxu0
        %v2315 = vadd.f32 0.0, %v2314
        %2316 = vdwg.mxu0
        %v2317 = vadd.f32 %v2103, %v2313
        %v2318 = vadd.f32 %v2104, %v2315
        %s2319 = scalar_lea.vmem %s5, 64
        %v2320 = vld [vmem:[%s2319] sm:$0xff]
        %v2322 = vsel %vm613, %v2320, 0
        %2324 = vmatprep.subr.mxu0 %v611
        %2325 = vmatpush1.msra.mxu0 %v610
        %2326 = vmatprep.subr.mxu0 0.0
        %2327 = vmatpush1.msra.mxu0 0.0
        %2328 = vmatprep.subr.mxu0 0.0
        %2329 = vmatpush1.msra.mxu0 0.0
        %2330 = vmatprep.subr.mxu0 0.0
        %2331 = vmatpush1.msra.mxu0 0.0
        %2332 = vmatprep.subr.mxu0 0.0
        %2333 = vmatpush1.msra.mxu0 0.0
        %2334 = vmatprep.subr.mxu0 0.0
        %2335 = vmatpush1.msra.mxu0 0.0
        %2336 = vmatprep.subr.mxu0 0.0
        %2337 = vmatpush1.msra.mxu0 0.0
        %2338 = vmatprep.subr.mxu0 0.0
        %2339 = vmatpush1.msra.mxu0 0.0
        %2340 = vmatprep.subr.mxu0 0.0
        %2341 = vmatpush1.msra.mxu0 0.0
        %2342 = vmatprep.subr.mxu0 0.0
        %2343 = vmatpush1.msra.mxu0 0.0
        %2344 = vmatprep.subr.mxu0 0.0
        %2345 = vmatpush1.msra.mxu0 0.0
        %2346 = vmatprep.subr.mxu0 0.0
        %2347 = vmatpush1.msra.mxu0 0.0
        %2348 = vmatprep.subr.mxu0 0.0
        %2349 = vmatpush1.msra.mxu0 0.0
        %2350 = vmatprep.subr.mxu0 0.0
        %2351 = vmatpush1.msra.mxu0 0.0
        %2352 = vmatprep.subr.mxu0 0.0
        %2353 = vmatpush1.msra.mxu0 0.0
        %2354 = vmatprep.subr.mxu0 0.0
        %2355 = vmatpush1.msra.mxu0 0.0
        %2356 = vmatprep.subr.mxu0 0.0
        %2357 = vmatpush1.msra.mxu0 0.0
        %2358 = vmatprep.subr.mxu0 0.0
        %2359 = vmatpush1.msra.mxu0 0.0
        %2360 = vmatprep.subr.mxu0 0.0
        %2361 = vmatpush1.msra.mxu0 0.0
        %2362 = vmatprep.subr.mxu0 0.0
        %2363 = vmatpush1.msra.mxu0 0.0
        %2364 = vmatprep.subr.mxu0 0.0
        %2365 = vmatpush1.msra.mxu0 0.0
        %2366 = vmatprep.subr.mxu0 0.0
        %2367 = vmatpush1.msra.mxu0 0.0
        %2368 = vmatprep.subr.mxu0 0.0
        %2369 = vmatpush1.msra.mxu0 0.0
        %2370 = vmatprep.subr.mxu0 0.0
        %2371 = vmatpush1.msra.mxu0 0.0
        %2372 = vmatprep.subr.mxu0 0.0
        %2373 = vmatpush1.msra.mxu0 0.0
        %2374 = vmatprep.subr.mxu0 0.0
        %2375 = vmatpush1.msra.mxu0 0.0
        %2376 = vmatprep.subr.mxu0 0.0
        %2377 = vmatpush1.msra.mxu0 0.0
        %2378 = vmatprep.subr.mxu0 0.0
        %2379 = vmatpush1.msra.mxu0 0.0
        %2380 = vmatprep.subr.mxu0 0.0
        %2381 = vmatpush1.msra.mxu0 0.0
        %2382 = vmatprep.subr.mxu0 0.0
        %2383 = vmatpush1.msra.mxu0 0.0
        %2384 = vmatprep.subr.mxu0 0.0
        %2385 = vmatpush1.msra.mxu0 0.0
        %2386 = vmatprep.subr.mxu0 0.0
        %2387 = vmatpush1.msra.mxu0 0.0
        %2388 = vmatprep.mubr.f32.mxu0 0.0
        %2389 = vmatmul.mubr.f32.gmra.mrb[0].mxu0 %v2322
        %v2390 = vpop.f32.mrb[0].mxu0
        %v2391 = vadd.f32 0.0, %v2390
        %v2392 = vpop.f32.mrb[0].mxu0
        %v2393 = vadd.f32 0.0, %v2392
        %2394 = vdwg.mxu0
        %s2395 = scalar_lea.vmem [#allocation3], 4096
        %v2396 = vld [vmem:[%s2395] sm:$0xff]
        %v2397 = vld [vmem:[%s2395 + $0x8] sm:$0xff]
        %v2398 = vld [vmem:[%s2395 + $0x10] sm:$0xff]
        %v2399 = vld [vmem:[%s2395 + $0x18] sm:$0xff]
        %v2400 = vld [vmem:[%s2395 + $0x20] sm:$0xff]
        %v2401 = vld [vmem:[%s2395 + $0x28] sm:$0xff]
        %v2402 = vld [vmem:[%s2395 + $0x30] sm:$0xff]
        %v2403 = vld [vmem:[%s2395 + $0x38] sm:$0xff]
        %v2404 = vld [vmem:[%s2395 + $0x40] sm:$0xff]
        %v2405 = vld [vmem:[%s2395 + $0x48] sm:$0xff]
        %v2406 = vld [vmem:[%s2395 + $0x50] sm:$0xff]
        %v2407 = vld [vmem:[%s2395 + $0x58] sm:$0xff]
        %v2408 = vld [vmem:[%s2395 + $0x60] sm:$0xff]
        %v2409 = vld [vmem:[%s2395 + $0x68] sm:$0xff]
        %v2410 = vld [vmem:[%s2395 + $0x70] sm:$0xff]
        %v2411 = vld [vmem:[%s2395 + $0x78] sm:$0xff]
        %v2412 = vld [vmem:[%s2395 + $0x80] sm:$0xff]
        %v2413 = vld [vmem:[%s2395 + $0x88] sm:$0xff]
        %v2414 = vld [vmem:[%s2395 + $0x90] sm:$0xff]
        %v2415 = vld [vmem:[%s2395 + $0x98] sm:$0xff]
        %v2416 = vld [vmem:[%s2395 + $0xa0] sm:$0xff]
        %v2417 = vld [vmem:[%s2395 + $0xa8] sm:$0xff]
        %v2418 = vld [vmem:[%s2395 + $0xb0] sm:$0xff]
        %v2419 = vld [vmem:[%s2395 + $0xb8] sm:$0xff]
        %v2420 = vld [vmem:[%s2395 + $0xc0] sm:$0xff]
        %v2421 = vld [vmem:[%s2395 + $0xc8] sm:$0xff]
        %v2422 = vld [vmem:[%s2395 + $0xd0] sm:$0xff]
        %v2423 = vld [vmem:[%s2395 + $0xd8] sm:$0xff]
        %v2424 = vld [vmem:[%s2395 + $0xe0] sm:$0xff]
        %v2425 = vld [vmem:[%s2395 + $0xe8] sm:$0xff]
        %v2426 = vld [vmem:[%s2395 + $0xf0] sm:$0xff]
        %v2427 = vld [vmem:[%s2395 + $0xf8] sm:$0xff]
        %v2428 = vld [vmem:[%s2395 + $0x100] sm:$0xff]
        %v2429 = vld [vmem:[%s2395 + $0x108] sm:$0xff]
        %v2430 = vld [vmem:[%s2395 + $0x110] sm:$0xff]
        %v2431 = vld [vmem:[%s2395 + $0x118] sm:$0xff]
        %v2432 = vld [vmem:[%s2395 + $0x120] sm:$0xff]
        %v2433 = vld [vmem:[%s2395 + $0x128] sm:$0xff]
        %v2434 = vld [vmem:[%s2395 + $0x130] sm:$0xff]
        %v2435 = vld [vmem:[%s2395 + $0x138] sm:$0xff]
        %v2436 = vld [vmem:[%s2395 + $0x140] sm:$0xff]
        %v2437 = vld [vmem:[%s2395 + $0x148] sm:$0xff]
        %v2438 = vld [vmem:[%s2395 + $0x150] sm:$0xff]
        %v2439 = vld [vmem:[%s2395 + $0x158] sm:$0xff]
        %v2440 = vld [vmem:[%s2395 + $0x160] sm:$0xff]
        %v2441 = vld [vmem:[%s2395 + $0x168] sm:$0xff]
        %v2442 = vld [vmem:[%s2395 + $0x170] sm:$0xff]
        %v2443 = vld [vmem:[%s2395 + $0x178] sm:$0xff]
        %v2444 = vld [vmem:[%s2395 + $0x180] sm:$0xff]
        %v2445 = vld [vmem:[%s2395 + $0x188] sm:$0xff]
        %v2446 = vld [vmem:[%s2395 + $0x190] sm:$0xff]
        %v2447 = vld [vmem:[%s2395 + $0x198] sm:$0xff]
        %v2448 = vld [vmem:[%s2395 + $0x1a0] sm:$0xff]
        %v2449 = vld [vmem:[%s2395 + $0x1a8] sm:$0xff]
        %v2450 = vld [vmem:[%s2395 + $0x1b0] sm:$0xff]
        %v2451 = vld [vmem:[%s2395 + $0x1b8] sm:$0xff]
        %v2452 = vld [vmem:[%s2395 + $0x1c0] sm:$0xff]
        %v2453 = vld [vmem:[%s2395 + $0x1c8] sm:$0xff]
        %v2454 = vld [vmem:[%s2395 + $0x1d0] sm:$0xff]
        %v2455 = vld [vmem:[%s2395 + $0x1d8] sm:$0xff]
        %v2456 = vld [vmem:[%s2395 + $0x1e0] sm:$0xff]
        %v2457 = vld [vmem:[%s2395 + $0x1e8] sm:$0xff]
        %v2458 = vld [vmem:[%s2395 + $0x1f0] sm:$0xff]
        %v2459 = vld [vmem:[%s2395 + $0x1f8] sm:$0xff]
        %2460 = vmatprep.subr.mxu0 %v2397
        %2461 = vmatpush1.msra.mxu0 %v2396
        %2462 = vmatprep.subr.mxu0 %v2399
        %2463 = vmatpush1.msra.mxu0 %v2398
        %2464 = vmatprep.subr.mxu0 %v2401
        %2465 = vmatpush1.msra.mxu0 %v2400
        %2466 = vmatprep.subr.mxu0 %v2403
        %2467 = vmatpush1.msra.mxu0 %v2402
        %2468 = vmatprep.subr.mxu0 %v2405
        %2469 = vmatpush1.msra.mxu0 %v2404
        %2470 = vmatprep.subr.mxu0 %v2407
        %2471 = vmatpush1.msra.mxu0 %v2406
        %2472 = vmatprep.subr.mxu0 %v2409
        %2473 = vmatpush1.msra.mxu0 %v2408
        %2474 = vmatprep.subr.mxu0 %v2411
        %2475 = vmatpush1.msra.mxu0 %v2410
        %2476 = vmatprep.subr.mxu0 %v2413
        %2477 = vmatpush1.msra.mxu0 %v2412
        %2478 = vmatprep.subr.mxu0 %v2415
        %2479 = vmatpush1.msra.mxu0 %v2414
        %2480 = vmatprep.subr.mxu0 %v2417
        %2481 = vmatpush1.msra.mxu0 %v2416
        %2482 = vmatprep.subr.mxu0 %v2419
        %2483 = vmatpush1.msra.mxu0 %v2418
        %2484 = vmatprep.subr.mxu0 %v2421
        %2485 = vmatpush1.msra.mxu0 %v2420
        %2486 = vmatprep.subr.mxu0 %v2423
        %2487 = vmatpush1.msra.mxu0 %v2422
        %2488 = vmatprep.subr.mxu0 %v2425
        %2489 = vmatpush1.msra.mxu0 %v2424
        %2490 = vmatprep.subr.mxu0 %v2427
        %2491 = vmatpush1.msra.mxu0 %v2426
        %2492 = vmatprep.subr.mxu0 %v2429
        %2493 = vmatpush1.msra.mxu0 %v2428
        %2494 = vmatprep.subr.mxu0 %v2431
        %2495 = vmatpush1.msra.mxu0 %v2430
        %2496 = vmatprep.subr.mxu0 %v2433
        %2497 = vmatpush1.msra.mxu0 %v2432
        %2498 = vmatprep.subr.mxu0 %v2435
        %2499 = vmatpush1.msra.mxu0 %v2434
        %2500 = vmatprep.subr.mxu0 %v2437
        %2501 = vmatpush1.msra.mxu0 %v2436
        %2502 = vmatprep.subr.mxu0 %v2439
        %2503 = vmatpush1.msra.mxu0 %v2438
        %2504 = vmatprep.subr.mxu0 %v2441
        %2505 = vmatpush1.msra.mxu0 %v2440
        %2506 = vmatprep.subr.mxu0 %v2443
        %2507 = vmatpush1.msra.mxu0 %v2442
        %2508 = vmatprep.subr.mxu0 %v2445
        %2509 = vmatpush1.msra.mxu0 %v2444
        %2510 = vmatprep.subr.mxu0 %v2447
        %2511 = vmatpush1.msra.mxu0 %v2446
        %2512 = vmatprep.subr.mxu0 %v2449
        %2513 = vmatpush1.msra.mxu0 %v2448
        %2514 = vmatprep.subr.mxu0 %v2451
        %2515 = vmatpush1.msra.mxu0 %v2450
        %2516 = vmatprep.subr.mxu0 %v2453
        %2517 = vmatpush1.msra.mxu0 %v2452
        %2518 = vmatprep.subr.mxu0 %v2455
        %2519 = vmatpush1.msra.mxu0 %v2454
        %2520 = vmatprep.subr.mxu0 %v2457
        %2521 = vmatpush1.msra.mxu0 %v2456
        %2522 = vmatprep.subr.mxu0 %v2459
        %2523 = vmatpush1.msra.mxu0 %v2458
        %2524 = vmatprep.mubr.f32.mxu0 %v2393
        %2525 = vmatmul.mubr.f32.gmra.mrb[0].mxu0 %v2391
        %v2526 = vpop.f32.mrb[0].mxu0
        %v2527 = vadd.f32 0.0, %v2526
        %v2528 = vpop.f32.mrb[0].mxu0
        %v2529 = vadd.f32 0.0, %v2528
        %2530 = vdwg.mxu0
        %v2531 = vadd.f32 %v2317, %v2527
        %v2532 = vadd.f32 %v2318, %v2529
        %v2533 = vld [vmem:[%s6] sm:$0xff]
        %2535 = vset.pattern.permute.xlu0 0
        %2536 = vperm.xlu0 %2535, %v2533
        %v2537 = vpop.permute.xlu0 %2536
        %v2539 = vadd.f32 %v2531, %v2537
        %v2540 = vadd.f32 %v2532, %v2537
        %v2541 = vmax.f32 %v2539, 0.0
        %v2542 = vmax.f32 %v2540, 0.0
        %v2543 = vld [vmem:[%s7] sm:$0xff]
        %v2545 = vsel %vm613, %v2543, 0
        %2547 = vmatprep.subr.mxu0 %v609
        %2548 = vmatpush1.msra.mxu0 %v608
        %2549 = vmatprep.subr.mxu0 0.0
        %2550 = vmatpush1.msra.mxu0 0.0
        %2551 = vmatprep.subr.mxu0 0.0
        %2552 = vmatpush1.msra.mxu0 0.0
        %2553 = vmatprep.subr.mxu0 0.0
        %2554 = vmatpush1.msra.mxu0 0.0
        %2555 = vmatprep.subr.mxu0 0.0
        %2556 = vmatpush1.msra.mxu0 0.0
        %2557 = vmatprep.subr.mxu0 0.0
        %2558 = vmatpush1.msra.mxu0 0.0
        %2559 = vmatprep.subr.mxu0 0.0
        %2560 = vmatpush1.msra.mxu0 0.0
        %2561 = vmatprep.subr.mxu0 0.0
        %2562 = vmatpush1.msra.mxu0 0.0
        %2563 = vmatprep.subr.mxu0 0.0
        %2564 = vmatpush1.msra.mxu0 0.0
        %2565 = vmatprep.subr.mxu0 0.0
        %2566 = vmatpush1.msra.mxu0 0.0
        %2567 = vmatprep.subr.mxu0 0.0
        %2568 = vmatpush1.msra.mxu0 0.0
        %2569 = vmatprep.subr.mxu0 0.0
        %2570 = vmatpush1.msra.mxu0 0.0
        %2571 = vmatprep.subr.mxu0 0.0
        %2572 = vmatpush1.msra.mxu0 0.0
        %2573 = vmatprep.subr.mxu0 0.0
        %2574 = vmatpush1.msra.mxu0 0.0
        %2575 = vmatprep.subr.mxu0 0.0
        %2576 = vmatpush1.msra.mxu0 0.0
        %2577 = vmatprep.subr.mxu0 0.0
        %2578 = vmatpush1.msra.mxu0 0.0
        %2579 = vmatprep.subr.mxu0 0.0
        %2580 = vmatpush1.msra.mxu0 0.0
        %2581 = vmatprep.subr.mxu0 0.0
        %2582 = vmatpush1.msra.mxu0 0.0
        %2583 = vmatprep.subr.mxu0 0.0
        %2584 = vmatpush1.msra.mxu0 0.0
        %2585 = vmatprep.subr.mxu0 0.0
        %2586 = vmatpush1.msra.mxu0 0.0
        %2587 = vmatprep.subr.mxu0 0.0
        %2588 = vmatpush1.msra.mxu0 0.0
        %2589 = vmatprep.subr.mxu0 0.0
        %2590 = vmatpush1.msra.mxu0 0.0
        %2591 = vmatprep.subr.mxu0 0.0
        %2592 = vmatpush1.msra.mxu0 0.0
        %2593 = vmatprep.subr.mxu0 0.0
        %2594 = vmatpush1.msra.mxu0 0.0
        %2595 = vmatprep.subr.mxu0 0.0
        %2596 = vmatpush1.msra.mxu0 0.0
        %2597 = vmatprep.subr.mxu0 0.0
        %2598 = vmatpush1.msra.mxu0 0.0
        %2599 = vmatprep.subr.mxu0 0.0
        %2600 = vmatpush1.msra.mxu0 0.0
        %2601 = vmatprep.subr.mxu0 0.0
        %2602 = vmatpush1.msra.mxu0 0.0
        %2603 = vmatprep.subr.mxu0 0.0
        %2604 = vmatpush1.msra.mxu0 0.0
        %2605 = vmatprep.subr.mxu0 0.0
        %2606 = vmatpush1.msra.mxu0 0.0
        %2607 = vmatprep.subr.mxu0 0.0
        %2608 = vmatpush1.msra.mxu0 0.0
        %2609 = vmatprep.subr.mxu0 0.0
        %2610 = vmatpush1.msra.mxu0 0.0
        %2611 = vmatprep.mubr.f32.mxu0 0.0
        %2612 = vmatmul.mubr.f32.gmra.mrb[0].mxu0 %v2545
        %v2613 = vpop.f32.mrb[0].mxu0
        %v2614 = vadd.f32 0.0, %v2613
        %v2615 = vpop.f32.mrb[0].mxu0
        %v2616 = vadd.f32 0.0, %v2615
        %2617 = vdwg.mxu0
        %s2618 = scalar_lea.vmem %s7, 8
        %v2619 = vld [vmem:[%s2618] sm:$0xff]
        %v2621 = vsel %vm613, %v2619, 0
        %2623 = vmatprep.subr.mxu0 %v609
        %2624 = vmatpush1.msra.mxu0 %v608
        %2625 = vmatprep.subr.mxu0 0.0
        %2626 = vmatpush1.msra.mxu0 0.0
        %2627 = vmatprep.subr.mxu0 0.0
        %2628 = vmatpush1.msra.mxu0 0.0
        %2629 = vmatprep.subr.mxu0 0.0
        %2630 = vmatpush1.msra.mxu0 0.0
        %2631 = vmatprep.subr.mxu0 0.0
        %2632 = vmatpush1.msra.mxu0 0.0
        %2633 = vmatprep.subr.mxu0 0.0
        %2634 = vmatpush1.msra.mxu0 0.0
        %2635 = vmatprep.subr.mxu0 0.0
        %2636 = vmatpush1.msra.mxu0 0.0
        %2637 = vmatprep.subr.mxu0 0.0
        %2638 = vmatpush1.msra.mxu0 0.0
        %2639 = vmatprep.subr.mxu0 0.0
        %2640 = vmatpush1.msra.mxu0 0.0
        %2641 = vmatprep.subr.mxu0 0.0
        %2642 = vmatpush1.msra.mxu0 0.0
        %2643 = vmatprep.subr.mxu0 0.0
        %2644 = vmatpush1.msra.mxu0 0.0
        %2645 = vmatprep.subr.mxu0 0.0
        %2646 = vmatpush1.msra.mxu0 0.0
        %2647 = vmatprep.subr.mxu0 0.0
        %2648 = vmatpush1.msra.mxu0 0.0
        %2649 = vmatprep.subr.mxu0 0.0
        %2650 = vmatpush1.msra.mxu0 0.0
        %2651 = vmatprep.subr.mxu0 0.0
        %2652 = vmatpush1.msra.mxu0 0.0
        %2653 = vmatprep.subr.mxu0 0.0
        %2654 = vmatpush1.msra.mxu0 0.0
        %2655 = vmatprep.subr.mxu0 0.0
        %2656 = vmatpush1.msra.mxu0 0.0
        %2657 = vmatprep.subr.mxu0 0.0
        %2658 = vmatpush1.msra.mxu0 0.0
        %2659 = vmatprep.subr.mxu0 0.0
        %2660 = vmatpush1.msra.mxu0 0.0
        %2661 = vmatprep.subr.mxu0 0.0
        %2662 = vmatpush1.msra.mxu0 0.0
        %2663 = vmatprep.subr.mxu0 0.0
        %2664 = vmatpush1.msra.mxu0 0.0
        %2665 = vmatprep.subr.mxu0 0.0
        %2666 = vmatpush1.msra.mxu0 0.0
        %2667 = vmatprep.subr.mxu0 0.0
        %2668 = vmatpush1.msra.mxu0 0.0
        %2669 = vmatprep.subr.mxu0 0.0
        %2670 = vmatpush1.msra.mxu0 0.0
        %2671 = vmatprep.subr.mxu0 0.0
        %2672 = vmatpush1.msra.mxu0 0.0
        %2673 = vmatprep.subr.mxu0 0.0
        %2674 = vmatpush1.msra.mxu0 0.0
        %2675 = vmatprep.subr.mxu0 0.0
        %2676 = vmatpush1.msra.mxu0 0.0
        %2677 = vmatprep.subr.mxu0 0.0
        %2678 = vmatpush1.msra.mxu0 0.0
        %2679 = vmatprep.subr.mxu0 0.0
        %2680 = vmatpush1.msra.mxu0 0.0
        %2681 = vmatprep.subr.mxu0 0.0
        %2682 = vmatpush1.msra.mxu0 0.0
        %2683 = vmatprep.subr.mxu0 0.0
        %2684 = vmatpush1.msra.mxu0 0.0
        %2685 = vmatprep.subr.mxu0 0.0
        %2686 = vmatpush1.msra.mxu0 0.0
        %2687 = vmatprep.mubr.f32.mxu0 0.0
        %2688 = vmatmul.mubr.f32.gmra.mrb[0].mxu0 %v2621
        %v2689 = vpop.f32.mrb[0].mxu0
        %v2690 = vadd.f32 0.0, %v2689
        %v2691 = vpop.f32.mrb[0].mxu0
        %v2692 = vadd.f32 0.0, %v2691
        %2693 = vdwg.mxu0
        %2694 = vmatprep.subr.mxu0 %v830
        %2695 = vmatpush1.msra.mxu0 %v829
        %2696 = vmatprep.subr.mxu0 %v832
        %2697 = vmatpush1.msra.mxu0 %v831
        %2698 = vmatprep.subr.mxu0 %v834
        %2699 = vmatpush1.msra.mxu0 %v833
        %2700 = vmatprep.subr.mxu0 %v836
        %2701 = vmatpush1.msra.mxu0 %v835
        %2702 = vmatprep.subr.mxu0 %v838
        %2703 = vmatpush1.msra.mxu0 %v837
        %2704 = vmatprep.subr.mxu0 %v840
        %2705 = vmatpush1.msra.mxu0 %v839
        %2706 = vmatprep.subr.mxu0 %v842
        %2707 = vmatpush1.msra.mxu0 %v841
        %2708 = vmatprep.subr.mxu0 %v844
        %2709 = vmatpush1.msra.mxu0 %v843
        %2710 = vmatprep.subr.mxu0 %v846
        %2711 = vmatpush1.msra.mxu0 %v845
        %2712 = vmatprep.subr.mxu0 %v848
        %2713 = vmatpush1.msra.mxu0 %v847
        %2714 = vmatprep.subr.mxu0 %v850
        %2715 = vmatpush1.msra.mxu0 %v849
        %2716 = vmatprep.subr.mxu0 %v852
        %2717 = vmatpush1.msra.mxu0 %v851
        %2718 = vmatprep.subr.mxu0 %v854
        %2719 = vmatpush1.msra.mxu0 %v853
        %2720 = vmatprep.subr.mxu0 %v856
        %2721 = vmatpush1.msra.mxu0 %v855
        %2722 = vmatprep.subr.mxu0 %v858
        %2723 = vmatpush1.msra.mxu0 %v857
        %2724 = vmatprep.subr.mxu0 %v860
        %2725 = vmatpush1.msra.mxu0 %v859
        %2726 = vmatprep.subr.mxu0 %v862
        %2727 = vmatpush1.msra.mxu0 %v861
        %2728 = vmatprep.subr.mxu0 %v864
        %2729 = vmatpush1.msra.mxu0 %v863
        %2730 = vmatprep.subr.mxu0 %v866
        %2731 = vmatpush1.msra.mxu0 %v865
        %2732 = vmatprep.subr.mxu0 %v868
        %2733 = vmatpush1.msra.mxu0 %v867
        %2734 = vmatprep.subr.mxu0 %v870
        %2735 = vmatpush1.msra.mxu0 %v869
        %2736 = vmatprep.subr.mxu0 %v872
        %2737 = vmatpush1.msra.mxu0 %v871
        %2738 = vmatprep.subr.mxu0 %v874
        %2739 = vmatpush1.msra.mxu0 %v873
        %2740 = vmatprep.subr.mxu0 %v876
        %2741 = vmatpush1.msra.mxu0 %v875
        %2742 = vmatprep.subr.mxu0 %v878
        %2743 = vmatpush1.msra.mxu0 %v877
        %2744 = vmatprep.subr.mxu0 %v880
        %2745 = vmatpush1.msra.mxu0 %v879
        %2746 = vmatprep.subr.mxu0 %v882
        %2747 = vmatpush1.msra.mxu0 %v881
        %2748 = vmatprep.subr.mxu0 %v884
        %2749 = vmatpush1.msra.mxu0 %v883
        %2750 = vmatprep.subr.mxu0 %v886
        %2751 = vmatpush1.msra.mxu0 %v885
        %2752 = vmatprep.subr.mxu0 %v888
        %2753 = vmatpush1.msra.mxu0 %v887
        %2754 = vmatprep.subr.mxu0 %v890
        %2755 = vmatpush1.msra.mxu0 %v889
        %2756 = vmatprep.subr.mxu0 %v892
        %2757 = vmatpush1.msra.mxu0 %v891
        %2758 = vmatprep.mubr.f32.mxu0 %v2692
        %2759 = vmatmul.mubr.f32.gmra.mrb[0].mxu0 %v2690
        %v2760 = vpop.f32.mrb[0].mxu0
        %v2761 = vadd.f32 0.0, %v2760
        %v2762 = vpop.f32.mrb[0].mxu0
        %v2763 = vadd.f32 0.0, %v2762
        %2764 = vdwg.mxu0
        %2765 = vmatprep.subr.mxu0 %v689
        %2766 = vmatpush1.msra.mxu0 %v688
        %2767 = vmatprep.subr.mxu0 %v691
        %2768 = vmatpush1.msra.mxu0 %v690
        %2769 = vmatprep.subr.mxu0 %v693
        %2770 = vmatpush1.msra.mxu0 %v692
        %2771 = vmatprep.subr.mxu0 %v695
        %2772 = vmatpush1.msra.mxu0 %v694
        %2773 = vmatprep.subr.mxu0 %v697
        %2774 = vmatpush1.msra.mxu0 %v696
        %2775 = vmatprep.subr.mxu0 %v699
        %2776 = vmatpush1.msra.mxu0 %v698
        %2777 = vmatprep.subr.mxu0 %v701
        %2778 = vmatpush1.msra.mxu0 %v700
        %2779 = vmatprep.subr.mxu0 %v703
        %2780 = vmatpush1.msra.mxu0 %v702
        %2781 = vmatprep.subr.mxu0 %v705
        %2782 = vmatpush1.msra.mxu0 %v704
        %2783 = vmatprep.subr.mxu0 %v707
        %2784 = vmatpush1.msra.mxu0 %v706
        %2785 = vmatprep.subr.mxu0 %v709
        %2786 = vmatpush1.msra.mxu0 %v708
        %2787 = vmatprep.subr.mxu0 %v711
        %2788 = vmatpush1.msra.mxu0 %v710
        %2789 = vmatprep.subr.mxu0 %v713
        %2790 = vmatpush1.msra.mxu0 %v712
        %2791 = vmatprep.subr.mxu0 %v715
        %2792 = vmatpush1.msra.mxu0 %v714
        %2793 = vmatprep.subr.mxu0 %v717
        %2794 = vmatpush1.msra.mxu0 %v716
        %2795 = vmatprep.subr.mxu0 %v719
        %2796 = vmatpush1.msra.mxu0 %v718
        %2797 = vmatprep.subr.mxu0 %v721
        %2798 = vmatpush1.msra.mxu0 %v720
        %2799 = vmatprep.subr.mxu0 %v723
        %2800 = vmatpush1.msra.mxu0 %v722
        %2801 = vmatprep.subr.mxu0 %v725
        %2802 = vmatpush1.msra.mxu0 %v724
        %2803 = vmatprep.subr.mxu0 %v727
        %2804 = vmatpush1.msra.mxu0 %v726
        %2805 = vmatprep.subr.mxu0 %v729
        %2806 = vmatpush1.msra.mxu0 %v728
        %2807 = vmatprep.subr.mxu0 %v731
        %2808 = vmatpush1.msra.mxu0 %v730
        %2809 = vmatprep.subr.mxu0 %v733
        %2810 = vmatpush1.msra.mxu0 %v732
        %2811 = vmatprep.subr.mxu0 %v735
        %2812 = vmatpush1.msra.mxu0 %v734
        %2813 = vmatprep.subr.mxu0 %v737
        %2814 = vmatpush1.msra.mxu0 %v736
        %2815 = vmatprep.subr.mxu0 %v739
        %2816 = vmatpush1.msra.mxu0 %v738
        %2817 = vmatprep.subr.mxu0 %v741
        %2818 = vmatpush1.msra.mxu0 %v740
        %2819 = vmatprep.subr.mxu0 %v743
        %2820 = vmatpush1.msra.mxu0 %v742
        %2821 = vmatprep.subr.mxu0 %v745
        %2822 = vmatpush1.msra.mxu0 %v744
        %2823 = vmatprep.subr.mxu0 %v747
        %2824 = vmatpush1.msra.mxu0 %v746
        %2825 = vmatprep.subr.mxu0 %v749
        %2826 = vmatpush1.msra.mxu0 %v748
        %2827 = vmatprep.subr.mxu0 %v751
        %2828 = vmatpush1.msra.mxu0 %v750
        %2829 = vmatprep.mubr.f32.mxu0 %v2616
        %2830 = vmatmul.mubr.f32.gmra.mrb[0].mxu0 %v2614
        %v2831 = vpop.f32.mrb[0].mxu0
        %v2832 = vadd.f32 %v2761, %v2831
        %v2833 = vpop.f32.mrb[0].mxu0
        %v2834 = vadd.f32 %v2763, %v2833
        %2835 = vdwg.mxu0
        %s2836 = scalar_lea.vmem %s7, 16
        %v2837 = vld [vmem:[%s2836] sm:$0xff]
        %v2839 = vsel %vm613, %v2837, 0
        %2841 = vmatprep.subr.mxu0 %v609
        %2842 = vmatpush1.msra.mxu0 %v608
        %2843 = vmatprep.subr.mxu0 0.0
        %2844 = vmatpush1.msra.mxu0 0.0
        %2845 = vmatprep.subr.mxu0 0.0
        %2846 = vmatpush1.msra.mxu0 0.0
        %2847 = vmatprep.subr.mxu0 0.0
        %2848 = vmatpush1.msra.mxu0 0.0
        %2849 = vmatprep.subr.mxu0 0.0
        %2850 = vmatpush1.msra.mxu0 0.0
        %2851 = vmatprep.subr.mxu0 0.0
        %2852 = vmatpush1.msra.mxu0 0.0
        %2853 = vmatprep.subr.mxu0 0.0
        %2854 = vmatpush1.msra.mxu0 0.0
        %2855 = vmatprep.subr.mxu0 0.0
        %2856 = vmatpush1.msra.mxu0 0.0
        %2857 = vmatprep.subr.mxu0 0.0
        %2858 = vmatpush1.msra.mxu0 0.0
        %2859 = vmatprep.subr.mxu0 0.0
        %2860 = vmatpush1.msra.mxu0 0.0
        %2861 = vmatprep.subr.mxu0 0.0
        %2862 = vmatpush1.msra.mxu0 0.0
        %2863 = vmatprep.subr.mxu0 0.0
        %2864 = vmatpush1.msra.mxu0 0.0
        %2865 = vmatprep.subr.mxu0 0.0
        %2866 = vmatpush1.msra.mxu0 0.0
        %2867 = vmatprep.subr.mxu0 0.0
        %2868 = vmatpush1.msra.mxu0 0.0
        %2869 = vmatprep.subr.mxu0 0.0
        %2870 = vmatpush1.msra.mxu0 0.0
        %2871 = vmatprep.subr.mxu0 0.0
        %2872 = vmatpush1.msra.mxu0 0.0
        %2873 = vmatprep.subr.mxu0 0.0
        %2874 = vmatpush1.msra.mxu0 0.0
        %2875 = vmatprep.subr.mxu0 0.0
        %2876 = vmatpush1.msra.mxu0 0.0
        %2877 = vmatprep.subr.mxu0 0.0
        %2878 = vmatpush1.msra.mxu0 0.0
        %2879 = vmatprep.subr.mxu0 0.0
        %2880 = vmatpush1.msra.mxu0 0.0
        %2881 = vmatprep.subr.mxu0 0.0
        %2882 = vmatpush1.msra.mxu0 0.0
        %2883 = vmatprep.subr.mxu0 0.0
        %2884 = vmatpush1.msra.mxu0 0.0
        %2885 = vmatprep.subr.mxu0 0.0
        %2886 = vmatpush1.msra.mxu0 0.0
        %2887 = vmatprep.subr.mxu0 0.0
        %2888 = vmatpush1.msra.mxu0 0.0
        %2889 = vmatprep.subr.mxu0 0.0
        %2890 = vmatpush1.msra.mxu0 0.0
        %2891 = vmatprep.subr.mxu0 0.0
        %2892 = vmatpush1.msra.mxu0 0.0
        %2893 = vmatprep.subr.mxu0 0.0
        %2894 = vmatpush1.msra.mxu0 0.0
        %2895 = vmatprep.subr.mxu0 0.0
        %2896 = vmatpush1.msra.mxu0 0.0
        %2897 = vmatprep.subr.mxu0 0.0
        %2898 = vmatpush1.msra.mxu0 0.0
        %2899 = vmatprep.subr.mxu0 0.0
        %2900 = vmatpush1.msra.mxu0 0.0
        %2901 = vmatprep.subr.mxu0 0.0
        %2902 = vmatpush1.msra.mxu0 0.0
        %2903 = vmatprep.subr.mxu0 0.0
        %2904 = vmatpush1.msra.mxu0 0.0
        %2905 = vmatprep.mubr.f32.mxu0 0.0
        %2906 = vmatmul.mubr.f32.gmra.mrb[0].mxu0 %v2839
        %v2907 = vpop.f32.mrb[0].mxu0
        %v2908 = vadd.f32 0.0, %v2907
        %v2909 = vpop.f32.mrb[0].mxu0
        %v2910 = vadd.f32 0.0, %v2909
        %2911 = vdwg.mxu0
        %2912 = vmatprep.subr.mxu0 %v1113
        %2913 = vmatpush1.msra.mxu0 %v1112
        %2914 = vmatprep.subr.mxu0 %v1115
        %2915 = vmatpush1.msra.mxu0 %v1114
        %2916 = vmatprep.subr.mxu0 %v1117
        %2917 = vmatpush1.msra.mxu0 %v1116
        %2918 = vmatprep.subr.mxu0 %v1119
        %2919 = vmatpush1.msra.mxu0 %v1118
        %2920 = vmatprep.subr.mxu0 %v1121
        %2921 = vmatpush1.msra.mxu0 %v1120
        %2922 = vmatprep.subr.mxu0 %v1123
        %2923 = vmatpush1.msra.mxu0 %v1122
        %2924 = vmatprep.subr.mxu0 %v1125
        %2925 = vmatpush1.msra.mxu0 %v1124
        %2926 = vmatprep.subr.mxu0 %v1127
        %2927 = vmatpush1.msra.mxu0 %v1126
        %2928 = vmatprep.subr.mxu0 %v1129
        %2929 = vmatpush1.msra.mxu0 %v1128
        %2930 = vmatprep.subr.mxu0 %v1131
        %2931 = vmatpush1.msra.mxu0 %v1130
        %2932 = vmatprep.subr.mxu0 %v1133
        %2933 = vmatpush1.msra.mxu0 %v1132
        %2934 = vmatprep.subr.mxu0 %v1135
        %2935 = vmatpush1.msra.mxu0 %v1134
        %2936 = vmatprep.subr.mxu0 %v1137
        %2937 = vmatpush1.msra.mxu0 %v1136
        %2938 = vmatprep.subr.mxu0 %v1139
        %2939 = vmatpush1.msra.mxu0 %v1138
        %2940 = vmatprep.subr.mxu0 %v1141
        %2941 = vmatpush1.msra.mxu0 %v1140
        %2942 = vmatprep.subr.mxu0 %v1143
        %2943 = vmatpush1.msra.mxu0 %v1142
        %2944 = vmatprep.subr.mxu0 %v1145
        %2945 = vmatpush1.msra.mxu0 %v1144
        %2946 = vmatprep.subr.mxu0 %v1147
        %2947 = vmatpush1.msra.mxu0 %v1146
        %2948 = vmatprep.subr.mxu0 %v1149
        %2949 = vmatpush1.msra.mxu0 %v1148
        %2950 = vmatprep.subr.mxu0 %v1151
        %2951 = vmatpush1.msra.mxu0 %v1150
        %2952 = vmatprep.subr.mxu0 %v1153
        %2953 = vmatpush1.msra.mxu0 %v1152
        %2954 = vmatprep.subr.mxu0 %v1155
        %2955 = vmatpush1.msra.mxu0 %v1154
        %2956 = vmatprep.subr.mxu0 %v1157
        %2957 = vmatpush1.msra.mxu0 %v1156
        %2958 = vmatprep.subr.mxu0 %v1159
        %2959 = vmatpush1.msra.mxu0 %v1158
        %2960 = vmatprep.subr.mxu0 %v1161
        %2961 = vmatpush1.msra.mxu0 %v1160
        %2962 = vmatprep.subr.mxu0 %v1163
        %2963 = vmatpush1.msra.mxu0 %v1162
        %2964 = vmatprep.subr.mxu0 %v1165
        %2965 = vmatpush1.msra.mxu0 %v1164
        %2966 = vmatprep.subr.mxu0 %v1167
        %2967 = vmatpush1.msra.mxu0 %v1166
        %2968 = vmatprep.subr.mxu0 %v1169
        %2969 = vmatpush1.msra.mxu0 %v1168
        %2970 = vmatprep.subr.mxu0 %v1171
        %2971 = vmatpush1.msra.mxu0 %v1170
        %2972 = vmatprep.subr.mxu0 %v1173
        %2973 = vmatpush1.msra.mxu0 %v1172
        %2974 = vmatprep.subr.mxu0 %v1175
        %2975 = vmatpush1.msra.mxu0 %v1174
        %2976 = vmatprep.mubr.f32.mxu0 %v2910
        %2977 = vmatmul.mubr.f32.gmra.mrb[0].mxu0 %v2908
        %v2978 = vpop.f32.mrb[0].mxu0
        %v2979 = vadd.f32 0.0, %v2978
        %v2980 = vpop.f32.mrb[0].mxu0
        %v2981 = vadd.f32 0.0, %v2980
        %2982 = vdwg.mxu0
        %v2983 = vadd.f32 %v2832, %v2979
        %v2984 = vadd.f32 %v2834, %v2981
        %s2985 = scalar_lea.vmem %s7, 24
        %v2986 = vld [vmem:[%s2985] sm:$0xff]
        %v2988 = vsel %vm613, %v2986, 0
        %2990 = vmatprep.subr.mxu0 %v609
        %2991 = vmatpush1.msra.mxu0 %v608
        %2992 = vmatprep.subr.mxu0 0.0
        %2993 = vmatpush1.msra.mxu0 0.0
        %2994 = vmatprep.subr.mxu0 0.0
        %2995 = vmatpush1.msra.mxu0 0.0
        %2996 = vmatprep.subr.mxu0 0.0
        %2997 = vmatpush1.msra.mxu0 0.0
        %2998 = vmatprep.subr.mxu0 0.0
        %2999 = vmatpush1.msra.mxu0 0.0
        %3000 = vmatprep.subr.mxu0 0.0
        %3001 = vmatpush1.msra.mxu0 0.0
        %3002 = vmatprep.subr.mxu0 0.0
        %3003 = vmatpush1.msra.mxu0 0.0
        %3004 = vmatprep.subr.mxu0 0.0
        %3005 = vmatpush1.msra.mxu0 0.0
        %3006 = vmatprep.subr.mxu0 0.0
        %3007 = vmatpush1.msra.mxu0 0.0
        %3008 = vmatprep.subr.mxu0 0.0
        %3009 = vmatpush1.msra.mxu0 0.0
        %3010 = vmatprep.subr.mxu0 0.0
        %3011 = vmatpush1.msra.mxu0 0.0
        %3012 = vmatprep.subr.mxu0 0.0
        %3013 = vmatpush1.msra.mxu0 0.0
        %3014 = vmatprep.subr.mxu0 0.0
        %3015 = vmatpush1.msra.mxu0 0.0
        %3016 = vmatprep.subr.mxu0 0.0
        %3017 = vmatpush1.msra.mxu0 0.0
        %3018 = vmatprep.subr.mxu0 0.0
        %3019 = vmatpush1.msra.mxu0 0.0
        %3020 = vmatprep.subr.mxu0 0.0
        %3021 = vmatpush1.msra.mxu0 0.0
        %3022 = vmatprep.subr.mxu0 0.0
        %3023 = vmatpush1.msra.mxu0 0.0
        %3024 = vmatprep.subr.mxu0 0.0
        %3025 = vmatpush1.msra.mxu0 0.0
        %3026 = vmatprep.subr.mxu0 0.0
        %3027 = vmatpush1.msra.mxu0 0.0
        %3028 = vmatprep.subr.mxu0 0.0
        %3029 = vmatpush1.msra.mxu0 0.0
        %3030 = vmatprep.subr.mxu0 0.0
        %3031 = vmatpush1.msra.mxu0 0.0
        %3032 = vmatprep.subr.mxu0 0.0
        %3033 = vmatpush1.msra.mxu0 0.0
        %3034 = vmatprep.subr.mxu0 0.0
        %3035 = vmatpush1.msra.mxu0 0.0
        %3036 = vmatprep.subr.mxu0 0.0
        %3037 = vmatpush1.msra.mxu0 0.0
        %3038 = vmatprep.subr.mxu0 0.0
        %3039 = vmatpush1.msra.mxu0 0.0
        %3040 = vmatprep.subr.mxu0 0.0
        %3041 = vmatpush1.msra.mxu0 0.0
        %3042 = vmatprep.subr.mxu0 0.0
        %3043 = vmatpush1.msra.mxu0 0.0
        %3044 = vmatprep.subr.mxu0 0.0
        %3045 = vmatpush1.msra.mxu0 0.0
        %3046 = vmatprep.subr.mxu0 0.0
        %3047 = vmatpush1.msra.mxu0 0.0
        %3048 = vmatprep.subr.mxu0 0.0
        %3049 = vmatpush1.msra.mxu0 0.0
        %3050 = vmatprep.subr.mxu0 0.0
        %3051 = vmatpush1.msra.mxu0 0.0
        %3052 = vmatprep.subr.mxu0 0.0
        %3053 = vmatpush1.msra.mxu0 0.0
        %3054 = vmatprep.mubr.f32.mxu0 0.0
        %3055 = vmatmul.mubr.f32.gmra.mrb[0].mxu0 %v2988
        %v3056 = vpop.f32.mrb[0].mxu0
        %v3057 = vadd.f32 0.0, %v3056
        %v3058 = vpop.f32.mrb[0].mxu0
        %v3059 = vadd.f32 0.0, %v3058
        %3060 = vdwg.mxu0
        %3061 = vmatprep.subr.mxu0 %v1327
        %3062 = vmatpush1.msra.mxu0 %v1326
        %3063 = vmatprep.subr.mxu0 %v1329
        %3064 = vmatpush1.msra.mxu0 %v1328
        %3065 = vmatprep.subr.mxu0 %v1331
        %3066 = vmatpush1.msra.mxu0 %v1330
        %3067 = vmatprep.subr.mxu0 %v1333
        %3068 = vmatpush1.msra.mxu0 %v1332
        %3069 = vmatprep.subr.mxu0 %v1335
        %3070 = vmatpush1.msra.mxu0 %v1334
        %3071 = vmatprep.subr.mxu0 %v1337
        %3072 = vmatpush1.msra.mxu0 %v1336
        %3073 = vmatprep.subr.mxu0 %v1339
        %3074 = vmatpush1.msra.mxu0 %v1338
        %3075 = vmatprep.subr.mxu0 %v1341
        %3076 = vmatpush1.msra.mxu0 %v1340
        %3077 = vmatprep.subr.mxu0 %v1343
        %3078 = vmatpush1.msra.mxu0 %v1342
        %3079 = vmatprep.subr.mxu0 %v1345
        %3080 = vmatpush1.msra.mxu0 %v1344
        %3081 = vmatprep.subr.mxu0 %v1347
        %3082 = vmatpush1.msra.mxu0 %v1346
        %3083 = vmatprep.subr.mxu0 %v1349
        %3084 = vmatpush1.msra.mxu0 %v1348
        %3085 = vmatprep.subr.mxu0 %v1351
        %3086 = vmatpush1.msra.mxu0 %v1350
        %3087 = vmatprep.subr.mxu0 %v1353
        %3088 = vmatpush1.msra.mxu0 %v1352
        %3089 = vmatprep.subr.mxu0 %v1355
        %3090 = vmatpush1.msra.mxu0 %v1354
        %3091 = vmatprep.subr.mxu0 %v1357
        %3092 = vmatpush1.msra.mxu0 %v1356
        %3093 = vmatprep.subr.mxu0 %v1359
        %3094 = vmatpush1.msra.mxu0 %v1358
        %3095 = vmatprep.subr.mxu0 %v1361
        %3096 = vmatpush1.msra.mxu0 %v1360
        %3097 = vmatprep.subr.mxu0 %v1363
        %3098 = vmatpush1.msra.mxu0 %v1362
        %3099 = vmatprep.subr.mxu0 %v1365
        %3100 = vmatpush1.msra.mxu0 %v1364
        %3101 = vmatprep.subr.mxu0 %v1367
        %3102 = vmatpush1.msra.mxu0 %v1366
        %3103 = vmatprep.subr.mxu0 %v1369
        %3104 = vmatpush1.msra.mxu0 %v1368
        %3105 = vmatprep.subr.mxu0 %v1371
        %3106 = vmatpush1.msra.mxu0 %v1370
        %3107 = vmatprep.subr.mxu0 %v1373
        %3108 = vmatpush1.msra.mxu0 %v1372
        %3109 = vmatprep.subr.mxu0 %v1375
        %3110 = vmatpush1.msra.mxu0 %v1374
        %3111 = vmatprep.subr.mxu0 %v1377
        %3112 = vmatpush1.msra.mxu0 %v1376
        %3113 = vmatprep.subr.mxu0 %v1379
        %3114 = vmatpush1.msra.mxu0 %v1378
        %3115 = vmatprep.subr.mxu0 %v1381
        %3116 = vmatpush1.msra.mxu0 %v1380
        %3117 = vmatprep.subr.mxu0 %v1383
        %3118 = vmatpush1.msra.mxu0 %v1382
        %3119 = vmatprep.subr.mxu0 %v1385
        %3120 = vmatpush1.msra.mxu0 %v1384
        %3121 = vmatprep.subr.mxu0 %v1387
        %3122 = vmatpush1.msra.mxu0 %v1386
        %3123 = vmatprep.subr.mxu0 %v1389
        %3124 = vmatpush1.msra.mxu0 %v1388
        %3125 = vmatprep.mubr.f32.mxu0 %v3059
        %3126 = vmatmul.mubr.f32.gmra.mrb[0].mxu0 %v3057
        %v3127 = vpop.f32.mrb[0].mxu0
        %v3128 = vadd.f32 0.0, %v3127
        %v3129 = vpop.f32.mrb[0].mxu0
        %v3130 = vadd.f32 0.0, %v3129
        %3131 = vdwg.mxu0
        %v3132 = vadd.f32 %v2983, %v3128
        %v3133 = vadd.f32 %v2984, %v3130
        %s3134 = scalar_lea.vmem %s7, 32
        %v3135 = vld [vmem:[%s3134] sm:$0xff]
        %v3137 = vsel %vm613, %v3135, 0
        %3139 = vmatprep.subr.mxu0 %v609
        %3140 = vmatpush1.msra.mxu0 %v608
        %3141 = vmatprep.subr.mxu0 0.0
        %3142 = vmatpush1.msra.mxu0 0.0
        %3143 = vmatprep.subr.mxu0 0.0
        %3144 = vmatpush1.msra.mxu0 0.0
        %3145 = vmatprep.subr.mxu0 0.0
        %3146 = vmatpush1.msra.mxu0 0.0
        %3147 = vmatprep.subr.mxu0 0.0
        %3148 = vmatpush1.msra.mxu0 0.0
        %3149 = vmatprep.subr.mxu0 0.0
        %3150 = vmatpush1.msra.mxu0 0.0
        %3151 = vmatprep.subr.mxu0 0.0
        %3152 = vmatpush1.msra.mxu0 0.0
        %3153 = vmatprep.subr.mxu0 0.0
        %3154 = vmatpush1.msra.mxu0 0.0
        %3155 = vmatprep.subr.mxu0 0.0
        %3156 = vmatpush1.msra.mxu0 0.0
        %3157 = vmatprep.subr.mxu0 0.0
        %3158 = vmatpush1.msra.mxu0 0.0
        %3159 = vmatprep.subr.mxu0 0.0
        %3160 = vmatpush1.msra.mxu0 0.0
        %3161 = vmatprep.subr.mxu0 0.0
        %3162 = vmatpush1.msra.mxu0 0.0
        %3163 = vmatprep.subr.mxu0 0.0
        %3164 = vmatpush1.msra.mxu0 0.0
        %3165 = vmatprep.subr.mxu0 0.0
        %3166 = vmatpush1.msra.mxu0 0.0
        %3167 = vmatprep.subr.mxu0 0.0
        %3168 = vmatpush1.msra.mxu0 0.0
        %3169 = vmatprep.subr.mxu0 0.0
        %3170 = vmatpush1.msra.mxu0 0.0
        %3171 = vmatprep.subr.mxu0 0.0
        %3172 = vmatpush1.msra.mxu0 0.0
        %3173 = vmatprep.subr.mxu0 0.0
        %3174 = vmatpush1.msra.mxu0 0.0
        %3175 = vmatprep.subr.mxu0 0.0
        %3176 = vmatpush1.msra.mxu0 0.0
        %3177 = vmatprep.subr.mxu0 0.0
        %3178 = vmatpush1.msra.mxu0 0.0
        %3179 = vmatprep.subr.mxu0 0.0
        %3180 = vmatpush1.msra.mxu0 0.0
        %3181 = vmatprep.subr.mxu0 0.0
        %3182 = vmatpush1.msra.mxu0 0.0
        %3183 = vmatprep.subr.mxu0 0.0
        %3184 = vmatpush1.msra.mxu0 0.0
        %3185 = vmatprep.subr.mxu0 0.0
        %3186 = vmatpush1.msra.mxu0 0.0
        %3187 = vmatprep.subr.mxu0 0.0
        %3188 = vmatpush1.msra.mxu0 0.0
        %3189 = vmatprep.subr.mxu0 0.0
        %3190 = vmatpush1.msra.mxu0 0.0
        %3191 = vmatprep.subr.mxu0 0.0
        %3192 = vmatpush1.msra.mxu0 0.0
        %3193 = vmatprep.subr.mxu0 0.0
        %3194 = vmatpush1.msra.mxu0 0.0
        %3195 = vmatprep.subr.mxu0 0.0
        %3196 = vmatpush1.msra.mxu0 0.0
        %3197 = vmatprep.subr.mxu0 0.0
        %3198 = vmatpush1.msra.mxu0 0.0
        %3199 = vmatprep.subr.mxu0 0.0
        %3200 = vmatpush1.msra.mxu0 0.0
        %3201 = vmatprep.subr.mxu0 0.0
        %3202 = vmatpush1.msra.mxu0 0.0
        %3203 = vmatprep.mubr.f32.mxu0 0.0
        %3204 = vmatmul.mubr.f32.gmra.mrb[0].mxu0 %v3137
        %v3205 = vpop.f32.mrb[0].mxu0
        %v3206 = vadd.f32 0.0, %v3205
        %v3207 = vpop.f32.mrb[0].mxu0
        %v3208 = vadd.f32 0.0, %v3207
        %3209 = vdwg.mxu0
        %3210 = vmatprep.subr.mxu0 %v1541
        %3211 = vmatpush1.msra.mxu0 %v1540
        %3212 = vmatprep.subr.mxu0 %v1543
        %3213 = vmatpush1.msra.mxu0 %v1542
        %3214 = vmatprep.subr.mxu0 %v1545
        %3215 = vmatpush1.msra.mxu0 %v1544
        %3216 = vmatprep.subr.mxu0 %v1547
        %3217 = vmatpush1.msra.mxu0 %v1546
        %3218 = vmatprep.subr.mxu0 %v1549
        %3219 = vmatpush1.msra.mxu0 %v1548
        %3220 = vmatprep.subr.mxu0 %v1551
        %3221 = vmatpush1.msra.mxu0 %v1550
        %3222 = vmatprep.subr.mxu0 %v1553
        %3223 = vmatpush1.msra.mxu0 %v1552
        %3224 = vmatprep.subr.mxu0 %v1555
        %3225 = vmatpush1.msra.mxu0 %v1554
        %3226 = vmatprep.subr.mxu0 %v1557
        %3227 = vmatpush1.msra.mxu0 %v1556
        %3228 = vmatprep.subr.mxu0 %v1559
        %3229 = vmatpush1.msra.mxu0 %v1558
        %3230 = vmatprep.subr.mxu0 %v1561
        %3231 = vmatpush1.msra.mxu0 %v1560
        %3232 = vmatprep.subr.mxu0 %v1563
        %3233 = vmatpush1.msra.mxu0 %v1562
        %3234 = vmatprep.subr.mxu0 %v1565
        %3235 = vmatpush1.msra.mxu0 %v1564
        %3236 = vmatprep.subr.mxu0 %v1567
        %3237 = vmatpush1.msra.mxu0 %v1566
        %3238 = vmatprep.subr.mxu0 %v1569
        %3239 = vmatpush1.msra.mxu0 %v1568
        %3240 = vmatprep.subr.mxu0 %v1571
        %3241 = vmatpush1.msra.mxu0 %v1570
        %3242 = vmatprep.subr.mxu0 %v1573
        %3243 = vmatpush1.msra.mxu0 %v1572
        %3244 = vmatprep.subr.mxu0 %v1575
        %3245 = vmatpush1.msra.mxu0 %v1574
        %3246 = vmatprep.subr.mxu0 %v1577
        %3247 = vmatpush1.msra.mxu0 %v1576
        %3248 = vmatprep.subr.mxu0 %v1579
        %3249 = vmatpush1.msra.mxu0 %v1578
        %3250 = vmatprep.subr.mxu0 %v1581
        %3251 = vmatpush1.msra.mxu0 %v1580
        %3252 = vmatprep.subr.mxu0 %v1583
        %3253 = vmatpush1.msra.mxu0 %v1582
        %3254 = vmatprep.subr.mxu0 %v1585
        %3255 = vmatpush1.msra.mxu0 %v1584
        %3256 = vmatprep.subr.mxu0 %v1587
        %3257 = vmatpush1.msra.mxu0 %v1586
        %3258 = vmatprep.subr.mxu0 %v1589
        %3259 = vmatpush1.msra.mxu0 %v1588
        %3260 = vmatprep.subr.mxu0 %v1591
        %3261 = vmatpush1.msra.mxu0 %v1590
        %3262 = vmatprep.subr.mxu0 %v1593
        %3263 = vmatpush1.msra.mxu0 %v1592
        %3264 = vmatprep.subr.mxu0 %v1595
        %3265 = vmatpush1.msra.mxu0 %v1594
        %3266 = vmatprep.subr.mxu0 %v1597
        %3267 = vmatpush1.msra.mxu0 %v1596
        %3268 = vmatprep.subr.mxu0 %v1599
        %3269 = vmatpush1.msra.mxu0 %v1598
        %3270 = vmatprep.subr.mxu0 %v1601
        %3271 = vmatpush1.msra.mxu0 %v1600
        %3272 = vmatprep.subr.mxu0 %v1603
        %3273 = vmatpush1.msra.mxu0 %v1602
        %3274 = vmatprep.mubr.f32.mxu0 %v3208
        %3275 = vmatmul.mubr.f32.gmra.mrb[0].mxu0 %v3206
        %v3276 = vpop.f32.mrb[0].mxu0
        %v3277 = vadd.f32 0.0, %v3276
        %v3278 = vpop.f32.mrb[0].mxu0
        %v3279 = vadd.f32 0.0, %v3278
        %3280 = vdwg.mxu0
        %v3281 = vadd.f32 %v3132, %v3277
        %v3282 = vadd.f32 %v3133, %v3279
        %s3283 = scalar_lea.vmem %s7, 40
        %v3284 = vld [vmem:[%s3283] sm:$0xff]
        %v3286 = vsel %vm613, %v3284, 0
        %3288 = vmatprep.subr.mxu0 %v609
        %3289 = vmatpush1.msra.mxu0 %v608
        %3290 = vmatprep.subr.mxu0 0.0
        %3291 = vmatpush1.msra.mxu0 0.0
        %3292 = vmatprep.subr.mxu0 0.0
        %3293 = vmatpush1.msra.mxu0 0.0
        %3294 = vmatprep.subr.mxu0 0.0
        %3295 = vmatpush1.msra.mxu0 0.0
        %3296 = vmatprep.subr.mxu0 0.0
        %3297 = vmatpush1.msra.mxu0 0.0
        %3298 = vmatprep.subr.mxu0 0.0
        %3299 = vmatpush1.msra.mxu0 0.0
        %3300 = vmatprep.subr.mxu0 0.0
        %3301 = vmatpush1.msra.mxu0 0.0
        %3302 = vmatprep.subr.mxu0 0.0
        %3303 = vmatpush1.msra.mxu0 0.0
        %3304 = vmatprep.subr.mxu0 0.0
        %3305 = vmatpush1.msra.mxu0 0.0
        %3306 = vmatprep.subr.mxu0 0.0
        %3307 = vmatpush1.msra.mxu0 0.0
        %3308 = vmatprep.subr.mxu0 0.0
        %3309 = vmatpush1.msra.mxu0 0.0
        %3310 = vmatprep.subr.mxu0 0.0
        %3311 = vmatpush1.msra.mxu0 0.0
        %3312 = vmatprep.subr.mxu0 0.0
        %3313 = vmatpush1.msra.mxu0 0.0
        %3314 = vmatprep.subr.mxu0 0.0
        %3315 = vmatpush1.msra.mxu0 0.0
        %3316 = vmatprep.subr.mxu0 0.0
        %3317 = vmatpush1.msra.mxu0 0.0
        %3318 = vmatprep.subr.mxu0 0.0
        %3319 = vmatpush1.msra.mxu0 0.0
        %3320 = vmatprep.subr.mxu0 0.0
        %3321 = vmatpush1.msra.mxu0 0.0
        %3322 = vmatprep.subr.mxu0 0.0
        %3323 = vmatpush1.msra.mxu0 0.0
        %3324 = vmatprep.subr.mxu0 0.0
        %3325 = vmatpush1.msra.mxu0 0.0
        %3326 = vmatprep.subr.mxu0 0.0
        %3327 = vmatpush1.msra.mxu0 0.0
        %3328 = vmatprep.subr.mxu0 0.0
        %3329 = vmatpush1.msra.mxu0 0.0
        %3330 = vmatprep.subr.mxu0 0.0
        %3331 = vmatpush1.msra.mxu0 0.0
        %3332 = vmatprep.subr.mxu0 0.0
        %3333 = vmatpush1.msra.mxu0 0.0
        %3334 = vmatprep.subr.mxu0 0.0
        %3335 = vmatpush1.msra.mxu0 0.0
        %3336 = vmatprep.subr.mxu0 0.0
        %3337 = vmatpush1.msra.mxu0 0.0
        %3338 = vmatprep.subr.mxu0 0.0
        %3339 = vmatpush1.msra.mxu0 0.0
        %3340 = vmatprep.subr.mxu0 0.0
        %3341 = vmatpush1.msra.mxu0 0.0
        %3342 = vmatprep.subr.mxu0 0.0
        %3343 = vmatpush1.msra.mxu0 0.0
        %3344 = vmatprep.subr.mxu0 0.0
        %3345 = vmatpush1.msra.mxu0 0.0
        %3346 = vmatprep.subr.mxu0 0.0
        %3347 = vmatpush1.msra.mxu0 0.0
        %3348 = vmatprep.subr.mxu0 0.0
        %3349 = vmatpush1.msra.mxu0 0.0
        %3350 = vmatprep.subr.mxu0 0.0
        %3351 = vmatpush1.msra.mxu0 0.0
        %3352 = vmatprep.mubr.f32.mxu0 0.0
        %3353 = vmatmul.mubr.f32.gmra.mrb[0].mxu0 %v3286
        %v3354 = vpop.f32.mrb[0].mxu0
        %v3355 = vadd.f32 0.0, %v3354
        %v3356 = vpop.f32.mrb[0].mxu0
        %v3357 = vadd.f32 0.0, %v3356
        %3358 = vdwg.mxu0
        %3359 = vmatprep.subr.mxu0 %v1755
        %3360 = vmatpush1.msra.mxu0 %v1754
        %3361 = vmatprep.subr.mxu0 %v1757
        %3362 = vmatpush1.msra.mxu0 %v1756
        %3363 = vmatprep.subr.mxu0 %v1759
        %3364 = vmatpush1.msra.mxu0 %v1758
        %3365 = vmatprep.subr.mxu0 %v1761
        %3366 = vmatpush1.msra.mxu0 %v1760
        %3367 = vmatprep.subr.mxu0 %v1763
        %3368 = vmatpush1.msra.mxu0 %v1762
        %3369 = vmatprep.subr.mxu0 %v1765
        %3370 = vmatpush1.msra.mxu0 %v1764
        %3371 = vmatprep.subr.mxu0 %v1767
        %3372 = vmatpush1.msra.mxu0 %v1766
        %3373 = vmatprep.subr.mxu0 %v1769
        %3374 = vmatpush1.msra.mxu0 %v1768
        %3375 = vmatprep.subr.mxu0 %v1771
        %3376 = vmatpush1.msra.mxu0 %v1770
        %3377 = vmatprep.subr.mxu0 %v1773
        %3378 = vmatpush1.msra.mxu0 %v1772
        %3379 = vmatprep.subr.mxu0 %v1775
        %3380 = vmatpush1.msra.mxu0 %v1774
        %3381 = vmatprep.subr.mxu0 %v1777
        %3382 = vmatpush1.msra.mxu0 %v1776
        %3383 = vmatprep.subr.mxu0 %v1779
        %3384 = vmatpush1.msra.mxu0 %v1778
        %3385 = vmatprep.subr.mxu0 %v1781
        %3386 = vmatpush1.msra.mxu0 %v1780
        %3387 = vmatprep.subr.mxu0 %v1783
        %3388 = vmatpush1.msra.mxu0 %v1782
        %3389 = vmatprep.subr.mxu0 %v1785
        %3390 = vmatpush1.msra.mxu0 %v1784
        %3391 = vmatprep.subr.mxu0 %v1787
        %3392 = vmatpush1.msra.mxu0 %v1786
        %3393 = vmatprep.subr.mxu0 %v1789
        %3394 = vmatpush1.msra.mxu0 %v1788
        %3395 = vmatprep.subr.mxu0 %v1791
        %3396 = vmatpush1.msra.mxu0 %v1790
        %3397 = vmatprep.subr.mxu0 %v1793
        %3398 = vmatpush1.msra.mxu0 %v1792
        %3399 = vmatprep.subr.mxu0 %v1795
        %3400 = vmatpush1.msra.mxu0 %v1794
        %3401 = vmatprep.subr.mxu0 %v1797
        %3402 = vmatpush1.msra.mxu0 %v1796
        %3403 = vmatprep.subr.mxu0 %v1799
        %3404 = vmatpush1.msra.mxu0 %v1798
        %3405 = vmatprep.subr.mxu0 %v1801
        %3406 = vmatpush1.msra.mxu0 %v1800
        %3407 = vmatprep.subr.mxu0 %v1803
        %3408 = vmatpush1.msra.mxu0 %v1802
        %3409 = vmatprep.subr.mxu0 %v1805
        %3410 = vmatpush1.msra.mxu0 %v1804
        %3411 = vmatprep.subr.mxu0 %v1807
        %3412 = vmatpush1.msra.mxu0 %v1806
        %3413 = vmatprep.subr.mxu0 %v1809
        %3414 = vmatpush1.msra.mxu0 %v1808
        %3415 = vmatprep.subr.mxu0 %v1811
        %3416 = vmatpush1.msra.mxu0 %v1810
        %3417 = vmatprep.subr.mxu0 %v1813
        %3418 = vmatpush1.msra.mxu0 %v1812
        %3419 = vmatprep.subr.mxu0 %v1815
        %3420 = vmatpush1.msra.mxu0 %v1814
        %3421 = vmatprep.subr.mxu0 %v1817
        %3422 = vmatpush1.msra.mxu0 %v1816
        %3423 = vmatprep.mubr.f32.mxu0 %v3357
        %3424 = vmatmul.mubr.f32.gmra.mrb[0].mxu0 %v3355
        %v3425 = vpop.f32.mrb[0].mxu0
        %v3426 = vadd.f32 0.0, %v3425
        %v3427 = vpop.f32.mrb[0].mxu0
        %v3428 = vadd.f32 0.0, %v3427
        %3429 = vdwg.mxu0
        %v3430 = vadd.f32 %v3281, %v3426
        %v3431 = vadd.f32 %v3282, %v3428
        %s3432 = scalar_lea.vmem %s7, 48
        %v3433 = vld [vmem:[%s3432] sm:$0xff]
        %v3435 = vsel %vm613, %v3433, 0
        %3437 = vmatprep.subr.mxu0 %v609
        %3438 = vmatpush1.msra.mxu0 %v608
        %3439 = vmatprep.subr.mxu0 0.0
        %3440 = vmatpush1.msra.mxu0 0.0
        %3441 = vmatprep.subr.mxu0 0.0
        %3442 = vmatpush1.msra.mxu0 0.0
        %3443 = vmatprep.subr.mxu0 0.0
        %3444 = vmatpush1.msra.mxu0 0.0
        %3445 = vmatprep.subr.mxu0 0.0
        %3446 = vmatpush1.msra.mxu0 0.0
        %3447 = vmatprep.subr.mxu0 0.0
        %3448 = vmatpush1.msra.mxu0 0.0
        %3449 = vmatprep.subr.mxu0 0.0
        %3450 = vmatpush1.msra.mxu0 0.0
        %3451 = vmatprep.subr.mxu0 0.0
        %3452 = vmatpush1.msra.mxu0 0.0
        %3453 = vmatprep.subr.mxu0 0.0
        %3454 = vmatpush1.msra.mxu0 0.0
        %3455 = vmatprep.subr.mxu0 0.0
        %3456 = vmatpush1.msra.mxu0 0.0
        %3457 = vmatprep.subr.mxu0 0.0
        %3458 = vmatpush1.msra.mxu0 0.0
        %3459 = vmatprep.subr.mxu0 0.0
        %3460 = vmatpush1.msra.mxu0 0.0
        %3461 = vmatprep.subr.mxu0 0.0
        %3462 = vmatpush1.msra.mxu0 0.0
        %3463 = vmatprep.subr.mxu0 0.0
        %3464 = vmatpush1.msra.mxu0 0.0
        %3465 = vmatprep.subr.mxu0 0.0
        %3466 = vmatpush1.msra.mxu0 0.0
        %3467 = vmatprep.subr.mxu0 0.0
        %3468 = vmatpush1.msra.mxu0 0.0
        %3469 = vmatprep.subr.mxu0 0.0
        %3470 = vmatpush1.msra.mxu0 0.0
        %3471 = vmatprep.subr.mxu0 0.0
        %3472 = vmatpush1.msra.mxu0 0.0
        %3473 = vmatprep.subr.mxu0 0.0
        %3474 = vmatpush1.msra.mxu0 0.0
        %3475 = vmatprep.subr.mxu0 0.0
        %3476 = vmatpush1.msra.mxu0 0.0
        %3477 = vmatprep.subr.mxu0 0.0
        %3478 = vmatpush1.msra.mxu0 0.0
        %3479 = vmatprep.subr.mxu0 0.0
        %3480 = vmatpush1.msra.mxu0 0.0
        %3481 = vmatprep.subr.mxu0 0.0
        %3482 = vmatpush1.msra.mxu0 0.0
        %3483 = vmatprep.subr.mxu0 0.0
        %3484 = vmatpush1.msra.mxu0 0.0
        %3485 = vmatprep.subr.mxu0 0.0
        %3486 = vmatpush1.msra.mxu0 0.0
        %3487 = vmatprep.subr.mxu0 0.0
        %3488 = vmatpush1.msra.mxu0 0.0
        %3489 = vmatprep.subr.mxu0 0.0
        %3490 = vmatpush1.msra.mxu0 0.0
        %3491 = vmatprep.subr.mxu0 0.0
        %3492 = vmatpush1.msra.mxu0 0.0
        %3493 = vmatprep.subr.mxu0 0.0
        %3494 = vmatpush1.msra.mxu0 0.0
        %3495 = vmatprep.subr.mxu0 0.0
        %3496 = vmatpush1.msra.mxu0 0.0
        %3497 = vmatprep.subr.mxu0 0.0
        %3498 = vmatpush1.msra.mxu0 0.0
        %3499 = vmatprep.subr.mxu0 0.0
        %3500 = vmatpush1.msra.mxu0 0.0
        %3501 = vmatprep.mubr.f32.mxu0 0.0
        %3502 = vmatmul.mubr.f32.gmra.mrb[0].mxu0 %v3435
        %v3503 = vpop.f32.mrb[0].mxu0
        %v3504 = vadd.f32 0.0, %v3503
        %v3505 = vpop.f32.mrb[0].mxu0
        %v3506 = vadd.f32 0.0, %v3505
        %3507 = vdwg.mxu0
        %3508 = vmatprep.subr.mxu0 %v1969
        %3509 = vmatpush1.msra.mxu0 %v1968
        %3510 = vmatprep.subr.mxu0 %v1971
        %3511 = vmatpush1.msra.mxu0 %v1970
        %3512 = vmatprep.subr.mxu0 %v1973
        %3513 = vmatpush1.msra.mxu0 %v1972
        %3514 = vmatprep.subr.mxu0 %v1975
        %3515 = vmatpush1.msra.mxu0 %v1974
        %3516 = vmatprep.subr.mxu0 %v1977
        %3517 = vmatpush1.msra.mxu0 %v1976
        %3518 = vmatprep.subr.mxu0 %v1979
        %3519 = vmatpush1.msra.mxu0 %v1978
        %3520 = vmatprep.subr.mxu0 %v1981
        %3521 = vmatpush1.msra.mxu0 %v1980
        %3522 = vmatprep.subr.mxu0 %v1983
        %3523 = vmatpush1.msra.mxu0 %v1982
        %3524 = vmatprep.subr.mxu0 %v1985
        %3525 = vmatpush1.msra.mxu0 %v1984
        %3526 = vmatprep.subr.mxu0 %v1987
        %3527 = vmatpush1.msra.mxu0 %v1986
        %3528 = vmatprep.subr.mxu0 %v1989
        %3529 = vmatpush1.msra.mxu0 %v1988
        %3530 = vmatprep.subr.mxu0 %v1991
        %3531 = vmatpush1.msra.mxu0 %v1990
        %3532 = vmatprep.subr.mxu0 %v1993
        %3533 = vmatpush1.msra.mxu0 %v1992
        %3534 = vmatprep.subr.mxu0 %v1995
        %3535 = vmatpush1.msra.mxu0 %v1994
        %3536 = vmatprep.subr.mxu0 %v1997
        %3537 = vmatpush1.msra.mxu0 %v1996
        %3538 = vmatprep.subr.mxu0 %v1999
        %3539 = vmatpush1.msra.mxu0 %v1998
        %3540 = vmatprep.subr.mxu0 %v2001
        %3541 = vmatpush1.msra.mxu0 %v2000
        %3542 = vmatprep.subr.mxu0 %v2003
        %3543 = vmatpush1.msra.mxu0 %v2002
        %3544 = vmatprep.subr.mxu0 %v2005
        %3545 = vmatpush1.msra.mxu0 %v2004
        %3546 = vmatprep.subr.mxu0 %v2007
        %3547 = vmatpush1.msra.mxu0 %v2006
        %3548 = vmatprep.subr.mxu0 %v2009
        %3549 = vmatpush1.msra.mxu0 %v2008
        %3550 = vmatprep.subr.mxu0 %v2011
        %3551 = vmatpush1.msra.mxu0 %v2010
        %3552 = vmatprep.subr.mxu0 %v2013
        %3553 = vmatpush1.msra.mxu0 %v2012
        %3554 = vmatprep.subr.mxu0 %v2015
        %3555 = vmatpush1.msra.mxu0 %v2014
        %3556 = vmatprep.subr.mxu0 %v2017
        %3557 = vmatpush1.msra.mxu0 %v2016
        %3558 = vmatprep.subr.mxu0 %v2019
        %3559 = vmatpush1.msra.mxu0 %v2018
        %3560 = vmatprep.subr.mxu0 %v2021
        %3561 = vmatpush1.msra.mxu0 %v2020
        %3562 = vmatprep.subr.mxu0 %v2023
        %3563 = vmatpush1.msra.mxu0 %v2022
        %3564 = vmatprep.subr.mxu0 %v2025
        %3565 = vmatpush1.msra.mxu0 %v2024
        %3566 = vmatprep.subr.mxu0 %v2027
        %3567 = vmatpush1.msra.mxu0 %v2026
        %3568 = vmatprep.subr.mxu0 %v2029
        %3569 = vmatpush1.msra.mxu0 %v2028
        %3570 = vmatprep.subr.mxu0 %v2031
        %3571 = vmatpush1.msra.mxu0 %v2030
        %3572 = vmatprep.mubr.f32.mxu0 %v3506
        %3573 = vmatmul.mubr.f32.gmra.mrb[0].mxu0 %v3504
        %v3574 = vpop.f32.mrb[0].mxu0
        %v3575 = vadd.f32 0.0, %v3574
        %v3576 = vpop.f32.mrb[0].mxu0
        %v3577 = vadd.f32 0.0, %v3576
        %3578 = vdwg.mxu0
        %v3579 = vadd.f32 %v3430, %v3575
        %v3580 = vadd.f32 %v3431, %v3577
        %s3581 = scalar_lea.vmem %s7, 56
        %v3582 = vld [vmem:[%s3581] sm:$0xff]
        %v3584 = vsel %vm613, %v3582, 0
        %3586 = vmatprep.subr.mxu0 %v609
        %3587 = vmatpush1.msra.mxu0 %v608
        %3588 = vmatprep.subr.mxu0 0.0
        %3589 = vmatpush1.msra.mxu0 0.0
        %3590 = vmatprep.subr.mxu0 0.0
        %3591 = vmatpush1.msra.mxu0 0.0
        %3592 = vmatprep.subr.mxu0 0.0
        %3593 = vmatpush1.msra.mxu0 0.0
        %3594 = vmatprep.subr.mxu0 0.0
        %3595 = vmatpush1.msra.mxu0 0.0
        %3596 = vmatprep.subr.mxu0 0.0
        %3597 = vmatpush1.msra.mxu0 0.0
        %3598 = vmatprep.subr.mxu0 0.0
        %3599 = vmatpush1.msra.mxu0 0.0
        %3600 = vmatprep.subr.mxu0 0.0
        %3601 = vmatpush1.msra.mxu0 0.0
        %3602 = vmatprep.subr.mxu0 0.0
        %3603 = vmatpush1.msra.mxu0 0.0
        %3604 = vmatprep.subr.mxu0 0.0
        %3605 = vmatpush1.msra.mxu0 0.0
        %3606 = vmatprep.subr.mxu0 0.0
        %3607 = vmatpush1.msra.mxu0 0.0
        %3608 = vmatprep.subr.mxu0 0.0
        %3609 = vmatpush1.msra.mxu0 0.0
        %3610 = vmatprep.subr.mxu0 0.0
        %3611 = vmatpush1.msra.mxu0 0.0
        %3612 = vmatprep.subr.mxu0 0.0
        %3613 = vmatpush1.msra.mxu0 0.0
        %3614 = vmatprep.subr.mxu0 0.0
        %3615 = vmatpush1.msra.mxu0 0.0
        %3616 = vmatprep.subr.mxu0 0.0
        %3617 = vmatpush1.msra.mxu0 0.0
        %3618 = vmatprep.subr.mxu0 0.0
        %3619 = vmatpush1.msra.mxu0 0.0
        %3620 = vmatprep.subr.mxu0 0.0
        %3621 = vmatpush1.msra.mxu0 0.0
        %3622 = vmatprep.subr.mxu0 0.0
        %3623 = vmatpush1.msra.mxu0 0.0
        %3624 = vmatprep.subr.mxu0 0.0
        %3625 = vmatpush1.msra.mxu0 0.0
        %3626 = vmatprep.subr.mxu0 0.0
        %3627 = vmatpush1.msra.mxu0 0.0
        %3628 = vmatprep.subr.mxu0 0.0
        %3629 = vmatpush1.msra.mxu0 0.0
        %3630 = vmatprep.subr.mxu0 0.0
        %3631 = vmatpush1.msra.mxu0 0.0
        %3632 = vmatprep.subr.mxu0 0.0
        %3633 = vmatpush1.msra.mxu0 0.0
        %3634 = vmatprep.subr.mxu0 0.0
        %3635 = vmatpush1.msra.mxu0 0.0
        %3636 = vmatprep.subr.mxu0 0.0
        %3637 = vmatpush1.msra.mxu0 0.0
        %3638 = vmatprep.subr.mxu0 0.0
        %3639 = vmatpush1.msra.mxu0 0.0
        %3640 = vmatprep.subr.mxu0 0.0
        %3641 = vmatpush1.msra.mxu0 0.0
        %3642 = vmatprep.subr.mxu0 0.0
        %3643 = vmatpush1.msra.mxu0 0.0
        %3644 = vmatprep.subr.mxu0 0.0
        %3645 = vmatpush1.msra.mxu0 0.0
        %3646 = vmatprep.subr.mxu0 0.0
        %3647 = vmatpush1.msra.mxu0 0.0
        %3648 = vmatprep.subr.mxu0 0.0
        %3649 = vmatpush1.msra.mxu0 0.0
        %3650 = vmatprep.mubr.f32.mxu0 0.0
        %3651 = vmatmul.mubr.f32.gmra.mrb[0].mxu0 %v3584
        %v3652 = vpop.f32.mrb[0].mxu0
        %v3653 = vadd.f32 0.0, %v3652
        %v3654 = vpop.f32.mrb[0].mxu0
        %v3655 = vadd.f32 0.0, %v3654
        %3656 = vdwg.mxu0
        %3657 = vmatprep.subr.mxu0 %v2183
        %3658 = vmatpush1.msra.mxu0 %v2182
        %3659 = vmatprep.subr.mxu0 %v2185
        %3660 = vmatpush1.msra.mxu0 %v2184
        %3661 = vmatprep.subr.mxu0 %v2187
        %3662 = vmatpush1.msra.mxu0 %v2186
        %3663 = vmatprep.subr.mxu0 %v2189
        %3664 = vmatpush1.msra.mxu0 %v2188
        %3665 = vmatprep.subr.mxu0 %v2191
        %3666 = vmatpush1.msra.mxu0 %v2190
        %3667 = vmatprep.subr.mxu0 %v2193
        %3668 = vmatpush1.msra.mxu0 %v2192
        %3669 = vmatprep.subr.mxu0 %v2195
        %3670 = vmatpush1.msra.mxu0 %v2194
        %3671 = vmatprep.subr.mxu0 %v2197
        %3672 = vmatpush1.msra.mxu0 %v2196
        %3673 = vmatprep.subr.mxu0 %v2199
        %3674 = vmatpush1.msra.mxu0 %v2198
        %3675 = vmatprep.subr.mxu0 %v2201
        %3676 = vmatpush1.msra.mxu0 %v2200
        %3677 = vmatprep.subr.mxu0 %v2203
        %3678 = vmatpush1.msra.mxu0 %v2202
        %3679 = vmatprep.subr.mxu0 %v2205
        %3680 = vmatpush1.msra.mxu0 %v2204
        %3681 = vmatprep.subr.mxu0 %v2207
        %3682 = vmatpush1.msra.mxu0 %v2206
        %3683 = vmatprep.subr.mxu0 %v2209
        %3684 = vmatpush1.msra.mxu0 %v2208
        %3685 = vmatprep.subr.mxu0 %v2211
        %3686 = vmatpush1.msra.mxu0 %v2210
        %3687 = vmatprep.subr.mxu0 %v2213
        %3688 = vmatpush1.msra.mxu0 %v2212
        %3689 = vmatprep.subr.mxu0 %v2215
        %3690 = vmatpush1.msra.mxu0 %v2214
        %3691 = vmatprep.subr.mxu0 %v2217
        %3692 = vmatpush1.msra.mxu0 %v2216
        %3693 = vmatprep.subr.mxu0 %v2219
        %3694 = vmatpush1.msra.mxu0 %v2218
        %3695 = vmatprep.subr.mxu0 %v2221
        %3696 = vmatpush1.msra.mxu0 %v2220
        %3697 = vmatprep.subr.mxu0 %v2223
        %3698 = vmatpush1.msra.mxu0 %v2222
        %3699 = vmatprep.subr.mxu0 %v2225
        %3700 = vmatpush1.msra.mxu0 %v2224
        %3701 = vmatprep.subr.mxu0 %v2227
        %3702 = vmatpush1.msra.mxu0 %v2226
        %3703 = vmatprep.subr.mxu0 %v2229
        %3704 = vmatpush1.msra.mxu0 %v2228
        %3705 = vmatprep.subr.mxu0 %v2231
        %3706 = vmatpush1.msra.mxu0 %v2230
        %3707 = vmatprep.subr.mxu0 %v2233
        %3708 = vmatpush1.msra.mxu0 %v2232
        %3709 = vmatprep.subr.mxu0 %v2235
        %3710 = vmatpush1.msra.mxu0 %v2234
        %3711 = vmatprep.subr.mxu0 %v2237
        %3712 = vmatpush1.msra.mxu0 %v2236
        %3713 = vmatprep.subr.mxu0 %v2239
        %3714 = vmatpush1.msra.mxu0 %v2238
        %3715 = vmatprep.subr.mxu0 %v2241
        %3716 = vmatpush1.msra.mxu0 %v2240
        %3717 = vmatprep.subr.mxu0 %v2243
        %3718 = vmatpush1.msra.mxu0 %v2242
        %3719 = vmatprep.subr.mxu0 %v2245
        %3720 = vmatpush1.msra.mxu0 %v2244
        %3721 = vmatprep.mubr.f32.mxu0 %v3655
        %3722 = vmatmul.mubr.f32.gmra.mrb[0].mxu0 %v3653
        %v3723 = vpop.f32.mrb[0].mxu0
        %v3724 = vadd.f32 0.0, %v3723
        %v3725 = vpop.f32.mrb[0].mxu0
        %v3726 = vadd.f32 0.0, %v3725
        %3727 = vdwg.mxu0
        %v3728 = vadd.f32 %v3579, %v3724
        %v3729 = vadd.f32 %v3580, %v3726
        %s3730 = scalar_lea.vmem %s7, 64
        %v3731 = vld [vmem:[%s3730] sm:$0xff]
        %v3733 = vsel %vm613, %v3731, 0
        %3735 = vmatprep.subr.mxu0 %v609
        %3736 = vmatpush1.msra.mxu0 %v608
        %3737 = vmatprep.subr.mxu0 0.0
        %3738 = vmatpush1.msra.mxu0 0.0
        %3739 = vmatprep.subr.mxu0 0.0
        %3740 = vmatpush1.msra.mxu0 0.0
        %3741 = vmatprep.subr.mxu0 0.0
        %3742 = vmatpush1.msra.mxu0 0.0
        %3743 = vmatprep.subr.mxu0 0.0
        %3744 = vmatpush1.msra.mxu0 0.0
        %3745 = vmatprep.subr.mxu0 0.0
        %3746 = vmatpush1.msra.mxu0 0.0
        %3747 = vmatprep.subr.mxu0 0.0
        %3748 = vmatpush1.msra.mxu0 0.0
        %3749 = vmatprep.subr.mxu0 0.0
        %3750 = vmatpush1.msra.mxu0 0.0
        %3751 = vmatprep.subr.mxu0 0.0
        %3752 = vmatpush1.msra.mxu0 0.0
        %3753 = vmatprep.subr.mxu0 0.0
        %3754 = vmatpush1.msra.mxu0 0.0
        %3755 = vmatprep.subr.mxu0 0.0
        %3756 = vmatpush1.msra.mxu0 0.0
        %3757 = vmatprep.subr.mxu0 0.0
        %3758 = vmatpush1.msra.mxu0 0.0
        %3759 = vmatprep.subr.mxu0 0.0
        %3760 = vmatpush1.msra.mxu0 0.0
        %3761 = vmatprep.subr.mxu0 0.0
        %3762 = vmatpush1.msra.mxu0 0.0
        %3763 = vmatprep.subr.mxu0 0.0
        %3764 = vmatpush1.msra.mxu0 0.0
        %3765 = vmatprep.subr.mxu0 0.0
        %3766 = vmatpush1.msra.mxu0 0.0
        %3767 = vmatprep.subr.mxu0 0.0
        %3768 = vmatpush1.msra.mxu0 0.0
        %3769 = vmatprep.subr.mxu0 0.0
        %3770 = vmatpush1.msra.mxu0 0.0
        %3771 = vmatprep.subr.mxu0 0.0
        %3772 = vmatpush1.msra.mxu0 0.0
        %3773 = vmatprep.subr.mxu0 0.0
        %3774 = vmatpush1.msra.mxu0 0.0
        %3775 = vmatprep.subr.mxu0 0.0
        %3776 = vmatpush1.msra.mxu0 0.0
        %3777 = vmatprep.subr.mxu0 0.0
        %3778 = vmatpush1.msra.mxu0 0.0
        %3779 = vmatprep.subr.mxu0 0.0
        %3780 = vmatpush1.msra.mxu0 0.0
        %3781 = vmatprep.subr.mxu0 0.0
        %3782 = vmatpush1.msra.mxu0 0.0
        %3783 = vmatprep.subr.mxu0 0.0
        %3784 = vmatpush1.msra.mxu0 0.0
        %3785 = vmatprep.subr.mxu0 0.0
        %3786 = vmatpush1.msra.mxu0 0.0
        %3787 = vmatprep.subr.mxu0 0.0
        %3788 = vmatpush1.msra.mxu0 0.0
        %3789 = vmatprep.subr.mxu0 0.0
        %3790 = vmatpush1.msra.mxu0 0.0
        %3791 = vmatprep.subr.mxu0 0.0
        %3792 = vmatpush1.msra.mxu0 0.0
        %3793 = vmatprep.subr.mxu0 0.0
        %3794 = vmatpush1.msra.mxu0 0.0
        %3795 = vmatprep.subr.mxu0 0.0
        %3796 = vmatpush1.msra.mxu0 0.0
        %3797 = vmatprep.subr.mxu0 0.0
        %3798 = vmatpush1.msra.mxu0 0.0
        %3799 = vmatprep.mubr.f32.mxu0 0.0
        %3800 = vmatmul.mubr.f32.gmra.mrb[0].mxu0 %v3733
        %v3801 = vpop.f32.mrb[0].mxu0
        %v3802 = vadd.f32 0.0, %v3801
        %v3803 = vpop.f32.mrb[0].mxu0
        %v3804 = vadd.f32 0.0, %v3803
        %3805 = vdwg.mxu0
        %3806 = vmatprep.subr.mxu0 %v2397
        %3807 = vmatpush1.msra.mxu0 %v2396
        %3808 = vmatprep.subr.mxu0 %v2399
        %3809 = vmatpush1.msra.mxu0 %v2398
        %3810 = vmatprep.subr.mxu0 %v2401
        %3811 = vmatpush1.msra.mxu0 %v2400
        %3812 = vmatprep.subr.mxu0 %v2403
        %3813 = vmatpush1.msra.mxu0 %v2402
        %3814 = vmatprep.subr.mxu0 %v2405
        %3815 = vmatpush1.msra.mxu0 %v2404
        %3816 = vmatprep.subr.mxu0 %v2407
        %3817 = vmatpush1.msra.mxu0 %v2406
        %3818 = vmatprep.subr.mxu0 %v2409
        %3819 = vmatpush1.msra.mxu0 %v2408
        %3820 = vmatprep.subr.mxu0 %v2411
        %3821 = vmatpush1.msra.mxu0 %v2410
        %3822 = vmatprep.subr.mxu0 %v2413
        %3823 = vmatpush1.msra.mxu0 %v2412
        %3824 = vmatprep.subr.mxu0 %v2415
        %3825 = vmatpush1.msra.mxu0 %v2414
        %3826 = vmatprep.subr.mxu0 %v2417
        %3827 = vmatpush1.msra.mxu0 %v2416
        %3828 = vmatprep.subr.mxu0 %v2419
        %3829 = vmatpush1.msra.mxu0 %v2418
        %3830 = vmatprep.subr.mxu0 %v2421
        %3831 = vmatpush1.msra.mxu0 %v2420
        %3832 = vmatprep.subr.mxu0 %v2423
        %3833 = vmatpush1.msra.mxu0 %v2422
        %3834 = vmatprep.subr.mxu0 %v2425
        %3835 = vmatpush1.msra.mxu0 %v2424
        %3836 = vmatprep.subr.mxu0 %v2427
        %3837 = vmatpush1.msra.mxu0 %v2426
        %3838 = vmatprep.subr.mxu0 %v2429
        %3839 = vmatpush1.msra.mxu0 %v2428
        %3840 = vmatprep.subr.mxu0 %v2431
        %3841 = vmatpush1.msra.mxu0 %v2430
        %3842 = vmatprep.subr.mxu0 %v2433
        %3843 = vmatpush1.msra.mxu0 %v2432
        %3844 = vmatprep.subr.mxu0 %v2435
        %3845 = vmatpush1.msra.mxu0 %v2434
        %3846 = vmatprep.subr.mxu0 %v2437
        %3847 = vmatpush1.msra.mxu0 %v2436
        %3848 = vmatprep.subr.mxu0 %v2439
        %3849 = vmatpush1.msra.mxu0 %v2438
        %3850 = vmatprep.subr.mxu0 %v2441
        %3851 = vmatpush1.msra.mxu0 %v2440
        %3852 = vmatprep.subr.mxu0 %v2443
        %3853 = vmatpush1.msra.mxu0 %v2442
        %3854 = vmatprep.subr.mxu0 %v2445
        %3855 = vmatpush1.msra.mxu0 %v2444
        %3856 = vmatprep.subr.mxu0 %v2447
        %3857 = vmatpush1.msra.mxu0 %v2446
        %3858 = vmatprep.subr.mxu0 %v2449
        %3859 = vmatpush1.msra.mxu0 %v2448
        %3860 = vmatprep.subr.mxu0 %v2451
        %3861 = vmatpush1.msra.mxu0 %v2450
        %3862 = vmatprep.subr.mxu0 %v2453
        %3863 = vmatpush1.msra.mxu0 %v2452
        %3864 = vmatprep.subr.mxu0 %v2455
        %3865 = vmatpush1.msra.mxu0 %v2454
        %3866 = vmatprep.subr.mxu0 %v2457
        %3867 = vmatpush1.msra.mxu0 %v2456
        %3868 = vmatprep.subr.mxu0 %v2459
        %3869 = vmatpush1.msra.mxu0 %v2458
        %3870 = vmatprep.mubr.f32.mxu0 %v3804
        %3871 = vmatmul.mubr.f32.gmra.mrb[0].mxu0 %v3802
        %v3872 = vpop.f32.mrb[0].mxu0
        %v3873 = vadd.f32 0.0, %v3872
        %v3874 = vpop.f32.mrb[0].mxu0
        %v3875 = vadd.f32 0.0, %v3874
        %3876 = vdwg.mxu0
        %v3877 = vadd.f32 %v3728, %v3873
        %v3878 = vadd.f32 %v3729, %v3875
        %v3879 = vld [vmem:[%s8] sm:$0xff]
        %3881 = vset.pattern.permute.xlu0 0
        %3882 = vperm.xlu0 %3881, %v3879
        %v3883 = vpop.permute.xlu0 %3882
        %v3885 = vadd.f32 %v3877, %v3883
        %v3886 = vadd.f32 %v3878, %v3883
        %v3887 = vmax.f32 %v3885, 0.0
        %v3888 = vmax.f32 %v3886, 0.0
        %v3889 = vld [vmem:[%s9] sm:$0xff]
        %v3890 = vld [vmem:[%s10] sm:$0xff]
        %v3892 = vsel %vm613, %v3890, 0
        %3894 = vmatprep.subr.mxu0 %v2542
        %3895 = vmatpush1.msra.mxu0 %v2541
        %3896 = vmatprep.subr.mxu0 0.0
        %3897 = vmatpush1.msra.mxu0 0.0
        %3898 = vmatprep.subr.mxu0 0.0
        %3899 = vmatpush1.msra.mxu0 0.0
        %3900 = vmatprep.subr.mxu0 0.0
        %3901 = vmatpush1.msra.mxu0 0.0
        %3902 = vmatprep.subr.mxu0 0.0
        %3903 = vmatpush1.msra.mxu0 0.0
        %3904 = vmatprep.subr.mxu0 0.0
        %3905 = vmatpush1.msra.mxu0 0.0
        %3906 = vmatprep.subr.mxu0 0.0
        %3907 = vmatpush1.msra.mxu0 0.0
        %3908 = vmatprep.subr.mxu0 0.0
        %3909 = vmatpush1.msra.mxu0 0.0
        %3910 = vmatprep.subr.mxu0 0.0
        %3911 = vmatpush1.msra.mxu0 0.0
        %3912 = vmatprep.subr.mxu0 0.0
        %3913 = vmatpush1.msra.mxu0 0.0
        %3914 = vmatprep.subr.mxu0 0.0
        %3915 = vmatpush1.msra.mxu0 0.0
        %3916 = vmatprep.subr.mxu0 0.0
        %3917 = vmatpush1.msra.mxu0 0.0
        %3918 = vmatprep.subr.mxu0 0.0
        %3919 = vmatpush1.msra.mxu0 0.0
        %3920 = vmatprep.subr.mxu0 0.0
        %3921 = vmatpush1.msra.mxu0 0.0
        %3922 = vmatprep.subr.mxu0 0.0
        %3923 = vmatpush1.msra.mxu0 0.0
        %3924 = vmatprep.subr.mxu0 0.0
        %3925 = vmatpush1.msra.mxu0 0.0
        %3926 = vmatprep.subr.mxu0 0.0
        %3927 = vmatpush1.msra.mxu0 0.0
        %3928 = vmatprep.subr.mxu0 0.0
        %3929 = vmatpush1.msra.mxu0 0.0
        %3930 = vmatprep.subr.mxu0 0.0
        %3931 = vmatpush1.msra.mxu0 0.0
        %3932 = vmatprep.subr.mxu0 0.0
        %3933 = vmatpush1.msra.mxu0 0.0
        %3934 = vmatprep.subr.mxu0 0.0
        %3935 = vmatpush1.msra.mxu0 0.0
        %3936 = vmatprep.subr.mxu0 0.0
        %3937 = vmatpush1.msra.mxu0 0.0
        %3938 = vmatprep.subr.mxu0 0.0
        %3939 = vmatpush1.msra.mxu0 0.0
        %3940 = vmatprep.subr.mxu0 0.0
        %3941 = vmatpush1.msra.mxu0 0.0
        %3942 = vmatprep.subr.mxu0 0.0
        %3943 = vmatpush1.msra.mxu0 0.0
        %3944 = vmatprep.subr.mxu0 0.0
        %3945 = vmatpush1.msra.mxu0 0.0
        %3946 = vmatprep.subr.mxu0 0.0
        %3947 = vmatpush1.msra.mxu0 0.0
        %3948 = vmatprep.subr.mxu0 0.0
        %3949 = vmatpush1.msra.mxu0 0.0
        %3950 = vmatprep.subr.mxu0 0.0
        %3951 = vmatpush1.msra.mxu0 0.0
        %3952 = vmatprep.subr.mxu0 0.0
        %3953 = vmatpush1.msra.mxu0 0.0
        %3954 = vmatprep.subr.mxu0 0.0
        %3955 = vmatpush1.msra.mxu0 0.0
        %3956 = vmatprep.subr.mxu0 0.0
        %3957 = vmatpush1.msra.mxu0 0.0
        %3958 = vmatprep.mubr.f32.mxu0 0.0
        %3959 = vmatmul.mubr.f32.gmra.mrb[0].mxu0 %v3892
        %v3960 = vpop.f32.mrb[0].mxu0
        %v3961 = vadd.f32 0.0, %v3960
        %v3962 = vpop.f32.mrb[0].mxu0
        %v3963 = vadd.f32 0.0, %v3962
        %3964 = vdwg.mxu0
        %v3966 = vsel %vm613, %v3889, 0
        %3968 = vmatprep.subr.mxu0 %v3888
        %3969 = vmatpush1.msra.mxu0 %v3887
        %3970 = vmatprep.subr.mxu0 0.0
        %3971 = vmatpush1.msra.mxu0 0.0
        %3972 = vmatprep.subr.mxu0 0.0
        %3973 = vmatpush1.msra.mxu0 0.0
        %3974 = vmatprep.subr.mxu0 0.0
        %3975 = vmatpush1.msra.mxu0 0.0
        %3976 = vmatprep.subr.mxu0 0.0
        %3977 = vmatpush1.msra.mxu0 0.0
        %3978 = vmatprep.subr.mxu0 0.0
        %3979 = vmatpush1.msra.mxu0 0.0
        %3980 = vmatprep.subr.mxu0 0.0
        %3981 = vmatpush1.msra.mxu0 0.0
        %3982 = vmatprep.subr.mxu0 0.0
        %3983 = vmatpush1.msra.mxu0 0.0
        %3984 = vmatprep.subr.mxu0 0.0
        %3985 = vmatpush1.msra.mxu0 0.0
        %3986 = vmatprep.subr.mxu0 0.0
        %3987 = vmatpush1.msra.mxu0 0.0
        %3988 = vmatprep.subr.mxu0 0.0
        %3989 = vmatpush1.msra.mxu0 0.0
        %3990 = vmatprep.subr.mxu0 0.0
        %3991 = vmatpush1.msra.mxu0 0.0
        %3992 = vmatprep.subr.mxu0 0.0
        %3993 = vmatpush1.msra.mxu0 0.0
        %3994 = vmatprep.subr.mxu0 0.0
        %3995 = vmatpush1.msra.mxu0 0.0
        %3996 = vmatprep.subr.mxu0 0.0
        %3997 = vmatpush1.msra.mxu0 0.0
        %3998 = vmatprep.subr.mxu0 0.0
        %3999 = vmatpush1.msra.mxu0 0.0
        %4000 = vmatprep.subr.mxu0 0.0
        %4001 = vmatpush1.msra.mxu0 0.0
        %4002 = vmatprep.subr.mxu0 0.0
        %4003 = vmatpush1.msra.mxu0 0.0
        %4004 = vmatprep.subr.mxu0 0.0
        %4005 = vmatpush1.msra.mxu0 0.0
        %4006 = vmatprep.subr.mxu0 0.0
        %4007 = vmatpush1.msra.mxu0 0.0
        %4008 = vmatprep.subr.mxu0 0.0
        %4009 = vmatpush1.msra.mxu0 0.0
        %4010 = vmatprep.subr.mxu0 0.0
        %4011 = vmatpush1.msra.mxu0 0.0
        %4012 = vmatprep.subr.mxu0 0.0
        %4013 = vmatpush1.msra.mxu0 0.0
        %4014 = vmatprep.subr.mxu0 0.0
        %4015 = vmatpush1.msra.mxu0 0.0
        %4016 = vmatprep.subr.mxu0 0.0
        %4017 = vmatpush1.msra.mxu0 0.0
        %4018 = vmatprep.subr.mxu0 0.0
        %4019 = vmatpush1.msra.mxu0 0.0
        %4020 = vmatprep.subr.mxu0 0.0
        %4021 = vmatpush1.msra.mxu0 0.0
        %4022 = vmatprep.subr.mxu0 0.0
        %4023 = vmatpush1.msra.mxu0 0.0
        %4024 = vmatprep.subr.mxu0 0.0
        %4025 = vmatpush1.msra.mxu0 0.0
        %4026 = vmatprep.subr.mxu0 0.0
        %4027 = vmatpush1.msra.mxu0 0.0
        %4028 = vmatprep.subr.mxu0 0.0
        %4029 = vmatpush1.msra.mxu0 0.0
        %4030 = vmatprep.subr.mxu0 0.0
        %4031 = vmatpush1.msra.mxu0 0.0
        %4032 = vmatprep.mubr.f32.mxu0 0.0
        %4033 = vmatmul.mubr.f32.gmra.mrb[0].mxu0 %v3966
        %v4034 = vpop.f32.mrb[0].mxu0
        %v4035 = vadd.f32 %v3961, %v4034
        %v4036 = vpop.f32.mrb[0].mxu0
        %v4037 = vadd.f32 %v3963, %v4036
        %4038 = vdwg.mxu0
        %s4039 = scalar_lea.vmem %s9, 8
        %v4040 = vld [vmem:[%s4039] sm:$0xff]
        %s4041 = scalar_lea.vmem %s10, 8
        %v4042 = vld [vmem:[%s4041] sm:$0xff]
        %v4044 = vsel %vm613, %v4042, 0
        %4046 = vmatprep.subr.mxu0 %v2542
        %4047 = vmatpush1.msra.mxu0 %v2541
        %4048 = vmatprep.subr.mxu0 0.0
        %4049 = vmatpush1.msra.mxu0 0.0
        %4050 = vmatprep.subr.mxu0 0.0
        %4051 = vmatpush1.msra.mxu0 0.0
        %4052 = vmatprep.subr.mxu0 0.0
        %4053 = vmatpush1.msra.mxu0 0.0
        %4054 = vmatprep.subr.mxu0 0.0
        %4055 = vmatpush1.msra.mxu0 0.0
        %4056 = vmatprep.subr.mxu0 0.0
        %4057 = vmatpush1.msra.mxu0 0.0
        %4058 = vmatprep.subr.mxu0 0.0
        %4059 = vmatpush1.msra.mxu0 0.0
        %4060 = vmatprep.subr.mxu0 0.0
        %4061 = vmatpush1.msra.mxu0 0.0
        %4062 = vmatprep.subr.mxu0 0.0
        %4063 = vmatpush1.msra.mxu0 0.0
        %4064 = vmatprep.subr.mxu0 0.0
        %4065 = vmatpush1.msra.mxu0 0.0
        %4066 = vmatprep.subr.mxu0 0.0
        %4067 = vmatpush1.msra.mxu0 0.0
        %4068 = vmatprep.subr.mxu0 0.0
        %4069 = vmatpush1.msra.mxu0 0.0
        %4070 = vmatprep.subr.mxu0 0.0
        %4071 = vmatpush1.msra.mxu0 0.0
        %4072 = vmatprep.subr.mxu0 0.0
        %4073 = vmatpush1.msra.mxu0 0.0
        %4074 = vmatprep.subr.mxu0 0.0
        %4075 = vmatpush1.msra.mxu0 0.0
        %4076 = vmatprep.subr.mxu0 0.0
        %4077 = vmatpush1.msra.mxu0 0.0
        %4078 = vmatprep.subr.mxu0 0.0
        %4079 = vmatpush1.msra.mxu0 0.0
        %4080 = vmatprep.subr.mxu0 0.0
        %4081 = vmatpush1.msra.mxu0 0.0
        %4082 = vmatprep.subr.mxu0 0.0
        %4083 = vmatpush1.msra.mxu0 0.0
        %4084 = vmatprep.subr.mxu0 0.0
        %4085 = vmatpush1.msra.mxu0 0.0
        %4086 = vmatprep.subr.mxu0 0.0
        %4087 = vmatpush1.msra.mxu0 0.0
        %4088 = vmatprep.subr.mxu0 0.0
        %4089 = vmatpush1.msra.mxu0 0.0
        %4090 = vmatprep.subr.mxu0 0.0
        %4091 = vmatpush1.msra.mxu0 0.0
        %4092 = vmatprep.subr.mxu0 0.0
        %4093 = vmatpush1.msra.mxu0 0.0
        %4094 = vmatprep.subr.mxu0 0.0
        %4095 = vmatpush1.msra.mxu0 0.0
        %4096 = vmatprep.subr.mxu0 0.0
        %4097 = vmatpush1.msra.mxu0 0.0
        %4098 = vmatprep.subr.mxu0 0.0
        %4099 = vmatpush1.msra.mxu0 0.0
        %4100 = vmatprep.subr.mxu0 0.0
        %4101 = vmatpush1.msra.mxu0 0.0
        %4102 = vmatprep.subr.mxu0 0.0
        %4103 = vmatpush1.msra.mxu0 0.0
        %4104 = vmatprep.subr.mxu0 0.0
        %4105 = vmatpush1.msra.mxu0 0.0
        %4106 = vmatprep.subr.mxu0 0.0
        %4107 = vmatpush1.msra.mxu0 0.0
        %4108 = vmatprep.subr.mxu0 0.0
        %4109 = vmatpush1.msra.mxu0 0.0
        %4110 = vmatprep.mubr.f32.mxu0 0.0
        %4111 = vmatmul.mubr.f32.gmra.mrb[0].mxu0 %v4044
        %v4112 = vpop.f32.mrb[0].mxu0
        %v4113 = vadd.f32 0.0, %v4112
        %v4114 = vpop.f32.mrb[0].mxu0
        %v4115 = vadd.f32 0.0, %v4114
        %4116 = vdwg.mxu0
        %v4118 = vsel %vm613, %v4040, 0
        %4120 = vmatprep.subr.mxu0 %v3888
        %4121 = vmatpush1.msra.mxu0 %v3887
        %4122 = vmatprep.subr.mxu0 0.0
        %4123 = vmatpush1.msra.mxu0 0.0
        %4124 = vmatprep.subr.mxu0 0.0
        %4125 = vmatpush1.msra.mxu0 0.0
        %4126 = vmatprep.subr.mxu0 0.0
        %4127 = vmatpush1.msra.mxu0 0.0
        %4128 = vmatprep.subr.mxu0 0.0
        %4129 = vmatpush1.msra.mxu0 0.0
        %4130 = vmatprep.subr.mxu0 0.0
        %4131 = vmatpush1.msra.mxu0 0.0
        %4132 = vmatprep.subr.mxu0 0.0
        %4133 = vmatpush1.msra.mxu0 0.0
        %4134 = vmatprep.subr.mxu0 0.0
        %4135 = vmatpush1.msra.mxu0 0.0
        %4136 = vmatprep.subr.mxu0 0.0
        %4137 = vmatpush1.msra.mxu0 0.0
        %4138 = vmatprep.subr.mxu0 0.0
        %4139 = vmatpush1.msra.mxu0 0.0
        %4140 = vmatprep.subr.mxu0 0.0
        %4141 = vmatpush1.msra.mxu0 0.0
        %4142 = vmatprep.subr.mxu0 0.0
        %4143 = vmatpush1.msra.mxu0 0.0
        %4144 = vmatprep.subr.mxu0 0.0
        %4145 = vmatpush1.msra.mxu0 0.0
        %4146 = vmatprep.subr.mxu0 0.0
        %4147 = vmatpush1.msra.mxu0 0.0
        %4148 = vmatprep.subr.mxu0 0.0
        %4149 = vmatpush1.msra.mxu0 0.0
        %4150 = vmatprep.subr.mxu0 0.0
        %4151 = vmatpush1.msra.mxu0 0.0
        %4152 = vmatprep.subr.mxu0 0.0
        %4153 = vmatpush1.msra.mxu0 0.0
        %4154 = vmatprep.subr.mxu0 0.0
        %4155 = vmatpush1.msra.mxu0 0.0
        %4156 = vmatprep.subr.mxu0 0.0
        %4157 = vmatpush1.msra.mxu0 0.0
        %4158 = vmatprep.subr.mxu0 0.0
        %4159 = vmatpush1.msra.mxu0 0.0
        %4160 = vmatprep.subr.mxu0 0.0
        %4161 = vmatpush1.msra.mxu0 0.0
        %4162 = vmatprep.subr.mxu0 0.0
        %4163 = vmatpush1.msra.mxu0 0.0
        %4164 = vmatprep.subr.mxu0 0.0
        %4165 = vmatpush1.msra.mxu0 0.0
        %4166 = vmatprep.subr.mxu0 0.0
        %4167 = vmatpush1.msra.mxu0 0.0
        %4168 = vmatprep.subr.mxu0 0.0
        %4169 = vmatpush1.msra.mxu0 0.0
        %4170 = vmatprep.subr.mxu0 0.0
        %4171 = vmatpush1.msra.mxu0 0.0
        %4172 = vmatprep.subr.mxu0 0.0
        %4173 = vmatpush1.msra.mxu0 0.0
        %4174 = vmatprep.subr.mxu0 0.0
        %4175 = vmatpush1.msra.mxu0 0.0
        %4176 = vmatprep.subr.mxu0 0.0
        %4177 = vmatpush1.msra.mxu0 0.0
        %4178 = vmatprep.subr.mxu0 0.0
        %4179 = vmatpush1.msra.mxu0 0.0
        %4180 = vmatprep.subr.mxu0 0.0
        %4181 = vmatpush1.msra.mxu0 0.0
        %4182 = vmatprep.subr.mxu0 0.0
        %4183 = vmatpush1.msra.mxu0 0.0
        %4184 = vmatprep.mubr.f32.mxu0 0.0
        %4185 = vmatmul.mubr.f32.gmra.mrb[0].mxu0 %v4118
        %v4186 = vpop.f32.mrb[0].mxu0
        %v4187 = vadd.f32 %v4113, %v4186
        %v4188 = vpop.f32.mrb[0].mxu0
        %v4189 = vadd.f32 %v4115, %v4188
        %4190 = vdwg.mxu0
        %4191 = vmatprep.subr.mxu0 %v830
        %4192 = vmatpush1.msra.mxu0 %v829
        %4193 = vmatprep.subr.mxu0 %v832
        %4194 = vmatpush1.msra.mxu0 %v831
        %4195 = vmatprep.subr.mxu0 %v834
        %4196 = vmatpush1.msra.mxu0 %v833
        %4197 = vmatprep.subr.mxu0 %v836
        %4198 = vmatpush1.msra.mxu0 %v835
        %4199 = vmatprep.subr.mxu0 %v838
        %4200 = vmatpush1.msra.mxu0 %v837
        %4201 = vmatprep.subr.mxu0 %v840
        %4202 = vmatpush1.msra.mxu0 %v839
        %4203 = vmatprep.subr.mxu0 %v842
        %4204 = vmatpush1.msra.mxu0 %v841
        %4205 = vmatprep.subr.mxu0 %v844
        %4206 = vmatpush1.msra.mxu0 %v843
        %4207 = vmatprep.subr.mxu0 %v846
        %4208 = vmatpush1.msra.mxu0 %v845
        %4209 = vmatprep.subr.mxu0 %v848
        %4210 = vmatpush1.msra.mxu0 %v847
        %4211 = vmatprep.subr.mxu0 %v850
        %4212 = vmatpush1.msra.mxu0 %v849
        %4213 = vmatprep.subr.mxu0 %v852
        %4214 = vmatpush1.msra.mxu0 %v851
        %4215 = vmatprep.subr.mxu0 %v854
        %4216 = vmatpush1.msra.mxu0 %v853
        %4217 = vmatprep.subr.mxu0 %v856
        %4218 = vmatpush1.msra.mxu0 %v855
        %4219 = vmatprep.subr.mxu0 %v858
        %4220 = vmatpush1.msra.mxu0 %v857
        %4221 = vmatprep.subr.mxu0 %v860
        %4222 = vmatpush1.msra.mxu0 %v859
        %4223 = vmatprep.subr.mxu0 %v862
        %4224 = vmatpush1.msra.mxu0 %v861
        %4225 = vmatprep.subr.mxu0 %v864
        %4226 = vmatpush1.msra.mxu0 %v863
        %4227 = vmatprep.subr.mxu0 %v866
        %4228 = vmatpush1.msra.mxu0 %v865
        %4229 = vmatprep.subr.mxu0 %v868
        %4230 = vmatpush1.msra.mxu0 %v867
        %4231 = vmatprep.subr.mxu0 %v870
        %4232 = vmatpush1.msra.mxu0 %v869
        %4233 = vmatprep.subr.mxu0 %v872
        %4234 = vmatpush1.msra.mxu0 %v871
        %4235 = vmatprep.subr.mxu0 %v874
        %4236 = vmatpush1.msra.mxu0 %v873
        %4237 = vmatprep.subr.mxu0 %v876
        %4238 = vmatpush1.msra.mxu0 %v875
        %4239 = vmatprep.subr.mxu0 %v878
        %4240 = vmatpush1.msra.mxu0 %v877
        %4241 = vmatprep.subr.mxu0 %v880
        %4242 = vmatpush1.msra.mxu0 %v879
        %4243 = vmatprep.subr.mxu0 %v882
        %4244 = vmatpush1.msra.mxu0 %v881
        %4245 = vmatprep.subr.mxu0 %v884
        %4246 = vmatpush1.msra.mxu0 %v883
        %4247 = vmatprep.subr.mxu0 %v886
        %4248 = vmatpush1.msra.mxu0 %v885
        %4249 = vmatprep.subr.mxu0 %v888
        %4250 = vmatpush1.msra.mxu0 %v887
        %4251 = vmatprep.subr.mxu0 %v890
        %4252 = vmatpush1.msra.mxu0 %v889
        %4253 = vmatprep.subr.mxu0 %v892
        %4254 = vmatpush1.msra.mxu0 %v891
        %4255 = vmatprep.mubr.f32.mxu0 %v4189
        %4256 = vmatmul.mubr.f32.gmra.mrb[0].mxu0 %v4187
        %v4257 = vpop.f32.mrb[0].mxu0
        %v4258 = vadd.f32 0.0, %v4257
        %v4259 = vpop.f32.mrb[0].mxu0
        %v4260 = vadd.f32 0.0, %v4259
        %4261 = vdwg.mxu0
        %4262 = vmatprep.subr.mxu0 %v689
        %4263 = vmatpush1.msra.mxu0 %v688
        %4264 = vmatprep.subr.mxu0 %v691
        %4265 = vmatpush1.msra.mxu0 %v690
        %4266 = vmatprep.subr.mxu0 %v693
        %4267 = vmatpush1.msra.mxu0 %v692
        %4268 = vmatprep.subr.mxu0 %v695
        %4269 = vmatpush1.msra.mxu0 %v694
        %4270 = vmatprep.subr.mxu0 %v697
        %4271 = vmatpush1.msra.mxu0 %v696
        %4272 = vmatprep.subr.mxu0 %v699
        %4273 = vmatpush1.msra.mxu0 %v698
        %4274 = vmatprep.subr.mxu0 %v701
        %4275 = vmatpush1.msra.mxu0 %v700
        %4276 = vmatprep.subr.mxu0 %v703
        %4277 = vmatpush1.msra.mxu0 %v702
        %4278 = vmatprep.subr.mxu0 %v705
        %4279 = vmatpush1.msra.mxu0 %v704
        %4280 = vmatprep.subr.mxu0 %v707
        %4281 = vmatpush1.msra.mxu0 %v706
        %4282 = vmatprep.subr.mxu0 %v709
        %4283 = vmatpush1.msra.mxu0 %v708
        %4284 = vmatprep.subr.mxu0 %v711
        %4285 = vmatpush1.msra.mxu0 %v710
        %4286 = vmatprep.subr.mxu0 %v713
        %4287 = vmatpush1.msra.mxu0 %v712
        %4288 = vmatprep.subr.mxu0 %v715
        %4289 = vmatpush1.msra.mxu0 %v714
        %4290 = vmatprep.subr.mxu0 %v717
        %4291 = vmatpush1.msra.mxu0 %v716
        %4292 = vmatprep.subr.mxu0 %v719
        %4293 = vmatpush1.msra.mxu0 %v718
        %4294 = vmatprep.subr.mxu0 %v721
        %4295 = vmatpush1.msra.mxu0 %v720
        %4296 = vmatprep.subr.mxu0 %v723
        %4297 = vmatpush1.msra.mxu0 %v722
        %4298 = vmatprep.subr.mxu0 %v725
        %4299 = vmatpush1.msra.mxu0 %v724
        %4300 = vmatprep.subr.mxu0 %v727
        %4301 = vmatpush1.msra.mxu0 %v726
        %4302 = vmatprep.subr.mxu0 %v729
        %4303 = vmatpush1.msra.mxu0 %v728
        %4304 = vmatprep.subr.mxu0 %v731
        %4305 = vmatpush1.msra.mxu0 %v730
        %4306 = vmatprep.subr.mxu0 %v733
        %4307 = vmatpush1.msra.mxu0 %v732
        %4308 = vmatprep.subr.mxu0 %v735
        %4309 = vmatpush1.msra.mxu0 %v734
        %4310 = vmatprep.subr.mxu0 %v737
        %4311 = vmatpush1.msra.mxu0 %v736
        %4312 = vmatprep.subr.mxu0 %v739
        %4313 = vmatpush1.msra.mxu0 %v738
        %4314 = vmatprep.subr.mxu0 %v741
        %4315 = vmatpush1.msra.mxu0 %v740
        %4316 = vmatprep.subr.mxu0 %v743
        %4317 = vmatpush1.msra.mxu0 %v742
        %4318 = vmatprep.subr.mxu0 %v745
        %4319 = vmatpush1.msra.mxu0 %v744
        %4320 = vmatprep.subr.mxu0 %v747
        %4321 = vmatpush1.msra.mxu0 %v746
        %4322 = vmatprep.subr.mxu0 %v749
        %4323 = vmatpush1.msra.mxu0 %v748
        %4324 = vmatprep.subr.mxu0 %v751
        %4325 = vmatpush1.msra.mxu0 %v750
        %4326 = vmatprep.mubr.f32.mxu0 %v4037
        %4327 = vmatmul.mubr.f32.gmra.mrb[0].mxu0 %v4035
        %v4328 = vpop.f32.mrb[0].mxu0
        %v4329 = vadd.f32 %v4258, %v4328
        %v4330 = vpop.f32.mrb[0].mxu0
        %v4331 = vadd.f32 %v4260, %v4330
        %4332 = vdwg.mxu0
        %s4333 = scalar_lea.vmem %s9, 16
        %v4334 = vld [vmem:[%s4333] sm:$0xff]
        %s4335 = scalar_lea.vmem %s10, 16
        %v4336 = vld [vmem:[%s4335] sm:$0xff]
        %v4338 = vsel %vm613, %v4336, 0
        %4340 = vmatprep.subr.mxu0 %v2542
        %4341 = vmatpush1.msra.mxu0 %v2541
        %4342 = vmatprep.subr.mxu0 0.0
        %4343 = vmatpush1.msra.mxu0 0.0
        %4344 = vmatprep.subr.mxu0 0.0
        %4345 = vmatpush1.msra.mxu0 0.0
        %4346 = vmatprep.subr.mxu0 0.0
        %4347 = vmatpush1.msra.mxu0 0.0
        %4348 = vmatprep.subr.mxu0 0.0
        %4349 = vmatpush1.msra.mxu0 0.0
        %4350 = vmatprep.subr.mxu0 0.0
        %4351 = vmatpush1.msra.mxu0 0.0
        %4352 = vmatprep.subr.mxu0 0.0
        %4353 = vmatpush1.msra.mxu0 0.0
        %4354 = vmatprep.subr.mxu0 0.0
        %4355 = vmatpush1.msra.mxu0 0.0
        %4356 = vmatprep.subr.mxu0 0.0
        %4357 = vmatpush1.msra.mxu0 0.0
        %4358 = vmatprep.subr.mxu0 0.0
        %4359 = vmatpush1.msra.mxu0 0.0
        %4360 = vmatprep.subr.mxu0 0.0
        %4361 = vmatpush1.msra.mxu0 0.0
        %4362 = vmatprep.subr.mxu0 0.0
        %4363 = vmatpush1.msra.mxu0 0.0
        %4364 = vmatprep.subr.mxu0 0.0
        %4365 = vmatpush1.msra.mxu0 0.0
        %4366 = vmatprep.subr.mxu0 0.0
        %4367 = vmatpush1.msra.mxu0 0.0
        %4368 = vmatprep.subr.mxu0 0.0
        %4369 = vmatpush1.msra.mxu0 0.0
        %4370 = vmatprep.subr.mxu0 0.0
        %4371 = vmatpush1.msra.mxu0 0.0
        %4372 = vmatprep.subr.mxu0 0.0
        %4373 = vmatpush1.msra.mxu0 0.0
        %4374 = vmatprep.subr.mxu0 0.0
        %4375 = vmatpush1.msra.mxu0 0.0
        %4376 = vmatprep.subr.mxu0 0.0
        %4377 = vmatpush1.msra.mxu0 0.0
        %4378 = vmatprep.subr.mxu0 0.0
        %4379 = vmatpush1.msra.mxu0 0.0
        %4380 = vmatprep.subr.mxu0 0.0
        %4381 = vmatpush1.msra.mxu0 0.0
        %4382 = vmatprep.subr.mxu0 0.0
        %4383 = vmatpush1.msra.mxu0 0.0
        %4384 = vmatprep.subr.mxu0 0.0
        %4385 = vmatpush1.msra.mxu0 0.0
        %4386 = vmatprep.subr.mxu0 0.0
        %4387 = vmatpush1.msra.mxu0 0.0
        %4388 = vmatprep.subr.mxu0 0.0
        %4389 = vmatpush1.msra.mxu0 0.0
        %4390 = vmatprep.subr.mxu0 0.0
        %4391 = vmatpush1.msra.mxu0 0.0
        %4392 = vmatprep.subr.mxu0 0.0
        %4393 = vmatpush1.msra.mxu0 0.0
        %4394 = vmatprep.subr.mxu0 0.0
        %4395 = vmatpush1.msra.mxu0 0.0
        %4396 = vmatprep.subr.mxu0 0.0
        %4397 = vmatpush1.msra.mxu0 0.0
        %4398 = vmatprep.subr.mxu0 0.0
        %4399 = vmatpush1.msra.mxu0 0.0
        %4400 = vmatprep.subr.mxu0 0.0
        %4401 = vmatpush1.msra.mxu0 0.0
        %4402 = vmatprep.subr.mxu0 0.0
        %4403 = vmatpush1.msra.mxu0 0.0
        %4404 = vmatprep.mubr.f32.mxu0 0.0
        %4405 = vmatmul.mubr.f32.gmra.mrb[0].mxu0 %v4338
        %v4406 = vpop.f32.mrb[0].mxu0
        %v4407 = vadd.f32 0.0, %v4406
        %v4408 = vpop.f32.mrb[0].mxu0
        %v4409 = vadd.f32 0.0, %v4408
        %4410 = vdwg.mxu0
        %v4412 = vsel %vm613, %v4334, 0
        %4414 = vmatprep.subr.mxu0 %v3888
        %4415 = vmatpush1.msra.mxu0 %v3887
        %4416 = vmatprep.subr.mxu0 0.0
        %4417 = vmatpush1.msra.mxu0 0.0
        %4418 = vmatprep.subr.mxu0 0.0
        %4419 = vmatpush1.msra.mxu0 0.0
        %4420 = vmatprep.subr.mxu0 0.0
        %4421 = vmatpush1.msra.mxu0 0.0
        %4422 = vmatprep.subr.mxu0 0.0
        %4423 = vmatpush1.msra.mxu0 0.0
        %4424 = vmatprep.subr.mxu0 0.0
        %4425 = vmatpush1.msra.mxu0 0.0
        %4426 = vmatprep.subr.mxu0 0.0
        %4427 = vmatpush1.msra.mxu0 0.0
        %4428 = vmatprep.subr.mxu0 0.0
        %4429 = vmatpush1.msra.mxu0 0.0
        %4430 = vmatprep.subr.mxu0 0.0
        %4431 = vmatpush1.msra.mxu0 0.0
        %4432 = vmatprep.subr.mxu0 0.0
        %4433 = vmatpush1.msra.mxu0 0.0
        %4434 = vmatprep.subr.mxu0 0.0
        %4435 = vmatpush1.msra.mxu0 0.0
        %4436 = vmatprep.subr.mxu0 0.0
        %4437 = vmatpush1.msra.mxu0 0.0
        %4438 = vmatprep.subr.mxu0 0.0
        %4439 = vmatpush1.msra.mxu0 0.0
        %4440 = vmatprep.subr.mxu0 0.0
        %4441 = vmatpush1.msra.mxu0 0.0
        %4442 = vmatprep.subr.mxu0 0.0
        %4443 = vmatpush1.msra.mxu0 0.0
        %4444 = vmatprep.subr.mxu0 0.0
        %4445 = vmatpush1.msra.mxu0 0.0
        %4446 = vmatprep.subr.mxu0 0.0
        %4447 = vmatpush1.msra.mxu0 0.0
        %4448 = vmatprep.subr.mxu0 0.0
        %4449 = vmatpush1.msra.mxu0 0.0
        %4450 = vmatprep.subr.mxu0 0.0
        %4451 = vmatpush1.msra.mxu0 0.0
        %4452 = vmatprep.subr.mxu0 0.0
        %4453 = vmatpush1.msra.mxu0 0.0
        %4454 = vmatprep.subr.mxu0 0.0
        %4455 = vmatpush1.msra.mxu0 0.0
        %4456 = vmatprep.subr.mxu0 0.0
        %4457 = vmatpush1.msra.mxu0 0.0
        %4458 = vmatprep.subr.mxu0 0.0
        %4459 = vmatpush1.msra.mxu0 0.0
        %4460 = vmatprep.subr.mxu0 0.0
        %4461 = vmatpush1.msra.mxu0 0.0
        %4462 = vmatprep.subr.mxu0 0.0
        %4463 = vmatpush1.msra.mxu0 0.0
        %4464 = vmatprep.subr.mxu0 0.0
        %4465 = vmatpush1.msra.mxu0 0.0
        %4466 = vmatprep.subr.mxu0 0.0
        %4467 = vmatpush1.msra.mxu0 0.0
        %4468 = vmatprep.subr.mxu0 0.0
        %4469 = vmatpush1.msra.mxu0 0.0
        %4470 = vmatprep.subr.mxu0 0.0
        %4471 = vmatpush1.msra.mxu0 0.0
        %4472 = vmatprep.subr.mxu0 0.0
        %4473 = vmatpush1.msra.mxu0 0.0
        %4474 = vmatprep.subr.mxu0 0.0
        %4475 = vmatpush1.msra.mxu0 0.0
        %4476 = vmatprep.subr.mxu0 0.0
        %4477 = vmatpush1.msra.mxu0 0.0
        %4478 = vmatprep.mubr.f32.mxu0 0.0
        %4479 = vmatmul.mubr.f32.gmra.mrb[0].mxu0 %v4412
        %v4480 = vpop.f32.mrb[0].mxu0
        %v4481 = vadd.f32 %v4407, %v4480
        %v4482 = vpop.f32.mrb[0].mxu0
        %v4483 = vadd.f32 %v4409, %v4482
        %4484 = vdwg.mxu0
        %4485 = vmatprep.subr.mxu0 %v1113
        %4486 = vmatpush1.msra.mxu0 %v1112
        %4487 = vmatprep.subr.mxu0 %v1115
        %4488 = vmatpush1.msra.mxu0 %v1114
        %4489 = vmatprep.subr.mxu0 %v1117
        %4490 = vmatpush1.msra.mxu0 %v1116
        %4491 = vmatprep.subr.mxu0 %v1119
        %4492 = vmatpush1.msra.mxu0 %v1118
        %4493 = vmatprep.subr.mxu0 %v1121
        %4494 = vmatpush1.msra.mxu0 %v1120
        %4495 = vmatprep.subr.mxu0 %v1123
        %4496 = vmatpush1.msra.mxu0 %v1122
        %4497 = vmatprep.subr.mxu0 %v1125
        %4498 = vmatpush1.msra.mxu0 %v1124
        %4499 = vmatprep.subr.mxu0 %v1127
        %4500 = vmatpush1.msra.mxu0 %v1126
        %4501 = vmatprep.subr.mxu0 %v1129
        %4502 = vmatpush1.msra.mxu0 %v1128
        %4503 = vmatprep.subr.mxu0 %v1131
        %4504 = vmatpush1.msra.mxu0 %v1130
        %4505 = vmatprep.subr.mxu0 %v1133
        %4506 = vmatpush1.msra.mxu0 %v1132
        %4507 = vmatprep.subr.mxu0 %v1135
        %4508 = vmatpush1.msra.mxu0 %v1134
        %4509 = vmatprep.subr.mxu0 %v1137
        %4510 = vmatpush1.msra.mxu0 %v1136
        %4511 = vmatprep.subr.mxu0 %v1139
        %4512 = vmatpush1.msra.mxu0 %v1138
        %4513 = vmatprep.subr.mxu0 %v1141
        %4514 = vmatpush1.msra.mxu0 %v1140
        %4515 = vmatprep.subr.mxu0 %v1143
        %4516 = vmatpush1.msra.mxu0 %v1142
        %4517 = vmatprep.subr.mxu0 %v1145
        %4518 = vmatpush1.msra.mxu0 %v1144
        %4519 = vmatprep.subr.mxu0 %v1147
        %4520 = vmatpush1.msra.mxu0 %v1146
        %4521 = vmatprep.subr.mxu0 %v1149
        %4522 = vmatpush1.msra.mxu0 %v1148
        %4523 = vmatprep.subr.mxu0 %v1151
        %4524 = vmatpush1.msra.mxu0 %v1150
        %4525 = vmatprep.subr.mxu0 %v1153
        %4526 = vmatpush1.msra.mxu0 %v1152
        %4527 = vmatprep.subr.mxu0 %v1155
        %4528 = vmatpush1.msra.mxu0 %v1154
        %4529 = vmatprep.subr.mxu0 %v1157
        %4530 = vmatpush1.msra.mxu0 %v1156
        %4531 = vmatprep.subr.mxu0 %v1159
        %4532 = vmatpush1.msra.mxu0 %v1158
        %4533 = vmatprep.subr.mxu0 %v1161
        %4534 = vmatpush1.msra.mxu0 %v1160
        %4535 = vmatprep.subr.mxu0 %v1163
        %4536 = vmatpush1.msra.mxu0 %v1162
        %4537 = vmatprep.subr.mxu0 %v1165
        %4538 = vmatpush1.msra.mxu0 %v1164
        %4539 = vmatprep.subr.mxu0 %v1167
        %4540 = vmatpush1.msra.mxu0 %v1166
        %4541 = vmatprep.subr.mxu0 %v1169
        %4542 = vmatpush1.msra.mxu0 %v1168
        %4543 = vmatprep.subr.mxu0 %v1171
        %4544 = vmatpush1.msra.mxu0 %v1170
        %4545 = vmatprep.subr.mxu0 %v1173
        %4546 = vmatpush1.msra.mxu0 %v1172
        %4547 = vmatprep.subr.mxu0 %v1175
        %4548 = vmatpush1.msra.mxu0 %v1174
        %4549 = vmatprep.mubr.f32.mxu0 %v4483
        %4550 = vmatmul.mubr.f32.gmra.mrb[0].mxu0 %v4481
        %v4551 = vpop.f32.mrb[0].mxu0
        %v4552 = vadd.f32 0.0, %v4551
        %v4553 = vpop.f32.mrb[0].mxu0
        %v4554 = vadd.f32 0.0, %v4553
        %4555 = vdwg.mxu0
        %v4556 = vadd.f32 %v4329, %v4552
        %v4557 = vadd.f32 %v4331, %v4554
        %s4558 = scalar_lea.vmem %s9, 24
        %v4559 = vld [vmem:[%s4558] sm:$0xff]
        %s4560 = scalar_lea.vmem %s10, 24
        %v4561 = vld [vmem:[%s4560] sm:$0xff]
        %v4563 = vsel %vm613, %v4561, 0
        %4565 = vmatprep.subr.mxu0 %v2542
        %4566 = vmatpush1.msra.mxu0 %v2541
        %4567 = vmatprep.subr.mxu0 0.0
        %4568 = vmatpush1.msra.mxu0 0.0
        %4569 = vmatprep.subr.mxu0 0.0
        %4570 = vmatpush1.msra.mxu0 0.0
        %4571 = vmatprep.subr.mxu0 0.0
        %4572 = vmatpush1.msra.mxu0 0.0
        %4573 = vmatprep.subr.mxu0 0.0
        %4574 = vmatpush1.msra.mxu0 0.0
        %4575 = vmatprep.subr.mxu0 0.0
        %4576 = vmatpush1.msra.mxu0 0.0
        %4577 = vmatprep.subr.mxu0 0.0
        %4578 = vmatpush1.msra.mxu0 0.0
        %4579 = vmatprep.subr.mxu0 0.0
        %4580 = vmatpush1.msra.mxu0 0.0
        %4581 = vmatprep.subr.mxu0 0.0
        %4582 = vmatpush1.msra.mxu0 0.0
        %4583 = vmatprep.subr.mxu0 0.0
        %4584 = vmatpush1.msra.mxu0 0.0
        %4585 = vmatprep.subr.mxu0 0.0
        %4586 = vmatpush1.msra.mxu0 0.0
        %4587 = vmatprep.subr.mxu0 0.0
        %4588 = vmatpush1.msra.mxu0 0.0
        %4589 = vmatprep.subr.mxu0 0.0
        %4590 = vmatpush1.msra.mxu0 0.0
        %4591 = vmatprep.subr.mxu0 0.0
        %4592 = vmatpush1.msra.mxu0 0.0
        %4593 = vmatprep.subr.mxu0 0.0
        %4594 = vmatpush1.msra.mxu0 0.0
        %4595 = vmatprep.subr.mxu0 0.0
        %4596 = vmatpush1.msra.mxu0 0.0
        %4597 = vmatprep.subr.mxu0 0.0
        %4598 = vmatpush1.msra.mxu0 0.0
        %4599 = vmatprep.subr.mxu0 0.0
        %4600 = vmatpush1.msra.mxu0 0.0
        %4601 = vmatprep.subr.mxu0 0.0
        %4602 = vmatpush1.msra.mxu0 0.0
        %4603 = vmatprep.subr.mxu0 0.0
        %4604 = vmatpush1.msra.mxu0 0.0
        %4605 = vmatprep.subr.mxu0 0.0
        %4606 = vmatpush1.msra.mxu0 0.0
        %4607 = vmatprep.subr.mxu0 0.0
        %4608 = vmatpush1.msra.mxu0 0.0
        %4609 = vmatprep.subr.mxu0 0.0
        %4610 = vmatpush1.msra.mxu0 0.0
        %4611 = vmatprep.subr.mxu0 0.0
        %4612 = vmatpush1.msra.mxu0 0.0
        %4613 = vmatprep.subr.mxu0 0.0
        %4614 = vmatpush1.msra.mxu0 0.0
        %4615 = vmatprep.subr.mxu0 0.0
        %4616 = vmatpush1.msra.mxu0 0.0
        %4617 = vmatprep.subr.mxu0 0.0
        %4618 = vmatpush1.msra.mxu0 0.0
        %4619 = vmatprep.subr.mxu0 0.0
        %4620 = vmatpush1.msra.mxu0 0.0
        %4621 = vmatprep.subr.mxu0 0.0
        %4622 = vmatpush1.msra.mxu0 0.0
        %4623 = vmatprep.subr.mxu0 0.0
        %4624 = vmatpush1.msra.mxu0 0.0
        %4625 = vmatprep.subr.mxu0 0.0
        %4626 = vmatpush1.msra.mxu0 0.0
        %4627 = vmatprep.subr.mxu0 0.0
        %4628 = vmatpush1.msra.mxu0 0.0
        %4629 = vmatprep.mubr.f32.mxu0 0.0
        %4630 = vmatmul.mubr.f32.gmra.mrb[0].mxu0 %v4563
        %v4631 = vpop.f32.mrb[0].mxu0
        %v4632 = vadd.f32 0.0, %v4631
        %v4633 = vpop.f32.mrb[0].mxu0
        %v4634 = vadd.f32 0.0, %v4633
        %4635 = vdwg.mxu0
        %v4637 = vsel %vm613, %v4559, 0
        %4639 = vmatprep.subr.mxu0 %v3888
        %4640 = vmatpush1.msra.mxu0 %v3887
        %4641 = vmatprep.subr.mxu0 0.0
        %4642 = vmatpush1.msra.mxu0 0.0
        %4643 = vmatprep.subr.mxu0 0.0
        %4644 = vmatpush1.msra.mxu0 0.0
        %4645 = vmatprep.subr.mxu0 0.0
        %4646 = vmatpush1.msra.mxu0 0.0
        %4647 = vmatprep.subr.mxu0 0.0
        %4648 = vmatpush1.msra.mxu0 0.0
        %4649 = vmatprep.subr.mxu0 0.0
        %4650 = vmatpush1.msra.mxu0 0.0
        %4651 = vmatprep.subr.mxu0 0.0
        %4652 = vmatpush1.msra.mxu0 0.0
        %4653 = vmatprep.subr.mxu0 0.0
        %4654 = vmatpush1.msra.mxu0 0.0
        %4655 = vmatprep.subr.mxu0 0.0
        %4656 = vmatpush1.msra.mxu0 0.0
        %4657 = vmatprep.subr.mxu0 0.0
        %4658 = vmatpush1.msra.mxu0 0.0
        %4659 = vmatprep.subr.mxu0 0.0
        %4660 = vmatpush1.msra.mxu0 0.0
        %4661 = vmatprep.subr.mxu0 0.0
        %4662 = vmatpush1.msra.mxu0 0.0
        %4663 = vmatprep.subr.mxu0 0.0
        %4664 = vmatpush1.msra.mxu0 0.0
        %4665 = vmatprep.subr.mxu0 0.0
        %4666 = vmatpush1.msra.mxu0 0.0
        %4667 = vmatprep.subr.mxu0 0.0
        %4668 = vmatpush1.msra.mxu0 0.0
        %4669 = vmatprep.subr.mxu0 0.0
        %4670 = vmatpush1.msra.mxu0 0.0
        %4671 = vmatprep.subr.mxu0 0.0
        %4672 = vmatpush1.msra.mxu0 0.0
        %4673 = vmatprep.subr.mxu0 0.0
        %4674 = vmatpush1.msra.mxu0 0.0
        %4675 = vmatprep.subr.mxu0 0.0
        %4676 = vmatpush1.msra.mxu0 0.0
        %4677 = vmatprep.subr.mxu0 0.0
        %4678 = vmatpush1.msra.mxu0 0.0
        %4679 = vmatprep.subr.mxu0 0.0
        %4680 = vmatpush1.msra.mxu0 0.0
        %4681 = vmatprep.subr.mxu0 0.0
        %4682 = vmatpush1.msra.mxu0 0.0
        %4683 = vmatprep.subr.mxu0 0.0
        %4684 = vmatpush1.msra.mxu0 0.0
        %4685 = vmatprep.subr.mxu0 0.0
        %4686 = vmatpush1.msra.mxu0 0.0
        %4687 = vmatprep.subr.mxu0 0.0
        %4688 = vmatpush1.msra.mxu0 0.0
        %4689 = vmatprep.subr.mxu0 0.0
        %4690 = vmatpush1.msra.mxu0 0.0
        %4691 = vmatprep.subr.mxu0 0.0
        %4692 = vmatpush1.msra.mxu0 0.0
        %4693 = vmatprep.subr.mxu0 0.0
        %4694 = vmatpush1.msra.mxu0 0.0
        %4695 = vmatprep.subr.mxu0 0.0
        %4696 = vmatpush1.msra.mxu0 0.0
        %4697 = vmatprep.subr.mxu0 0.0
        %4698 = vmatpush1.msra.mxu0 0.0
        %4699 = vmatprep.subr.mxu0 0.0
        %4700 = vmatpush1.msra.mxu0 0.0
        %4701 = vmatprep.subr.mxu0 0.0
        %4702 = vmatpush1.msra.mxu0 0.0
        %4703 = vmatprep.mubr.f32.mxu0 0.0
        %4704 = vmatmul.mubr.f32.gmra.mrb[0].mxu0 %v4637
        %v4705 = vpop.f32.mrb[0].mxu0
        %v4706 = vadd.f32 %v4632, %v4705
        %v4707 = vpop.f32.mrb[0].mxu0
        %v4708 = vadd.f32 %v4634, %v4707
        %4709 = vdwg.mxu0
        %4710 = vmatprep.subr.mxu0 %v1327
        %4711 = vmatpush1.msra.mxu0 %v1326
        %4712 = vmatprep.subr.mxu0 %v1329
        %4713 = vmatpush1.msra.mxu0 %v1328
        %4714 = vmatprep.subr.mxu0 %v1331
        %4715 = vmatpush1.msra.mxu0 %v1330
        %4716 = vmatprep.subr.mxu0 %v1333
        %4717 = vmatpush1.msra.mxu0 %v1332
        %4718 = vmatprep.subr.mxu0 %v1335
        %4719 = vmatpush1.msra.mxu0 %v1334
        %4720 = vmatprep.subr.mxu0 %v1337
        %4721 = vmatpush1.msra.mxu0 %v1336
        %4722 = vmatprep.subr.mxu0 %v1339
        %4723 = vmatpush1.msra.mxu0 %v1338
        %4724 = vmatprep.subr.mxu0 %v1341
        %4725 = vmatpush1.msra.mxu0 %v1340
        %4726 = vmatprep.subr.mxu0 %v1343
        %4727 = vmatpush1.msra.mxu0 %v1342
        %4728 = vmatprep.subr.mxu0 %v1345
        %4729 = vmatpush1.msra.mxu0 %v1344
        %4730 = vmatprep.subr.mxu0 %v1347
        %4731 = vmatpush1.msra.mxu0 %v1346
        %4732 = vmatprep.subr.mxu0 %v1349
        %4733 = vmatpush1.msra.mxu0 %v1348
        %4734 = vmatprep.subr.mxu0 %v1351
        %4735 = vmatpush1.msra.mxu0 %v1350
        %4736 = vmatprep.subr.mxu0 %v1353
        %4737 = vmatpush1.msra.mxu0 %v1352
        %4738 = vmatprep.subr.mxu0 %v1355
        %4739 = vmatpush1.msra.mxu0 %v1354
        %4740 = vmatprep.subr.mxu0 %v1357
        %4741 = vmatpush1.msra.mxu0 %v1356
        %4742 = vmatprep.subr.mxu0 %v1359
        %4743 = vmatpush1.msra.mxu0 %v1358
        %4744 = vmatprep.subr.mxu0 %v1361
        %4745 = vmatpush1.msra.mxu0 %v1360
        %4746 = vmatprep.subr.mxu0 %v1363
        %4747 = vmatpush1.msra.mxu0 %v1362
        %4748 = vmatprep.subr.mxu0 %v1365
        %4749 = vmatpush1.msra.mxu0 %v1364
        %4750 = vmatprep.subr.mxu0 %v1367
        %4751 = vmatpush1.msra.mxu0 %v1366
        %4752 = vmatprep.subr.mxu0 %v1369
        %4753 = vmatpush1.msra.mxu0 %v1368
        %4754 = vmatprep.subr.mxu0 %v1371
        %4755 = vmatpush1.msra.mxu0 %v1370
        %4756 = vmatprep.subr.mxu0 %v1373
        %4757 = vmatpush1.msra.mxu0 %v1372
        %4758 = vmatprep.subr.mxu0 %v1375
        %4759 = vmatpush1.msra.mxu0 %v1374
        %4760 = vmatprep.subr.mxu0 %v1377
        %4761 = vmatpush1.msra.mxu0 %v1376
        %4762 = vmatprep.subr.mxu0 %v1379
        %4763 = vmatpush1.msra.mxu0 %v1378
        %4764 = vmatprep.subr.mxu0 %v1381
        %4765 = vmatpush1.msra.mxu0 %v1380
        %4766 = vmatprep.subr.mxu0 %v1383
        %4767 = vmatpush1.msra.mxu0 %v1382
        %4768 = vmatprep.subr.mxu0 %v1385
        %4769 = vmatpush1.msra.mxu0 %v1384
        %4770 = vmatprep.subr.mxu0 %v1387
        %4771 = vmatpush1.msra.mxu0 %v1386
        %4772 = vmatprep.subr.mxu0 %v1389
        %4773 = vmatpush1.msra.mxu0 %v1388
        %4774 = vmatprep.mubr.f32.mxu0 %v4708
        %4775 = vmatmul.mubr.f32.gmra.mrb[0].mxu0 %v4706
        %v4776 = vpop.f32.mrb[0].mxu0
        %v4777 = vadd.f32 0.0, %v4776
        %v4778 = vpop.f32.mrb[0].mxu0
        %v4779 = vadd.f32 0.0, %v4778
        %4780 = vdwg.mxu0
        %v4781 = vadd.f32 %v4556, %v4777
        %v4782 = vadd.f32 %v4557, %v4779
        %s4783 = scalar_lea.vmem %s9, 32
        %v4784 = vld [vmem:[%s4783] sm:$0xff]
        %s4785 = scalar_lea.vmem %s10, 32
        %v4786 = vld [vmem:[%s4785] sm:$0xff]
        %v4788 = vsel %vm613, %v4786, 0
        %4790 = vmatprep.subr.mxu0 %v2542
        %4791 = vmatpush1.msra.mxu0 %v2541
        %4792 = vmatprep.subr.mxu0 0.0
        %4793 = vmatpush1.msra.mxu0 0.0
        %4794 = vmatprep.subr.mxu0 0.0
        %4795 = vmatpush1.msra.mxu0 0.0
        %4796 = vmatprep.subr.mxu0 0.0
        %4797 = vmatpush1.msra.mxu0 0.0
        %4798 = vmatprep.subr.mxu0 0.0
        %4799 = vmatpush1.msra.mxu0 0.0
        %4800 = vmatprep.subr.mxu0 0.0
        %4801 = vmatpush1.msra.mxu0 0.0
        %4802 = vmatprep.subr.mxu0 0.0
        %4803 = vmatpush1.msra.mxu0 0.0
        %4804 = vmatprep.subr.mxu0 0.0
        %4805 = vmatpush1.msra.mxu0 0.0
        %4806 = vmatprep.subr.mxu0 0.0
        %4807 = vmatpush1.msra.mxu0 0.0
        %4808 = vmatprep.subr.mxu0 0.0
        %4809 = vmatpush1.msra.mxu0 0.0
        %4810 = vmatprep.subr.mxu0 0.0
        %4811 = vmatpush1.msra.mxu0 0.0
        %4812 = vmatprep.subr.mxu0 0.0
        %4813 = vmatpush1.msra.mxu0 0.0
        %4814 = vmatprep.subr.mxu0 0.0
        %4815 = vmatpush1.msra.mxu0 0.0
        %4816 = vmatprep.subr.mxu0 0.0
        %4817 = vmatpush1.msra.mxu0 0.0
        %4818 = vmatprep.subr.mxu0 0.0
        %4819 = vmatpush1.msra.mxu0 0.0
        %4820 = vmatprep.subr.mxu0 0.0
        %4821 = vmatpush1.msra.mxu0 0.0
        %4822 = vmatprep.subr.mxu0 0.0
        %4823 = vmatpush1.msra.mxu0 0.0
        %4824 = vmatprep.subr.mxu0 0.0
        %4825 = vmatpush1.msra.mxu0 0.0
        %4826 = vmatprep.subr.mxu0 0.0
        %4827 = vmatpush1.msra.mxu0 0.0
        %4828 = vmatprep.subr.mxu0 0.0
        %4829 = vmatpush1.msra.mxu0 0.0
        %4830 = vmatprep.subr.mxu0 0.0
        %4831 = vmatpush1.msra.mxu0 0.0
        %4832 = vmatprep.subr.mxu0 0.0
        %4833 = vmatpush1.msra.mxu0 0.0
        %4834 = vmatprep.subr.mxu0 0.0
        %4835 = vmatpush1.msra.mxu0 0.0
        %4836 = vmatprep.subr.mxu0 0.0
        %4837 = vmatpush1.msra.mxu0 0.0
        %4838 = vmatprep.subr.mxu0 0.0
        %4839 = vmatpush1.msra.mxu0 0.0
        %4840 = vmatprep.subr.mxu0 0.0
        %4841 = vmatpush1.msra.mxu0 0.0
        %4842 = vmatprep.subr.mxu0 0.0
        %4843 = vmatpush1.msra.mxu0 0.0
        %4844 = vmatprep.subr.mxu0 0.0
        %4845 = vmatpush1.msra.mxu0 0.0
        %4846 = vmatprep.subr.mxu0 0.0
        %4847 = vmatpush1.msra.mxu0 0.0
        %4848 = vmatprep.subr.mxu0 0.0
        %4849 = vmatpush1.msra.mxu0 0.0
        %4850 = vmatprep.subr.mxu0 0.0
        %4851 = vmatpush1.msra.mxu0 0.0
        %4852 = vmatprep.subr.mxu0 0.0
        %4853 = vmatpush1.msra.mxu0 0.0
        %4854 = vmatprep.mubr.f32.mxu0 0.0
        %4855 = vmatmul.mubr.f32.gmra.mrb[0].mxu0 %v4788
        %v4856 = vpop.f32.mrb[0].mxu0
        %v4857 = vadd.f32 0.0, %v4856
        %v4858 = vpop.f32.mrb[0].mxu0
        %v4859 = vadd.f32 0.0, %v4858
        %4860 = vdwg.mxu0
        %v4862 = vsel %vm613, %v4784, 0
        %4864 = vmatprep.subr.mxu0 %v3888
        %4865 = vmatpush1.msra.mxu0 %v3887
        %4866 = vmatprep.subr.mxu0 0.0
        %4867 = vmatpush1.msra.mxu0 0.0
        %4868 = vmatprep.subr.mxu0 0.0
        %4869 = vmatpush1.msra.mxu0 0.0
        %4870 = vmatprep.subr.mxu0 0.0
        %4871 = vmatpush1.msra.mxu0 0.0
        %4872 = vmatprep.subr.mxu0 0.0
        %4873 = vmatpush1.msra.mxu0 0.0
        %4874 = vmatprep.subr.mxu0 0.0
        %4875 = vmatpush1.msra.mxu0 0.0
        %4876 = vmatprep.subr.mxu0 0.0
        %4877 = vmatpush1.msra.mxu0 0.0
        %4878 = vmatprep.subr.mxu0 0.0
        %4879 = vmatpush1.msra.mxu0 0.0
        %4880 = vmatprep.subr.mxu0 0.0
        %4881 = vmatpush1.msra.mxu0 0.0
        %4882 = vmatprep.subr.mxu0 0.0
        %4883 = vmatpush1.msra.mxu0 0.0
        %4884 = vmatprep.subr.mxu0 0.0
        %4885 = vmatpush1.msra.mxu0 0.0
        %4886 = vmatprep.subr.mxu0 0.0
        %4887 = vmatpush1.msra.mxu0 0.0
        %4888 = vmatprep.subr.mxu0 0.0
        %4889 = vmatpush1.msra.mxu0 0.0
        %4890 = vmatprep.subr.mxu0 0.0
        %4891 = vmatpush1.msra.mxu0 0.0
        %4892 = vmatprep.subr.mxu0 0.0
        %4893 = vmatpush1.msra.mxu0 0.0
        %4894 = vmatprep.subr.mxu0 0.0
        %4895 = vmatpush1.msra.mxu0 0.0
        %4896 = vmatprep.subr.mxu0 0.0
        %4897 = vmatpush1.msra.mxu0 0.0
        %4898 = vmatprep.subr.mxu0 0.0
        %4899 = vmatpush1.msra.mxu0 0.0
        %4900 = vmatprep.subr.mxu0 0.0
        %4901 = vmatpush1.msra.mxu0 0.0
        %4902 = vmatprep.subr.mxu0 0.0
        %4903 = vmatpush1.msra.mxu0 0.0
        %4904 = vmatprep.subr.mxu0 0.0
        %4905 = vmatpush1.msra.mxu0 0.0
        %4906 = vmatprep.subr.mxu0 0.0
        %4907 = vmatpush1.msra.mxu0 0.0
        %4908 = vmatprep.subr.mxu0 0.0
        %4909 = vmatpush1.msra.mxu0 0.0
        %4910 = vmatprep.subr.mxu0 0.0
        %4911 = vmatpush1.msra.mxu0 0.0
        %4912 = vmatprep.subr.mxu0 0.0
        %4913 = vmatpush1.msra.mxu0 0.0
        %4914 = vmatprep.subr.mxu0 0.0
        %4915 = vmatpush1.msra.mxu0 0.0
        %4916 = vmatprep.subr.mxu0 0.0
        %4917 = vmatpush1.msra.mxu0 0.0
        %4918 = vmatprep.subr.mxu0 0.0
        %4919 = vmatpush1.msra.mxu0 0.0
        %4920 = vmatprep.subr.mxu0 0.0
        %4921 = vmatpush1.msra.mxu0 0.0
        %4922 = vmatprep.subr.mxu0 0.0
        %4923 = vmatpush1.msra.mxu0 0.0
        %4924 = vmatprep.subr.mxu0 0.0
        %4925 = vmatpush1.msra.mxu0 0.0
        %4926 = vmatprep.subr.mxu0 0.0
        %4927 = vmatpush1.msra.mxu0 0.0
        %4928 = vmatprep.mubr.f32.mxu0 0.0
        %4929 = vmatmul.mubr.f32.gmra.mrb[0].mxu0 %v4862
        %v4930 = vpop.f32.mrb[0].mxu0
        %v4931 = vadd.f32 %v4857, %v4930
        %v4932 = vpop.f32.mrb[0].mxu0
        %v4933 = vadd.f32 %v4859, %v4932
        %4934 = vdwg.mxu0
        %4935 = vmatprep.subr.mxu0 %v1541
        %4936 = vmatpush1.msra.mxu0 %v1540
        %4937 = vmatprep.subr.mxu0 %v1543
        %4938 = vmatpush1.msra.mxu0 %v1542
        %4939 = vmatprep.subr.mxu0 %v1545
        %4940 = vmatpush1.msra.mxu0 %v1544
        %4941 = vmatprep.subr.mxu0 %v1547
        %4942 = vmatpush1.msra.mxu0 %v1546
        %4943 = vmatprep.subr.mxu0 %v1549
        %4944 = vmatpush1.msra.mxu0 %v1548
        %4945 = vmatprep.subr.mxu0 %v1551
        %4946 = vmatpush1.msra.mxu0 %v1550
        %4947 = vmatprep.subr.mxu0 %v1553
        %4948 = vmatpush1.msra.mxu0 %v1552
        %4949 = vmatprep.subr.mxu0 %v1555
        %4950 = vmatpush1.msra.mxu0 %v1554
        %4951 = vmatprep.subr.mxu0 %v1557
        %4952 = vmatpush1.msra.mxu0 %v1556
        %4953 = vmatprep.subr.mxu0 %v1559
        %4954 = vmatpush1.msra.mxu0 %v1558
        %4955 = vmatprep.subr.mxu0 %v1561
        %4956 = vmatpush1.msra.mxu0 %v1560
        %4957 = vmatprep.subr.mxu0 %v1563
        %4958 = vmatpush1.msra.mxu0 %v1562
        %4959 = vmatprep.subr.mxu0 %v1565
        %4960 = vmatpush1.msra.mxu0 %v1564
        %4961 = vmatprep.subr.mxu0 %v1567
        %4962 = vmatpush1.msra.mxu0 %v1566
        %4963 = vmatprep.subr.mxu0 %v1569
        %4964 = vmatpush1.msra.mxu0 %v1568
        %4965 = vmatprep.subr.mxu0 %v1571
        %4966 = vmatpush1.msra.mxu0 %v1570
        %4967 = vmatprep.subr.mxu0 %v1573
        %4968 = vmatpush1.msra.mxu0 %v1572
        %4969 = vmatprep.subr.mxu0 %v1575
        %4970 = vmatpush1.msra.mxu0 %v1574
        %4971 = vmatprep.subr.mxu0 %v1577
        %4972 = vmatpush1.msra.mxu0 %v1576
        %4973 = vmatprep.subr.mxu0 %v1579
        %4974 = vmatpush1.msra.mxu0 %v1578
        %4975 = vmatprep.subr.mxu0 %v1581
        %4976 = vmatpush1.msra.mxu0 %v1580
        %4977 = vmatprep.subr.mxu0 %v1583
        %4978 = vmatpush1.msra.mxu0 %v1582
        %4979 = vmatprep.subr.mxu0 %v1585
        %4980 = vmatpush1.msra.mxu0 %v1584
        %4981 = vmatprep.subr.mxu0 %v1587
        %4982 = vmatpush1.msra.mxu0 %v1586
        %4983 = vmatprep.subr.mxu0 %v1589
        %4984 = vmatpush1.msra.mxu0 %v1588
        %4985 = vmatprep.subr.mxu0 %v1591
        %4986 = vmatpush1.msra.mxu0 %v1590
        %4987 = vmatprep.subr.mxu0 %v1593
        %4988 = vmatpush1.msra.mxu0 %v1592
        %4989 = vmatprep.subr.mxu0 %v1595
        %4990 = vmatpush1.msra.mxu0 %v1594
        %4991 = vmatprep.subr.mxu0 %v1597
        %4992 = vmatpush1.msra.mxu0 %v1596
        %4993 = vmatprep.subr.mxu0 %v1599
        %4994 = vmatpush1.msra.mxu0 %v1598
        %4995 = vmatprep.subr.mxu0 %v1601
        %4996 = vmatpush1.msra.mxu0 %v1600
        %4997 = vmatprep.subr.mxu0 %v1603
        %4998 = vmatpush1.msra.mxu0 %v1602
        %4999 = vmatprep.mubr.f32.mxu0 %v4933
        %5000 = vmatmul.mubr.f32.gmra.mrb[0].mxu0 %v4931
        %v5001 = vpop.f32.mrb[0].mxu0
        %v5002 = vadd.f32 0.0, %v5001
        %v5003 = vpop.f32.mrb[0].mxu0
        %v5004 = vadd.f32 0.0, %v5003
        %5005 = vdwg.mxu0
        %v5006 = vadd.f32 %v4781, %v5002
        %v5007 = vadd.f32 %v4782, %v5004
        %s5008 = scalar_lea.vmem %s9, 40
        %v5009 = vld [vmem:[%s5008] sm:$0xff]
        %s5010 = scalar_lea.vmem %s10, 40
        %v5011 = vld [vmem:[%s5010] sm:$0xff]
        %v5013 = vsel %vm613, %v5011, 0
        %5015 = vmatprep.subr.mxu0 %v2542
        %5016 = vmatpush1.msra.mxu0 %v2541
        %5017 = vmatprep.subr.mxu0 0.0
        %5018 = vmatpush1.msra.mxu0 0.0
        %5019 = vmatprep.subr.mxu0 0.0
        %5020 = vmatpush1.msra.mxu0 0.0
        %5021 = vmatprep.subr.mxu0 0.0
        %5022 = vmatpush1.msra.mxu0 0.0
        %5023 = vmatprep.subr.mxu0 0.0
        %5024 = vmatpush1.msra.mxu0 0.0
        %5025 = vmatprep.subr.mxu0 0.0
        %5026 = vmatpush1.msra.mxu0 0.0
        %5027 = vmatprep.subr.mxu0 0.0
        %5028 = vmatpush1.msra.mxu0 0.0
        %5029 = vmatprep.subr.mxu0 0.0
        %5030 = vmatpush1.msra.mxu0 0.0
        %5031 = vmatprep.subr.mxu0 0.0
        %5032 = vmatpush1.msra.mxu0 0.0
        %5033 = vmatprep.subr.mxu0 0.0
        %5034 = vmatpush1.msra.mxu0 0.0
        %5035 = vmatprep.subr.mxu0 0.0
        %5036 = vmatpush1.msra.mxu0 0.0
        %5037 = vmatprep.subr.mxu0 0.0
        %5038 = vmatpush1.msra.mxu0 0.0
        %5039 = vmatprep.subr.mxu0 0.0
        %5040 = vmatpush1.msra.mxu0 0.0
        %5041 = vmatprep.subr.mxu0 0.0
        %5042 = vmatpush1.msra.mxu0 0.0
        %5043 = vmatprep.subr.mxu0 0.0
        %5044 = vmatpush1.msra.mxu0 0.0
        %5045 = vmatprep.subr.mxu0 0.0
        %5046 = vmatpush1.msra.mxu0 0.0
        %5047 = vmatprep.subr.mxu0 0.0
        %5048 = vmatpush1.msra.mxu0 0.0
        %5049 = vmatprep.subr.mxu0 0.0
        %5050 = vmatpush1.msra.mxu0 0.0
        %5051 = vmatprep.subr.mxu0 0.0
        %5052 = vmatpush1.msra.mxu0 0.0
        %5053 = vmatprep.subr.mxu0 0.0
        %5054 = vmatpush1.msra.mxu0 0.0
        %5055 = vmatprep.subr.mxu0 0.0
        %5056 = vmatpush1.msra.mxu0 0.0
        %5057 = vmatprep.subr.mxu0 0.0
        %5058 = vmatpush1.msra.mxu0 0.0
        %5059 = vmatprep.subr.mxu0 0.0
        %5060 = vmatpush1.msra.mxu0 0.0
        %5061 = vmatprep.subr.mxu0 0.0
        %5062 = vmatpush1.msra.mxu0 0.0
        %5063 = vmatprep.subr.mxu0 0.0
        %5064 = vmatpush1.msra.mxu0 0.0
        %5065 = vmatprep.subr.mxu0 0.0
        %5066 = vmatpush1.msra.mxu0 0.0
        %5067 = vmatprep.subr.mxu0 0.0
        %5068 = vmatpush1.msra.mxu0 0.0
        %5069 = vmatprep.subr.mxu0 0.0
        %5070 = vmatpush1.msra.mxu0 0.0
        %5071 = vmatprep.subr.mxu0 0.0
        %5072 = vmatpush1.msra.mxu0 0.0
        %5073 = vmatprep.subr.mxu0 0.0
        %5074 = vmatpush1.msra.mxu0 0.0
        %5075 = vmatprep.subr.mxu0 0.0
        %5076 = vmatpush1.msra.mxu0 0.0
        %5077 = vmatprep.subr.mxu0 0.0
        %5078 = vmatpush1.msra.mxu0 0.0
        %5079 = vmatprep.mubr.f32.mxu0 0.0
        %5080 = vmatmul.mubr.f32.gmra.mrb[0].mxu0 %v5013
        %v5081 = vpop.f32.mrb[0].mxu0
        %v5082 = vadd.f32 0.0, %v5081
        %v5083 = vpop.f32.mrb[0].mxu0
        %v5084 = vadd.f32 0.0, %v5083
        %5085 = vdwg.mxu0
        %v5087 = vsel %vm613, %v5009, 0
        %5089 = vmatprep.subr.mxu0 %v3888
        %5090 = vmatpush1.msra.mxu0 %v3887
        %5091 = vmatprep.subr.mxu0 0.0
        %5092 = vmatpush1.msra.mxu0 0.0
        %5093 = vmatprep.subr.mxu0 0.0
        %5094 = vmatpush1.msra.mxu0 0.0
        %5095 = vmatprep.subr.mxu0 0.0
        %5096 = vmatpush1.msra.mxu0 0.0
        %5097 = vmatprep.subr.mxu0 0.0
        %5098 = vmatpush1.msra.mxu0 0.0
        %5099 = vmatprep.subr.mxu0 0.0
        %5100 = vmatpush1.msra.mxu0 0.0
        %5101 = vmatprep.subr.mxu0 0.0
        %5102 = vmatpush1.msra.mxu0 0.0
        %5103 = vmatprep.subr.mxu0 0.0
        %5104 = vmatpush1.msra.mxu0 0.0
        %5105 = vmatprep.subr.mxu0 0.0
        %5106 = vmatpush1.msra.mxu0 0.0
        %5107 = vmatprep.subr.mxu0 0.0
        %5108 = vmatpush1.msra.mxu0 0.0
        %5109 = vmatprep.subr.mxu0 0.0
        %5110 = vmatpush1.msra.mxu0 0.0
        %5111 = vmatprep.subr.mxu0 0.0
        %5112 = vmatpush1.msra.mxu0 0.0
        %5113 = vmatprep.subr.mxu0 0.0
        %5114 = vmatpush1.msra.mxu0 0.0
        %5115 = vmatprep.subr.mxu0 0.0
        %5116 = vmatpush1.msra.mxu0 0.0
        %5117 = vmatprep.subr.mxu0 0.0
        %5118 = vmatpush1.msra.mxu0 0.0
        %5119 = vmatprep.subr.mxu0 0.0
        %5120 = vmatpush1.msra.mxu0 0.0
        %5121 = vmatprep.subr.mxu0 0.0
        %5122 = vmatpush1.msra.mxu0 0.0
        %5123 = vmatprep.subr.mxu0 0.0
        %5124 = vmatpush1.msra.mxu0 0.0
        %5125 = vmatprep.subr.mxu0 0.0
        %5126 = vmatpush1.msra.mxu0 0.0
        %5127 = vmatprep.subr.mxu0 0.0
        %5128 = vmatpush1.msra.mxu0 0.0
        %5129 = vmatprep.subr.mxu0 0.0
        %5130 = vmatpush1.msra.mxu0 0.0
        %5131 = vmatprep.subr.mxu0 0.0
        %5132 = vmatpush1.msra.mxu0 0.0
        %5133 = vmatprep.subr.mxu0 0.0
        %5134 = vmatpush1.msra.mxu0 0.0
        %5135 = vmatprep.subr.mxu0 0.0
        %5136 = vmatpush1.msra.mxu0 0.0
        %5137 = vmatprep.subr.mxu0 0.0
        %5138 = vmatpush1.msra.mxu0 0.0
        %5139 = vmatprep.subr.mxu0 0.0
        %5140 = vmatpush1.msra.mxu0 0.0
        %5141 = vmatprep.subr.mxu0 0.0
        %5142 = vmatpush1.msra.mxu0 0.0
        %5143 = vmatprep.subr.mxu0 0.0
        %5144 = vmatpush1.msra.mxu0 0.0
        %5145 = vmatprep.subr.mxu0 0.0
        %5146 = vmatpush1.msra.mxu0 0.0
        %5147 = vmatprep.subr.mxu0 0.0
        %5148 = vmatpush1.msra.mxu0 0.0
        %5149 = vmatprep.subr.mxu0 0.0
        %5150 = vmatpush1.msra.mxu0 0.0
        %5151 = vmatprep.subr.mxu0 0.0
        %5152 = vmatpush1.msra.mxu0 0.0
        %5153 = vmatprep.mubr.f32.mxu0 0.0
        %5154 = vmatmul.mubr.f32.gmra.mrb[0].mxu0 %v5087
        %v5155 = vpop.f32.mrb[0].mxu0
        %v5156 = vadd.f32 %v5082, %v5155
        %v5157 = vpop.f32.mrb[0].mxu0
        %v5158 = vadd.f32 %v5084, %v5157
        %5159 = vdwg.mxu0
        %5160 = vmatprep.subr.mxu0 %v1755
        %5161 = vmatpush1.msra.mxu0 %v1754
        %5162 = vmatprep.subr.mxu0 %v1757
        %5163 = vmatpush1.msra.mxu0 %v1756
        %5164 = vmatprep.subr.mxu0 %v1759
        %5165 = vmatpush1.msra.mxu0 %v1758
        %5166 = vmatprep.subr.mxu0 %v1761
        %5167 = vmatpush1.msra.mxu0 %v1760
        %5168 = vmatprep.subr.mxu0 %v1763
        %5169 = vmatpush1.msra.mxu0 %v1762
        %5170 = vmatprep.subr.mxu0 %v1765
        %5171 = vmatpush1.msra.mxu0 %v1764
        %5172 = vmatprep.subr.mxu0 %v1767
        %5173 = vmatpush1.msra.mxu0 %v1766
        %5174 = vmatprep.subr.mxu0 %v1769
        %5175 = vmatpush1.msra.mxu0 %v1768
        %5176 = vmatprep.subr.mxu0 %v1771
        %5177 = vmatpush1.msra.mxu0 %v1770
        %5178 = vmatprep.subr.mxu0 %v1773
        %5179 = vmatpush1.msra.mxu0 %v1772
        %5180 = vmatprep.subr.mxu0 %v1775
        %5181 = vmatpush1.msra.mxu0 %v1774
        %5182 = vmatprep.subr.mxu0 %v1777
        %5183 = vmatpush1.msra.mxu0 %v1776
        %5184 = vmatprep.subr.mxu0 %v1779
        %5185 = vmatpush1.msra.mxu0 %v1778
        %5186 = vmatprep.subr.mxu0 %v1781
        %5187 = vmatpush1.msra.mxu0 %v1780
        %5188 = vmatprep.subr.mxu0 %v1783
        %5189 = vmatpush1.msra.mxu0 %v1782
        %5190 = vmatprep.subr.mxu0 %v1785
        %5191 = vmatpush1.msra.mxu0 %v1784
        %5192 = vmatprep.subr.mxu0 %v1787
        %5193 = vmatpush1.msra.mxu0 %v1786
        %5194 = vmatprep.subr.mxu0 %v1789
        %5195 = vmatpush1.msra.mxu0 %v1788
        %5196 = vmatprep.subr.mxu0 %v1791
        %5197 = vmatpush1.msra.mxu0 %v1790
        %5198 = vmatprep.subr.mxu0 %v1793
        %5199 = vmatpush1.msra.mxu0 %v1792
        %5200 = vmatprep.subr.mxu0 %v1795
        %5201 = vmatpush1.msra.mxu0 %v1794
        %5202 = vmatprep.subr.mxu0 %v1797
        %5203 = vmatpush1.msra.mxu0 %v1796
        %5204 = vmatprep.subr.mxu0 %v1799
        %5205 = vmatpush1.msra.mxu0 %v1798
        %5206 = vmatprep.subr.mxu0 %v1801
        %5207 = vmatpush1.msra.mxu0 %v1800
        %5208 = vmatprep.subr.mxu0 %v1803
        %5209 = vmatpush1.msra.mxu0 %v1802
        %5210 = vmatprep.subr.mxu0 %v1805
        %5211 = vmatpush1.msra.mxu0 %v1804
        %5212 = vmatprep.subr.mxu0 %v1807
        %5213 = vmatpush1.msra.mxu0 %v1806
        %5214 = vmatprep.subr.mxu0 %v1809
        %5215 = vmatpush1.msra.mxu0 %v1808
        %5216 = vmatprep.subr.mxu0 %v1811
        %5217 = vmatpush1.msra.mxu0 %v1810
        %5218 = vmatprep.subr.mxu0 %v1813
        %5219 = vmatpush1.msra.mxu0 %v1812
        %5220 = vmatprep.subr.mxu0 %v1815
        %5221 = vmatpush1.msra.mxu0 %v1814
        %5222 = vmatprep.subr.mxu0 %v1817
        %5223 = vmatpush1.msra.mxu0 %v1816
        %5224 = vmatprep.mubr.f32.mxu0 %v5158
        %5225 = vmatmul.mubr.f32.gmra.mrb[0].mxu0 %v5156
        %v5226 = vpop.f32.mrb[0].mxu0
        %v5227 = vadd.f32 0.0, %v5226
        %v5228 = vpop.f32.mrb[0].mxu0
        %v5229 = vadd.f32 0.0, %v5228
        %5230 = vdwg.mxu0
        %v5231 = vadd.f32 %v5006, %v5227
        %v5232 = vadd.f32 %v5007, %v5229
        %s5233 = scalar_lea.vmem %s9, 48
        %v5234 = vld [vmem:[%s5233] sm:$0xff]
        %s5235 = scalar_lea.vmem %s10, 48
        %v5236 = vld [vmem:[%s5235] sm:$0xff]
        %v5238 = vsel %vm613, %v5236, 0
        %5240 = vmatprep.subr.mxu0 %v2542
        %5241 = vmatpush1.msra.mxu0 %v2541
        %5242 = vmatprep.subr.mxu0 0.0
        %5243 = vmatpush1.msra.mxu0 0.0
        %5244 = vmatprep.subr.mxu0 0.0
        %5245 = vmatpush1.msra.mxu0 0.0
        %5246 = vmatprep.subr.mxu0 0.0
        %5247 = vmatpush1.msra.mxu0 0.0
        %5248 = vmatprep.subr.mxu0 0.0
        %5249 = vmatpush1.msra.mxu0 0.0
        %5250 = vmatprep.subr.mxu0 0.0
        %5251 = vmatpush1.msra.mxu0 0.0
        %5252 = vmatprep.subr.mxu0 0.0
        %5253 = vmatpush1.msra.mxu0 0.0
        %5254 = vmatprep.subr.mxu0 0.0
        %5255 = vmatpush1.msra.mxu0 0.0
        %5256 = vmatprep.subr.mxu0 0.0
        %5257 = vmatpush1.msra.mxu0 0.0
        %5258 = vmatprep.subr.mxu0 0.0
        %5259 = vmatpush1.msra.mxu0 0.0
        %5260 = vmatprep.subr.mxu0 0.0
        %5261 = vmatpush1.msra.mxu0 0.0
        %5262 = vmatprep.subr.mxu0 0.0
        %5263 = vmatpush1.msra.mxu0 0.0
        %5264 = vmatprep.subr.mxu0 0.0
        %5265 = vmatpush1.msra.mxu0 0.0
        %5266 = vmatprep.subr.mxu0 0.0
        %5267 = vmatpush1.msra.mxu0 0.0
        %5268 = vmatprep.subr.mxu0 0.0
        %5269 = vmatpush1.msra.mxu0 0.0
        %5270 = vmatprep.subr.mxu0 0.0
        %5271 = vmatpush1.msra.mxu0 0.0
        %5272 = vmatprep.subr.mxu0 0.0
        %5273 = vmatpush1.msra.mxu0 0.0
        %5274 = vmatprep.subr.mxu0 0.0
        %5275 = vmatpush1.msra.mxu0 0.0
        %5276 = vmatprep.subr.mxu0 0.0
        %5277 = vmatpush1.msra.mxu0 0.0
        %5278 = vmatprep.subr.mxu0 0.0
        %5279 = vmatpush1.msra.mxu0 0.0
        %5280 = vmatprep.subr.mxu0 0.0
        %5281 = vmatpush1.msra.mxu0 0.0
        %5282 = vmatprep.subr.mxu0 0.0
        %5283 = vmatpush1.msra.mxu0 0.0
        %5284 = vmatprep.subr.mxu0 0.0
        %5285 = vmatpush1.msra.mxu0 0.0
        %5286 = vmatprep.subr.mxu0 0.0
        %5287 = vmatpush1.msra.mxu0 0.0
        %5288 = vmatprep.subr.mxu0 0.0
        %5289 = vmatpush1.msra.mxu0 0.0
        %5290 = vmatprep.subr.mxu0 0.0
        %5291 = vmatpush1.msra.mxu0 0.0
        %5292 = vmatprep.subr.mxu0 0.0
        %5293 = vmatpush1.msra.mxu0 0.0
        %5294 = vmatprep.subr.mxu0 0.0
        %5295 = vmatpush1.msra.mxu0 0.0
        %5296 = vmatprep.subr.mxu0 0.0
        %5297 = vmatpush1.msra.mxu0 0.0
        %5298 = vmatprep.subr.mxu0 0.0
        %5299 = vmatpush1.msra.mxu0 0.0
        %5300 = vmatprep.subr.mxu0 0.0
        %5301 = vmatpush1.msra.mxu0 0.0
        %5302 = vmatprep.subr.mxu0 0.0
        %5303 = vmatpush1.msra.mxu0 0.0
        %5304 = vmatprep.mubr.f32.mxu0 0.0
        %5305 = vmatmul.mubr.f32.gmra.mrb[0].mxu0 %v5238
        %v5306 = vpop.f32.mrb[0].mxu0
        %v5307 = vadd.f32 0.0, %v5306
        %v5308 = vpop.f32.mrb[0].mxu0
        %v5309 = vadd.f32 0.0, %v5308
        %5310 = vdwg.mxu0
        %v5312 = vsel %vm613, %v5234, 0
        %5314 = vmatprep.subr.mxu0 %v3888
        %5315 = vmatpush1.msra.mxu0 %v3887
        %5316 = vmatprep.subr.mxu0 0.0
        %5317 = vmatpush1.msra.mxu0 0.0
        %5318 = vmatprep.subr.mxu0 0.0
        %5319 = vmatpush1.msra.mxu0 0.0
        %5320 = vmatprep.subr.mxu0 0.0
        %5321 = vmatpush1.msra.mxu0 0.0
        %5322 = vmatprep.subr.mxu0 0.0
        %5323 = vmatpush1.msra.mxu0 0.0
        %5324 = vmatprep.subr.mxu0 0.0
        %5325 = vmatpush1.msra.mxu0 0.0
        %5326 = vmatprep.subr.mxu0 0.0
        %5327 = vmatpush1.msra.mxu0 0.0
        %5328 = vmatprep.subr.mxu0 0.0
        %5329 = vmatpush1.msra.mxu0 0.0
        %5330 = vmatprep.subr.mxu0 0.0
        %5331 = vmatpush1.msra.mxu0 0.0
        %5332 = vmatprep.subr.mxu0 0.0
        %5333 = vmatpush1.msra.mxu0 0.0
        %5334 = vmatprep.subr.mxu0 0.0
        %5335 = vmatpush1.msra.mxu0 0.0
        %5336 = vmatprep.subr.mxu0 0.0
        %5337 = vmatpush1.msra.mxu0 0.0
        %5338 = vmatprep.subr.mxu0 0.0
        %5339 = vmatpush1.msra.mxu0 0.0
        %5340 = vmatprep.subr.mxu0 0.0
        %5341 = vmatpush1.msra.mxu0 0.0
        %5342 = vmatprep.subr.mxu0 0.0
        %5343 = vmatpush1.msra.mxu0 0.0
        %5344 = vmatprep.subr.mxu0 0.0
        %5345 = vmatpush1.msra.mxu0 0.0
        %5346 = vmatprep.subr.mxu0 0.0
        %5347 = vmatpush1.msra.mxu0 0.0
        %5348 = vmatprep.subr.mxu0 0.0
        %5349 = vmatpush1.msra.mxu0 0.0
        %5350 = vmatprep.subr.mxu0 0.0
        %5351 = vmatpush1.msra.mxu0 0.0
        %5352 = vmatprep.subr.mxu0 0.0
        %5353 = vmatpush1.msra.mxu0 0.0
        %5354 = vmatprep.subr.mxu0 0.0
        %5355 = vmatpush1.msra.mxu0 0.0
        %5356 = vmatprep.subr.mxu0 0.0
        %5357 = vmatpush1.msra.mxu0 0.0
        %5358 = vmatprep.subr.mxu0 0.0
        %5359 = vmatpush1.msra.mxu0 0.0
        %5360 = vmatprep.subr.mxu0 0.0
        %5361 = vmatpush1.msra.mxu0 0.0
        %5362 = vmatprep.subr.mxu0 0.0
        %5363 = vmatpush1.msra.mxu0 0.0
        %5364 = vmatprep.subr.mxu0 0.0
        %5365 = vmatpush1.msra.mxu0 0.0
        %5366 = vmatprep.subr.mxu0 0.0
        %5367 = vmatpush1.msra.mxu0 0.0
        %5368 = vmatprep.subr.mxu0 0.0
        %5369 = vmatpush1.msra.mxu0 0.0
        %5370 = vmatprep.subr.mxu0 0.0
        %5371 = vmatpush1.msra.mxu0 0.0
        %5372 = vmatprep.subr.mxu0 0.0
        %5373 = vmatpush1.msra.mxu0 0.0
        %5374 = vmatprep.subr.mxu0 0.0
        %5375 = vmatpush1.msra.mxu0 0.0
        %5376 = vmatprep.subr.mxu0 0.0
        %5377 = vmatpush1.msra.mxu0 0.0
        %5378 = vmatprep.mubr.f32.mxu0 0.0
        %5379 = vmatmul.mubr.f32.gmra.mrb[0].mxu0 %v5312
        %v5380 = vpop.f32.mrb[0].mxu0
        %v5381 = vadd.f32 %v5307, %v5380
        %v5382 = vpop.f32.mrb[0].mxu0
        %v5383 = vadd.f32 %v5309, %v5382
        %5384 = vdwg.mxu0
        %5385 = vmatprep.subr.mxu0 %v1969
        %5386 = vmatpush1.msra.mxu0 %v1968
        %5387 = vmatprep.subr.mxu0 %v1971
        %5388 = vmatpush1.msra.mxu0 %v1970
        %5389 = vmatprep.subr.mxu0 %v1973
        %5390 = vmatpush1.msra.mxu0 %v1972
        %5391 = vmatprep.subr.mxu0 %v1975
        %5392 = vmatpush1.msra.mxu0 %v1974
        %5393 = vmatprep.subr.mxu0 %v1977
        %5394 = vmatpush1.msra.mxu0 %v1976
        %5395 = vmatprep.subr.mxu0 %v1979
        %5396 = vmatpush1.msra.mxu0 %v1978
        %5397 = vmatprep.subr.mxu0 %v1981
        %5398 = vmatpush1.msra.mxu0 %v1980
        %5399 = vmatprep.subr.mxu0 %v1983
        %5400 = vmatpush1.msra.mxu0 %v1982
        %5401 = vmatprep.subr.mxu0 %v1985
        %5402 = vmatpush1.msra.mxu0 %v1984
        %5403 = vmatprep.subr.mxu0 %v1987
        %5404 = vmatpush1.msra.mxu0 %v1986
        %5405 = vmatprep.subr.mxu0 %v1989
        %5406 = vmatpush1.msra.mxu0 %v1988
        %5407 = vmatprep.subr.mxu0 %v1991
        %5408 = vmatpush1.msra.mxu0 %v1990
        %5409 = vmatprep.subr.mxu0 %v1993
        %5410 = vmatpush1.msra.mxu0 %v1992
        %5411 = vmatprep.subr.mxu0 %v1995
        %5412 = vmatpush1.msra.mxu0 %v1994
        %5413 = vmatprep.subr.mxu0 %v1997
        %5414 = vmatpush1.msra.mxu0 %v1996
        %5415 = vmatprep.subr.mxu0 %v1999
        %5416 = vmatpush1.msra.mxu0 %v1998
        %5417 = vmatprep.subr.mxu0 %v2001
        %5418 = vmatpush1.msra.mxu0 %v2000
        %5419 = vmatprep.subr.mxu0 %v2003
        %5420 = vmatpush1.msra.mxu0 %v2002
        %5421 = vmatprep.subr.mxu0 %v2005
        %5422 = vmatpush1.msra.mxu0 %v2004
        %5423 = vmatprep.subr.mxu0 %v2007
        %5424 = vmatpush1.msra.mxu0 %v2006
        %5425 = vmatprep.subr.mxu0 %v2009
        %5426 = vmatpush1.msra.mxu0 %v2008
        %5427 = vmatprep.subr.mxu0 %v2011
        %5428 = vmatpush1.msra.mxu0 %v2010
        %5429 = vmatprep.subr.mxu0 %v2013
        %5430 = vmatpush1.msra.mxu0 %v2012
        %5431 = vmatprep.subr.mxu0 %v2015
        %5432 = vmatpush1.msra.mxu0 %v2014
        %5433 = vmatprep.subr.mxu0 %v2017
        %5434 = vmatpush1.msra.mxu0 %v2016
        %5435 = vmatprep.subr.mxu0 %v2019
        %5436 = vmatpush1.msra.mxu0 %v2018
        %5437 = vmatprep.subr.mxu0 %v2021
        %5438 = vmatpush1.msra.mxu0 %v2020
        %5439 = vmatprep.subr.mxu0 %v2023
        %5440 = vmatpush1.msra.mxu0 %v2022
        %5441 = vmatprep.subr.mxu0 %v2025
        %5442 = vmatpush1.msra.mxu0 %v2024
        %5443 = vmatprep.subr.mxu0 %v2027
        %5444 = vmatpush1.msra.mxu0 %v2026
        %5445 = vmatprep.subr.mxu0 %v2029
        %5446 = vmatpush1.msra.mxu0 %v2028
        %5447 = vmatprep.subr.mxu0 %v2031
        %5448 = vmatpush1.msra.mxu0 %v2030
        %5449 = vmatprep.mubr.f32.mxu0 %v5383
        %5450 = vmatmul.mubr.f32.gmra.mrb[0].mxu0 %v5381
        %v5451 = vpop.f32.mrb[0].mxu0
        %v5452 = vadd.f32 0.0, %v5451
        %v5453 = vpop.f32.mrb[0].mxu0
        %v5454 = vadd.f32 0.0, %v5453
        %5455 = vdwg.mxu0
        %v5456 = vadd.f32 %v5231, %v5452
        %v5457 = vadd.f32 %v5232, %v5454
        %s5458 = scalar_lea.vmem %s9, 56
        %v5459 = vld [vmem:[%s5458] sm:$0xff]
        %s5460 = scalar_lea.vmem %s10, 56
        %v5461 = vld [vmem:[%s5460] sm:$0xff]
        %v5463 = vsel %vm613, %v5461, 0
        %5465 = vmatprep.subr.mxu0 %v2542
        %5466 = vmatpush1.msra.mxu0 %v2541
        %5467 = vmatprep.subr.mxu0 0.0
        %5468 = vmatpush1.msra.mxu0 0.0
        %5469 = vmatprep.subr.mxu0 0.0
        %5470 = vmatpush1.msra.mxu0 0.0
        %5471 = vmatprep.subr.mxu0 0.0
        %5472 = vmatpush1.msra.mxu0 0.0
        %5473 = vmatprep.subr.mxu0 0.0
        %5474 = vmatpush1.msra.mxu0 0.0
        %5475 = vmatprep.subr.mxu0 0.0
        %5476 = vmatpush1.msra.mxu0 0.0
        %5477 = vmatprep.subr.mxu0 0.0
        %5478 = vmatpush1.msra.mxu0 0.0
        %5479 = vmatprep.subr.mxu0 0.0
        %5480 = vmatpush1.msra.mxu0 0.0
        %5481 = vmatprep.subr.mxu0 0.0
        %5482 = vmatpush1.msra.mxu0 0.0
        %5483 = vmatprep.subr.mxu0 0.0
        %5484 = vmatpush1.msra.mxu0 0.0
        %5485 = vmatprep.subr.mxu0 0.0
        %5486 = vmatpush1.msra.mxu0 0.0
        %5487 = vmatprep.subr.mxu0 0.0
        %5488 = vmatpush1.msra.mxu0 0.0
        %5489 = vmatprep.subr.mxu0 0.0
        %5490 = vmatpush1.msra.mxu0 0.0
        %5491 = vmatprep.subr.mxu0 0.0
        %5492 = vmatpush1.msra.mxu0 0.0
        %5493 = vmatprep.subr.mxu0 0.0
        %5494 = vmatpush1.msra.mxu0 0.0
        %5495 = vmatprep.subr.mxu0 0.0
        %5496 = vmatpush1.msra.mxu0 0.0
        %5497 = vmatprep.subr.mxu0 0.0
        %5498 = vmatpush1.msra.mxu0 0.0
        %5499 = vmatprep.subr.mxu0 0.0
        %5500 = vmatpush1.msra.mxu0 0.0
        %5501 = vmatprep.subr.mxu0 0.0
        %5502 = vmatpush1.msra.mxu0 0.0
        %5503 = vmatprep.subr.mxu0 0.0
        %5504 = vmatpush1.msra.mxu0 0.0
        %5505 = vmatprep.subr.mxu0 0.0
        %5506 = vmatpush1.msra.mxu0 0.0
        %5507 = vmatprep.subr.mxu0 0.0
        %5508 = vmatpush1.msra.mxu0 0.0
        %5509 = vmatprep.subr.mxu0 0.0
        %5510 = vmatpush1.msra.mxu0 0.0
        %5511 = vmatprep.subr.mxu0 0.0
        %5512 = vmatpush1.msra.mxu0 0.0
        %5513 = vmatprep.subr.mxu0 0.0
        %5514 = vmatpush1.msra.mxu0 0.0
        %5515 = vmatprep.subr.mxu0 0.0
        %5516 = vmatpush1.msra.mxu0 0.0
        %5517 = vmatprep.subr.mxu0 0.0
        %5518 = vmatpush1.msra.mxu0 0.0
        %5519 = vmatprep.subr.mxu0 0.0
        %5520 = vmatpush1.msra.mxu0 0.0
        %5521 = vmatprep.subr.mxu0 0.0
        %5522 = vmatpush1.msra.mxu0 0.0
        %5523 = vmatprep.subr.mxu0 0.0
        %5524 = vmatpush1.msra.mxu0 0.0
        %5525 = vmatprep.subr.mxu0 0.0
        %5526 = vmatpush1.msra.mxu0 0.0
        %5527 = vmatprep.subr.mxu0 0.0
        %5528 = vmatpush1.msra.mxu0 0.0
        %5529 = vmatprep.mubr.f32.mxu0 0.0
        %5530 = vmatmul.mubr.f32.gmra.mrb[0].mxu0 %v5463
        %v5531 = vpop.f32.mrb[0].mxu0
        %v5532 = vadd.f32 0.0, %v5531
        %v5533 = vpop.f32.mrb[0].mxu0
        %v5534 = vadd.f32 0.0, %v5533
        %5535 = vdwg.mxu0
        %v5537 = vsel %vm613, %v5459, 0
        %5539 = vmatprep.subr.mxu0 %v3888
        %5540 = vmatpush1.msra.mxu0 %v3887
        %5541 = vmatprep.subr.mxu0 0.0
        %5542 = vmatpush1.msra.mxu0 0.0
        %5543 = vmatprep.subr.mxu0 0.0
        %5544 = vmatpush1.msra.mxu0 0.0
        %5545 = vmatprep.subr.mxu0 0.0
        %5546 = vmatpush1.msra.mxu0 0.0
        %5547 = vmatprep.subr.mxu0 0.0
        %5548 = vmatpush1.msra.mxu0 0.0
        %5549 = vmatprep.subr.mxu0 0.0
        %5550 = vmatpush1.msra.mxu0 0.0
        %5551 = vmatprep.subr.mxu0 0.0
        %5552 = vmatpush1.msra.mxu0 0.0
        %5553 = vmatprep.subr.mxu0 0.0
        %5554 = vmatpush1.msra.mxu0 0.0
        %5555 = vmatprep.subr.mxu0 0.0
        %5556 = vmatpush1.msra.mxu0 0.0
        %5557 = vmatprep.subr.mxu0 0.0
        %5558 = vmatpush1.msra.mxu0 0.0
        %5559 = vmatprep.subr.mxu0 0.0
        %5560 = vmatpush1.msra.mxu0 0.0
        %5561 = vmatprep.subr.mxu0 0.0
        %5562 = vmatpush1.msra.mxu0 0.0
        %5563 = vmatprep.subr.mxu0 0.0
        %5564 = vmatpush1.msra.mxu0 0.0
        %5565 = vmatprep.subr.mxu0 0.0
        %5566 = vmatpush1.msra.mxu0 0.0
        %5567 = vmatprep.subr.mxu0 0.0
        %5568 = vmatpush1.msra.mxu0 0.0
        %5569 = vmatprep.subr.mxu0 0.0
        %5570 = vmatpush1.msra.mxu0 0.0
        %5571 = vmatprep.subr.mxu0 0.0
        %5572 = vmatpush1.msra.mxu0 0.0
        %5573 = vmatprep.subr.mxu0 0.0
        %5574 = vmatpush1.msra.mxu0 0.0
        %5575 = vmatprep.subr.mxu0 0.0
        %5576 = vmatpush1.msra.mxu0 0.0
        %5577 = vmatprep.subr.mxu0 0.0
        %5578 = vmatpush1.msra.mxu0 0.0
        %5579 = vmatprep.subr.mxu0 0.0
        %5580 = vmatpush1.msra.mxu0 0.0
        %5581 = vmatprep.subr.mxu0 0.0
        %5582 = vmatpush1.msra.mxu0 0.0
        %5583 = vmatprep.subr.mxu0 0.0
        %5584 = vmatpush1.msra.mxu0 0.0
        %5585 = vmatprep.subr.mxu0 0.0
        %5586 = vmatpush1.msra.mxu0 0.0
        %5587 = vmatprep.subr.mxu0 0.0
        %5588 = vmatpush1.msra.mxu0 0.0
        %5589 = vmatprep.subr.mxu0 0.0
        %5590 = vmatpush1.msra.mxu0 0.0
        %5591 = vmatprep.subr.mxu0 0.0
        %5592 = vmatpush1.msra.mxu0 0.0
        %5593 = vmatprep.subr.mxu0 0.0
        %5594 = vmatpush1.msra.mxu0 0.0
        %5595 = vmatprep.subr.mxu0 0.0
        %5596 = vmatpush1.msra.mxu0 0.0
        %5597 = vmatprep.subr.mxu0 0.0
        %5598 = vmatpush1.msra.mxu0 0.0
        %5599 = vmatprep.subr.mxu0 0.0
        %5600 = vmatpush1.msra.mxu0 0.0
        %5601 = vmatprep.subr.mxu0 0.0
        %5602 = vmatpush1.msra.mxu0 0.0
        %5603 = vmatprep.mubr.f32.mxu0 0.0
        %5604 = vmatmul.mubr.f32.gmra.mrb[0].mxu0 %v5537
        %v5605 = vpop.f32.mrb[0].mxu0
        %v5606 = vadd.f32 %v5532, %v5605
        %v5607 = vpop.f32.mrb[0].mxu0
        %v5608 = vadd.f32 %v5534, %v5607
        %5609 = vdwg.mxu0
        %5610 = vmatprep.subr.mxu0 %v2183
        %5611 = vmatpush1.msra.mxu0 %v2182
        %5612 = vmatprep.subr.mxu0 %v2185
        %5613 = vmatpush1.msra.mxu0 %v2184
        %5614 = vmatprep.subr.mxu0 %v2187
        %5615 = vmatpush1.msra.mxu0 %v2186
        %5616 = vmatprep.subr.mxu0 %v2189
        %5617 = vmatpush1.msra.mxu0 %v2188
        %5618 = vmatprep.subr.mxu0 %v2191
        %5619 = vmatpush1.msra.mxu0 %v2190
        %5620 = vmatprep.subr.mxu0 %v2193
        %5621 = vmatpush1.msra.mxu0 %v2192
        %5622 = vmatprep.subr.mxu0 %v2195
        %5623 = vmatpush1.msra.mxu0 %v2194
        %5624 = vmatprep.subr.mxu0 %v2197
        %5625 = vmatpush1.msra.mxu0 %v2196
        %5626 = vmatprep.subr.mxu0 %v2199
        %5627 = vmatpush1.msra.mxu0 %v2198
        %5628 = vmatprep.subr.mxu0 %v2201
        %5629 = vmatpush1.msra.mxu0 %v2200
        %5630 = vmatprep.subr.mxu0 %v2203
        %5631 = vmatpush1.msra.mxu0 %v2202
        %5632 = vmatprep.subr.mxu0 %v2205
        %5633 = vmatpush1.msra.mxu0 %v2204
        %5634 = vmatprep.subr.mxu0 %v2207
        %5635 = vmatpush1.msra.mxu0 %v2206
        %5636 = vmatprep.subr.mxu0 %v2209
        %5637 = vmatpush1.msra.mxu0 %v2208
        %5638 = vmatprep.subr.mxu0 %v2211
        %5639 = vmatpush1.msra.mxu0 %v2210
        %5640 = vmatprep.subr.mxu0 %v2213
        %5641 = vmatpush1.msra.mxu0 %v2212
        %5642 = vmatprep.subr.mxu0 %v2215
        %5643 = vmatpush1.msra.mxu0 %v2214
        %5644 = vmatprep.subr.mxu0 %v2217
        %5645 = vmatpush1.msra.mxu0 %v2216
        %5646 = vmatprep.subr.mxu0 %v2219
        %5647 = vmatpush1.msra.mxu0 %v2218
        %5648 = vmatprep.subr.mxu0 %v2221
        %5649 = vmatpush1.msra.mxu0 %v2220
        %5650 = vmatprep.subr.mxu0 %v2223
        %5651 = vmatpush1.msra.mxu0 %v2222
        %5652 = vmatprep.subr.mxu0 %v2225
        %5653 = vmatpush1.msra.mxu0 %v2224
        %5654 = vmatprep.subr.mxu0 %v2227
        %5655 = vmatpush1.msra.mxu0 %v2226
        %5656 = vmatprep.subr.mxu0 %v2229
        %5657 = vmatpush1.msra.mxu0 %v2228
        %5658 = vmatprep.subr.mxu0 %v2231
        %5659 = vmatpush1.msra.mxu0 %v2230
        %5660 = vmatprep.subr.mxu0 %v2233
        %5661 = vmatpush1.msra.mxu0 %v2232
        %5662 = vmatprep.subr.mxu0 %v2235
        %5663 = vmatpush1.msra.mxu0 %v2234
        %5664 = vmatprep.subr.mxu0 %v2237
        %5665 = vmatpush1.msra.mxu0 %v2236
        %5666 = vmatprep.subr.mxu0 %v2239
        %5667 = vmatpush1.msra.mxu0 %v2238
        %5668 = vmatprep.subr.mxu0 %v2241
        %5669 = vmatpush1.msra.mxu0 %v2240
        %5670 = vmatprep.subr.mxu0 %v2243
        %5671 = vmatpush1.msra.mxu0 %v2242
        %5672 = vmatprep.subr.mxu0 %v2245
        %5673 = vmatpush1.msra.mxu0 %v2244
        %5674 = vmatprep.mubr.f32.mxu0 %v5608
        %5675 = vmatmul.mubr.f32.gmra.mrb[0].mxu0 %v5606
        %v5676 = vpop.f32.mrb[0].mxu0
        %v5677 = vadd.f32 0.0, %v5676
        %v5678 = vpop.f32.mrb[0].mxu0
        %v5679 = vadd.f32 0.0, %v5678
        %5680 = vdwg.mxu0
        %v5681 = vadd.f32 %v5456, %v5677
        %v5682 = vadd.f32 %v5457, %v5679
        %s5683 = scalar_lea.vmem %s9, 64
        %v5684 = vld [vmem:[%s5683] sm:$0xff]
        %s5685 = scalar_lea.vmem %s10, 64
        %v5686 = vld [vmem:[%s5685] sm:$0xff]
        %v5688 = vsel %vm613, %v5686, 0
        %5690 = vmatprep.subr.mxu0 %v2542
        %5691 = vmatpush1.msra.mxu0 %v2541
        %5692 = vmatprep.subr.mxu0 0.0
        %5693 = vmatpush1.msra.mxu0 0.0
        %5694 = vmatprep.subr.mxu0 0.0
        %5695 = vmatpush1.msra.mxu0 0.0
        %5696 = vmatprep.subr.mxu0 0.0
        %5697 = vmatpush1.msra.mxu0 0.0
        %5698 = vmatprep.subr.mxu0 0.0
        %5699 = vmatpush1.msra.mxu0 0.0
        %5700 = vmatprep.subr.mxu0 0.0
        %5701 = vmatpush1.msra.mxu0 0.0
        %5702 = vmatprep.subr.mxu0 0.0
        %5703 = vmatpush1.msra.mxu0 0.0
        %5704 = vmatprep.subr.mxu0 0.0
        %5705 = vmatpush1.msra.mxu0 0.0
        %5706 = vmatprep.subr.mxu0 0.0
        %5707 = vmatpush1.msra.mxu0 0.0
        %5708 = vmatprep.subr.mxu0 0.0
        %5709 = vmatpush1.msra.mxu0 0.0
        %5710 = vmatprep.subr.mxu0 0.0
        %5711 = vmatpush1.msra.mxu0 0.0
        %5712 = vmatprep.subr.mxu0 0.0
        %5713 = vmatpush1.msra.mxu0 0.0
        %5714 = vmatprep.subr.mxu0 0.0
        %5715 = vmatpush1.msra.mxu0 0.0
        %5716 = vmatprep.subr.mxu0 0.0
        %5717 = vmatpush1.msra.mxu0 0.0
        %5718 = vmatprep.subr.mxu0 0.0
        %5719 = vmatpush1.msra.mxu0 0.0
        %5720 = vmatprep.subr.mxu0 0.0
        %5721 = vmatpush1.msra.mxu0 0.0
        %5722 = vmatprep.subr.mxu0 0.0
        %5723 = vmatpush1.msra.mxu0 0.0
        %5724 = vmatprep.subr.mxu0 0.0
        %5725 = vmatpush1.msra.mxu0 0.0
        %5726 = vmatprep.subr.mxu0 0.0
        %5727 = vmatpush1.msra.mxu0 0.0
        %5728 = vmatprep.subr.mxu0 0.0
        %5729 = vmatpush1.msra.mxu0 0.0
        %5730 = vmatprep.subr.mxu0 0.0
        %5731 = vmatpush1.msra.mxu0 0.0
        %5732 = vmatprep.subr.mxu0 0.0
        %5733 = vmatpush1.msra.mxu0 0.0
        %5734 = vmatprep.subr.mxu0 0.0
        %5735 = vmatpush1.msra.mxu0 0.0
        %5736 = vmatprep.subr.mxu0 0.0
        %5737 = vmatpush1.msra.mxu0 0.0
        %5738 = vmatprep.subr.mxu0 0.0
        %5739 = vmatpush1.msra.mxu0 0.0
        %5740 = vmatprep.subr.mxu0 0.0
        %5741 = vmatpush1.msra.mxu0 0.0
        %5742 = vmatprep.subr.mxu0 0.0
        %5743 = vmatpush1.msra.mxu0 0.0
        %5744 = vmatprep.subr.mxu0 0.0
        %5745 = vmatpush1.msra.mxu0 0.0
        %5746 = vmatprep.subr.mxu0 0.0
        %5747 = vmatpush1.msra.mxu0 0.0
        %5748 = vmatprep.subr.mxu0 0.0
        %5749 = vmatpush1.msra.mxu0 0.0
        %5750 = vmatprep.subr.mxu0 0.0
        %5751 = vmatpush1.msra.mxu0 0.0
        %5752 = vmatprep.subr.mxu0 0.0
        %5753 = vmatpush1.msra.mxu0 0.0
        %5754 = vmatprep.mubr.f32.mxu0 0.0
        %5755 = vmatmul.mubr.f32.gmra.mrb[0].mxu0 %v5688
        %v5756 = vpop.f32.mrb[0].mxu0
        %v5757 = vadd.f32 0.0, %v5756
        %v5758 = vpop.f32.mrb[0].mxu0
        %v5759 = vadd.f32 0.0, %v5758
        %5760 = vdwg.mxu0
        %v5762 = vsel %vm613, %v5684, 0
        %5764 = vmatprep.subr.mxu0 %v3888
        %5765 = vmatpush1.msra.mxu0 %v3887
        %5766 = vmatprep.subr.mxu0 0.0
        %5767 = vmatpush1.msra.mxu0 0.0
        %5768 = vmatprep.subr.mxu0 0.0
        %5769 = vmatpush1.msra.mxu0 0.0
        %5770 = vmatprep.subr.mxu0 0.0
        %5771 = vmatpush1.msra.mxu0 0.0
        %5772 = vmatprep.subr.mxu0 0.0
        %5773 = vmatpush1.msra.mxu0 0.0
        %5774 = vmatprep.subr.mxu0 0.0
        %5775 = vmatpush1.msra.mxu0 0.0
        %5776 = vmatprep.subr.mxu0 0.0
        %5777 = vmatpush1.msra.mxu0 0.0
        %5778 = vmatprep.subr.mxu0 0.0
        %5779 = vmatpush1.msra.mxu0 0.0
        %5780 = vmatprep.subr.mxu0 0.0
        %5781 = vmatpush1.msra.mxu0 0.0
        %5782 = vmatprep.subr.mxu0 0.0
        %5783 = vmatpush1.msra.mxu0 0.0
        %5784 = vmatprep.subr.mxu0 0.0
        %5785 = vmatpush1.msra.mxu0 0.0
        %5786 = vmatprep.subr.mxu0 0.0
        %5787 = vmatpush1.msra.mxu0 0.0
        %5788 = vmatprep.subr.mxu0 0.0
        %5789 = vmatpush1.msra.mxu0 0.0
        %5790 = vmatprep.subr.mxu0 0.0
        %5791 = vmatpush1.msra.mxu0 0.0
        %5792 = vmatprep.subr.mxu0 0.0
        %5793 = vmatpush1.msra.mxu0 0.0
        %5794 = vmatprep.subr.mxu0 0.0
        %5795 = vmatpush1.msra.mxu0 0.0
        %5796 = vmatprep.subr.mxu0 0.0
        %5797 = vmatpush1.msra.mxu0 0.0
        %5798 = vmatprep.subr.mxu0 0.0
        %5799 = vmatpush1.msra.mxu0 0.0
        %5800 = vmatprep.subr.mxu0 0.0
        %5801 = vmatpush1.msra.mxu0 0.0
        %5802 = vmatprep.subr.mxu0 0.0
        %5803 = vmatpush1.msra.mxu0 0.0
        %5804 = vmatprep.subr.mxu0 0.0
        %5805 = vmatpush1.msra.mxu0 0.0
        %5806 = vmatprep.subr.mxu0 0.0
        %5807 = vmatpush1.msra.mxu0 0.0
        %5808 = vmatprep.subr.mxu0 0.0
        %5809 = vmatpush1.msra.mxu0 0.0
        %5810 = vmatprep.subr.mxu0 0.0
        %5811 = vmatpush1.msra.mxu0 0.0
        %5812 = vmatprep.subr.mxu0 0.0
        %5813 = vmatpush1.msra.mxu0 0.0
        %5814 = vmatprep.subr.mxu0 0.0
        %5815 = vmatpush1.msra.mxu0 0.0
        %5816 = vmatprep.subr.mxu0 0.0
        %5817 = vmatpush1.msra.mxu0 0.0
        %5818 = vmatprep.subr.mxu0 0.0
        %5819 = vmatpush1.msra.mxu0 0.0
        %5820 = vmatprep.subr.mxu0 0.0
        %5821 = vmatpush1.msra.mxu0 0.0
        %5822 = vmatprep.subr.mxu0 0.0
        %5823 = vmatpush1.msra.mxu0 0.0
        %5824 = vmatprep.subr.mxu0 0.0
        %5825 = vmatpush1.msra.mxu0 0.0
        %5826 = vmatprep.subr.mxu0 0.0
        %5827 = vmatpush1.msra.mxu0 0.0
        %5828 = vmatprep.mubr.f32.mxu0 0.0
        %5829 = vmatmul.mubr.f32.gmra.mrb[0].mxu0 %v5762
        %v5830 = vpop.f32.mrb[0].mxu0
        %v5831 = vadd.f32 %v5757, %v5830
        %v5832 = vpop.f32.mrb[0].mxu0
        %v5833 = vadd.f32 %v5759, %v5832
        %5834 = vdwg.mxu0
        %5835 = vmatprep.subr.mxu0 %v2397
        %5836 = vmatpush1.msra.mxu0 %v2396
        %5837 = vmatprep.subr.mxu0 %v2399
        %5838 = vmatpush1.msra.mxu0 %v2398
        %5839 = vmatprep.subr.mxu0 %v2401
        %5840 = vmatpush1.msra.mxu0 %v2400
        %5841 = vmatprep.subr.mxu0 %v2403
        %5842 = vmatpush1.msra.mxu0 %v2402
        %5843 = vmatprep.subr.mxu0 %v2405
        %5844 = vmatpush1.msra.mxu0 %v2404
        %5845 = vmatprep.subr.mxu0 %v2407
        %5846 = vmatpush1.msra.mxu0 %v2406
        %5847 = vmatprep.subr.mxu0 %v2409
        %5848 = vmatpush1.msra.mxu0 %v2408
        %5849 = vmatprep.subr.mxu0 %v2411
        %5850 = vmatpush1.msra.mxu0 %v2410
        %5851 = vmatprep.subr.mxu0 %v2413
        %5852 = vmatpush1.msra.mxu0 %v2412
        %5853 = vmatprep.subr.mxu0 %v2415
        %5854 = vmatpush1.msra.mxu0 %v2414
        %5855 = vmatprep.subr.mxu0 %v2417
        %5856 = vmatpush1.msra.mxu0 %v2416
        %5857 = vmatprep.subr.mxu0 %v2419
        %5858 = vmatpush1.msra.mxu0 %v2418
        %5859 = vmatprep.subr.mxu0 %v2421
        %5860 = vmatpush1.msra.mxu0 %v2420
        %5861 = vmatprep.subr.mxu0 %v2423
        %5862 = vmatpush1.msra.mxu0 %v2422
        %5863 = vmatprep.subr.mxu0 %v2425
        %5864 = vmatpush1.msra.mxu0 %v2424
        %5865 = vmatprep.subr.mxu0 %v2427
        %5866 = vmatpush1.msra.mxu0 %v2426
        %5867 = vmatprep.subr.mxu0 %v2429
        %5868 = vmatpush1.msra.mxu0 %v2428
        %5869 = vmatprep.subr.mxu0 %v2431
        %5870 = vmatpush1.msra.mxu0 %v2430
        %5871 = vmatprep.subr.mxu0 %v2433
        %5872 = vmatpush1.msra.mxu0 %v2432
        %5873 = vmatprep.subr.mxu0 %v2435
        %5874 = vmatpush1.msra.mxu0 %v2434
        %5875 = vmatprep.subr.mxu0 %v2437
        %5876 = vmatpush1.msra.mxu0 %v2436
        %5877 = vmatprep.subr.mxu0 %v2439
        %5878 = vmatpush1.msra.mxu0 %v2438
        %5879 = vmatprep.subr.mxu0 %v2441
        %5880 = vmatpush1.msra.mxu0 %v2440
        %5881 = vmatprep.subr.mxu0 %v2443
        %5882 = vmatpush1.msra.mxu0 %v2442
        %5883 = vmatprep.subr.mxu0 %v2445
        %5884 = vmatpush1.msra.mxu0 %v2444
        %5885 = vmatprep.subr.mxu0 %v2447
        %5886 = vmatpush1.msra.mxu0 %v2446
        %5887 = vmatprep.subr.mxu0 %v2449
        %5888 = vmatpush1.msra.mxu0 %v2448
        %5889 = vmatprep.subr.mxu0 %v2451
        %5890 = vmatpush1.msra.mxu0 %v2450
        %5891 = vmatprep.subr.mxu0 %v2453
        %5892 = vmatpush1.msra.mxu0 %v2452
        %5893 = vmatprep.subr.mxu0 %v2455
        %5894 = vmatpush1.msra.mxu0 %v2454
        %5895 = vmatprep.subr.mxu0 %v2457
        %5896 = vmatpush1.msra.mxu0 %v2456
        %5897 = vmatprep.subr.mxu0 %v2459
        %5898 = vmatpush1.msra.mxu0 %v2458
        %5899 = vmatprep.mubr.f32.mxu0 %v5833
        %5900 = vmatmul.mubr.f32.gmra.mrb[0].mxu0 %v5831
        %v5901 = vpop.f32.mrb[0].mxu0
        %v5902 = vadd.f32 0.0, %v5901
        %v5903 = vpop.f32.mrb[0].mxu0
        %v5904 = vadd.f32 0.0, %v5903
        %5905 = vdwg.mxu0
        %v5906 = vadd.f32 %v5681, %v5902
        %v5907 = vadd.f32 %v5682, %v5904
        %v5908 = vld [vmem:[%s11] sm:$0xff]
        %5910 = vset.pattern.permute.xlu0 0
        %5911 = vperm.xlu0 %5910, %v5908
        %v5912 = vpop.permute.xlu0 %5911
        %v5914 = vadd.f32 %v5906, %v5912
        %v5915 = vadd.f32 %v5907, %v5912
        %v5916 = vmax.f32 %v5914, 0.0
        %v5917 = vmax.f32 %v5915, 0.0
        %v5918 = vld [vmem:[%s12] sm:$0x1]
        %v5920 = vsel %vm613, %v5918, 0
        %5922 = vmatprep.subr.mxu0 %v5917
        %5923 = vmatpush1.msra.mxu0 %v5916
        %5924 = vmatprep.subr.mxu0 0.0
        %5925 = vmatpush1.msra.mxu0 0.0
        %5926 = vmatprep.subr.mxu0 0.0
        %5927 = vmatpush1.msra.mxu0 0.0
        %5928 = vmatprep.subr.mxu0 0.0
        %5929 = vmatpush1.msra.mxu0 0.0
        %5930 = vmatprep.subr.mxu0 0.0
        %5931 = vmatpush1.msra.mxu0 0.0
        %5932 = vmatprep.subr.mxu0 0.0
        %5933 = vmatpush1.msra.mxu0 0.0
        %5934 = vmatprep.subr.mxu0 0.0
        %5935 = vmatpush1.msra.mxu0 0.0
        %5936 = vmatprep.subr.mxu0 0.0
        %5937 = vmatpush1.msra.mxu0 0.0
        %5938 = vmatprep.subr.mxu0 0.0
        %5939 = vmatpush1.msra.mxu0 0.0
        %5940 = vmatprep.subr.mxu0 0.0
        %5941 = vmatpush1.msra.mxu0 0.0
        %5942 = vmatprep.subr.mxu0 0.0
        %5943 = vmatpush1.msra.mxu0 0.0
        %5944 = vmatprep.subr.mxu0 0.0
        %5945 = vmatpush1.msra.mxu0 0.0
        %5946 = vmatprep.subr.mxu0 0.0
        %5947 = vmatpush1.msra.mxu0 0.0
        %5948 = vmatprep.subr.mxu0 0.0
        %5949 = vmatpush1.msra.mxu0 0.0
        %5950 = vmatprep.subr.mxu0 0.0
        %5951 = vmatpush1.msra.mxu0 0.0
        %5952 = vmatprep.subr.mxu0 0.0
        %5953 = vmatpush1.msra.mxu0 0.0
        %5954 = vmatprep.subr.mxu0 0.0
        %5955 = vmatpush1.msra.mxu0 0.0
        %5956 = vmatprep.subr.mxu0 0.0
        %5957 = vmatpush1.msra.mxu0 0.0
        %5958 = vmatprep.subr.mxu0 0.0
        %5959 = vmatpush1.msra.mxu0 0.0
        %5960 = vmatprep.subr.mxu0 0.0
        %5961 = vmatpush1.msra.mxu0 0.0
        %5962 = vmatprep.subr.mxu0 0.0
        %5963 = vmatpush1.msra.mxu0 0.0
        %5964 = vmatprep.subr.mxu0 0.0
        %5965 = vmatpush1.msra.mxu0 0.0
        %5966 = vmatprep.subr.mxu0 0.0
        %5967 = vmatpush1.msra.mxu0 0.0
        %5968 = vmatprep.subr.mxu0 0.0
        %5969 = vmatpush1.msra.mxu0 0.0
        %5970 = vmatprep.subr.mxu0 0.0
        %5971 = vmatpush1.msra.mxu0 0.0
        %5972 = vmatprep.subr.mxu0 0.0
        %5973 = vmatpush1.msra.mxu0 0.0
        %5974 = vmatprep.subr.mxu0 0.0
        %5975 = vmatpush1.msra.mxu0 0.0
        %5976 = vmatprep.subr.mxu0 0.0
        %5977 = vmatpush1.msra.mxu0 0.0
        %5978 = vmatprep.subr.mxu0 0.0
        %5979 = vmatpush1.msra.mxu0 0.0
        %5980 = vmatprep.subr.mxu0 0.0
        %5981 = vmatpush1.msra.mxu0 0.0
        %5982 = vmatprep.subr.mxu0 0.0
        %5983 = vmatpush1.msra.mxu0 0.0
        %5984 = vmatprep.subr.mxu0 0.0
        %5985 = vmatpush1.msra.mxu0 0.0
        %5986 = vmatprep.mubr.f32.mxu0 0.0
        %5987 = vmatmul.mubr.f32.gmra.mrb[0].mxu0 %v5920
        %v5988 = vpop.f32.mrb[0].mxu0
        %v5989 = vadd.f32 0.0, %v5988
        %v5990 = vpop.f32.mrb[0].mxu0
        %v5991 = vadd.f32 0.0, %v5990
        %5992 = vdwg.mxu0
        %s5993 = scalar_lea.vmem %s12, 1
        %v5994 = vld [vmem:[%s5993] sm:$0x1]
        %v5996 = vsel %vm613, %v5994, 0
        %5998 = vmatprep.subr.mxu0 %v5917
        %5999 = vmatpush1.msra.mxu0 %v5916
        %6000 = vmatprep.subr.mxu0 0.0
        %6001 = vmatpush1.msra.mxu0 0.0
        %6002 = vmatprep.subr.mxu0 0.0
        %6003 = vmatpush1.msra.mxu0 0.0
        %6004 = vmatprep.subr.mxu0 0.0
        %6005 = vmatpush1.msra.mxu0 0.0
        %6006 = vmatprep.subr.mxu0 0.0
        %6007 = vmatpush1.msra.mxu0 0.0
        %6008 = vmatprep.subr.mxu0 0.0
        %6009 = vmatpush1.msra.mxu0 0.0
        %6010 = vmatprep.subr.mxu0 0.0
        %6011 = vmatpush1.msra.mxu0 0.0
        %6012 = vmatprep.subr.mxu0 0.0
        %6013 = vmatpush1.msra.mxu0 0.0
        %6014 = vmatprep.subr.mxu0 0.0
        %6015 = vmatpush1.msra.mxu0 0.0
        %6016 = vmatprep.subr.mxu0 0.0
        %6017 = vmatpush1.msra.mxu0 0.0
        %6018 = vmatprep.subr.mxu0 0.0
        %6019 = vmatpush1.msra.mxu0 0.0
        %6020 = vmatprep.subr.mxu0 0.0
        %6021 = vmatpush1.msra.mxu0 0.0
        %6022 = vmatprep.subr.mxu0 0.0
        %6023 = vmatpush1.msra.mxu0 0.0
        %6024 = vmatprep.subr.mxu0 0.0
        %6025 = vmatpush1.msra.mxu0 0.0
        %6026 = vmatprep.subr.mxu0 0.0
        %6027 = vmatpush1.msra.mxu0 0.0
        %6028 = vmatprep.subr.mxu0 0.0
        %6029 = vmatpush1.msra.mxu0 0.0
        %6030 = vmatprep.subr.mxu0 0.0
        %6031 = vmatpush1.msra.mxu0 0.0
        %6032 = vmatprep.subr.mxu0 0.0
        %6033 = vmatpush1.msra.mxu0 0.0
        %6034 = vmatprep.subr.mxu0 0.0
        %6035 = vmatpush1.msra.mxu0 0.0
        %6036 = vmatprep.subr.mxu0 0.0
        %6037 = vmatpush1.msra.mxu0 0.0
        %6038 = vmatprep.subr.mxu0 0.0
        %6039 = vmatpush1.msra.mxu0 0.0
        %6040 = vmatprep.subr.mxu0 0.0
        %6041 = vmatpush1.msra.mxu0 0.0
        %6042 = vmatprep.subr.mxu0 0.0
        %6043 = vmatpush1.msra.mxu0 0.0
        %6044 = vmatprep.subr.mxu0 0.0
        %6045 = vmatpush1.msra.mxu0 0.0
        %6046 = vmatprep.subr.mxu0 0.0
        %6047 = vmatpush1.msra.mxu0 0.0
        %6048 = vmatprep.subr.mxu0 0.0
        %6049 = vmatpush1.msra.mxu0 0.0
        %6050 = vmatprep.subr.mxu0 0.0
        %6051 = vmatpush1.msra.mxu0 0.0
        %6052 = vmatprep.subr.mxu0 0.0
        %6053 = vmatpush1.msra.mxu0 0.0
        %6054 = vmatprep.subr.mxu0 0.0
        %6055 = vmatpush1.msra.mxu0 0.0
        %6056 = vmatprep.subr.mxu0 0.0
        %6057 = vmatpush1.msra.mxu0 0.0
        %6058 = vmatprep.subr.mxu0 0.0
        %6059 = vmatpush1.msra.mxu0 0.0
        %6060 = vmatprep.subr.mxu0 0.0
        %6061 = vmatpush1.msra.mxu0 0.0
        %6062 = vmatprep.mubr.f32.mxu0 0.0
        %6063 = vmatmul.mubr.f32.gmra.mrb[0].mxu0 %v5996
        %v6064 = vpop.f32.mrb[0].mxu0
        %v6065 = vadd.f32 0.0, %v6064
        %v6066 = vpop.f32.mrb[0].mxu0
        %v6067 = vadd.f32 0.0, %v6066
        %6068 = vdwg.mxu0
        %6069 = vmatprep.subr.mxu0 %v830
        %6070 = vmatpush1.msra.mxu0 %v829
        %6071 = vmatprep.subr.mxu0 %v832
        %6072 = vmatpush1.msra.mxu0 %v831
        %6073 = vmatprep.subr.mxu0 %v834
        %6074 = vmatpush1.msra.mxu0 %v833
        %6075 = vmatprep.subr.mxu0 %v836
        %6076 = vmatpush1.msra.mxu0 %v835
        %6077 = vmatprep.subr.mxu0 %v838
        %6078 = vmatpush1.msra.mxu0 %v837
        %6079 = vmatprep.subr.mxu0 %v840
        %6080 = vmatpush1.msra.mxu0 %v839
        %6081 = vmatprep.subr.mxu0 %v842
        %6082 = vmatpush1.msra.mxu0 %v841
        %6083 = vmatprep.subr.mxu0 %v844
        %6084 = vmatpush1.msra.mxu0 %v843
        %6085 = vmatprep.subr.mxu0 %v846
        %6086 = vmatpush1.msra.mxu0 %v845
        %6087 = vmatprep.subr.mxu0 %v848
        %6088 = vmatpush1.msra.mxu0 %v847
        %6089 = vmatprep.subr.mxu0 %v850
        %6090 = vmatpush1.msra.mxu0 %v849
        %6091 = vmatprep.subr.mxu0 %v852
        %6092 = vmatpush1.msra.mxu0 %v851
        %6093 = vmatprep.subr.mxu0 %v854
        %6094 = vmatpush1.msra.mxu0 %v853
        %6095 = vmatprep.subr.mxu0 %v856
        %6096 = vmatpush1.msra.mxu0 %v855
        %6097 = vmatprep.subr.mxu0 %v858
        %6098 = vmatpush1.msra.mxu0 %v857
        %6099 = vmatprep.subr.mxu0 %v860
        %6100 = vmatpush1.msra.mxu0 %v859
        %6101 = vmatprep.subr.mxu0 %v862
        %6102 = vmatpush1.msra.mxu0 %v861
        %6103 = vmatprep.subr.mxu0 %v864
        %6104 = vmatpush1.msra.mxu0 %v863
        %6105 = vmatprep.subr.mxu0 %v866
        %6106 = vmatpush1.msra.mxu0 %v865
        %6107 = vmatprep.subr.mxu0 %v868
        %6108 = vmatpush1.msra.mxu0 %v867
        %6109 = vmatprep.subr.mxu0 %v870
        %6110 = vmatpush1.msra.mxu0 %v869
        %6111 = vmatprep.subr.mxu0 %v872
        %6112 = vmatpush1.msra.mxu0 %v871
        %6113 = vmatprep.subr.mxu0 %v874
        %6114 = vmatpush1.msra.mxu0 %v873
        %6115 = vmatprep.subr.mxu0 %v876
        %6116 = vmatpush1.msra.mxu0 %v875
        %6117 = vmatprep.subr.mxu0 %v878
        %6118 = vmatpush1.msra.mxu0 %v877
        %6119 = vmatprep.subr.mxu0 %v880
        %6120 = vmatpush1.msra.mxu0 %v879
        %6121 = vmatprep.subr.mxu0 %v882
        %6122 = vmatpush1.msra.mxu0 %v881
        %6123 = vmatprep.subr.mxu0 %v884
        %6124 = vmatpush1.msra.mxu0 %v883
        %6125 = vmatprep.subr.mxu0 %v886
        %6126 = vmatpush1.msra.mxu0 %v885
        %6127 = vmatprep.subr.mxu0 %v888
        %6128 = vmatpush1.msra.mxu0 %v887
        %6129 = vmatprep.subr.mxu0 %v890
        %6130 = vmatpush1.msra.mxu0 %v889
        %6131 = vmatprep.subr.mxu0 %v892
        %6132 = vmatpush1.msra.mxu0 %v891
        %6133 = vmatprep.mubr.f32.mxu0 %v6067
        %6134 = vmatmul.mubr.f32.gmra.mrb[0].mxu0 %v6065
        %v6135 = vpop.f32.mrb[0].mxu0
        %v6136 = vadd.f32 0.0, %v6135
        %v6137 = vpop.f32.mrb[0].mxu0
        %v6138 = vadd.f32 0.0, %v6137
        %6139 = vdwg.mxu0
        %6140 = vmatprep.subr.mxu0 %v689
        %6141 = vmatpush1.msra.mxu0 %v688
        %6142 = vmatprep.subr.mxu0 %v691
        %6143 = vmatpush1.msra.mxu0 %v690
        %6144 = vmatprep.subr.mxu0 %v693
        %6145 = vmatpush1.msra.mxu0 %v692
        %6146 = vmatprep.subr.mxu0 %v695
        %6147 = vmatpush1.msra.mxu0 %v694
        %6148 = vmatprep.subr.mxu0 %v697
        %6149 = vmatpush1.msra.mxu0 %v696
        %6150 = vmatprep.subr.mxu0 %v699
        %6151 = vmatpush1.msra.mxu0 %v698
        %6152 = vmatprep.subr.mxu0 %v701
        %6153 = vmatpush1.msra.mxu0 %v700
        %6154 = vmatprep.subr.mxu0 %v703
        %6155 = vmatpush1.msra.mxu0 %v702
        %6156 = vmatprep.subr.mxu0 %v705
        %6157 = vmatpush1.msra.mxu0 %v704
        %6158 = vmatprep.subr.mxu0 %v707
        %6159 = vmatpush1.msra.mxu0 %v706
        %6160 = vmatprep.subr.mxu0 %v709
        %6161 = vmatpush1.msra.mxu0 %v708
        %6162 = vmatprep.subr.mxu0 %v711
        %6163 = vmatpush1.msra.mxu0 %v710
        %6164 = vmatprep.subr.mxu0 %v713
        %6165 = vmatpush1.msra.mxu0 %v712
        %6166 = vmatprep.subr.mxu0 %v715
        %6167 = vmatpush1.msra.mxu0 %v714
        %6168 = vmatprep.subr.mxu0 %v717
        %6169 = vmatpush1.msra.mxu0 %v716
        %6170 = vmatprep.subr.mxu0 %v719
        %6171 = vmatpush1.msra.mxu0 %v718
        %6172 = vmatprep.subr.mxu0 %v721
        %6173 = vmatpush1.msra.mxu0 %v720
        %6174 = vmatprep.subr.mxu0 %v723
        %6175 = vmatpush1.msra.mxu0 %v722
        %6176 = vmatprep.subr.mxu0 %v725
        %6177 = vmatpush1.msra.mxu0 %v724
        %6178 = vmatprep.subr.mxu0 %v727
        %6179 = vmatpush1.msra.mxu0 %v726
        %6180 = vmatprep.subr.mxu0 %v729
        %6181 = vmatpush1.msra.mxu0 %v728
        %6182 = vmatprep.subr.mxu0 %v731
        %6183 = vmatpush1.msra.mxu0 %v730
        %6184 = vmatprep.subr.mxu0 %v733
        %6185 = vmatpush1.msra.mxu0 %v732
        %6186 = vmatprep.subr.mxu0 %v735
        %6187 = vmatpush1.msra.mxu0 %v734
        %6188 = vmatprep.subr.mxu0 %v737
        %6189 = vmatpush1.msra.mxu0 %v736
        %6190 = vmatprep.subr.mxu0 %v739
        %6191 = vmatpush1.msra.mxu0 %v738
        %6192 = vmatprep.subr.mxu0 %v741
        %6193 = vmatpush1.msra.mxu0 %v740
        %6194 = vmatprep.subr.mxu0 %v743
        %6195 = vmatpush1.msra.mxu0 %v742
        %6196 = vmatprep.subr.mxu0 %v745
        %6197 = vmatpush1.msra.mxu0 %v744
        %6198 = vmatprep.subr.mxu0 %v747
        %6199 = vmatpush1.msra.mxu0 %v746
        %6200 = vmatprep.subr.mxu0 %v749
        %6201 = vmatpush1.msra.mxu0 %v748
        %6202 = vmatprep.subr.mxu0 %v751
        %6203 = vmatpush1.msra.mxu0 %v750
        %6204 = vmatprep.mubr.f32.mxu0 %v5991
        %6205 = vmatmul.mubr.f32.gmra.mrb[0].mxu0 %v5989
        %v6206 = vpop.f32.mrb[0].mxu0
        %v6207 = vadd.f32 %v6136, %v6206
        %v6208 = vpop.f32.mrb[0].mxu0
        %v6209 = vadd.f32 %v6138, %v6208
        %6210 = vdwg.mxu0
        %s6211 = scalar_lea.vmem %s12, 2
        %v6212 = vld [vmem:[%s6211] sm:$0x1]
        %v6214 = vsel %vm613, %v6212, 0
        %6216 = vmatprep.subr.mxu0 %v5917
        %6217 = vmatpush1.msra.mxu0 %v5916
        %6218 = vmatprep.subr.mxu0 0.0
        %6219 = vmatpush1.msra.mxu0 0.0
        %6220 = vmatprep.subr.mxu0 0.0
        %6221 = vmatpush1.msra.mxu0 0.0
        %6222 = vmatprep.subr.mxu0 0.0
        %6223 = vmatpush1.msra.mxu0 0.0
        %6224 = vmatprep.subr.mxu0 0.0
        %6225 = vmatpush1.msra.mxu0 0.0
        %6226 = vmatprep.subr.mxu0 0.0
        %6227 = vmatpush1.msra.mxu0 0.0
        %6228 = vmatprep.subr.mxu0 0.0
        %6229 = vmatpush1.msra.mxu0 0.0
        %6230 = vmatprep.subr.mxu0 0.0
        %6231 = vmatpush1.msra.mxu0 0.0
        %6232 = vmatprep.subr.mxu0 0.0
        %6233 = vmatpush1.msra.mxu0 0.0
        %6234 = vmatprep.subr.mxu0 0.0
        %6235 = vmatpush1.msra.mxu0 0.0
        %6236 = vmatprep.subr.mxu0 0.0
        %6237 = vmatpush1.msra.mxu0 0.0
        %6238 = vmatprep.subr.mxu0 0.0
        %6239 = vmatpush1.msra.mxu0 0.0
        %6240 = vmatprep.subr.mxu0 0.0
        %6241 = vmatpush1.msra.mxu0 0.0
        %6242 = vmatprep.subr.mxu0 0.0
        %6243 = vmatpush1.msra.mxu0 0.0
        %6244 = vmatprep.subr.mxu0 0.0
        %6245 = vmatpush1.msra.mxu0 0.0
        %6246 = vmatprep.subr.mxu0 0.0
        %6247 = vmatpush1.msra.mxu0 0.0
        %6248 = vmatprep.subr.mxu0 0.0
        %6249 = vmatpush1.msra.mxu0 0.0
        %6250 = vmatprep.subr.mxu0 0.0
        %6251 = vmatpush1.msra.mxu0 0.0
        %6252 = vmatprep.subr.mxu0 0.0
        %6253 = vmatpush1.msra.mxu0 0.0
        %6254 = vmatprep.subr.mxu0 0.0
        %6255 = vmatpush1.msra.mxu0 0.0
        %6256 = vmatprep.subr.mxu0 0.0
        %6257 = vmatpush1.msra.mxu0 0.0
        %6258 = vmatprep.subr.mxu0 0.0
        %6259 = vmatpush1.msra.mxu0 0.0
        %6260 = vmatprep.subr.mxu0 0.0
        %6261 = vmatpush1.msra.mxu0 0.0
        %6262 = vmatprep.subr.mxu0 0.0
        %6263 = vmatpush1.msra.mxu0 0.0
        %6264 = vmatprep.subr.mxu0 0.0
        %6265 = vmatpush1.msra.mxu0 0.0
        %6266 = vmatprep.subr.mxu0 0.0
        %6267 = vmatpush1.msra.mxu0 0.0
        %6268 = vmatprep.subr.mxu0 0.0
        %6269 = vmatpush1.msra.mxu0 0.0
        %6270 = vmatprep.subr.mxu0 0.0
        %6271 = vmatpush1.msra.mxu0 0.0
        %6272 = vmatprep.subr.mxu0 0.0
        %6273 = vmatpush1.msra.mxu0 0.0
        %6274 = vmatprep.subr.mxu0 0.0
        %6275 = vmatpush1.msra.mxu0 0.0
        %6276 = vmatprep.subr.mxu0 0.0
        %6277 = vmatpush1.msra.mxu0 0.0
        %6278 = vmatprep.subr.mxu0 0.0
        %6279 = vmatpush1.msra.mxu0 0.0
        %6280 = vmatprep.mubr.f32.mxu0 0.0
        %6281 = vmatmul.mubr.f32.gmra.mrb[0].mxu0 %v6214
        %v6282 = vpop.f32.mrb[0].mxu0
        %v6283 = vadd.f32 0.0, %v6282
        %v6284 = vpop.f32.mrb[0].mxu0
        %v6285 = vadd.f32 0.0, %v6284
        %6286 = vdwg.mxu0
        %6287 = vmatprep.subr.mxu0 %v1113
        %6288 = vmatpush1.msra.mxu0 %v1112
        %6289 = vmatprep.subr.mxu0 %v1115
        %6290 = vmatpush1.msra.mxu0 %v1114
        %6291 = vmatprep.subr.mxu0 %v1117
        %6292 = vmatpush1.msra.mxu0 %v1116
        %6293 = vmatprep.subr.mxu0 %v1119
        %6294 = vmatpush1.msra.mxu0 %v1118
        %6295 = vmatprep.subr.mxu0 %v1121
        %6296 = vmatpush1.msra.mxu0 %v1120
        %6297 = vmatprep.subr.mxu0 %v1123
        %6298 = vmatpush1.msra.mxu0 %v1122
        %6299 = vmatprep.subr.mxu0 %v1125
        %6300 = vmatpush1.msra.mxu0 %v1124
        %6301 = vmatprep.subr.mxu0 %v1127
        %6302 = vmatpush1.msra.mxu0 %v1126
        %6303 = vmatprep.subr.mxu0 %v1129
        %6304 = vmatpush1.msra.mxu0 %v1128
        %6305 = vmatprep.subr.mxu0 %v1131
        %6306 = vmatpush1.msra.mxu0 %v1130
        %6307 = vmatprep.subr.mxu0 %v1133
        %6308 = vmatpush1.msra.mxu0 %v1132
        %6309 = vmatprep.subr.mxu0 %v1135
        %6310 = vmatpush1.msra.mxu0 %v1134
        %6311 = vmatprep.subr.mxu0 %v1137
        %6312 = vmatpush1.msra.mxu0 %v1136
        %6313 = vmatprep.subr.mxu0 %v1139
        %6314 = vmatpush1.msra.mxu0 %v1138
        %6315 = vmatprep.subr.mxu0 %v1141
        %6316 = vmatpush1.msra.mxu0 %v1140
        %6317 = vmatprep.subr.mxu0 %v1143
        %6318 = vmatpush1.msra.mxu0 %v1142
        %6319 = vmatprep.subr.mxu0 %v1145
        %6320 = vmatpush1.msra.mxu0 %v1144
        %6321 = vmatprep.subr.mxu0 %v1147
        %6322 = vmatpush1.msra.mxu0 %v1146
        %6323 = vmatprep.subr.mxu0 %v1149
        %6324 = vmatpush1.msra.mxu0 %v1148
        %6325 = vmatprep.subr.mxu0 %v1151
        %6326 = vmatpush1.msra.mxu0 %v1150
        %6327 = vmatprep.subr.mxu0 %v1153
        %6328 = vmatpush1.msra.mxu0 %v1152
        %6329 = vmatprep.subr.mxu0 %v1155
        %6330 = vmatpush1.msra.mxu0 %v1154
        %6331 = vmatprep.subr.mxu0 %v1157
        %6332 = vmatpush1.msra.mxu0 %v1156
        %6333 = vmatprep.subr.mxu0 %v1159
        %6334 = vmatpush1.msra.mxu0 %v1158
        %6335 = vmatprep.subr.mxu0 %v1161
        %6336 = vmatpush1.msra.mxu0 %v1160
        %6337 = vmatprep.subr.mxu0 %v1163
        %6338 = vmatpush1.msra.mxu0 %v1162
        %6339 = vmatprep.subr.mxu0 %v1165
        %6340 = vmatpush1.msra.mxu0 %v1164
        %6341 = vmatprep.subr.mxu0 %v1167
        %6342 = vmatpush1.msra.mxu0 %v1166
        %6343 = vmatprep.subr.mxu0 %v1169
        %6344 = vmatpush1.msra.mxu0 %v1168
        %6345 = vmatprep.subr.mxu0 %v1171
        %6346 = vmatpush1.msra.mxu0 %v1170
        %6347 = vmatprep.subr.mxu0 %v1173
        %6348 = vmatpush1.msra.mxu0 %v1172
        %6349 = vmatprep.subr.mxu0 %v1175
        %6350 = vmatpush1.msra.mxu0 %v1174
        %6351 = vmatprep.mubr.f32.mxu0 %v6285
        %6352 = vmatmul.mubr.f32.gmra.mrb[0].mxu0 %v6283
        %v6353 = vpop.f32.mrb[0].mxu0
        %v6354 = vadd.f32 0.0, %v6353
        %v6355 = vpop.f32.mrb[0].mxu0
        %v6356 = vadd.f32 0.0, %v6355
        %6357 = vdwg.mxu0
        %v6358 = vadd.f32 %v6207, %v6354
        %v6359 = vadd.f32 %v6209, %v6356
        %s6360 = scalar_lea.vmem %s12, 3
        %v6361 = vld [vmem:[%s6360] sm:$0x1]
        %v6363 = vsel %vm613, %v6361, 0
        %6365 = vmatprep.subr.mxu0 %v5917
        %6366 = vmatpush1.msra.mxu0 %v5916
        %6367 = vmatprep.subr.mxu0 0.0
        %6368 = vmatpush1.msra.mxu0 0.0
        %6369 = vmatprep.subr.mxu0 0.0
        %6370 = vmatpush1.msra.mxu0 0.0
        %6371 = vmatprep.subr.mxu0 0.0
        %6372 = vmatpush1.msra.mxu0 0.0
        %6373 = vmatprep.subr.mxu0 0.0
        %6374 = vmatpush1.msra.mxu0 0.0
        %6375 = vmatprep.subr.mxu0 0.0
        %6376 = vmatpush1.msra.mxu0 0.0
        %6377 = vmatprep.subr.mxu0 0.0
        %6378 = vmatpush1.msra.mxu0 0.0
        %6379 = vmatprep.subr.mxu0 0.0
        %6380 = vmatpush1.msra.mxu0 0.0
        %6381 = vmatprep.subr.mxu0 0.0
        %6382 = vmatpush1.msra.mxu0 0.0
        %6383 = vmatprep.subr.mxu0 0.0
        %6384 = vmatpush1.msra.mxu0 0.0
        %6385 = vmatprep.subr.mxu0 0.0
        %6386 = vmatpush1.msra.mxu0 0.0
        %6387 = vmatprep.subr.mxu0 0.0
        %6388 = vmatpush1.msra.mxu0 0.0
        %6389 = vmatprep.subr.mxu0 0.0
        %6390 = vmatpush1.msra.mxu0 0.0
        %6391 = vmatprep.subr.mxu0 0.0
        %6392 = vmatpush1.msra.mxu0 0.0
        %6393 = vmatprep.subr.mxu0 0.0
        %6394 = vmatpush1.msra.mxu0 0.0
        %6395 = vmatprep.subr.mxu0 0.0
        %6396 = vmatpush1.msra.mxu0 0.0
        %6397 = vmatprep.subr.mxu0 0.0
        %6398 = vmatpush1.msra.mxu0 0.0
        %6399 = vmatprep.subr.mxu0 0.0
        %6400 = vmatpush1.msra.mxu0 0.0
        %6401 = vmatprep.subr.mxu0 0.0
        %6402 = vmatpush1.msra.mxu0 0.0
        %6403 = vmatprep.subr.mxu0 0.0
        %6404 = vmatpush1.msra.mxu0 0.0
        %6405 = vmatprep.subr.mxu0 0.0
        %6406 = vmatpush1.msra.mxu0 0.0
        %6407 = vmatprep.subr.mxu0 0.0
        %6408 = vmatpush1.msra.mxu0 0.0
        %6409 = vmatprep.subr.mxu0 0.0
        %6410 = vmatpush1.msra.mxu0 0.0
        %6411 = vmatprep.subr.mxu0 0.0
        %6412 = vmatpush1.msra.mxu0 0.0
        %6413 = vmatprep.subr.mxu0 0.0
        %6414 = vmatpush1.msra.mxu0 0.0
        %6415 = vmatprep.subr.mxu0 0.0
        %6416 = vmatpush1.msra.mxu0 0.0
        %6417 = vmatprep.subr.mxu0 0.0
        %6418 = vmatpush1.msra.mxu0 0.0
        %6419 = vmatprep.subr.mxu0 0.0
        %6420 = vmatpush1.msra.mxu0 0.0
        %6421 = vmatprep.subr.mxu0 0.0
        %6422 = vmatpush1.msra.mxu0 0.0
        %6423 = vmatprep.subr.mxu0 0.0
        %6424 = vmatpush1.msra.mxu0 0.0
        %6425 = vmatprep.subr.mxu0 0.0
        %6426 = vmatpush1.msra.mxu0 0.0
        %6427 = vmatprep.subr.mxu0 0.0
        %6428 = vmatpush1.msra.mxu0 0.0
        %6429 = vmatprep.mubr.f32.mxu0 0.0
        %6430 = vmatmul.mubr.f32.gmra.mrb[0].mxu0 %v6363
        %v6431 = vpop.f32.mrb[0].mxu0
        %v6432 = vadd.f32 0.0, %v6431
        %v6433 = vpop.f32.mrb[0].mxu0
        %v6434 = vadd.f32 0.0, %v6433
        %6435 = vdwg.mxu0
        %6436 = vmatprep.subr.mxu0 %v1327
        %6437 = vmatpush1.msra.mxu0 %v1326
        %6438 = vmatprep.subr.mxu0 %v1329
        %6439 = vmatpush1.msra.mxu0 %v1328
        %6440 = vmatprep.subr.mxu0 %v1331
        %6441 = vmatpush1.msra.mxu0 %v1330
        %6442 = vmatprep.subr.mxu0 %v1333
        %6443 = vmatpush1.msra.mxu0 %v1332
        %6444 = vmatprep.subr.mxu0 %v1335
        %6445 = vmatpush1.msra.mxu0 %v1334
        %6446 = vmatprep.subr.mxu0 %v1337
        %6447 = vmatpush1.msra.mxu0 %v1336
        %6448 = vmatprep.subr.mxu0 %v1339
        %6449 = vmatpush1.msra.mxu0 %v1338
        %6450 = vmatprep.subr.mxu0 %v1341
        %6451 = vmatpush1.msra.mxu0 %v1340
        %6452 = vmatprep.subr.mxu0 %v1343
        %6453 = vmatpush1.msra.mxu0 %v1342
        %6454 = vmatprep.subr.mxu0 %v1345
        %6455 = vmatpush1.msra.mxu0 %v1344
        %6456 = vmatprep.subr.mxu0 %v1347
        %6457 = vmatpush1.msra.mxu0 %v1346
        %6458 = vmatprep.subr.mxu0 %v1349
        %6459 = vmatpush1.msra.mxu0 %v1348
        %6460 = vmatprep.subr.mxu0 %v1351
        %6461 = vmatpush1.msra.mxu0 %v1350
        %6462 = vmatprep.subr.mxu0 %v1353
        %6463 = vmatpush1.msra.mxu0 %v1352
        %6464 = vmatprep.subr.mxu0 %v1355
        %6465 = vmatpush1.msra.mxu0 %v1354
        %6466 = vmatprep.subr.mxu0 %v1357
        %6467 = vmatpush1.msra.mxu0 %v1356
        %6468 = vmatprep.subr.mxu0 %v1359
        %6469 = vmatpush1.msra.mxu0 %v1358
        %6470 = vmatprep.subr.mxu0 %v1361
        %6471 = vmatpush1.msra.mxu0 %v1360
        %6472 = vmatprep.subr.mxu0 %v1363
        %6473 = vmatpush1.msra.mxu0 %v1362
        %6474 = vmatprep.subr.mxu0 %v1365
        %6475 = vmatpush1.msra.mxu0 %v1364
        %6476 = vmatprep.subr.mxu0 %v1367
        %6477 = vmatpush1.msra.mxu0 %v1366
        %6478 = vmatprep.subr.mxu0 %v1369
        %6479 = vmatpush1.msra.mxu0 %v1368
        %6480 = vmatprep.subr.mxu0 %v1371
        %6481 = vmatpush1.msra.mxu0 %v1370
        %6482 = vmatprep.subr.mxu0 %v1373
        %6483 = vmatpush1.msra.mxu0 %v1372
        %6484 = vmatprep.subr.mxu0 %v1375
        %6485 = vmatpush1.msra.mxu0 %v1374
        %6486 = vmatprep.subr.mxu0 %v1377
        %6487 = vmatpush1.msra.mxu0 %v1376
        %6488 = vmatprep.subr.mxu0 %v1379
        %6489 = vmatpush1.msra.mxu0 %v1378
        %6490 = vmatprep.subr.mxu0 %v1381
        %6491 = vmatpush1.msra.mxu0 %v1380
        %6492 = vmatprep.subr.mxu0 %v1383
        %6493 = vmatpush1.msra.mxu0 %v1382
        %6494 = vmatprep.subr.mxu0 %v1385
        %6495 = vmatpush1.msra.mxu0 %v1384
        %6496 = vmatprep.subr.mxu0 %v1387
        %6497 = vmatpush1.msra.mxu0 %v1386
        %6498 = vmatprep.subr.mxu0 %v1389
        %6499 = vmatpush1.msra.mxu0 %v1388
        %6500 = vmatprep.mubr.f32.mxu0 %v6434
        %6501 = vmatmul.mubr.f32.gmra.mrb[0].mxu0 %v6432
        %v6502 = vpop.f32.mrb[0].mxu0
        %v6503 = vadd.f32 0.0, %v6502
        %v6504 = vpop.f32.mrb[0].mxu0
        %v6505 = vadd.f32 0.0, %v6504
        %6506 = vdwg.mxu0
        %v6507 = vadd.f32 %v6358, %v6503
        %v6508 = vadd.f32 %v6359, %v6505
        %s6509 = scalar_lea.vmem %s12, 4
        %v6510 = vld [vmem:[%s6509] sm:$0x1]
        %v6512 = vsel %vm613, %v6510, 0
        %6514 = vmatprep.subr.mxu0 %v5917
        %6515 = vmatpush1.msra.mxu0 %v5916
        %6516 = vmatprep.subr.mxu0 0.0
        %6517 = vmatpush1.msra.mxu0 0.0
        %6518 = vmatprep.subr.mxu0 0.0
        %6519 = vmatpush1.msra.mxu0 0.0
        %6520 = vmatprep.subr.mxu0 0.0
        %6521 = vmatpush1.msra.mxu0 0.0
        %6522 = vmatprep.subr.mxu0 0.0
        %6523 = vmatpush1.msra.mxu0 0.0
        %6524 = vmatprep.subr.mxu0 0.0
        %6525 = vmatpush1.msra.mxu0 0.0
        %6526 = vmatprep.subr.mxu0 0.0
        %6527 = vmatpush1.msra.mxu0 0.0
        %6528 = vmatprep.subr.mxu0 0.0
        %6529 = vmatpush1.msra.mxu0 0.0
        %6530 = vmatprep.subr.mxu0 0.0
        %6531 = vmatpush1.msra.mxu0 0.0
        %6532 = vmatprep.subr.mxu0 0.0
        %6533 = vmatpush1.msra.mxu0 0.0
        %6534 = vmatprep.subr.mxu0 0.0
        %6535 = vmatpush1.msra.mxu0 0.0
        %6536 = vmatprep.subr.mxu0 0.0
        %6537 = vmatpush1.msra.mxu0 0.0
        %6538 = vmatprep.subr.mxu0 0.0
        %6539 = vmatpush1.msra.mxu0 0.0
        %6540 = vmatprep.subr.mxu0 0.0
        %6541 = vmatpush1.msra.mxu0 0.0
        %6542 = vmatprep.subr.mxu0 0.0
        %6543 = vmatpush1.msra.mxu0 0.0
        %6544 = vmatprep.subr.mxu0 0.0
        %6545 = vmatpush1.msra.mxu0 0.0
        %6546 = vmatprep.subr.mxu0 0.0
        %6547 = vmatpush1.msra.mxu0 0.0
        %6548 = vmatprep.subr.mxu0 0.0
        %6549 = vmatpush1.msra.mxu0 0.0
        %6550 = vmatprep.subr.mxu0 0.0
        %6551 = vmatpush1.msra.mxu0 0.0
        %6552 = vmatprep.subr.mxu0 0.0
        %6553 = vmatpush1.msra.mxu0 0.0
        %6554 = vmatprep.subr.mxu0 0.0
        %6555 = vmatpush1.msra.mxu0 0.0
        %6556 = vmatprep.subr.mxu0 0.0
        %6557 = vmatpush1.msra.mxu0 0.0
        %6558 = vmatprep.subr.mxu0 0.0
        %6559 = vmatpush1.msra.mxu0 0.0
        %6560 = vmatprep.subr.mxu0 0.0
        %6561 = vmatpush1.msra.mxu0 0.0
        %6562 = vmatprep.subr.mxu0 0.0
        %6563 = vmatpush1.msra.mxu0 0.0
        %6564 = vmatprep.subr.mxu0 0.0
        %6565 = vmatpush1.msra.mxu0 0.0
        %6566 = vmatprep.subr.mxu0 0.0
        %6567 = vmatpush1.msra.mxu0 0.0
        %6568 = vmatprep.subr.mxu0 0.0
        %6569 = vmatpush1.msra.mxu0 0.0
        %6570 = vmatprep.subr.mxu0 0.0
        %6571 = vmatpush1.msra.mxu0 0.0
        %6572 = vmatprep.subr.mxu0 0.0
        %6573 = vmatpush1.msra.mxu0 0.0
        %6574 = vmatprep.subr.mxu0 0.0
        %6575 = vmatpush1.msra.mxu0 0.0
        %6576 = vmatprep.subr.mxu0 0.0
        %6577 = vmatpush1.msra.mxu0 0.0
        %6578 = vmatprep.mubr.f32.mxu0 0.0
        %6579 = vmatmul.mubr.f32.gmra.mrb[0].mxu0 %v6512
        %v6580 = vpop.f32.mrb[0].mxu0
        %v6581 = vadd.f32 0.0, %v6580
        %v6582 = vpop.f32.mrb[0].mxu0
        %v6583 = vadd.f32 0.0, %v6582
        %6584 = vdwg.mxu0
        %6585 = vmatprep.subr.mxu0 %v1541
        %6586 = vmatpush1.msra.mxu0 %v1540
        %6587 = vmatprep.subr.mxu0 %v1543
        %6588 = vmatpush1.msra.mxu0 %v1542
        %6589 = vmatprep.subr.mxu0 %v1545
        %6590 = vmatpush1.msra.mxu0 %v1544
        %6591 = vmatprep.subr.mxu0 %v1547
        %6592 = vmatpush1.msra.mxu0 %v1546
        %6593 = vmatprep.subr.mxu0 %v1549
        %6594 = vmatpush1.msra.mxu0 %v1548
        %6595 = vmatprep.subr.mxu0 %v1551
        %6596 = vmatpush1.msra.mxu0 %v1550
        %6597 = vmatprep.subr.mxu0 %v1553
        %6598 = vmatpush1.msra.mxu0 %v1552
        %6599 = vmatprep.subr.mxu0 %v1555
        %6600 = vmatpush1.msra.mxu0 %v1554
        %6601 = vmatprep.subr.mxu0 %v1557
        %6602 = vmatpush1.msra.mxu0 %v1556
        %6603 = vmatprep.subr.mxu0 %v1559
        %6604 = vmatpush1.msra.mxu0 %v1558
        %6605 = vmatprep.subr.mxu0 %v1561
        %6606 = vmatpush1.msra.mxu0 %v1560
        %6607 = vmatprep.subr.mxu0 %v1563
        %6608 = vmatpush1.msra.mxu0 %v1562
        %6609 = vmatprep.subr.mxu0 %v1565
        %6610 = vmatpush1.msra.mxu0 %v1564
        %6611 = vmatprep.subr.mxu0 %v1567
        %6612 = vmatpush1.msra.mxu0 %v1566
        %6613 = vmatprep.subr.mxu0 %v1569
        %6614 = vmatpush1.msra.mxu0 %v1568
        %6615 = vmatprep.subr.mxu0 %v1571
        %6616 = vmatpush1.msra.mxu0 %v1570
        %6617 = vmatprep.subr.mxu0 %v1573
        %6618 = vmatpush1.msra.mxu0 %v1572
        %6619 = vmatprep.subr.mxu0 %v1575
        %6620 = vmatpush1.msra.mxu0 %v1574
        %6621 = vmatprep.subr.mxu0 %v1577
        %6622 = vmatpush1.msra.mxu0 %v1576
        %6623 = vmatprep.subr.mxu0 %v1579
        %6624 = vmatpush1.msra.mxu0 %v1578
        %6625 = vmatprep.subr.mxu0 %v1581
        %6626 = vmatpush1.msra.mxu0 %v1580
        %6627 = vmatprep.subr.mxu0 %v1583
        %6628 = vmatpush1.msra.mxu0 %v1582
        %6629 = vmatprep.subr.mxu0 %v1585
        %6630 = vmatpush1.msra.mxu0 %v1584
        %6631 = vmatprep.subr.mxu0 %v1587
        %6632 = vmatpush1.msra.mxu0 %v1586
        %6633 = vmatprep.subr.mxu0 %v1589
        %6634 = vmatpush1.msra.mxu0 %v1588
        %6635 = vmatprep.subr.mxu0 %v1591
        %6636 = vmatpush1.msra.mxu0 %v1590
        %6637 = vmatprep.subr.mxu0 %v1593
        %6638 = vmatpush1.msra.mxu0 %v1592
        %6639 = vmatprep.subr.mxu0 %v1595
        %6640 = vmatpush1.msra.mxu0 %v1594
        %6641 = vmatprep.subr.mxu0 %v1597
        %6642 = vmatpush1.msra.mxu0 %v1596
        %6643 = vmatprep.subr.mxu0 %v1599
        %6644 = vmatpush1.msra.mxu0 %v1598
        %6645 = vmatprep.subr.mxu0 %v1601
        %6646 = vmatpush1.msra.mxu0 %v1600
        %6647 = vmatprep.subr.mxu0 %v1603
        %6648 = vmatpush1.msra.mxu0 %v1602
        %6649 = vmatprep.mubr.f32.mxu0 %v6583
        %6650 = vmatmul.mubr.f32.gmra.mrb[0].mxu0 %v6581
        %v6651 = vpop.f32.mrb[0].mxu0
        %v6652 = vadd.f32 0.0, %v6651
        %v6653 = vpop.f32.mrb[0].mxu0
        %v6654 = vadd.f32 0.0, %v6653
        %6655 = vdwg.mxu0
        %v6656 = vadd.f32 %v6507, %v6652
        %v6657 = vadd.f32 %v6508, %v6654
        %s6658 = scalar_lea.vmem %s12, 5
        %v6659 = vld [vmem:[%s6658] sm:$0x1]
        %v6661 = vsel %vm613, %v6659, 0
        %6663 = vmatprep.subr.mxu0 %v5917
        %6664 = vmatpush1.msra.mxu0 %v5916
        %6665 = vmatprep.subr.mxu0 0.0
        %6666 = vmatpush1.msra.mxu0 0.0
        %6667 = vmatprep.subr.mxu0 0.0
        %6668 = vmatpush1.msra.mxu0 0.0
        %6669 = vmatprep.subr.mxu0 0.0
        %6670 = vmatpush1.msra.mxu0 0.0
        %6671 = vmatprep.subr.mxu0 0.0
        %6672 = vmatpush1.msra.mxu0 0.0
        %6673 = vmatprep.subr.mxu0 0.0
        %6674 = vmatpush1.msra.mxu0 0.0
        %6675 = vmatprep.subr.mxu0 0.0
        %6676 = vmatpush1.msra.mxu0 0.0
        %6677 = vmatprep.subr.mxu0 0.0
        %6678 = vmatpush1.msra.mxu0 0.0
        %6679 = vmatprep.subr.mxu0 0.0
        %6680 = vmatpush1.msra.mxu0 0.0
        %6681 = vmatprep.subr.mxu0 0.0
        %6682 = vmatpush1.msra.mxu0 0.0
        %6683 = vmatprep.subr.mxu0 0.0
        %6684 = vmatpush1.msra.mxu0 0.0
        %6685 = vmatprep.subr.mxu0 0.0
        %6686 = vmatpush1.msra.mxu0 0.0
        %6687 = vmatprep.subr.mxu0 0.0
        %6688 = vmatpush1.msra.mxu0 0.0
        %6689 = vmatprep.subr.mxu0 0.0
        %6690 = vmatpush1.msra.mxu0 0.0
        %6691 = vmatprep.subr.mxu0 0.0
        %6692 = vmatpush1.msra.mxu0 0.0
        %6693 = vmatprep.subr.mxu0 0.0
        %6694 = vmatpush1.msra.mxu0 0.0
        %6695 = vmatprep.subr.mxu0 0.0
        %6696 = vmatpush1.msra.mxu0 0.0
        %6697 = vmatprep.subr.mxu0 0.0
        %6698 = vmatpush1.msra.mxu0 0.0
        %6699 = vmatprep.subr.mxu0 0.0
        %6700 = vmatpush1.msra.mxu0 0.0
        %6701 = vmatprep.subr.mxu0 0.0
        %6702 = vmatpush1.msra.mxu0 0.0
        %6703 = vmatprep.subr.mxu0 0.0
        %6704 = vmatpush1.msra.mxu0 0.0
        %6705 = vmatprep.subr.mxu0 0.0
        %6706 = vmatpush1.msra.mxu0 0.0
        %6707 = vmatprep.subr.mxu0 0.0
        %6708 = vmatpush1.msra.mxu0 0.0
        %6709 = vmatprep.subr.mxu0 0.0
        %6710 = vmatpush1.msra.mxu0 0.0
        %6711 = vmatprep.subr.mxu0 0.0
        %6712 = vmatpush1.msra.mxu0 0.0
        %6713 = vmatprep.subr.mxu0 0.0
        %6714 = vmatpush1.msra.mxu0 0.0
        %6715 = vmatprep.subr.mxu0 0.0
        %6716 = vmatpush1.msra.mxu0 0.0
        %6717 = vmatprep.subr.mxu0 0.0
        %6718 = vmatpush1.msra.mxu0 0.0
        %6719 = vmatprep.subr.mxu0 0.0
        %6720 = vmatpush1.msra.mxu0 0.0
        %6721 = vmatprep.subr.mxu0 0.0
        %6722 = vmatpush1.msra.mxu0 0.0
        %6723 = vmatprep.subr.mxu0 0.0
        %6724 = vmatpush1.msra.mxu0 0.0
        %6725 = vmatprep.subr.mxu0 0.0
        %6726 = vmatpush1.msra.mxu0 0.0
        %6727 = vmatprep.mubr.f32.mxu0 0.0
        %6728 = vmatmul.mubr.f32.gmra.mrb[0].mxu0 %v6661
        %v6729 = vpop.f32.mrb[0].mxu0
        %v6730 = vadd.f32 0.0, %v6729
        %v6731 = vpop.f32.mrb[0].mxu0
        %v6732 = vadd.f32 0.0, %v6731
        %6733 = vdwg.mxu0
        %6734 = vmatprep.subr.mxu0 %v1755
        %6735 = vmatpush1.msra.mxu0 %v1754
        %6736 = vmatprep.subr.mxu0 %v1757
        %6737 = vmatpush1.msra.mxu0 %v1756
        %6738 = vmatprep.subr.mxu0 %v1759
        %6739 = vmatpush1.msra.mxu0 %v1758
        %6740 = vmatprep.subr.mxu0 %v1761
        %6741 = vmatpush1.msra.mxu0 %v1760
        %6742 = vmatprep.subr.mxu0 %v1763
        %6743 = vmatpush1.msra.mxu0 %v1762
        %6744 = vmatprep.subr.mxu0 %v1765
        %6745 = vmatpush1.msra.mxu0 %v1764
        %6746 = vmatprep.subr.mxu0 %v1767
        %6747 = vmatpush1.msra.mxu0 %v1766
        %6748 = vmatprep.subr.mxu0 %v1769
        %6749 = vmatpush1.msra.mxu0 %v1768
        %6750 = vmatprep.subr.mxu0 %v1771
        %6751 = vmatpush1.msra.mxu0 %v1770
        %6752 = vmatprep.subr.mxu0 %v1773
        %6753 = vmatpush1.msra.mxu0 %v1772
        %6754 = vmatprep.subr.mxu0 %v1775
        %6755 = vmatpush1.msra.mxu0 %v1774
        %6756 = vmatprep.subr.mxu0 %v1777
        %6757 = vmatpush1.msra.mxu0 %v1776
        %6758 = vmatprep.subr.mxu0 %v1779
        %6759 = vmatpush1.msra.mxu0 %v1778
        %6760 = vmatprep.subr.mxu0 %v1781
        %6761 = vmatpush1.msra.mxu0 %v1780
        %6762 = vmatprep.subr.mxu0 %v1783
        %6763 = vmatpush1.msra.mxu0 %v1782
        %6764 = vmatprep.subr.mxu0 %v1785
        %6765 = vmatpush1.msra.mxu0 %v1784
        %6766 = vmatprep.subr.mxu0 %v1787
        %6767 = vmatpush1.msra.mxu0 %v1786
        %6768 = vmatprep.subr.mxu0 %v1789
        %6769 = vmatpush1.msra.mxu0 %v1788
        %6770 = vmatprep.subr.mxu0 %v1791
        %6771 = vmatpush1.msra.mxu0 %v1790
        %6772 = vmatprep.subr.mxu0 %v1793
        %6773 = vmatpush1.msra.mxu0 %v1792
        %6774 = vmatprep.subr.mxu0 %v1795
        %6775 = vmatpush1.msra.mxu0 %v1794
        %6776 = vmatprep.subr.mxu0 %v1797
        %6777 = vmatpush1.msra.mxu0 %v1796
        %6778 = vmatprep.subr.mxu0 %v1799
        %6779 = vmatpush1.msra.mxu0 %v1798
        %6780 = vmatprep.subr.mxu0 %v1801
        %6781 = vmatpush1.msra.mxu0 %v1800
        %6782 = vmatprep.subr.mxu0 %v1803
        %6783 = vmatpush1.msra.mxu0 %v1802
        %6784 = vmatprep.subr.mxu0 %v1805
        %6785 = vmatpush1.msra.mxu0 %v1804
        %6786 = vmatprep.subr.mxu0 %v1807
        %6787 = vmatpush1.msra.mxu0 %v1806
        %6788 = vmatprep.subr.mxu0 %v1809
        %6789 = vmatpush1.msra.mxu0 %v1808
        %6790 = vmatprep.subr.mxu0 %v1811
        %6791 = vmatpush1.msra.mxu0 %v1810
        %6792 = vmatprep.subr.mxu0 %v1813
        %6793 = vmatpush1.msra.mxu0 %v1812
        %6794 = vmatprep.subr.mxu0 %v1815
        %6795 = vmatpush1.msra.mxu0 %v1814
        %6796 = vmatprep.subr.mxu0 %v1817
        %6797 = vmatpush1.msra.mxu0 %v1816
        %6798 = vmatprep.mubr.f32.mxu0 %v6732
        %6799 = vmatmul.mubr.f32.gmra.mrb[0].mxu0 %v6730
        %v6800 = vpop.f32.mrb[0].mxu0
        %v6801 = vadd.f32 0.0, %v6800
        %v6802 = vpop.f32.mrb[0].mxu0
        %v6803 = vadd.f32 0.0, %v6802
        %6804 = vdwg.mxu0
        %v6805 = vadd.f32 %v6656, %v6801
        %v6806 = vadd.f32 %v6657, %v6803
        %s6807 = scalar_lea.vmem %s12, 6
        %v6808 = vld [vmem:[%s6807] sm:$0x1]
        %v6810 = vsel %vm613, %v6808, 0
        %6812 = vmatprep.subr.mxu0 %v5917
        %6813 = vmatpush1.msra.mxu0 %v5916
        %6814 = vmatprep.subr.mxu0 0.0
        %6815 = vmatpush1.msra.mxu0 0.0
        %6816 = vmatprep.subr.mxu0 0.0
        %6817 = vmatpush1.msra.mxu0 0.0
        %6818 = vmatprep.subr.mxu0 0.0
        %6819 = vmatpush1.msra.mxu0 0.0
        %6820 = vmatprep.subr.mxu0 0.0
        %6821 = vmatpush1.msra.mxu0 0.0
        %6822 = vmatprep.subr.mxu0 0.0
        %6823 = vmatpush1.msra.mxu0 0.0
        %6824 = vmatprep.subr.mxu0 0.0
        %6825 = vmatpush1.msra.mxu0 0.0
        %6826 = vmatprep.subr.mxu0 0.0
        %6827 = vmatpush1.msra.mxu0 0.0
        %6828 = vmatprep.subr.mxu0 0.0
        %6829 = vmatpush1.msra.mxu0 0.0
        %6830 = vmatprep.subr.mxu0 0.0
        %6831 = vmatpush1.msra.mxu0 0.0
        %6832 = vmatprep.subr.mxu0 0.0
        %6833 = vmatpush1.msra.mxu0 0.0
        %6834 = vmatprep.subr.mxu0 0.0
        %6835 = vmatpush1.msra.mxu0 0.0
        %6836 = vmatprep.subr.mxu0 0.0
        %6837 = vmatpush1.msra.mxu0 0.0
        %6838 = vmatprep.subr.mxu0 0.0
        %6839 = vmatpush1.msra.mxu0 0.0
        %6840 = vmatprep.subr.mxu0 0.0
        %6841 = vmatpush1.msra.mxu0 0.0
        %6842 = vmatprep.subr.mxu0 0.0
        %6843 = vmatpush1.msra.mxu0 0.0
        %6844 = vmatprep.subr.mxu0 0.0
        %6845 = vmatpush1.msra.mxu0 0.0
        %6846 = vmatprep.subr.mxu0 0.0
        %6847 = vmatpush1.msra.mxu0 0.0
        %6848 = vmatprep.subr.mxu0 0.0
        %6849 = vmatpush1.msra.mxu0 0.0
        %6850 = vmatprep.subr.mxu0 0.0
        %6851 = vmatpush1.msra.mxu0 0.0
        %6852 = vmatprep.subr.mxu0 0.0
        %6853 = vmatpush1.msra.mxu0 0.0
        %6854 = vmatprep.subr.mxu0 0.0
        %6855 = vmatpush1.msra.mxu0 0.0
        %6856 = vmatprep.subr.mxu0 0.0
        %6857 = vmatpush1.msra.mxu0 0.0
        %6858 = vmatprep.subr.mxu0 0.0
        %6859 = vmatpush1.msra.mxu0 0.0
        %6860 = vmatprep.subr.mxu0 0.0
        %6861 = vmatpush1.msra.mxu0 0.0
        %6862 = vmatprep.subr.mxu0 0.0
        %6863 = vmatpush1.msra.mxu0 0.0
        %6864 = vmatprep.subr.mxu0 0.0
        %6865 = vmatpush1.msra.mxu0 0.0
        %6866 = vmatprep.subr.mxu0 0.0
        %6867 = vmatpush1.msra.mxu0 0.0
        %6868 = vmatprep.subr.mxu0 0.0
        %6869 = vmatpush1.msra.mxu0 0.0
        %6870 = vmatprep.subr.mxu0 0.0
        %6871 = vmatpush1.msra.mxu0 0.0
        %6872 = vmatprep.subr.mxu0 0.0
        %6873 = vmatpush1.msra.mxu0 0.0
        %6874 = vmatprep.subr.mxu0 0.0
        %6875 = vmatpush1.msra.mxu0 0.0
        %6876 = vmatprep.mubr.f32.mxu0 0.0
        %6877 = vmatmul.mubr.f32.gmra.mrb[0].mxu0 %v6810
        %v6878 = vpop.f32.mrb[0].mxu0
        %v6879 = vadd.f32 0.0, %v6878
        %v6880 = vpop.f32.mrb[0].mxu0
        %v6881 = vadd.f32 0.0, %v6880
        %6882 = vdwg.mxu0
        %6883 = vmatprep.subr.mxu0 %v1969
        %6884 = vmatpush1.msra.mxu0 %v1968
        %6885 = vmatprep.subr.mxu0 %v1971
        %6886 = vmatpush1.msra.mxu0 %v1970
        %6887 = vmatprep.subr.mxu0 %v1973
        %6888 = vmatpush1.msra.mxu0 %v1972
        %6889 = vmatprep.subr.mxu0 %v1975
        %6890 = vmatpush1.msra.mxu0 %v1974
        %6891 = vmatprep.subr.mxu0 %v1977
        %6892 = vmatpush1.msra.mxu0 %v1976
        %6893 = vmatprep.subr.mxu0 %v1979
        %6894 = vmatpush1.msra.mxu0 %v1978
        %6895 = vmatprep.subr.mxu0 %v1981
        %6896 = vmatpush1.msra.mxu0 %v1980
        %6897 = vmatprep.subr.mxu0 %v1983
        %6898 = vmatpush1.msra.mxu0 %v1982
        %6899 = vmatprep.subr.mxu0 %v1985
        %6900 = vmatpush1.msra.mxu0 %v1984
        %6901 = vmatprep.subr.mxu0 %v1987
        %6902 = vmatpush1.msra.mxu0 %v1986
        %6903 = vmatprep.subr.mxu0 %v1989
        %6904 = vmatpush1.msra.mxu0 %v1988
        %6905 = vmatprep.subr.mxu0 %v1991
        %6906 = vmatpush1.msra.mxu0 %v1990
        %6907 = vmatprep.subr.mxu0 %v1993
        %6908 = vmatpush1.msra.mxu0 %v1992
        %6909 = vmatprep.subr.mxu0 %v1995
        %6910 = vmatpush1.msra.mxu0 %v1994
        %6911 = vmatprep.subr.mxu0 %v1997
        %6912 = vmatpush1.msra.mxu0 %v1996
        %6913 = vmatprep.subr.mxu0 %v1999
        %6914 = vmatpush1.msra.mxu0 %v1998
        %6915 = vmatprep.subr.mxu0 %v2001
        %6916 = vmatpush1.msra.mxu0 %v2000
        %6917 = vmatprep.subr.mxu0 %v2003
        %6918 = vmatpush1.msra.mxu0 %v2002
        %6919 = vmatprep.subr.mxu0 %v2005
        %6920 = vmatpush1.msra.mxu0 %v2004
        %6921 = vmatprep.subr.mxu0 %v2007
        %6922 = vmatpush1.msra.mxu0 %v2006
        %6923 = vmatprep.subr.mxu0 %v2009
        %6924 = vmatpush1.msra.mxu0 %v2008
        %6925 = vmatprep.subr.mxu0 %v2011
        %6926 = vmatpush1.msra.mxu0 %v2010
        %6927 = vmatprep.subr.mxu0 %v2013
        %6928 = vmatpush1.msra.mxu0 %v2012
        %6929 = vmatprep.subr.mxu0 %v2015
        %6930 = vmatpush1.msra.mxu0 %v2014
        %6931 = vmatprep.subr.mxu0 %v2017
        %6932 = vmatpush1.msra.mxu0 %v2016
        %6933 = vmatprep.subr.mxu0 %v2019
        %6934 = vmatpush1.msra.mxu0 %v2018
        %6935 = vmatprep.subr.mxu0 %v2021
        %6936 = vmatpush1.msra.mxu0 %v2020
        %6937 = vmatprep.subr.mxu0 %v2023
        %6938 = vmatpush1.msra.mxu0 %v2022
        %6939 = vmatprep.subr.mxu0 %v2025
        %6940 = vmatpush1.msra.mxu0 %v2024
        %6941 = vmatprep.subr.mxu0 %v2027
        %6942 = vmatpush1.msra.mxu0 %v2026
        %6943 = vmatprep.subr.mxu0 %v2029
        %6944 = vmatpush1.msra.mxu0 %v2028
        %6945 = vmatprep.subr.mxu0 %v2031
        %6946 = vmatpush1.msra.mxu0 %v2030
        %6947 = vmatprep.mubr.f32.mxu0 %v6881
        %6948 = vmatmul.mubr.f32.gmra.mrb[0].mxu0 %v6879
        %v6949 = vpop.f32.mrb[0].mxu0
        %v6950 = vadd.f32 0.0, %v6949
        %v6951 = vpop.f32.mrb[0].mxu0
        %v6952 = vadd.f32 0.0, %v6951
        %6953 = vdwg.mxu0
        %v6954 = vadd.f32 %v6805, %v6950
        %v6955 = vadd.f32 %v6806, %v6952
        %s6956 = scalar_lea.vmem %s12, 7
        %v6957 = vld [vmem:[%s6956] sm:$0x1]
        %v6959 = vsel %vm613, %v6957, 0
        %6961 = vmatprep.subr.mxu0 %v5917
        %6962 = vmatpush1.msra.mxu0 %v5916
        %6963 = vmatprep.subr.mxu0 0.0
        %6964 = vmatpush1.msra.mxu0 0.0
        %6965 = vmatprep.subr.mxu0 0.0
        %6966 = vmatpush1.msra.mxu0 0.0
        %6967 = vmatprep.subr.mxu0 0.0
        %6968 = vmatpush1.msra.mxu0 0.0
        %6969 = vmatprep.subr.mxu0 0.0
        %6970 = vmatpush1.msra.mxu0 0.0
        %6971 = vmatprep.subr.mxu0 0.0
        %6972 = vmatpush1.msra.mxu0 0.0
        %6973 = vmatprep.subr.mxu0 0.0
        %6974 = vmatpush1.msra.mxu0 0.0
        %6975 = vmatprep.subr.mxu0 0.0
        %6976 = vmatpush1.msra.mxu0 0.0
        %6977 = vmatprep.subr.mxu0 0.0
        %6978 = vmatpush1.msra.mxu0 0.0
        %6979 = vmatprep.subr.mxu0 0.0
        %6980 = vmatpush1.msra.mxu0 0.0
        %6981 = vmatprep.subr.mxu0 0.0
        %6982 = vmatpush1.msra.mxu0 0.0
        %6983 = vmatprep.subr.mxu0 0.0
        %6984 = vmatpush1.msra.mxu0 0.0
        %6985 = vmatprep.subr.mxu0 0.0
        %6986 = vmatpush1.msra.mxu0 0.0
        %6987 = vmatprep.subr.mxu0 0.0
        %6988 = vmatpush1.msra.mxu0 0.0
        %6989 = vmatprep.subr.mxu0 0.0
        %6990 = vmatpush1.msra.mxu0 0.0
        %6991 = vmatprep.subr.mxu0 0.0
        %6992 = vmatpush1.msra.mxu0 0.0
        %6993 = vmatprep.subr.mxu0 0.0
        %6994 = vmatpush1.msra.mxu0 0.0
        %6995 = vmatprep.subr.mxu0 0.0
        %6996 = vmatpush1.msra.mxu0 0.0
        %6997 = vmatprep.subr.mxu0 0.0
        %6998 = vmatpush1.msra.mxu0 0.0
        %6999 = vmatprep.subr.mxu0 0.0
        %7000 = vmatpush1.msra.mxu0 0.0
        %7001 = vmatprep.subr.mxu0 0.0
        %7002 = vmatpush1.msra.mxu0 0.0
        %7003 = vmatprep.subr.mxu0 0.0
        %7004 = vmatpush1.msra.mxu0 0.0
        %7005 = vmatprep.subr.mxu0 0.0
        %7006 = vmatpush1.msra.mxu0 0.0
        %7007 = vmatprep.subr.mxu0 0.0
        %7008 = vmatpush1.msra.mxu0 0.0
        %7009 = vmatprep.subr.mxu0 0.0
        %7010 = vmatpush1.msra.mxu0 0.0
        %7011 = vmatprep.subr.mxu0 0.0
        %7012 = vmatpush1.msra.mxu0 0.0
        %7013 = vmatprep.subr.mxu0 0.0
        %7014 = vmatpush1.msra.mxu0 0.0
        %7015 = vmatprep.subr.mxu0 0.0
        %7016 = vmatpush1.msra.mxu0 0.0
        %7017 = vmatprep.subr.mxu0 0.0
        %7018 = vmatpush1.msra.mxu0 0.0
        %7019 = vmatprep.subr.mxu0 0.0
        %7020 = vmatpush1.msra.mxu0 0.0
        %7021 = vmatprep.subr.mxu0 0.0
        %7022 = vmatpush1.msra.mxu0 0.0
        %7023 = vmatprep.subr.mxu0 0.0
        %7024 = vmatpush1.msra.mxu0 0.0
        %7025 = vmatprep.mubr.f32.mxu0 0.0
        %7026 = vmatmul.mubr.f32.gmra.mrb[0].mxu0 %v6959
        %v7027 = vpop.f32.mrb[0].mxu0
        %v7028 = vadd.f32 0.0, %v7027
        %v7029 = vpop.f32.mrb[0].mxu0
        %v7030 = vadd.f32 0.0, %v7029
        %7031 = vdwg.mxu0
        %7032 = vmatprep.subr.mxu0 %v2183
        %7033 = vmatpush1.msra.mxu0 %v2182
        %7034 = vmatprep.subr.mxu0 %v2185
        %7035 = vmatpush1.msra.mxu0 %v2184
        %7036 = vmatprep.subr.mxu0 %v2187
        %7037 = vmatpush1.msra.mxu0 %v2186
        %7038 = vmatprep.subr.mxu0 %v2189
        %7039 = vmatpush1.msra.mxu0 %v2188
        %7040 = vmatprep.subr.mxu0 %v2191
        %7041 = vmatpush1.msra.mxu0 %v2190
        %7042 = vmatprep.subr.mxu0 %v2193
        %7043 = vmatpush1.msra.mxu0 %v2192
        %7044 = vmatprep.subr.mxu0 %v2195
        %7045 = vmatpush1.msra.mxu0 %v2194
        %7046 = vmatprep.subr.mxu0 %v2197
        %7047 = vmatpush1.msra.mxu0 %v2196
        %7048 = vmatprep.subr.mxu0 %v2199
        %7049 = vmatpush1.msra.mxu0 %v2198
        %7050 = vmatprep.subr.mxu0 %v2201
        %7051 = vmatpush1.msra.mxu0 %v2200
        %7052 = vmatprep.subr.mxu0 %v2203
        %7053 = vmatpush1.msra.mxu0 %v2202
        %7054 = vmatprep.subr.mxu0 %v2205
        %7055 = vmatpush1.msra.mxu0 %v2204
        %7056 = vmatprep.subr.mxu0 %v2207
        %7057 = vmatpush1.msra.mxu0 %v2206
        %7058 = vmatprep.subr.mxu0 %v2209
        %7059 = vmatpush1.msra.mxu0 %v2208
        %7060 = vmatprep.subr.mxu0 %v2211
        %7061 = vmatpush1.msra.mxu0 %v2210
        %7062 = vmatprep.subr.mxu0 %v2213
        %7063 = vmatpush1.msra.mxu0 %v2212
        %7064 = vmatprep.subr.mxu0 %v2215
        %7065 = vmatpush1.msra.mxu0 %v2214
        %7066 = vmatprep.subr.mxu0 %v2217
        %7067 = vmatpush1.msra.mxu0 %v2216
        %7068 = vmatprep.subr.mxu0 %v2219
        %7069 = vmatpush1.msra.mxu0 %v2218
        %7070 = vmatprep.subr.mxu0 %v2221
        %7071 = vmatpush1.msra.mxu0 %v2220
        %7072 = vmatprep.subr.mxu0 %v2223
        %7073 = vmatpush1.msra.mxu0 %v2222
        %7074 = vmatprep.subr.mxu0 %v2225
        %7075 = vmatpush1.msra.mxu0 %v2224
        %7076 = vmatprep.subr.mxu0 %v2227
        %7077 = vmatpush1.msra.mxu0 %v2226
        %7078 = vmatprep.subr.mxu0 %v2229
        %7079 = vmatpush1.msra.mxu0 %v2228
        %7080 = vmatprep.subr.mxu0 %v2231
        %7081 = vmatpush1.msra.mxu0 %v2230
        %7082 = vmatprep.subr.mxu0 %v2233
        %7083 = vmatpush1.msra.mxu0 %v2232
        %7084 = vmatprep.subr.mxu0 %v2235
        %7085 = vmatpush1.msra.mxu0 %v2234
        %7086 = vmatprep.subr.mxu0 %v2237
        %7087 = vmatpush1.msra.mxu0 %v2236
        %7088 = vmatprep.subr.mxu0 %v2239
        %7089 = vmatpush1.msra.mxu0 %v2238
        %7090 = vmatprep.subr.mxu0 %v2241
        %7091 = vmatpush1.msra.mxu0 %v2240
        %7092 = vmatprep.subr.mxu0 %v2243
        %7093 = vmatpush1.msra.mxu0 %v2242
        %7094 = vmatprep.subr.mxu0 %v2245
        %7095 = vmatpush1.msra.mxu0 %v2244
        %7096 = vmatprep.mubr.f32.mxu0 %v7030
        %7097 = vmatmul.mubr.f32.gmra.mrb[0].mxu0 %v7028
        %v7098 = vpop.f32.mrb[0].mxu0
        %v7099 = vadd.f32 0.0, %v7098
        %v7100 = vpop.f32.mrb[0].mxu0
        %v7101 = vadd.f32 0.0, %v7100
        %7102 = vdwg.mxu0
        %v7103 = vadd.f32 %v6954, %v7099
        %v7104 = vadd.f32 %v6955, %v7101
        %s7105 = scalar_lea.vmem %s12, 8
        %v7106 = vld [vmem:[%s7105] sm:$0x1]
        %v7108 = vsel %vm613, %v7106, 0
        %7110 = vmatprep.subr.mxu0 %v5917
        %7111 = vmatpush1.msra.mxu0 %v5916
        %7112 = vmatprep.subr.mxu0 0.0
        %7113 = vmatpush1.msra.mxu0 0.0
        %7114 = vmatprep.subr.mxu0 0.0
        %7115 = vmatpush1.msra.mxu0 0.0
        %7116 = vmatprep.subr.mxu0 0.0
        %7117 = vmatpush1.msra.mxu0 0.0
        %7118 = vmatprep.subr.mxu0 0.0
        %7119 = vmatpush1.msra.mxu0 0.0
        %7120 = vmatprep.subr.mxu0 0.0
        %7121 = vmatpush1.msra.mxu0 0.0
        %7122 = vmatprep.subr.mxu0 0.0
        %7123 = vmatpush1.msra.mxu0 0.0
        %7124 = vmatprep.subr.mxu0 0.0
        %7125 = vmatpush1.msra.mxu0 0.0
        %7126 = vmatprep.subr.mxu0 0.0
        %7127 = vmatpush1.msra.mxu0 0.0
        %7128 = vmatprep.subr.mxu0 0.0
        %7129 = vmatpush1.msra.mxu0 0.0
        %7130 = vmatprep.subr.mxu0 0.0
        %7131 = vmatpush1.msra.mxu0 0.0
        %7132 = vmatprep.subr.mxu0 0.0
        %7133 = vmatpush1.msra.mxu0 0.0
        %7134 = vmatprep.subr.mxu0 0.0
        %7135 = vmatpush1.msra.mxu0 0.0
        %7136 = vmatprep.subr.mxu0 0.0
        %7137 = vmatpush1.msra.mxu0 0.0
        %7138 = vmatprep.subr.mxu0 0.0
        %7139 = vmatpush1.msra.mxu0 0.0
        %7140 = vmatprep.subr.mxu0 0.0
        %7141 = vmatpush1.msra.mxu0 0.0
        %7142 = vmatprep.subr.mxu0 0.0
        %7143 = vmatpush1.msra.mxu0 0.0
        %7144 = vmatprep.subr.mxu0 0.0
        %7145 = vmatpush1.msra.mxu0 0.0
        %7146 = vmatprep.subr.mxu0 0.0
        %7147 = vmatpush1.msra.mxu0 0.0
        %7148 = vmatprep.subr.mxu0 0.0
        %7149 = vmatpush1.msra.mxu0 0.0
        %7150 = vmatprep.subr.mxu0 0.0
        %7151 = vmatpush1.msra.mxu0 0.0
        %7152 = vmatprep.subr.mxu0 0.0
        %7153 = vmatpush1.msra.mxu0 0.0
        %7154 = vmatprep.subr.mxu0 0.0
        %7155 = vmatpush1.msra.mxu0 0.0
        %7156 = vmatprep.subr.mxu0 0.0
        %7157 = vmatpush1.msra.mxu0 0.0
        %7158 = vmatprep.subr.mxu0 0.0
        %7159 = vmatpush1.msra.mxu0 0.0
        %7160 = vmatprep.subr.mxu0 0.0
        %7161 = vmatpush1.msra.mxu0 0.0
        %7162 = vmatprep.subr.mxu0 0.0
        %7163 = vmatpush1.msra.mxu0 0.0
        %7164 = vmatprep.subr.mxu0 0.0
        %7165 = vmatpush1.msra.mxu0 0.0
        %7166 = vmatprep.subr.mxu0 0.0
        %7167 = vmatpush1.msra.mxu0 0.0
        %7168 = vmatprep.subr.mxu0 0.0
        %7169 = vmatpush1.msra.mxu0 0.0
        %7170 = vmatprep.subr.mxu0 0.0
        %7171 = vmatpush1.msra.mxu0 0.0
        %7172 = vmatprep.subr.mxu0 0.0
        %7173 = vmatpush1.msra.mxu0 0.0
        %7174 = vmatprep.mubr.f32.mxu0 0.0
        %7175 = vmatmul.mubr.f32.gmra.mrb[0].mxu0 %v7108
        %v7176 = vpop.f32.mrb[0].mxu0
        %v7177 = vadd.f32 0.0, %v7176
        %v7178 = vpop.f32.mrb[0].mxu0
        %v7179 = vadd.f32 0.0, %v7178
        %7180 = vdwg.mxu0
        %7181 = vmatprep.subr.mxu0 %v2397
        %7182 = vmatpush1.msra.mxu0 %v2396
        %7183 = vmatprep.subr.mxu0 %v2399
        %7184 = vmatpush1.msra.mxu0 %v2398
        %7185 = vmatprep.subr.mxu0 %v2401
        %7186 = vmatpush1.msra.mxu0 %v2400
        %7187 = vmatprep.subr.mxu0 %v2403
        %7188 = vmatpush1.msra.mxu0 %v2402
        %7189 = vmatprep.subr.mxu0 %v2405
        %7190 = vmatpush1.msra.mxu0 %v2404
        %7191 = vmatprep.subr.mxu0 %v2407
        %7192 = vmatpush1.msra.mxu0 %v2406
        %7193 = vmatprep.subr.mxu0 %v2409
        %7194 = vmatpush1.msra.mxu0 %v2408
        %7195 = vmatprep.subr.mxu0 %v2411
        %7196 = vmatpush1.msra.mxu0 %v2410
        %7197 = vmatprep.subr.mxu0 %v2413
        %7198 = vmatpush1.msra.mxu0 %v2412
        %7199 = vmatprep.subr.mxu0 %v2415
        %7200 = vmatpush1.msra.mxu0 %v2414
        %7201 = vmatprep.subr.mxu0 %v2417
        %7202 = vmatpush1.msra.mxu0 %v2416
        %7203 = vmatprep.subr.mxu0 %v2419
        %7204 = vmatpush1.msra.mxu0 %v2418
        %7205 = vmatprep.subr.mxu0 %v2421
        %7206 = vmatpush1.msra.mxu0 %v2420
        %7207 = vmatprep.subr.mxu0 %v2423
        %7208 = vmatpush1.msra.mxu0 %v2422
        %7209 = vmatprep.subr.mxu0 %v2425
        %7210 = vmatpush1.msra.mxu0 %v2424
        %7211 = vmatprep.subr.mxu0 %v2427
        %7212 = vmatpush1.msra.mxu0 %v2426
        %7213 = vmatprep.subr.mxu0 %v2429
        %7214 = vmatpush1.msra.mxu0 %v2428
        %7215 = vmatprep.subr.mxu0 %v2431
        %7216 = vmatpush1.msra.mxu0 %v2430
        %7217 = vmatprep.subr.mxu0 %v2433
        %7218 = vmatpush1.msra.mxu0 %v2432
        %7219 = vmatprep.subr.mxu0 %v2435
        %7220 = vmatpush1.msra.mxu0 %v2434
        %7221 = vmatprep.subr.mxu0 %v2437
        %7222 = vmatpush1.msra.mxu0 %v2436
        %7223 = vmatprep.subr.mxu0 %v2439
        %7224 = vmatpush1.msra.mxu0 %v2438
        %7225 = vmatprep.subr.mxu0 %v2441
        %7226 = vmatpush1.msra.mxu0 %v2440
        %7227 = vmatprep.subr.mxu0 %v2443
        %7228 = vmatpush1.msra.mxu0 %v2442
        %7229 = vmatprep.subr.mxu0 %v2445
        %7230 = vmatpush1.msra.mxu0 %v2444
        %7231 = vmatprep.subr.mxu0 %v2447
        %7232 = vmatpush1.msra.mxu0 %v2446
        %7233 = vmatprep.subr.mxu0 %v2449
        %7234 = vmatpush1.msra.mxu0 %v2448
        %7235 = vmatprep.subr.mxu0 %v2451
        %7236 = vmatpush1.msra.mxu0 %v2450
        %7237 = vmatprep.subr.mxu0 %v2453
        %7238 = vmatpush1.msra.mxu0 %v2452
        %7239 = vmatprep.subr.mxu0 %v2455
        %7240 = vmatpush1.msra.mxu0 %v2454
        %7241 = vmatprep.subr.mxu0 %v2457
        %7242 = vmatpush1.msra.mxu0 %v2456
        %7243 = vmatprep.subr.mxu0 %v2459
        %7244 = vmatpush1.msra.mxu0 %v2458
        %7245 = vmatprep.mubr.f32.mxu0 %v7179
        %7246 = vmatmul.mubr.f32.gmra.mrb[0].mxu0 %v7177
        %v7247 = vpop.f32.mrb[0].mxu0
        %v7248 = vadd.f32 0.0, %v7247
        %v7249 = vpop.f32.mrb[0].mxu0
        %v7250 = vadd.f32 0.0, %v7249
        %7251 = vdwg.mxu0
        %v7252 = vadd.f32 %v7103, %v7248
        %v7253 = vadd.f32 %v7104, %v7250
        %v7254 = vld [vmem:[#allocation2] sm:$0x1]
        %7256 = vset.pattern.permute.xlu0 0
        %7257 = vperm.xlu0 %7256, %v7254
        %v7258 = vpop.permute.xlu0 %7257
        %v7260 = vlaneseq
        %v7261 = vshrl.u32 %v7260, 7
        %v7262 = vsub.s32 0, %v7261
        %v7263 = vrot.slane %v7258, %v7262
        %v7264 = vadd.f32 %v7252, %v7263
        %v7265 = vadd.f32 %v7253, %v7263
        %v7268 = vcombine.low %v7264, %v7265
        %v7270 = vunpack.c.l.s4 1966171168
        %v7271 = vunpack.c.0.s8 %v7270
        %v7272 = vlaneseq
        %v7273 = vshrl.u32 %v7272, 7
        %v7274 = vsub.s32 %v7271, %v7273
        %v7275 = vrot.slane %v7268, %v7274
        %v7277 = vunpack.c.l.s4 1966171168
        %v7278 = vunpack.c.0.s8 %v7277
        %v7279 = vlaneseq
        %v7280 = vshrl.u32 %v7279, 7
        %v7281 = vsub.s32 %v7278, %v7280
        %v7282 = vrot.slane %v7275, %v7281
        %v7284 = vlaneseq
        %vm7285 = vcmp.ge.s32.totalorder %v7284, 0
        %vm7286 = vcmp.lt.s32.totalorder %v7284, 256
        %vm7287 = vmand %vm7285, %vm7286
        %7288 = vst.msk [vmem:[%s499] sm:$0x3] %vm7287, %v7282
        %p7289 = scmp.lt.s32.totalorder %s28, 1
        %s7290 = scalar_select %p7289, %s28, 1
        %s7291 = smul.addr %s7290, 2
        %s7292 = scalar_lea.vmem %s14, %s7291
        // Predicated region
        $region81: #{resi_layer_forward.1} parent=75 // pred_check
          %p7293 = pneg %p350
        $region82: #{resi_layer_forward.1} parent=75 // pred_check_branch
          %7295 = sbr.rel (%p7293) target = $region84
        $region83: #{resi_layer_forward.1} parent=75 // pred_region
          _
        $region84: #{resi_layer_forward.1} parent=75 // pred_fallthru
          _
      $region76: #{resi_layer_forward.1} parent=5 // pred_fallthru
        _
      %p7296 = scmp.le.s32.totalorder 2, %s23
      // Predicated region
      $region85: #{resi_layer_forward.1} parent=5 // pred_check
        %p7297 = pneg %p7296
      $region86: #{resi_layer_forward.1} parent=5 // pred_check_branch
        %7299 = sbr.rel (%p7297) target = $region88
      $region87: #{resi_layer_forward.1} parent=5 // pred_region
        %s7300 = ssub.s32 %s23, 2
        // Predicated region
        $region89: #{resi_layer_forward.1} parent=87 // pred_check
          %p7301 = pneg %p356
        $region90: #{resi_layer_forward.1} parent=87 // pred_check_branch
          %7303 = sbr.rel (%p7301) target = $region92
        $region91: #{resi_layer_forward.1} parent=87 // pred_region
          %p7304 = scmp.lt.s32.totalorder %s29, 1
          %s7305 = scalar_select %p7304, %s29, 1
          %s7306 = smul.addr %s7305, 2
          %s7307 = scalar_lea.vmem %s14, %s7306
        $region92: #{resi_layer_forward.1} parent=87 // pred_fallthru
          _
      $region88: #{resi_layer_forward.1} parent=5 // pred_fallthru
        _
    $region6: #{resi_layer_forward.1} parent=1 // loop_footer
      %s27 = sadd.s32 1, %s23
    $region7: #{resi_layer_forward.1} parent=1 // loop_footer_branch
      %22 = sbr.rel target = $region3
    $region8: #{resi_layer_forward.1} parent=1 // loop_exit
      _
    %7308 = vsyncpa [#allocation4], 1
    %s7309 = scalar_lea.sflag [#allocation4], 1
    %7310 = vsyncpa %s7309, 1

</llo_original>
